<compile_context>
chip_gen: v7x
topology: tpu7x:2x2x1
jax: 0.10.0
libtpu: 0.0.40
codegen_flags: <defaults>
</compile_context>

<pallas_src>
import numpy as np
import jax
import jax.numpy as jnp
from jax.experimental import pallas as pl
from jax.experimental.pallas import tpu as pltpu

EPS = 1e-5          # nn.BatchNorm2d default eps
NEG_SLOPE = 0.2     # F.leaky_relu(x, 0.2)

CONV_DIM = 32
IMAGE_CHANNELS = 3
IMG_SIZE = 32       # forced by fc = Linear(conv_dim*4*4*4, 1): 32 -> 16 -> 8 -> 4
C_PAD = 128         # lane-dense channel width used inside the kernel

_VMEM = pl.BlockSpec(memory_space=pltpu.MemorySpace.VMEM)


# ------------------------------------------------------------------ helpers ---

def _c2_tap(s, k):
    """conv2 (k=4, stride=2, pad=1): (output parity s, tap k) ->
    (mod-4 input plane index, start row inside the 6-row halo buffer)."""
    v = 2 * s + k - 1
    if v < 0:
        return 3, 0
    if v > 3:
        return 0, 2
    return v, 1


def _c3_tap(k):
    """conv3 (k=3, stride=2, pad=1): tap k ->
    (mod-2 input plane index, start row inside the 5-row halo buffer)."""
    return ((1, 0), (0, 1), (1, 1))[k]


def _bn_lrelu(acc):
    """Training-mode BatchNorm over rows (two-pass: mean, then mean of squared
    deviations; biased variance; gamma=1 / beta=0 folded away) + LeakyReLU(0.2)."""
    m = acc.shape[0]
    mean = jnp.sum(acc, axis=0, keepdims=True) * (1.0 / m)
    cent = acc - mean
    var = jnp.sum(cent * cent, axis=0, keepdims=True) * (1.0 / m)
    y = cent * jax.lax.rsqrt(var + EPS)
    return jnp.where(y > 0, y, NEG_SLOPE * y)


# ------------------------------------------------------------------- kernel ---

def dc_disc_kernel(p1_ref, w1_ref, b1_ref, w2_ref, b2_ref, w3_ref, b3_ref,
                   wk_ref, bfc_ref, y3_ref, prob_ref, pad2_ref, pad3_ref):
    n = p1_ref.shape[0] // 256                                    # batch size

    # ---- conv1 + bn1 + leaky_relu (patches built host-side, lane-padded to 128)
    acc1 = jnp.dot(p1_ref[...], w1_ref[...],
                   preferred_element_type=jnp.float32) + b1_ref[...]
    a1 = _bn_lrelu(acc1)                                          # (n*256, 128) f32
    # a1 rows are ordered (n, h%4, w%4, h//4, w//4)  -- chosen by the host im2col.

    # ---- scatter a1 into zero-init halo planes (mod-4 parity split, conv2 input)
    pad2_ref[...] = jnp.zeros(pad2_ref.shape, pad2_ref.dtype)
    for p in range(n * 16):                                       # static, unrolled
        pad2_ref[p, 1:5, 1:5, :] = a1[p * 16:(p + 1) * 16, :].reshape(4, 4, C_PAD)

    # ---- conv2 + bn2 + leaky_relu: ONE wide-K GEMM (K = 16*128) over contiguous taps
    groups = []
    for b in range(n):
        for sh in range(2):                                       # output row parity
            for sw in range(2):                                   # output col parity
                taps = []
                for kh in range(4):
                    mh, ah = _c2_tap(sh, kh)
                    for kw in range(4):
                        mw, aw = _c2_tap(sw, kw)
                        blk = pad2_ref[b * 16 + mh * 4 + mw,
                                       ah:ah + 4, aw:aw + 4, :]   # (4,4,128) f32
                        taps.append(blk.reshape(16, C_PAD).astype(jnp.bfloat16))
                groups.append(jnp.concatenate(taps, axis=1))      # (16, 2048)
    patch2 = jnp.concatenate(groups, axis=0)                      # (n*64, 2048) bf16
    acc2 = jnp.dot(patch2, w2_ref[...],
                   preferred_element_type=jnp.float32) + b2_ref[...]
    a2 = _bn_lrelu(acc2)                                          # (n*64, 128) f32
    # a2 rows are ordered (n, oh%2, ow%2, oh//2, ow//2) -> exactly conv3's planes.

    # ---- scatter a2 into zero-init halo planes (mod-2 parity split, conv3 input)
    pad3_ref[...] = jnp.zeros(pad3_ref.shape, pad3_ref.dtype)
    for j in range(n * 4):
        pad3_ref[j, 1:5, 1:5, :] = a2[j * 16:(j + 1) * 16, :].reshape(4, 4, C_PAD)

    # ---- conv3 + bn3 + leaky_relu: ONE wide-K GEMM (K = 9*128)
    groups = []
    for b in range(n):
        taps = []
        for kh in range(3):
            ph, ah = _c3_tap(kh)
            for kw in range(3):
                pw, aw = _c3_tap(kw)
                blk = pad3_ref[(b * 2 + ph) * 2 + pw,
                               ah:ah + 4, aw:aw + 4, :]           # (4,4,128) f32
                taps.append(blk.reshape(16, C_PAD).astype(jnp.bfloat16))
        groups.append(jnp.concatenate(taps, axis=1))              # (16, 1152)
    patch3 = jnp.concatenate(groups, axis=0)                      # (n*16, 1152) bf16
    acc3 = jnp.dot(patch3, w3_ref[...],
                   preferred_element_type=jnp.float32) + b3_ref[...]
    y3 = _bn_lrelu(acc3)                                          # (n*16, 128) f32
    y3_ref[...] = y3                                              # lane-dense store

    # ---- fc + sigmoid: broadcast multiply against one (16,128) slab + lane reduces
    prod = y3.reshape(n, 16, C_PAD) * wk_ref[...]                 # (n, 16, 128)
    t = jnp.sum(prod, axis=2)                                     # (n, 16)
    z = jnp.sum(t, axis=1, keepdims=True) + bfc_ref[...]          # (n, 1)
    prob_ref[...] = jax.nn.sigmoid(z)


# --------------------------------------------------------------- host glue ---

def conv1_patches(x_nhwc):
    """conv1 im2col (k=4, s=2, p=1), columns (kh,kw,ci) zero-padded to 128, rows
    permuted to (n, h%4, w%4, h//4, w//4) so the kernel's mod-4 plane scatter is
    a plain sequence of contiguous 16-row chunks."""
    N = x_nhwc.shape[0]
    xp = jnp.pad(x_nhwc, ((0, 0), (1, 1), (1, 1), (0, 0)))        # (N, 34, 34, 3)
    cols = []
    for kh in range(4):
        for kw in range(4):
            cols.append(jax.lax.slice(xp, (0, kh, kw, 0),
                                      (N, kh + 31, kw + 31, IMAGE_CHANNELS),
                                      (1, 2, 2, 1)))              # (N, 16, 16, 3)
    pat = jnp.stack(cols, axis=3).reshape(N, 16, 16, 16 * IMAGE_CHANNELS)
    pat = pat.reshape(N, 4, 4, 4, 4, 16 * IMAGE_CHANNELS)         # (n,qh,mh,qw,mw,:)
    pat = jnp.transpose(pat, (0, 2, 4, 1, 3, 5))                  # (n,mh,mw,qh,qw,:)
    p1 = pat.reshape(N * 256, 16 * IMAGE_CHANNELS)
    p1 = jnp.pad(p1, ((0, 0), (0, C_PAD - p1.shape[1])))          # lane-dense K=128
    return p1.astype(jnp.bfloat16)


def _conv1_weight(w_oihw):
    """torch (Cout,Cin,4,4) -> (128, 128) bf16 slab, rows (kh,kw,ci) zero-padded."""
    co = w_oihw.shape[0]
    w = jnp.transpose(w_oihw, (2, 3, 1, 0)).reshape(-1, co)       # (48, 32)
    w = jnp.pad(w, ((0, C_PAD - w.shape[0]), (0, C_PAD - co)))
    return w.astype(jnp.bfloat16)


def _conv_weight_blocks(w_oihw):
    """torch (Cout,Cin,kh,kw) -> (kh*kw*128, 128) bf16, per-tap (Cin_pad,Cout_pad)."""
    co, ci, kh, kw = w_oihw.shape
    w = jnp.transpose(w_oihw, (2, 3, 1, 0))                       # (kh, kw, ci, co)
    w = jnp.pad(w, ((0, 0), (0, 0), (0, C_PAD - ci), (0, C_PAD - co)))
    return w.reshape(kh * kw * C_PAD, C_PAD).astype(jnp.bfloat16)


def _pad_row(v):
    v = jnp.asarray(v, jnp.float32).reshape(1, -1)
    return jnp.pad(v, ((0, 0), (0, C_PAD - v.shape[1])))


def init_torch_params(key):
    """PyTorch-layout parameters (used for both the kernel params and the reference)."""
    ks = jax.random.split(key, 8)
    d = CONV_DIM
    return {
        "w1": 0.05 * jax.random.normal(ks[0], (d, IMAGE_CHANNELS, 4, 4), jnp.float32),
        "b1": 0.01 * jax.random.normal(ks[1], (d,), jnp.float32),
        "w2": 0.05 * jax.random.normal(ks[2], (2 * d, d, 4, 4), jnp.float32),
        "b2": 0.01 * jax.random.normal(ks[3], (2 * d,), jnp.float32),
        "w3": 0.05 * jax.random.normal(ks[4], (4 * d, 2 * d, 3, 3), jnp.float32),
        "b3": 0.01 * jax.random.normal(ks[5], (4 * d,), jnp.float32),
        "wfc": 0.02 * jax.random.normal(ks[6], (1, 4 * d * 4 * 4), jnp.float32),
        "bfc": 0.01 * jax.random.normal(ks[7], (1,), jnp.float32),
    }


def build_kernel_params(t):
    """Batch-independent kernel operands (no S matrices, no gsum, no gamma/beta)."""
    h3 = IMG_SIZE // 8                                            # 4
    # fc weight permuted so it matches y3's (row=(oh,ow), col=channel) layout.
    wk = jnp.transpose(t["wfc"].reshape(4 * CONV_DIM, h3 * h3))   # (16, 128)
    return {
        "w1": _conv1_weight(t["w1"]), "b1": _pad_row(t["b1"]),
        "w2": _conv_weight_blocks(t["w2"]), "b2": _pad_row(t["b2"]),
        "w3": _conv_weight_blocks(t["w3"]), "b3": _pad_row(t["b3"]),
        "wk": wk.astype(jnp.float32),
        "bfc": t["bfc"].reshape(1, 1).astype(jnp.float32),
    }


def dc_discriminator_forward(x_nchw, params):
    n = x_nchw.shape[0]
    x = jnp.transpose(x_nchw, (0, 2, 3, 1)).astype(jnp.float32)   # NHWC
    p1 = conv1_patches(x)                                         # (n*256, 128) bf16

    flops = 2 * (n * 256 * C_PAD * C_PAD                          # conv1
                 + n * 64 * (16 * C_PAD) * C_PAD                  # conv2 (wide-K)
                 + n * 16 * (9 * C_PAD) * C_PAD                   # conv3 (wide-K)
                 + n * 16 * C_PAD)                                # fc
    bytes_accessed = (p1.shape[0] * p1.shape[1] * 2
                      + sum(int(np.prod(v.shape)) * v.dtype.itemsize
                            for v in params.values())
                      + n * 16 * C_PAD * 4 + n * 4)
    cost = pl.CostEstimate(flops=int(flops), transcendentals=int(3 * C_PAD + 2 * n),
                           bytes_accessed=int(bytes_accessed))

    y3, prob = pl.pallas_call(
        dc_disc_kernel,
        out_shape=(jax.ShapeDtypeStruct((n * 16, C_PAD), jnp.float32),  # lane-dense y3
                   jax.ShapeDtypeStruct((n, 1), jnp.float32)),
        in_specs=[_VMEM] * 9,
        out_specs=(_VMEM, _VMEM),
        scratch_shapes=[
            pltpu.VMEM((n * 16, 6, 6, C_PAD), jnp.float32),   # conv2 input halo planes
            pltpu.VMEM((n * 4, 5, 5, C_PAD), jnp.float32),    # conv3 input halo planes
        ],
        cost_estimate=cost,
    )(p1, params["w1"], params["b1"], params["w2"], params["b2"],
      params["w3"], params["b3"], params["wk"], params["bfc"])

    # PyTorch x.view(N, -1) flattens NCHW (index = c*16 + oh*4 + ow).  y3 rows are
    # (n, oh, ow) with channels on the lane axis -> per-sample transpose (glue op).
    h3 = IMG_SIZE // 8
    lth_layer = jnp.transpose(y3.reshape(n, h3 * h3, C_PAD), (0, 2, 1)).reshape(n, -1)
    return prob, lth_layer


# -------------------------------------------------------- pure-JAX reference --

def reference_forward(x_nchw, t):
    dn = ("NCHW", "OIHW", "NCHW")
    hp = jax.lax.Precision.HIGHEST

    def conv(x, w, b, stride, pad):
        y = jax.lax.conv_general_dilated(x, w, (stride, stride),
                                         [(pad, pad), (pad, pad)],
                                         dimension_numbers=dn, precision=hp)
        return y + b.reshape(1, -1, 1, 1)

    def bn_lrelu(x):
        mean = jnp.mean(x, axis=(0, 2, 3), keepdims=True)
        var = jnp.mean(jnp.square(x - mean), axis=(0, 2, 3), keepdims=True)
        y = (x - mean) * jax.lax.rsqrt(var + EPS)
        return jnp.where(y > 0, y, NEG_SLOPE * y)

    x = bn_lrelu(conv(x_nchw, t["w1"], t["b1"], 2, 1))
    x = bn_lrelu(conv(x, t["w2"], t["b2"], 2, 1))
    x = bn_lrelu(conv(x, t["w3"], t["b3"], 2, 1))
    lth = x.reshape(x.shape[0], -1)
    z = jnp.dot(lth, t["wfc"].T, precision=hp) + t["bfc"]
    return jax.nn.sigmoid(z), lth


# --------------------------------------------------------------------- main --

if __name__ == "__main__":
    key = jax.random.PRNGKey(0)
    kx, kp = jax.random.split(key)
    batch = 2
    x = jax.random.normal(kx, (batch, IMAGE_CHANNELS, IMG_SIZE, IMG_SIZE), jnp.float32)

    tparams = init_torch_params(kp)
    kparams = build_kernel_params(tparams)

    fwd = jax.jit(dc_discriminator_forward)
    out, lth = fwd(x, kparams)
    jax.block_until_ready((out, lth))

    assert out.shape == (batch, 1)
    assert lth.shape == (batch, CONV_DIM * 4 * 4 * 4)
    assert bool(jnp.all(jnp.isfinite(out))) and bool(jnp.all((out >= 0) & (out <= 1)))

    # Correctness vs. an independent pure-JAX reference (bf16 MXU inputs -> relaxed tol).
    out_ref, lth_ref = reference_forward(x, tparams)
    np.testing.assert_allclose(np.asarray(lth), np.asarray(lth_ref), atol=2e-1, rtol=2e-1)
    np.testing.assert_allclose(np.asarray(out), np.asarray(out_ref), atol=3e-2, rtol=3e-2)

    print("KERNEL_OK")
</pallas_src>

<mosaic_0001>
module attributes {stable_mosaic.version = 11 : i64} {
  func.func @dc_disc_kernel(%arg0: memref<512x128xbf16, #tpu.memory_space<vmem>>, %arg1: memref<128x128xbf16, #tpu.memory_space<vmem>>, %arg2: memref<1x128xf32, #tpu.memory_space<vmem>>, %arg3: memref<2048x128xbf16, #tpu.memory_space<vmem>>, %arg4: memref<1x128xf32, #tpu.memory_space<vmem>>, %arg5: memref<1152x128xbf16, #tpu.memory_space<vmem>>, %arg6: memref<1x128xf32, #tpu.memory_space<vmem>>, %arg7: memref<16x128xf32, #tpu.memory_space<vmem>>, %arg8: memref<1x1xf32, #tpu.memory_space<vmem>>, %arg9: memref<32x128xf32, #tpu.memory_space<vmem>>, %arg10: memref<2x1xf32, #tpu.memory_space<vmem>>, %arg11: memref<32x6x6x128xf32, #tpu.memory_space<vmem>>, %arg12: memref<8x5x5x128xf32, #tpu.memory_space<vmem>>) attributes {dimension_semantics = [], scalar_prefetch = 0 : i64, scratch_operands = 2 : i64, tpu.core_type = #tpu.core_type<tc>} {
    %c0 = arith.constant 0 : index
    %c0_0 = arith.constant 0 : index
    %0 = vector.load %arg0[%c0, %c0_0] : memref<512x128xbf16, #tpu.memory_space<vmem>>, vector<512x128xbf16>
    %c0_1 = arith.constant 0 : index
    %c0_2 = arith.constant 0 : index
    %1 = vector.load %arg1[%c0_1, %c0_2] : memref<128x128xbf16, #tpu.memory_space<vmem>>, vector<128x128xbf16>
    %cst = arith.constant dense<0.000000e+00> : vector<512x128xf32>
    %2 = tpu.matmul %0, %1, %cst {dimension_numbers = #tpu.dot_dimension_numbers<[1], [0], [0], [1], [0, 0, 1, 1], [], []>} : vector<512x128xbf16>, vector<128x128xbf16>, vector<512x128xf32> -> vector<512x128xf32>
    %c0_3 = arith.constant 0 : index
    %c0_4 = arith.constant 0 : index
    %3 = vector.load %arg2[%c0_3, %c0_4] : memref<1x128xf32, #tpu.memory_space<vmem>>, vector<1x128xf32>
    %4 = vector.broadcast %3 : vector<1x128xf32> to vector<512x128xf32>
    %5 = arith.addf %2, %4 : vector<512x128xf32>
    %cst_5 = arith.constant dense<0.000000e+00> : vector<128xf32>
    %6 = vector.multi_reduction <add>, %5, %cst_5 [0] : vector<512x128xf32> to vector<128xf32>
    %7 = vector.shape_cast %6 : vector<128xf32> to vector<1x128xf32>
    %cst_6 = arith.constant 0.001953125 : f32
    %8 = vector.broadcast %cst_6 : f32 to vector<1x128xf32>
    %9 = arith.mulf %7, %8 : vector<1x128xf32>
    %10 = vector.broadcast %9 : vector<1x128xf32> to vector<512x128xf32>
    %11 = arith.subf %5, %10 : vector<512x128xf32>
    %12 = arith.mulf %11, %11 : vector<512x128xf32>
    %cst_7 = arith.constant dense<0.000000e+00> : vector<128xf32>
    %13 = vector.multi_reduction <add>, %12, %cst_7 [0] : vector<512x128xf32> to vector<128xf32>
    %14 = vector.shape_cast %13 : vector<128xf32> to vector<1x128xf32>
    %cst_8 = arith.constant 0.001953125 : f32
    %15 = vector.broadcast %cst_8 : f32 to vector<1x128xf32>
    %16 = arith.mulf %14, %15 : vector<1x128xf32>
    %cst_9 = arith.constant 9.99999974E-6 : f32
    %17 = vector.broadcast %cst_9 : f32 to vector<1x128xf32>
    %18 = arith.addf %16, %17 : vector<1x128xf32>
    %19 = math.rsqrt %18 : vector<1x128xf32>
    %20 = vector.broadcast %19 : vector<1x128xf32> to vector<512x128xf32>
    %21 = arith.mulf %11, %20 : vector<512x128xf32>
    %cst_10 = arith.constant 0.000000e+00 : f32
    %22 = vector.broadcast %cst_10 : f32 to vector<512x128xf32>
    %23 = arith.cmpf ogt, %21, %22 : vector<512x128xf32>
    %cst_11 = arith.constant 2.000000e-01 : f32
    %24 = vector.broadcast %cst_11 : f32 to vector<512x128xf32>
    %25 = arith.mulf %24, %21 : vector<512x128xf32>
    %26 = arith.select %23, %21, %25 : vector<512x128xi1>, vector<512x128xf32>
    %cst_12 = arith.constant 0.000000e+00 : f32
    %27 = vector.broadcast %cst_12 : f32 to vector<32x6x6x128xf32>
    %c0_13 = arith.constant 0 : index
    %c0_14 = arith.constant 0 : index
    %c0_15 = arith.constant 0 : index
    %c0_16 = arith.constant 0 : index
    %28 = vector.load %arg11[%c0_13, %c0_14, %c0_15, %c0_16] : memref<32x6x6x128xf32, #tpu.memory_space<vmem>>, vector<32x6x6x128xf32>
    tpu.vector_store %arg11[%c0_13, %c0_14, %c0_15, %c0_16], %27 {strides = array<i32>} : memref<32x6x6x128xf32, #tpu.memory_space<vmem>>, vector<32x6x6x128xf32>,
    %29 = vector.extract_strided_slice %26 {offsets = [0, 0], sizes = [16, 128], strides = [1, 1]} : vector<512x128xf32> to vector<16x128xf32>
    %30 = vector.shape_cast %29 : vector<16x128xf32> to vector<4x4x128xf32>
    %c0_17 = arith.constant 0 : index
    %c1 = arith.constant 1 : index
    %c1_18 = arith.constant 1 : index
    %c0_19 = arith.constant 0 : index
    %31 = vector.load %arg11[%c0_17, %c1, %c1_18, %c0_19] : memref<32x6x6x128xf32, #tpu.memory_space<vmem>>, vector<1x4x4x128xf32>
    %32 = vector.shape_cast %31 : vector<1x4x4x128xf32> to vector<4x4x128xf32>
    %33 = vector.shape_cast %30 : vector<4x4x128xf32> to vector<1x4x4x128xf32>
    tpu.vector_store %arg11[%c0_17, %c1, %c1_18, %c0_19], %33 {strides = array<i32>} : memref<32x6x6x128xf32, #tpu.memory_space<vmem>>, vector<1x4x4x128xf32>,
    %34 = vector.extract_strided_slice %26 {offsets = [16, 0], sizes = [16, 128], strides = [1, 1]} : vector<512x128xf32> to vector<16x128xf32>
    %35 = vector.shape_cast %34 : vector<16x128xf32> to vector<4x4x128xf32>
    %c1_20 = arith.constant 1 : index
    %c1_21 = arith.constant 1 : index
    %c1_22 = arith.constant 1 : index
    %c0_23 = arith.constant 0 : index
    %36 = vector.load %arg11[%c1_20, %c1_21, %c1_22, %c0_23] : memref<32x6x6x128xf32, #tpu.memory_space<vmem>>, vector<1x4x4x128xf32>
    %37 = vector.shape_cast %36 : vector<1x4x4x128xf32> to vector<4x4x128xf32>
    %38 = vector.shape_cast %35 : vector<4x4x128xf32> to vector<1x4x4x128xf32>
    tpu.vector_store %arg11[%c1_20, %c1_21, %c1_22, %c0_23], %38 {strides = array<i32>} : memref<32x6x6x128xf32, #tpu.memory_space<vmem>>, vector<1x4x4x128xf32>,
    %39 = vector.extract_strided_slice %26 {offsets = [32, 0], sizes = [16, 128], strides = [1, 1]} : vector<512x128xf32> to vector<16x128xf32>
    %40 = vector.shape_cast %39 : vector<16x128xf32> to vector<4x4x128xf32>
    %c2 = arith.constant 2 : index
    %c1_24 = arith.constant 1 : index
    %c1_25 = arith.constant 1 : index
    %c0_26 = arith.constant 0 : index
    %41 = vector.load %arg11[%c2, %c1_24, %c1_25, %c0_26] : memref<32x6x6x128xf32, #tpu.memory_space<vmem>>, vector<1x4x4x128xf32>
    %42 = vector.shape_cast %41 : vector<1x4x4x128xf32> to vector<4x4x128xf32>
    %43 = vector.shape_cast %40 : vector<4x4x128xf32> to vector<1x4x4x128xf32>
    tpu.vector_store %arg11[%c2, %c1_24, %c1_25, %c0_26], %43 {strides = array<i32>} : memref<32x6x6x128xf32, #tpu.memory_space<vmem>>, vector<1x4x4x128xf32>,
    %44 = vector.extract_strided_slice %26 {offsets = [48, 0], sizes = [16, 128], strides = [1, 1]} : vector<512x128xf32> to vector<16x128xf32>
    %45 = vector.shape_cast %44 : vector<16x128xf32> to vector<4x4x128xf32>
    %c3 = arith.constant 3 : index
    %c1_27 = arith.constant 1 : index
    %c1_28 = arith.constant 1 : index
    %c0_29 = arith.constant 0 : index
    %46 = vector.load %arg11[%c3, %c1_27, %c1_28, %c0_29] : memref<32x6x6x128xf32, #tpu.memory_space<vmem>>, vector<1x4x4x128xf32>
    %47 = vector.shape_cast %46 : vector<1x4x4x128xf32> to vector<4x4x128xf32>
    %48 = vector.shape_cast %45 : vector<4x4x128xf32> to vector<1x4x4x128xf32>
    tpu.vector_store %arg11[%c3, %c1_27, %c1_28, %c0_29], %48 {strides = array<i32>} : memref<32x6x6x128xf32, #tpu.memory_space<vmem>>, vector<1x4x4x128xf32>,
    %49 = vector.extract_strided_slice %26 {offsets = [64, 0], sizes = [16, 128], strides = [1, 1]} : vector<512x128xf32> to vector<16x128xf32>
    %50 = vector.shape_cast %49 : vector<16x128xf32> to vector<4x4x128xf32>
    %c4 = arith.constant 4 : index
    %c1_30 = arith.constant 1 : index
    %c1_31 = arith.constant 1 : index
    %c0_32 = arith.constant 0 : index
    %51 = vector.load %arg11[%c4, %c1_30, %c1_31, %c0_32] : memref<32x6x6x128xf32, #tpu.memory_space<vmem>>, vector<1x4x4x128xf32>
    %52 = vector.shape_cast %51 : vector<1x4x4x128xf32> to vector<4x4x128xf32>
    %53 = vector.shape_cast %50 : vector<4x4x128xf32> to vector<1x4x4x128xf32>
    tpu.vector_store %arg11[%c4, %c1_30, %c1_31, %c0_32], %53 {strides = array<i32>} : memref<32x6x6x128xf32, #tpu.memory_space<vmem>>, vector<1x4x4x128xf32>,
    %54 = vector.extract_strided_slice %26 {offsets = [80, 0], sizes = [16, 128], strides = [1, 1]} : vector<512x128xf32> to vector<16x128xf32>
    %55 = vector.shape_cast %54 : vector<16x128xf32> to vector<4x4x128xf32>
    %c5 = arith.constant 5 : index
    %c1_33 = arith.constant 1 : index
    %c1_34 = arith.constant 1 : index
    %c0_35 = arith.constant 0 : index
    %56 = vector.load %arg11[%c5, %c1_33, %c1_34, %c0_35] : memref<32x6x6x128xf32, #tpu.memory_space<vmem>>, vector<1x4x4x128xf32>
    %57 = vector.shape_cast %56 : vector<1x4x4x128xf32> to vector<4x4x128xf32>
    %58 = vector.shape_cast %55 : vector<4x4x128xf32> to vector<1x4x4x128xf32>
    tpu.vector_store %arg11[%c5, %c1_33, %c1_34, %c0_35], %58 {strides = array<i32>} : memref<32x6x6x128xf32, #tpu.memory_space<vmem>>, vector<1x4x4x128xf32>,
    %59 = vector.extract_strided_slice %26 {offsets = [96, 0], sizes = [16, 128], strides = [1, 1]} : vector<512x128xf32> to vector<16x128xf32>
    %60 = vector.shape_cast %59 : vector<16x128xf32> to vector<4x4x128xf32>
    %c6 = arith.constant 6 : index
    %c1_36 = arith.constant 1 : index
    %c1_37 = arith.constant 1 : index
    %c0_38 = arith.constant 0 : index
    %61 = vector.load %arg11[%c6, %c1_36, %c1_37, %c0_38] : memref<32x6x6x128xf32, #tpu.memory_space<vmem>>, vector<1x4x4x128xf32>
    %62 = vector.shape_cast %61 : vector<1x4x4x128xf32> to vector<4x4x128xf32>
    %63 = vector.shape_cast %60 : vector<4x4x128xf32> to vector<1x4x4x128xf32>
    tpu.vector_store %arg11[%c6, %c1_36, %c1_37, %c0_38], %63 {strides = array<i32>} : memref<32x6x6x128xf32, #tpu.memory_space<vmem>>, vector<1x4x4x128xf32>,
    %64 = vector.extract_strided_slice %26 {offsets = [112, 0], sizes = [16, 128], strides = [1, 1]} : vector<512x128xf32> to vector<16x128xf32>
    %65 = vector.shape_cast %64 : vector<16x128xf32> to vector<4x4x128xf32>
    %c7 = arith.constant 7 : index
    %c1_39 = arith.constant 1 : index
    %c1_40 = arith.constant 1 : index
    %c0_41 = arith.constant 0 : index
    %66 = vector.load %arg11[%c7, %c1_39, %c1_40, %c0_41] : memref<32x6x6x128xf32, #tpu.memory_space<vmem>>, vector<1x4x4x128xf32>
    %67 = vector.shape_cast %66 : vector<1x4x4x128xf32> to vector<4x4x128xf32>
    %68 = vector.shape_cast %65 : vector<4x4x128xf32> to vector<1x4x4x128xf32>
    tpu.vector_store %arg11[%c7, %c1_39, %c1_40, %c0_41], %68 {strides = array<i32>} : memref<32x6x6x128xf32, #tpu.memory_space<vmem>>, vector<1x4x4x128xf32>,
    %69 = vector.extract_strided_slice %26 {offsets = [128, 0], sizes = [16, 128], strides = [1, 1]} : vector<512x128xf32> to vector<16x128xf32>
    %70 = vector.shape_cast %69 : vector<16x128xf32> to vector<4x4x128xf32>
    %c8 = arith.constant 8 : index
    %c1_42 = arith.constant 1 : index
    %c1_43 = arith.constant 1 : index
    %c0_44 = arith.constant 0 : index
    %71 = vector.load %arg11[%c8, %c1_42, %c1_43, %c0_44] : memref<32x6x6x128xf32, #tpu.memory_space<vmem>>, vector<1x4x4x128xf32>
    %72 = vector.shape_cast %71 : vector<1x4x4x128xf32> to vector<4x4x128xf32>
    %73 = vector.shape_cast %70 : vector<4x4x128xf32> to vector<1x4x4x128xf32>
    tpu.vector_store %arg11[%c8, %c1_42, %c1_43, %c0_44], %73 {strides = array<i32>} : memref<32x6x6x128xf32, #tpu.memory_space<vmem>>, vector<1x4x4x128xf32>,
    %74 = vector.extract_strided_slice %26 {offsets = [144, 0], sizes = [16, 128], strides = [1, 1]} : vector<512x128xf32> to vector<16x128xf32>
    %75 = vector.shape_cast %74 : vector<16x128xf32> to vector<4x4x128xf32>
    %c9 = arith.constant 9 : index
    %c1_45 = arith.constant 1 : index
    %c1_46 = arith.constant 1 : index
    %c0_47 = arith.constant 0 : index
    %76 = vector.load %arg11[%c9, %c1_45, %c1_46, %c0_47] : memref<32x6x6x128xf32, #tpu.memory_space<vmem>>, vector<1x4x4x128xf32>
    %77 = vector.shape_cast %76 : vector<1x4x4x128xf32> to vector<4x4x128xf32>
    %78 = vector.shape_cast %75 : vector<4x4x128xf32> to vector<1x4x4x128xf32>
    tpu.vector_store %arg11[%c9, %c1_45, %c1_46, %c0_47], %78 {strides = array<i32>} : memref<32x6x6x128xf32, #tpu.memory_space<vmem>>, vector<1x4x4x128xf32>,
    %79 = vector.extract_strided_slice %26 {offsets = [160, 0], sizes = [16, 128], strides = [1, 1]} : vector<512x128xf32> to vector<16x128xf32>
    %80 = vector.shape_cast %79 : vector<16x128xf32> to vector<4x4x128xf32>
    %c10 = arith.constant 10 : index
    %c1_48 = arith.constant 1 : index
    %c1_49 = arith.constant 1 : index
    %c0_50 = arith.constant 0 : index
    %81 = vector.load %arg11[%c10, %c1_48, %c1_49, %c0_50] : memref<32x6x6x128xf32, #tpu.memory_space<vmem>>, vector<1x4x4x128xf32>
    %82 = vector.shape_cast %81 : vector<1x4x4x128xf32> to vector<4x4x128xf32>
    %83 = vector.shape_cast %80 : vector<4x4x128xf32> to vector<1x4x4x128xf32>
    tpu.vector_store %arg11[%c10, %c1_48, %c1_49, %c0_50], %83 {strides = array<i32>} : memref<32x6x6x128xf32, #tpu.memory_space<vmem>>, vector<1x4x4x128xf32>,
    %84 = vector.extract_strided_slice %26 {offsets = [176, 0], sizes = [16, 128], strides = [1, 1]} : vector<512x128xf32> to vector<16x128xf32>
    %85 = vector.shape_cast %84 : vector<16x128xf32> to vector<4x4x128xf32>
    %c11 = arith.constant 11 : index
    %c1_51 = arith.constant 1 : index
    %c1_52 = arith.constant 1 : index
    %c0_53 = arith.constant 0 : index
    %86 = vector.load %arg11[%c11, %c1_51, %c1_52, %c0_53] : memref<32x6x6x128xf32, #tpu.memory_space<vmem>>, vector<1x4x4x128xf32>
    %87 = vector.shape_cast %86 : vector<1x4x4x128xf32> to vector<4x4x128xf32>
    %88 = vector.shape_cast %85 : vector<4x4x128xf32> to vector<1x4x4x128xf32>
    tpu.vector_store %arg11[%c11, %c1_51, %c1_52, %c0_53], %88 {strides = array<i32>} : memref<32x6x6x128xf32, #tpu.memory_space<vmem>>, vector<1x4x4x128xf32>,
    %89 = vector.extract_strided_slice %26 {offsets = [192, 0], sizes = [16, 128], strides = [1, 1]} : vector<512x128xf32> to vector<16x128xf32>
    %90 = vector.shape_cast %89 : vector<16x128xf32> to vector<4x4x128xf32>
    %c12 = arith.constant 12 : index
    %c1_54 = arith.constant 1 : index
    %c1_55 = arith.constant 1 : index
    %c0_56 = arith.constant 0 : index
    %91 = vector.load %arg11[%c12, %c1_54, %c1_55, %c0_56] : memref<32x6x6x128xf32, #tpu.memory_space<vmem>>, vector<1x4x4x128xf32>
    %92 = vector.shape_cast %91 : vector<1x4x4x128xf32> to vector<4x4x128xf32>
    %93 = vector.shape_cast %90 : vector<4x4x128xf32> to vector<1x4x4x128xf32>
    tpu.vector_store %arg11[%c12, %c1_54, %c1_55, %c0_56], %93 {strides = array<i32>} : memref<32x6x6x128xf32, #tpu.memory_space<vmem>>, vector<1x4x4x128xf32>,
    %94 = vector.extract_strided_slice %26 {offsets = [208, 0], sizes = [16, 128], strides = [1, 1]} : vector<512x128xf32> to vector<16x128xf32>
    %95 = vector.shape_cast %94 : vector<16x128xf32> to vector<4x4x128xf32>
    %c13 = arith.constant 13 : index
    %c1_57 = arith.constant 1 : index
    %c1_58 = arith.constant 1 : index
    %c0_59 = arith.constant 0 : index
    %96 = vector.load %arg11[%c13, %c1_57, %c1_58, %c0_59] : memref<32x6x6x128xf32, #tpu.memory_space<vmem>>, vector<1x4x4x128xf32>
    %97 = vector.shape_cast %96 : vector<1x4x4x128xf32> to vector<4x4x128xf32>
    %98 = vector.shape_cast %95 : vector<4x4x128xf32> to vector<1x4x4x128xf32>
    tpu.vector_store %arg11[%c13, %c1_57, %c1_58, %c0_59], %98 {strides = array<i32>} : memref<32x6x6x128xf32, #tpu.memory_space<vmem>>, vector<1x4x4x128xf32>,
    %99 = vector.extract_strided_slice %26 {offsets = [224, 0], sizes = [16, 128], strides = [1, 1]} : vector<512x128xf32> to vector<16x128xf32>
    %100 = vector.shape_cast %99 : vector<16x128xf32> to vector<4x4x128xf32>
    %c14 = arith.constant 14 : index
    %c1_60 = arith.constant 1 : index
    %c1_61 = arith.constant 1 : index
    %c0_62 = arith.constant 0 : index
    %101 = vector.load %arg11[%c14, %c1_60, %c1_61, %c0_62] : memref<32x6x6x128xf32, #tpu.memory_space<vmem>>, vector<1x4x4x128xf32>
    %102 = vector.shape_cast %101 : vector<1x4x4x128xf32> to vector<4x4x128xf32>
    %103 = vector.shape_cast %100 : vector<4x4x128xf32> to vector<1x4x4x128xf32>
    tpu.vector_store %arg11[%c14, %c1_60, %c1_61, %c0_62], %103 {strides = array<i32>} : memref<32x6x6x128xf32, #tpu.memory_space<vmem>>, vector<1x4x4x128xf32>,
    %104 = vector.extract_strided_slice %26 {offsets = [240, 0], sizes = [16, 128], strides = [1, 1]} : vector<512x128xf32> to vector<16x128xf32>
    %105 = vector.shape_cast %104 : vector<16x128xf32> to vector<4x4x128xf32>
    %c15 = arith.constant 15 : index
    %c1_63 = arith.constant 1 : index
    %c1_64 = arith.constant 1 : index
    %c0_65 = arith.constant 0 : index
    %106 = vector.load %arg11[%c15, %c1_63, %c1_64, %c0_65] : memref<32x6x6x128xf32, #tpu.memory_space<vmem>>, vector<1x4x4x128xf32>
    %107 = vector.shape_cast %106 : vector<1x4x4x128xf32> to vector<4x4x128xf32>
    %108 = vector.shape_cast %105 : vector<4x4x128xf32> to vector<1x4x4x128xf32>
    tpu.vector_store %arg11[%c15, %c1_63, %c1_64, %c0_65], %108 {strides = array<i32>} : memref<32x6x6x128xf32, #tpu.memory_space<vmem>>, vector<1x4x4x128xf32>,
    %109 = vector.extract_strided_slice %26 {offsets = [256, 0], sizes = [16, 128], strides = [1, 1]} : vector<512x128xf32> to vector<16x128xf32>
    %110 = vector.shape_cast %109 : vector<16x128xf32> to vector<4x4x128xf32>
    %c16 = arith.constant 16 : index
    %c1_66 = arith.constant 1 : index
    %c1_67 = arith.constant 1 : index
    %c0_68 = arith.constant 0 : index
    %111 = vector.load %arg11[%c16, %c1_66, %c1_67, %c0_68] : memref<32x6x6x128xf32, #tpu.memory_space<vmem>>, vector<1x4x4x128xf32>
    %112 = vector.shape_cast %111 : vector<1x4x4x128xf32> to vector<4x4x128xf32>
    %113 = vector.shape_cast %110 : vector<4x4x128xf32> to vector<1x4x4x128xf32>
    tpu.vector_store %arg11[%c16, %c1_66, %c1_67, %c0_68], %113 {strides = array<i32>} : memref<32x6x6x128xf32, #tpu.memory_space<vmem>>, vector<1x4x4x128xf32>,
    %114 = vector.extract_strided_slice %26 {offsets = [272, 0], sizes = [16, 128], strides = [1, 1]} : vector<512x128xf32> to vector<16x128xf32>
    %115 = vector.shape_cast %114 : vector<16x128xf32> to vector<4x4x128xf32>
    %c17 = arith.constant 17 : index
    %c1_69 = arith.constant 1 : index
    %c1_70 = arith.constant 1 : index
    %c0_71 = arith.constant 0 : index
    %116 = vector.load %arg11[%c17, %c1_69, %c1_70, %c0_71] : memref<32x6x6x128xf32, #tpu.memory_space<vmem>>, vector<1x4x4x128xf32>
    %117 = vector.shape_cast %116 : vector<1x4x4x128xf32> to vector<4x4x128xf32>
    %118 = vector.shape_cast %115 : vector<4x4x128xf32> to vector<1x4x4x128xf32>
    tpu.vector_store %arg11[%c17, %c1_69, %c1_70, %c0_71], %118 {strides = array<i32>} : memref<32x6x6x128xf32, #tpu.memory_space<vmem>>, vector<1x4x4x128xf32>,
    %119 = vector.extract_strided_slice %26 {offsets = [288, 0], sizes = [16, 128], strides = [1, 1]} : vector<512x128xf32> to vector<16x128xf32>
    %120 = vector.shape_cast %119 : vector<16x128xf32> to vector<4x4x128xf32>
    %c18 = arith.constant 18 : index
    %c1_72 = arith.constant 1 : index
    %c1_73 = arith.constant 1 : index
    %c0_74 = arith.constant 0 : index
    %121 = vector.load %arg11[%c18, %c1_72, %c1_73, %c0_74] : memref<32x6x6x128xf32, #tpu.memory_space<vmem>>, vector<1x4x4x128xf32>
    %122 = vector.shape_cast %121 : vector<1x4x4x128xf32> to vector<4x4x128xf32>
    %123 = vector.shape_cast %120 : vector<4x4x128xf32> to vector<1x4x4x128xf32>
    tpu.vector_store %arg11[%c18, %c1_72, %c1_73, %c0_74], %123 {strides = array<i32>} : memref<32x6x6x128xf32, #tpu.memory_space<vmem>>, vector<1x4x4x128xf32>,
    %124 = vector.extract_strided_slice %26 {offsets = [304, 0], sizes = [16, 128], strides = [1, 1]} : vector<512x128xf32> to vector<16x128xf32>
    %125 = vector.shape_cast %124 : vector<16x128xf32> to vector<4x4x128xf32>
    %c19 = arith.constant 19 : index
    %c1_75 = arith.constant 1 : index
    %c1_76 = arith.constant 1 : index
    %c0_77 = arith.constant 0 : index
    %126 = vector.load %arg11[%c19, %c1_75, %c1_76, %c0_77] : memref<32x6x6x128xf32, #tpu.memory_space<vmem>>, vector<1x4x4x128xf32>
    %127 = vector.shape_cast %126 : vector<1x4x4x128xf32> to vector<4x4x128xf32>
    %128 = vector.shape_cast %125 : vector<4x4x128xf32> to vector<1x4x4x128xf32>
    tpu.vector_store %arg11[%c19, %c1_75, %c1_76, %c0_77], %128 {strides = array<i32>} : memref<32x6x6x128xf32, #tpu.memory_space<vmem>>, vector<1x4x4x128xf32>,
    %129 = vector.extract_strided_slice %26 {offsets = [320, 0], sizes = [16, 128], strides = [1, 1]} : vector<512x128xf32> to vector<16x128xf32>
    %130 = vector.shape_cast %129 : vector<16x128xf32> to vector<4x4x128xf32>
    %c20 = arith.constant 20 : index
    %c1_78 = arith.constant 1 : index
    %c1_79 = arith.constant 1 : index
    %c0_80 = arith.constant 0 : index
    %131 = vector.load %arg11[%c20, %c1_78, %c1_79, %c0_80] : memref<32x6x6x128xf32, #tpu.memory_space<vmem>>, vector<1x4x4x128xf32>
    %132 = vector.shape_cast %131 : vector<1x4x4x128xf32> to vector<4x4x128xf32>
    %133 = vector.shape_cast %130 : vector<4x4x128xf32> to vector<1x4x4x128xf32>
    tpu.vector_store %arg11[%c20, %c1_78, %c1_79, %c0_80], %133 {strides = array<i32>} : memref<32x6x6x128xf32, #tpu.memory_space<vmem>>, vector<1x4x4x128xf32>,
    %134 = vector.extract_strided_slice %26 {offsets = [336, 0], sizes = [16, 128], strides = [1, 1]} : vector<512x128xf32> to vector<16x128xf32>
    %135 = vector.shape_cast %134 : vector<16x128xf32> to vector<4x4x128xf32>
    %c21 = arith.constant 21 : index
    %c1_81 = arith.constant 1 : index
    %c1_82 = arith.constant 1 : index
    %c0_83 = arith.constant 0 : index
    %136 = vector.load %arg11[%c21, %c1_81, %c1_82, %c0_83] : memref<32x6x6x128xf32, #tpu.memory_space<vmem>>, vector<1x4x4x128xf32>
    %137 = vector.shape_cast %136 : vector<1x4x4x128xf32> to vector<4x4x128xf32>
    %138 = vector.shape_cast %135 : vector<4x4x128xf32> to vector<1x4x4x128xf32>
    tpu.vector_store %arg11[%c21, %c1_81, %c1_82, %c0_83], %138 {strides = array<i32>} : memref<32x6x6x128xf32, #tpu.memory_space<vmem>>, vector<1x4x4x128xf32>,
    %139 = vector.extract_strided_slice %26 {offsets = [352, 0], sizes = [16, 128], strides = [1, 1]} : vector<512x128xf32> to vector<16x128xf32>
    %140 = vector.shape_cast %139 : vector<16x128xf32> to vector<4x4x128xf32>
    %c22 = arith.constant 22 : index
    %c1_84 = arith.constant 1 : index
    %c1_85 = arith.constant 1 : index
    %c0_86 = arith.constant 0 : index
    %141 = vector.load %arg11[%c22, %c1_84, %c1_85, %c0_86] : memref<32x6x6x128xf32, #tpu.memory_space<vmem>>, vector<1x4x4x128xf32>
    %142 = vector.shape_cast %141 : vector<1x4x4x128xf32> to vector<4x4x128xf32>
    %143 = vector.shape_cast %140 : vector<4x4x128xf32> to vector<1x4x4x128xf32>
    tpu.vector_store %arg11[%c22, %c1_84, %c1_85, %c0_86], %143 {strides = array<i32>} : memref<32x6x6x128xf32, #tpu.memory_space<vmem>>, vector<1x4x4x128xf32>,
    %144 = vector.extract_strided_slice %26 {offsets = [368, 0], sizes = [16, 128], strides = [1, 1]} : vector<512x128xf32> to vector<16x128xf32>
    %145 = vector.shape_cast %144 : vector<16x128xf32> to vector<4x4x128xf32>
    %c23 = arith.constant 23 : index
    %c1_87 = arith.constant 1 : index
    %c1_88 = arith.constant 1 : index
    %c0_89 = arith.constant 0 : index
    %146 = vector.load %arg11[%c23, %c1_87, %c1_88, %c0_89] : memref<32x6x6x128xf32, #tpu.memory_space<vmem>>, vector<1x4x4x128xf32>
    %147 = vector.shape_cast %146 : vector<1x4x4x128xf32> to vector<4x4x128xf32>
    %148 = vector.shape_cast %145 : vector<4x4x128xf32> to vector<1x4x4x128xf32>
    tpu.vector_store %arg11[%c23, %c1_87, %c1_88, %c0_89], %148 {strides = array<i32>} : memref<32x6x6x128xf32, #tpu.memory_space<vmem>>, vector<1x4x4x128xf32>,
    %149 = vector.extract_strided_slice %26 {offsets = [384, 0], sizes = [16, 128], strides = [1, 1]} : vector<512x128xf32> to vector<16x128xf32>
    %150 = vector.shape_cast %149 : vector<16x128xf32> to vector<4x4x128xf32>
    %c24 = arith.constant 24 : index
    %c1_90 = arith.constant 1 : index
    %c1_91 = arith.constant 1 : index
    %c0_92 = arith.constant 0 : index
    %151 = vector.load %arg11[%c24, %c1_90, %c1_91, %c0_92] : memref<32x6x6x128xf32, #tpu.memory_space<vmem>>, vector<1x4x4x128xf32>
    %152 = vector.shape_cast %151 : vector<1x4x4x128xf32> to vector<4x4x128xf32>
    %153 = vector.shape_cast %150 : vector<4x4x128xf32> to vector<1x4x4x128xf32>
    tpu.vector_store %arg11[%c24, %c1_90, %c1_91, %c0_92], %153 {strides = array<i32>} : memref<32x6x6x128xf32, #tpu.memory_space<vmem>>, vector<1x4x4x128xf32>,
    %154 = vector.extract_strided_slice %26 {offsets = [400, 0], sizes = [16, 128], strides = [1, 1]} : vector<512x128xf32> to vector<16x128xf32>
    %155 = vector.shape_cast %154 : vector<16x128xf32> to vector<4x4x128xf32>
    %c25 = arith.constant 25 : index
    %c1_93 = arith.constant 1 : index
    %c1_94 = arith.constant 1 : index
    %c0_95 = arith.constant 0 : index
    %156 = vector.load %arg11[%c25, %c1_93, %c1_94, %c0_95] : memref<32x6x6x128xf32, #tpu.memory_space<vmem>>, vector<1x4x4x128xf32>
    %157 = vector.shape_cast %156 : vector<1x4x4x128xf32> to vector<4x4x128xf32>
    %158 = vector.shape_cast %155 : vector<4x4x128xf32> to vector<1x4x4x128xf32>
    tpu.vector_store %arg11[%c25, %c1_93, %c1_94, %c0_95], %158 {strides = array<i32>} : memref<32x6x6x128xf32, #tpu.memory_space<vmem>>, vector<1x4x4x128xf32>,
    %159 = vector.extract_strided_slice %26 {offsets = [416, 0], sizes = [16, 128], strides = [1, 1]} : vector<512x128xf32> to vector<16x128xf32>
    %160 = vector.shape_cast %159 : vector<16x128xf32> to vector<4x4x128xf32>
    %c26 = arith.constant 26 : index
    %c1_96 = arith.constant 1 : index
    %c1_97 = arith.constant 1 : index
    %c0_98 = arith.constant 0 : index
    %161 = vector.load %arg11[%c26, %c1_96, %c1_97, %c0_98] : memref<32x6x6x128xf32, #tpu.memory_space<vmem>>, vector<1x4x4x128xf32>
    %162 = vector.shape_cast %161 : vector<1x4x4x128xf32> to vector<4x4x128xf32>
    %163 = vector.shape_cast %160 : vector<4x4x128xf32> to vector<1x4x4x128xf32>
    tpu.vector_store %arg11[%c26, %c1_96, %c1_97, %c0_98], %163 {strides = array<i32>} : memref<32x6x6x128xf32, #tpu.memory_space<vmem>>, vector<1x4x4x128xf32>,
    %164 = vector.extract_strided_slice %26 {offsets = [432, 0], sizes = [16, 128], strides = [1, 1]} : vector<512x128xf32> to vector<16x128xf32>
    %165 = vector.shape_cast %164 : vector<16x128xf32> to vector<4x4x128xf32>
    %c27 = arith.constant 27 : index
    %c1_99 = arith.constant 1 : index
    %c1_100 = arith.constant 1 : index
    %c0_101 = arith.constant 0 : index
    %166 = vector.load %arg11[%c27, %c1_99, %c1_100, %c0_101] : memref<32x6x6x128xf32, #tpu.memory_space<vmem>>, vector<1x4x4x128xf32>
    %167 = vector.shape_cast %166 : vector<1x4x4x128xf32> to vector<4x4x128xf32>
    %168 = vector.shape_cast %165 : vector<4x4x128xf32> to vector<1x4x4x128xf32>
    tpu.vector_store %arg11[%c27, %c1_99, %c1_100, %c0_101], %168 {strides = array<i32>} : memref<32x6x6x128xf32, #tpu.memory_space<vmem>>, vector<1x4x4x128xf32>,
    %169 = vector.extract_strided_slice %26 {offsets = [448, 0], sizes = [16, 128], strides = [1, 1]} : vector<512x128xf32> to vector<16x128xf32>
    %170 = vector.shape_cast %169 : vector<16x128xf32> to vector<4x4x128xf32>
    %c28 = arith.constant 28 : index
    %c1_102 = arith.constant 1 : index
    %c1_103 = arith.constant 1 : index
    %c0_104 = arith.constant 0 : index
    %171 = vector.load %arg11[%c28, %c1_102, %c1_103, %c0_104] : memref<32x6x6x128xf32, #tpu.memory_space<vmem>>, vector<1x4x4x128xf32>
    %172 = vector.shape_cast %171 : vector<1x4x4x128xf32> to vector<4x4x128xf32>
    %173 = vector.shape_cast %170 : vector<4x4x128xf32> to vector<1x4x4x128xf32>
    tpu.vector_store %arg11[%c28, %c1_102, %c1_103, %c0_104], %173 {strides = array<i32>} : memref<32x6x6x128xf32, #tpu.memory_space<vmem>>, vector<1x4x4x128xf32>,
    %174 = vector.extract_strided_slice %26 {offsets = [464, 0], sizes = [16, 128], strides = [1, 1]} : vector<512x128xf32> to vector<16x128xf32>
    %175 = vector.shape_cast %174 : vector<16x128xf32> to vector<4x4x128xf32>
    %c29 = arith.constant 29 : index
    %c1_105 = arith.constant 1 : index
    %c1_106 = arith.constant 1 : index
    %c0_107 = arith.constant 0 : index
    %176 = vector.load %arg11[%c29, %c1_105, %c1_106, %c0_107] : memref<32x6x6x128xf32, #tpu.memory_space<vmem>>, vector<1x4x4x128xf32>
    %177 = vector.shape_cast %176 : vector<1x4x4x128xf32> to vector<4x4x128xf32>
    %178 = vector.shape_cast %175 : vector<4x4x128xf32> to vector<1x4x4x128xf32>
    tpu.vector_store %arg11[%c29, %c1_105, %c1_106, %c0_107], %178 {strides = array<i32>} : memref<32x6x6x128xf32, #tpu.memory_space<vmem>>, vector<1x4x4x128xf32>,
    %179 = vector.extract_strided_slice %26 {offsets = [480, 0], sizes = [16, 128], strides = [1, 1]} : vector<512x128xf32> to vector<16x128xf32>
    %180 = vector.shape_cast %179 : vector<16x128xf32> to vector<4x4x128xf32>
    %c30 = arith.constant 30 : index
    %c1_108 = arith.constant 1 : index
    %c1_109 = arith.constant 1 : index
    %c0_110 = arith.constant 0 : index
    %181 = vector.load %arg11[%c30, %c1_108, %c1_109, %c0_110] : memref<32x6x6x128xf32, #tpu.memory_space<vmem>>, vector<1x4x4x128xf32>
    %182 = vector.shape_cast %181 : vector<1x4x4x128xf32> to vector<4x4x128xf32>
    %183 = vector.shape_cast %180 : vector<4x4x128xf32> to vector<1x4x4x128xf32>
    tpu.vector_store %arg11[%c30, %c1_108, %c1_109, %c0_110], %183 {strides = array<i32>} : memref<32x6x6x128xf32, #tpu.memory_space<vmem>>, vector<1x4x4x128xf32>,
    %184 = vector.extract_strided_slice %26 {offsets = [496, 0], sizes = [16, 128], strides = [1, 1]} : vector<512x128xf32> to vector<16x128xf32>
    %185 = vector.shape_cast %184 : vector<16x128xf32> to vector<4x4x128xf32>
    %c31 = arith.constant 31 : index
    %c1_111 = arith.constant 1 : index
    %c1_112 = arith.constant 1 : index
    %c0_113 = arith.constant 0 : index
    %186 = vector.load %arg11[%c31, %c1_111, %c1_112, %c0_113] : memref<32x6x6x128xf32, #tpu.memory_space<vmem>>, vector<1x4x4x128xf32>
    %187 = vector.shape_cast %186 : vector<1x4x4x128xf32> to vector<4x4x128xf32>
    %188 = vector.shape_cast %185 : vector<4x4x128xf32> to vector<1x4x4x128xf32>
    tpu.vector_store %arg11[%c31, %c1_111, %c1_112, %c0_113], %188 {strides = array<i32>} : memref<32x6x6x128xf32, #tpu.memory_space<vmem>>, vector<1x4x4x128xf32>,
    %c15_114 = arith.constant 15 : index
    %c0_115 = arith.constant 0 : index
    %c0_116 = arith.constant 0 : index
    %c0_117 = arith.constant 0 : index
    %189 = vector.load %arg11[%c15_114, %c0_115, %c0_116, %c0_117] : memref<32x6x6x128xf32, #tpu.memory_space<vmem>>, vector<1x4x4x128xf32>
    %190 = vector.shape_cast %189 : vector<1x4x4x128xf32> to vector<4x4x128xf32>
    %191 = vector.shape_cast %190 : vector<4x4x128xf32> to vector<16x128xf32>
    %192 = arith.truncf %191 : vector<16x128xf32> to vector<16x128xbf16>
    %c12_118 = arith.constant 12 : index
    %c0_119 = arith.constant 0 : index
    %c1_120 = arith.constant 1 : index
    %c0_121 = arith.constant 0 : index
    %193 = vector.load %arg11[%c12_118, %c0_119, %c1_120, %c0_121] : memref<32x6x6x128xf32, #tpu.memory_space<vmem>>, vector<1x4x4x128xf32>
    %194 = vector.shape_cast %193 : vector<1x4x4x128xf32> to vector<4x4x128xf32>
    %195 = vector.shape_cast %194 : vector<4x4x128xf32> to vector<16x128xf32>
    %196 = arith.truncf %195 : vector<16x128xf32> to vector<16x128xbf16>
    %c13_122 = arith.constant 13 : index
    %c0_123 = arith.constant 0 : index
    %c1_124 = arith.constant 1 : index
    %c0_125 = arith.constant 0 : index
    %197 = vector.load %arg11[%c13_122, %c0_123, %c1_124, %c0_125] : memref<32x6x6x128xf32, #tpu.memory_space<vmem>>, vector<1x4x4x128xf32>
    %198 = vector.shape_cast %197 : vector<1x4x4x128xf32> to vector<4x4x128xf32>
    %199 = vector.shape_cast %198 : vector<4x4x128xf32> to vector<16x128xf32>
    %200 = arith.truncf %199 : vector<16x128xf32> to vector<16x128xbf16>
    %c14_126 = arith.constant 14 : index
    %c0_127 = arith.constant 0 : index
    %c1_128 = arith.constant 1 : index
    %c0_129 = arith.constant 0 : index
    %201 = vector.load %arg11[%c14_126, %c0_127, %c1_128, %c0_129] : memref<32x6x6x128xf32, #tpu.memory_space<vmem>>, vector<1x4x4x128xf32>
    %202 = vector.shape_cast %201 : vector<1x4x4x128xf32> to vector<4x4x128xf32>
    %203 = vector.shape_cast %202 : vector<4x4x128xf32> to vector<16x128xf32>
    %204 = arith.truncf %203 : vector<16x128xf32> to vector<16x128xbf16>
    %c3_130 = arith.constant 3 : index
    %c1_131 = arith.constant 1 : index
    %c0_132 = arith.constant 0 : index
    %c0_133 = arith.constant 0 : index
    %205 = vector.load %arg11[%c3_130, %c1_131, %c0_132, %c0_133] : memref<32x6x6x128xf32, #tpu.memory_space<vmem>>, vector<1x4x4x128xf32>
    %206 = vector.shape_cast %205 : vector<1x4x4x128xf32> to vector<4x4x128xf32>
    %207 = vector.shape_cast %206 : vector<4x4x128xf32> to vector<16x128xf32>
    %208 = arith.truncf %207 : vector<16x128xf32> to vector<16x128xbf16>
    %c0_134 = arith.constant 0 : index
    %c1_135 = arith.constant 1 : index
    %c1_136 = arith.constant 1 : index
    %c0_137 = arith.constant 0 : index
    %209 = vector.load %arg11[%c0_134, %c1_135, %c1_136, %c0_137] : memref<32x6x6x128xf32, #tpu.memory_space<vmem>>, vector<1x4x4x128xf32>
    %210 = vector.shape_cast %209 : vector<1x4x4x128xf32> to vector<4x4x128xf32>
    %211 = vector.shape_cast %210 : vector<4x4x128xf32> to vector<16x128xf32>
    %212 = arith.truncf %211 : vector<16x128xf32> to vector<16x128xbf16>
    %c1_138 = arith.constant 1 : index
    %c1_139 = arith.constant 1 : index
    %c1_140 = arith.constant 1 : index
    %c0_141 = arith.constant 0 : index
    %213 = vector.load %arg11[%c1_138, %c1_139, %c1_140, %c0_141] : memref<32x6x6x128xf32, #tpu.memory_space<vmem>>, vector<1x4x4x128xf32>
    %214 = vector.shape_cast %213 : vector<1x4x4x128xf32> to vector<4x4x128xf32>
    %215 = vector.shape_cast %214 : vector<4x4x128xf32> to vector<16x128xf32>
    %216 = arith.truncf %215 : vector<16x128xf32> to vector<16x128xbf16>
    %c2_142 = arith.constant 2 : index
    %c1_143 = arith.constant 1 : index
    %c1_144 = arith.constant 1 : index
    %c0_145 = arith.constant 0 : index
    %217 = vector.load %arg11[%c2_142, %c1_143, %c1_144, %c0_145] : memref<32x6x6x128xf32, #tpu.memory_space<vmem>>, vector<1x4x4x128xf32>
    %218 = vector.shape_cast %217 : vector<1x4x4x128xf32> to vector<4x4x128xf32>
    %219 = vector.shape_cast %218 : vector<4x4x128xf32> to vector<16x128xf32>
    %220 = arith.truncf %219 : vector<16x128xf32> to vector<16x128xbf16>
    %c7_146 = arith.constant 7 : index
    %c1_147 = arith.constant 1 : index
    %c0_148 = arith.constant 0 : index
    %c0_149 = arith.constant 0 : index
    %221 = vector.load %arg11[%c7_146, %c1_147, %c0_148, %c0_149] : memref<32x6x6x128xf32, #tpu.memory_space<vmem>>, vector<1x4x4x128xf32>
    %222 = vector.shape_cast %221 : vector<1x4x4x128xf32> to vector<4x4x128xf32>
    %223 = vector.shape_cast %222 : vector<4x4x128xf32> to vector<16x128xf32>
    %224 = arith.truncf %223 : vector<16x128xf32> to vector<16x128xbf16>
    %c4_150 = arith.constant 4 : index
    %c1_151 = arith.constant 1 : index
    %c1_152 = arith.constant 1 : index
    %c0_153 = arith.constant 0 : index
    %225 = vector.load %arg11[%c4_150, %c1_151, %c1_152, %c0_153] : memref<32x6x6x128xf32, #tpu.memory_space<vmem>>, vector<1x4x4x128xf32>
    %226 = vector.shape_cast %225 : vector<1x4x4x128xf32> to vector<4x4x128xf32>
    %227 = vector.shape_cast %226 : vector<4x4x128xf32> to vector<16x128xf32>
    %228 = arith.truncf %227 : vector<16x128xf32> to vector<16x128xbf16>
    %c5_154 = arith.constant 5 : index
    %c1_155 = arith.constant 1 : index
    %c1_156 = arith.constant 1 : index
    %c0_157 = arith.constant 0 : index
    %229 = vector.load %arg11[%c5_154, %c1_155, %c1_156, %c0_157] : memref<32x6x6x128xf32, #tpu.memory_space<vmem>>, vector<1x4x4x128xf32>
    %230 = vector.shape_cast %229 : vector<1x4x4x128xf32> to vector<4x4x128xf32>
    %231 = vector.shape_cast %230 : vector<4x4x128xf32> to vector<16x128xf32>
    %232 = arith.truncf %231 : vector<16x128xf32> to vector<16x128xbf16>
    %c6_158 = arith.constant 6 : index
    %c1_159 = arith.constant 1 : index
    %c1_160 = arith.constant 1 : index
    %c0_161 = arith.constant 0 : index
    %233 = vector.load %arg11[%c6_158, %c1_159, %c1_160, %c0_161] : memref<32x6x6x128xf32, #tpu.memory_space<vmem>>, vector<1x4x4x128xf32>
    %234 = vector.shape_cast %233 : vector<1x4x4x128xf32> to vector<4x4x128xf32>
    %235 = vector.shape_cast %234 : vector<4x4x128xf32> to vector<16x128xf32>
    %236 = arith.truncf %235 : vector<16x128xf32> to vector<16x128xbf16>
    %c11_162 = arith.constant 11 : index
    %c1_163 = arith.constant 1 : index
    %c0_164 = arith.constant 0 : index
    %c0_165 = arith.constant 0 : index
    %237 = vector.load %arg11[%c11_162, %c1_163, %c0_164, %c0_165] : memref<32x6x6x128xf32, #tpu.memory_space<vmem>>, vector<1x4x4x128xf32>
    %238 = vector.shape_cast %237 : vector<1x4x4x128xf32> to vector<4x4x128xf32>
    %239 = vector.shape_cast %238 : vector<4x4x128xf32> to vector<16x128xf32>
    %240 = arith.truncf %239 : vector<16x128xf32> to vector<16x128xbf16>
    %c8_166 = arith.constant 8 : index
    %c1_167 = arith.constant 1 : index
    %c1_168 = arith.constant 1 : index
    %c0_169 = arith.constant 0 : index
    %241 = vector.load %arg11[%c8_166, %c1_167, %c1_168, %c0_169] : memref<32x6x6x128xf32, #tpu.memory_space<vmem>>, vector<1x4x4x128xf32>
    %242 = vector.shape_cast %241 : vector<1x4x4x128xf32> to vector<4x4x128xf32>
    %243 = vector.shape_cast %242 : vector<4x4x128xf32> to vector<16x128xf32>
    %244 = arith.truncf %243 : vector<16x128xf32> to vector<16x128xbf16>
    %c9_170 = arith.constant 9 : index
    %c1_171 = arith.constant 1 : index
    %c1_172 = arith.constant 1 : index
    %c0_173 = arith.constant 0 : index
    %245 = vector.load %arg11[%c9_170, %c1_171, %c1_172, %c0_173] : memref<32x6x6x128xf32, #tpu.memory_space<vmem>>, vector<1x4x4x128xf32>
    %246 = vector.shape_cast %245 : vector<1x4x4x128xf32> to vector<4x4x128xf32>
    %247 = vector.shape_cast %246 : vector<4x4x128xf32> to vector<16x128xf32>
    %248 = arith.truncf %247 : vector<16x128xf32> to vector<16x128xbf16>
    %c10_174 = arith.constant 10 : index
    %c1_175 = arith.constant 1 : index
    %c1_176 = arith.constant 1 : index
    %c0_177 = arith.constant 0 : index
    %249 = vector.load %arg11[%c10_174, %c1_175, %c1_176, %c0_177] : memref<32x6x6x128xf32, #tpu.memory_space<vmem>>, vector<1x4x4x128xf32>
    %250 = vector.shape_cast %249 : vector<1x4x4x128xf32> to vector<4x4x128xf32>
    %251 = vector.shape_cast %250 : vector<4x4x128xf32> to vector<16x128xf32>
    %252 = arith.truncf %251 : vector<16x128xf32> to vector<16x128xbf16>
    %253 = tpu.concatenate %192, %196, %200, %204, %208, %212, %216, %220, %224, %228, %232, %236, %240, %244, %248, %252 in 1 : vector<16x128xbf16>, vector<16x128xbf16>, vector<16x128xbf16>, vector<16x128xbf16>, vector<16x128xbf16>, vector<16x128xbf16>, vector<16x128xbf16>, vector<16x128xbf16>, vector<16x128xbf16>, vector<16x128xbf16>, vector<16x128xbf16>, vector<16x128xbf16>, vector<16x128xbf16>, vector<16x128xbf16>, vector<16x128xbf16>, vector<16x128xbf16> -> vector<16x2048xbf16>
    %c13_178 = arith.constant 13 : index
    %c0_179 = arith.constant 0 : index
    %c1_180 = arith.constant 1 : index
    %c0_181 = arith.constant 0 : index
    %254 = vector.load %arg11[%c13_178, %c0_179, %c1_180, %c0_181] : memref<32x6x6x128xf32, #tpu.memory_space<vmem>>, vector<1x4x4x128xf32>
    %255 = vector.shape_cast %254 : vector<1x4x4x128xf32> to vector<4x4x128xf32>
    %256 = vector.shape_cast %255 : vector<4x4x128xf32> to vector<16x128xf32>
    %257 = arith.truncf %256 : vector<16x128xf32> to vector<16x128xbf16>
    %c14_182 = arith.constant 14 : index
    %c0_183 = arith.constant 0 : index
    %c1_184 = arith.constant 1 : index
    %c0_185 = arith.constant 0 : index
    %258 = vector.load %arg11[%c14_182, %c0_183, %c1_184, %c0_185] : memref<32x6x6x128xf32, #tpu.memory_space<vmem>>, vector<1x4x4x128xf32>
    %259 = vector.shape_cast %258 : vector<1x4x4x128xf32> to vector<4x4x128xf32>
    %260 = vector.shape_cast %259 : vector<4x4x128xf32> to vector<16x128xf32>
    %261 = arith.truncf %260 : vector<16x128xf32> to vector<16x128xbf16>
    %c15_186 = arith.constant 15 : index
    %c0_187 = arith.constant 0 : index
    %c1_188 = arith.constant 1 : index
    %c0_189 = arith.constant 0 : index
    %262 = vector.load %arg11[%c15_186, %c0_187, %c1_188, %c0_189] : memref<32x6x6x128xf32, #tpu.memory_space<vmem>>, vector<1x4x4x128xf32>
    %263 = vector.shape_cast %262 : vector<1x4x4x128xf32> to vector<4x4x128xf32>
    %264 = vector.shape_cast %263 : vector<4x4x128xf32> to vector<16x128xf32>
    %265 = arith.truncf %264 : vector<16x128xf32> to vector<16x128xbf16>
    %c12_190 = arith.constant 12 : index
    %c0_191 = arith.constant 0 : index
    %c2_192 = arith.constant 2 : index
    %c0_193 = arith.constant 0 : index
    %266 = vector.load %arg11[%c12_190, %c0_191, %c2_192, %c0_193] : memref<32x6x6x128xf32, #tpu.memory_space<vmem>>, vector<1x4x4x128xf32>
    %267 = vector.shape_cast %266 : vector<1x4x4x128xf32> to vector<4x4x128xf32>
    %268 = vector.shape_cast %267 : vector<4x4x128xf32> to vector<16x128xf32>
    %269 = arith.truncf %268 : vector<16x128xf32> to vector<16x128xbf16>
    %c1_194 = arith.constant 1 : index
    %c1_195 = arith.constant 1 : index
    %c1_196 = arith.constant 1 : index
    %c0_197 = arith.constant 0 : index
    %270 = vector.load %arg11[%c1_194, %c1_195, %c1_196, %c0_197] : memref<32x6x6x128xf32, #tpu.memory_space<vmem>>, vector<1x4x4x128xf32>
    %271 = vector.shape_cast %270 : vector<1x4x4x128xf32> to vector<4x4x128xf32>
    %272 = vector.shape_cast %271 : vector<4x4x128xf32> to vector<16x128xf32>
    %273 = arith.truncf %272 : vector<16x128xf32> to vector<16x128xbf16>
    %c2_198 = arith.constant 2 : index
    %c1_199 = arith.constant 1 : index
    %c1_200 = arith.constant 1 : index
    %c0_201 = arith.constant 0 : index
    %274 = vector.load %arg11[%c2_198, %c1_199, %c1_200, %c0_201] : memref<32x6x6x128xf32, #tpu.memory_space<vmem>>, vector<1x4x4x128xf32>
    %275 = vector.shape_cast %274 : vector<1x4x4x128xf32> to vector<4x4x128xf32>
    %276 = vector.shape_cast %275 : vector<4x4x128xf32> to vector<16x128xf32>
    %277 = arith.truncf %276 : vector<16x128xf32> to vector<16x128xbf16>
    %c3_202 = arith.constant 3 : index
    %c1_203 = arith.constant 1 : index
    %c1_204 = arith.constant 1 : index
    %c0_205 = arith.constant 0 : index
    %278 = vector.load %arg11[%c3_202, %c1_203, %c1_204, %c0_205] : memref<32x6x6x128xf32, #tpu.memory_space<vmem>>, vector<1x4x4x128xf32>
    %279 = vector.shape_cast %278 : vector<1x4x4x128xf32> to vector<4x4x128xf32>
    %280 = vector.shape_cast %279 : vector<4x4x128xf32> to vector<16x128xf32>
    %281 = arith.truncf %280 : vector<16x128xf32> to vector<16x128xbf16>
    %c0_206 = arith.constant 0 : index
    %c1_207 = arith.constant 1 : index
    %c2_208 = arith.constant 2 : index
    %c0_209 = arith.constant 0 : index
    %282 = vector.load %arg11[%c0_206, %c1_207, %c2_208, %c0_209] : memref<32x6x6x128xf32, #tpu.memory_space<vmem>>, vector<1x4x4x128xf32>
    %283 = vector.shape_cast %282 : vector<1x4x4x128xf32> to vector<4x4x128xf32>
    %284 = vector.shape_cast %283 : vector<4x4x128xf32> to vector<16x128xf32>
    %285 = arith.truncf %284 : vector<16x128xf32> to vector<16x128xbf16>
    %c5_210 = arith.constant 5 : index
    %c1_211 = arith.constant 1 : index
    %c1_212 = arith.constant 1 : index
    %c0_213 = arith.constant 0 : index
    %286 = vector.load %arg11[%c5_210, %c1_211, %c1_212, %c0_213] : memref<32x6x6x128xf32, #tpu.memory_space<vmem>>, vector<1x4x4x128xf32>
    %287 = vector.shape_cast %286 : vector<1x4x4x128xf32> to vector<4x4x128xf32>
    %288 = vector.shape_cast %287 : vector<4x4x128xf32> to vector<16x128xf32>
    %289 = arith.truncf %288 : vector<16x128xf32> to vector<16x128xbf16>
    %c6_214 = arith.constant 6 : index
    %c1_215 = arith.constant 1 : index
    %c1_216 = arith.constant 1 : index
    %c0_217 = arith.constant 0 : index
    %290 = vector.load %arg11[%c6_214, %c1_215, %c1_216, %c0_217] : memref<32x6x6x128xf32, #tpu.memory_space<vmem>>, vector<1x4x4x128xf32>
    %291 = vector.shape_cast %290 : vector<1x4x4x128xf32> to vector<4x4x128xf32>
    %292 = vector.shape_cast %291 : vector<4x4x128xf32> to vector<16x128xf32>
    %293 = arith.truncf %292 : vector<16x128xf32> to vector<16x128xbf16>
    %c7_218 = arith.constant 7 : index
    %c1_219 = arith.constant 1 : index
    %c1_220 = arith.constant 1 : index
    %c0_221 = arith.constant 0 : index
    %294 = vector.load %arg11[%c7_218, %c1_219, %c1_220, %c0_221] : memref<32x6x6x128xf32, #tpu.memory_space<vmem>>, vector<1x4x4x128xf32>
    %295 = vector.shape_cast %294 : vector<1x4x4x128xf32> to vector<4x4x128xf32>
    %296 = vector.shape_cast %295 : vector<4x4x128xf32> to vector<16x128xf32>
    %297 = arith.truncf %296 : vector<16x128xf32> to vector<16x128xbf16>
    %c4_222 = arith.constant 4 : index
    %c1_223 = arith.constant 1 : index
    %c2_224 = arith.constant 2 : index
    %c0_225 = arith.constant 0 : index
    %298 = vector.load %arg11[%c4_222, %c1_223, %c2_224, %c0_225] : memref<32x6x6x128xf32, #tpu.memory_space<vmem>>, vector<1x4x4x128xf32>
    %299 = vector.shape_cast %298 : vector<1x4x4x128xf32> to vector<4x4x128xf32>
    %300 = vector.shape_cast %299 : vector<4x4x128xf32> to vector<16x128xf32>
    %301 = arith.truncf %300 : vector<16x128xf32> to vector<16x128xbf16>
    %c9_226 = arith.constant 9 : index
    %c1_227 = arith.constant 1 : index
    %c1_228 = arith.constant 1 : index
    %c0_229 = arith.constant 0 : index
    %302 = vector.load %arg11[%c9_226, %c1_227, %c1_228, %c0_229] : memref<32x6x6x128xf32, #tpu.memory_space<vmem>>, vector<1x4x4x128xf32>
    %303 = vector.shape_cast %302 : vector<1x4x4x128xf32> to vector<4x4x128xf32>
    %304 = vector.shape_cast %303 : vector<4x4x128xf32> to vector<16x128xf32>
    %305 = arith.truncf %304 : vector<16x128xf32> to vector<16x128xbf16>
    %c10_230 = arith.constant 10 : index
    %c1_231 = arith.constant 1 : index
    %c1_232 = arith.constant 1 : index
    %c0_233 = arith.constant 0 : index
    %306 = vector.load %arg11[%c10_230, %c1_231, %c1_232, %c0_233] : memref<32x6x6x128xf32, #tpu.memory_space<vmem>>, vector<1x4x4x128xf32>
    %307 = vector.shape_cast %306 : vector<1x4x4x128xf32> to vector<4x4x128xf32>
    %308 = vector.shape_cast %307 : vector<4x4x128xf32> to vector<16x128xf32>
    %309 = arith.truncf %308 : vector<16x128xf32> to vector<16x128xbf16>
    %c11_234 = arith.constant 11 : index
    %c1_235 = arith.constant 1 : index
    %c1_236 = arith.constant 1 : index
    %c0_237 = arith.constant 0 : index
    %310 = vector.load %arg11[%c11_234, %c1_235, %c1_236, %c0_237] : memref<32x6x6x128xf32, #tpu.memory_space<vmem>>, vector<1x4x4x128xf32>
    %311 = vector.shape_cast %310 : vector<1x4x4x128xf32> to vector<4x4x128xf32>
    %312 = vector.shape_cast %311 : vector<4x4x128xf32> to vector<16x128xf32>
    %313 = arith.truncf %312 : vector<16x128xf32> to vector<16x128xbf16>
    %c8_238 = arith.constant 8 : index
    %c1_239 = arith.constant 1 : index
    %c2_240 = arith.constant 2 : index
    %c0_241 = arith.constant 0 : index
    %314 = vector.load %arg11[%c8_238, %c1_239, %c2_240, %c0_241] : memref<32x6x6x128xf32, #tpu.memory_space<vmem>>, vector<1x4x4x128xf32>
    %315 = vector.shape_cast %314 : vector<1x4x4x128xf32> to vector<4x4x128xf32>
    %316 = vector.shape_cast %315 : vector<4x4x128xf32> to vector<16x128xf32>
    %317 = arith.truncf %316 : vector<16x128xf32> to vector<16x128xbf16>
    %318 = tpu.concatenate %257, %261, %265, %269, %273, %277, %281, %285, %289, %293, %297, %301, %305, %309, %313, %317 in 1 : vector<16x128xbf16>, vector<16x128xbf16>, vector<16x128xbf16>, vector<16x128xbf16>, vector<16x128xbf16>, vector<16x128xbf16>, vector<16x128xbf16>, vector<16x128xbf16>, vector<16x128xbf16>, vector<16x128xbf16>, vector<16x128xbf16>, vector<16x128xbf16>, vector<16x128xbf16>, vector<16x128xbf16>, vector<16x128xbf16>, vector<16x128xbf16> -> vector<16x2048xbf16>
    %c7_242 = arith.constant 7 : index
    %c1_243 = arith.constant 1 : index
    %c0_244 = arith.constant 0 : index
    %c0_245 = arith.constant 0 : index
    %319 = vector.load %arg11[%c7_242, %c1_243, %c0_244, %c0_245] : memref<32x6x6x128xf32, #tpu.memory_space<vmem>>, vector<1x4x4x128xf32>
    %320 = vector.shape_cast %319 : vector<1x4x4x128xf32> to vector<4x4x128xf32>
    %321 = vector.shape_cast %320 : vector<4x4x128xf32> to vector<16x128xf32>
    %322 = arith.truncf %321 : vector<16x128xf32> to vector<16x128xbf16>
    %c4_246 = arith.constant 4 : index
    %c1_247 = arith.constant 1 : index
    %c1_248 = arith.constant 1 : index
    %c0_249 = arith.constant 0 : index
    %323 = vector.load %arg11[%c4_246, %c1_247, %c1_248, %c0_249] : memref<32x6x6x128xf32, #tpu.memory_space<vmem>>, vector<1x4x4x128xf32>
    %324 = vector.shape_cast %323 : vector<1x4x4x128xf32> to vector<4x4x128xf32>
    %325 = vector.shape_cast %324 : vector<4x4x128xf32> to vector<16x128xf32>
    %326 = arith.truncf %325 : vector<16x128xf32> to vector<16x128xbf16>
    %c5_250 = arith.constant 5 : index
    %c1_251 = arith.constant 1 : index
    %c1_252 = arith.constant 1 : index
    %c0_253 = arith.constant 0 : index
    %327 = vector.load %arg11[%c5_250, %c1_251, %c1_252, %c0_253] : memref<32x6x6x128xf32, #tpu.memory_space<vmem>>, vector<1x4x4x128xf32>
    %328 = vector.shape_cast %327 : vector<1x4x4x128xf32> to vector<4x4x128xf32>
    %329 = vector.shape_cast %328 : vector<4x4x128xf32> to vector<16x128xf32>
    %330 = arith.truncf %329 : vector<16x128xf32> to vector<16x128xbf16>
    %c6_254 = arith.constant 6 : index
    %c1_255 = arith.constant 1 : index
    %c1_256 = arith.constant 1 : index
    %c0_257 = arith.constant 0 : index
    %331 = vector.load %arg11[%c6_254, %c1_255, %c1_256, %c0_257] : memref<32x6x6x128xf32, #tpu.memory_space<vmem>>, vector<1x4x4x128xf32>
    %332 = vector.shape_cast %331 : vector<1x4x4x128xf32> to vector<4x4x128xf32>
    %333 = vector.shape_cast %332 : vector<4x4x128xf32> to vector<16x128xf32>
    %334 = arith.truncf %333 : vector<16x128xf32> to vector<16x128xbf16>
    %c11_258 = arith.constant 11 : index
    %c1_259 = arith.constant 1 : index
    %c0_260 = arith.constant 0 : index
    %c0_261 = arith.constant 0 : index
    %335 = vector.load %arg11[%c11_258, %c1_259, %c0_260, %c0_261] : memref<32x6x6x128xf32, #tpu.memory_space<vmem>>, vector<1x4x4x128xf32>
    %336 = vector.shape_cast %335 : vector<1x4x4x128xf32> to vector<4x4x128xf32>
    %337 = vector.shape_cast %336 : vector<4x4x128xf32> to vector<16x128xf32>
    %338 = arith.truncf %337 : vector<16x128xf32> to vector<16x128xbf16>
    %c8_262 = arith.constant 8 : index
    %c1_263 = arith.constant 1 : index
    %c1_264 = arith.constant 1 : index
    %c0_265 = arith.constant 0 : index
    %339 = vector.load %arg11[%c8_262, %c1_263, %c1_264, %c0_265] : memref<32x6x6x128xf32, #tpu.memory_space<vmem>>, vector<1x4x4x128xf32>
    %340 = vector.shape_cast %339 : vector<1x4x4x128xf32> to vector<4x4x128xf32>
    %341 = vector.shape_cast %340 : vector<4x4x128xf32> to vector<16x128xf32>
    %342 = arith.truncf %341 : vector<16x128xf32> to vector<16x128xbf16>
    %c9_266 = arith.constant 9 : index
    %c1_267 = arith.constant 1 : index
    %c1_268 = arith.constant 1 : index
    %c0_269 = arith.constant 0 : index
    %343 = vector.load %arg11[%c9_266, %c1_267, %c1_268, %c0_269] : memref<32x6x6x128xf32, #tpu.memory_space<vmem>>, vector<1x4x4x128xf32>
    %344 = vector.shape_cast %343 : vector<1x4x4x128xf32> to vector<4x4x128xf32>
    %345 = vector.shape_cast %344 : vector<4x4x128xf32> to vector<16x128xf32>
    %346 = arith.truncf %345 : vector<16x128xf32> to vector<16x128xbf16>
    %c10_270 = arith.constant 10 : index
    %c1_271 = arith.constant 1 : index
    %c1_272 = arith.constant 1 : index
    %c0_273 = arith.constant 0 : index
    %347 = vector.load %arg11[%c10_270, %c1_271, %c1_272, %c0_273] : memref<32x6x6x128xf32, #tpu.memory_space<vmem>>, vector<1x4x4x128xf32>
    %348 = vector.shape_cast %347 : vector<1x4x4x128xf32> to vector<4x4x128xf32>
    %349 = vector.shape_cast %348 : vector<4x4x128xf32> to vector<16x128xf32>
    %350 = arith.truncf %349 : vector<16x128xf32> to vector<16x128xbf16>
    %c15_274 = arith.constant 15 : index
    %c1_275 = arith.constant 1 : index
    %c0_276 = arith.constant 0 : index
    %c0_277 = arith.constant 0 : index
    %351 = vector.load %arg11[%c15_274, %c1_275, %c0_276, %c0_277] : memref<32x6x6x128xf32, #tpu.memory_space<vmem>>, vector<1x4x4x128xf32>
    %352 = vector.shape_cast %351 : vector<1x4x4x128xf32> to vector<4x4x128xf32>
    %353 = vector.shape_cast %352 : vector<4x4x128xf32> to vector<16x128xf32>
    %354 = arith.truncf %353 : vector<16x128xf32> to vector<16x128xbf16>
    %c12_278 = arith.constant 12 : index
    %c1_279 = arith.constant 1 : index
    %c1_280 = arith.constant 1 : index
    %c0_281 = arith.constant 0 : index
    %355 = vector.load %arg11[%c12_278, %c1_279, %c1_280, %c0_281] : memref<32x6x6x128xf32, #tpu.memory_space<vmem>>, vector<1x4x4x128xf32>
    %356 = vector.shape_cast %355 : vector<1x4x4x128xf32> to vector<4x4x128xf32>
    %357 = vector.shape_cast %356 : vector<4x4x128xf32> to vector<16x128xf32>
    %358 = arith.truncf %357 : vector<16x128xf32> to vector<16x128xbf16>
    %c13_282 = arith.constant 13 : index
    %c1_283 = arith.constant 1 : index
    %c1_284 = arith.constant 1 : index
    %c0_285 = arith.constant 0 : index
    %359 = vector.load %arg11[%c13_282, %c1_283, %c1_284, %c0_285] : memref<32x6x6x128xf32, #tpu.memory_space<vmem>>, vector<1x4x4x128xf32>
    %360 = vector.shape_cast %359 : vector<1x4x4x128xf32> to vector<4x4x128xf32>
    %361 = vector.shape_cast %360 : vector<4x4x128xf32> to vector<16x128xf32>
    %362 = arith.truncf %361 : vector<16x128xf32> to vector<16x128xbf16>
    %c14_286 = arith.constant 14 : index
    %c1_287 = arith.constant 1 : index
    %c1_288 = arith.constant 1 : index
    %c0_289 = arith.constant 0 : index
    %363 = vector.load %arg11[%c14_286, %c1_287, %c1_288, %c0_289] : memref<32x6x6x128xf32, #tpu.memory_space<vmem>>, vector<1x4x4x128xf32>
    %364 = vector.shape_cast %363 : vector<1x4x4x128xf32> to vector<4x4x128xf32>
    %365 = vector.shape_cast %364 : vector<4x4x128xf32> to vector<16x128xf32>
    %366 = arith.truncf %365 : vector<16x128xf32> to vector<16x128xbf16>
    %c3_290 = arith.constant 3 : index
    %c2_291 = arith.constant 2 : index
    %c0_292 = arith.constant 0 : index
    %c0_293 = arith.constant 0 : index
    %367 = vector.load %arg11[%c3_290, %c2_291, %c0_292, %c0_293] : memref<32x6x6x128xf32, #tpu.memory_space<vmem>>, vector<1x4x4x128xf32>
    %368 = vector.shape_cast %367 : vector<1x4x4x128xf32> to vector<4x4x128xf32>
    %369 = vector.shape_cast %368 : vector<4x4x128xf32> to vector<16x128xf32>
    %370 = arith.truncf %369 : vector<16x128xf32> to vector<16x128xbf16>
    %c0_294 = arith.constant 0 : index
    %c2_295 = arith.constant 2 : index
    %c1_296 = arith.constant 1 : index
    %c0_297 = arith.constant 0 : index
    %371 = vector.load %arg11[%c0_294, %c2_295, %c1_296, %c0_297] : memref<32x6x6x128xf32, #tpu.memory_space<vmem>>, vector<1x4x4x128xf32>
    %372 = vector.shape_cast %371 : vector<1x4x4x128xf32> to vector<4x4x128xf32>
    %373 = vector.shape_cast %372 : vector<4x4x128xf32> to vector<16x128xf32>
    %374 = arith.truncf %373 : vector<16x128xf32> to vector<16x128xbf16>
    %c1_298 = arith.constant 1 : index
    %c2_299 = arith.constant 2 : index
    %c1_300 = arith.constant 1 : index
    %c0_301 = arith.constant 0 : index
    %375 = vector.load %arg11[%c1_298, %c2_299, %c1_300, %c0_301] : memref<32x6x6x128xf32, #tpu.memory_space<vmem>>, vector<1x4x4x128xf32>
    %376 = vector.shape_cast %375 : vector<1x4x4x128xf32> to vector<4x4x128xf32>
    %377 = vector.shape_cast %376 : vector<4x4x128xf32> to vector<16x128xf32>
    %378 = arith.truncf %377 : vector<16x128xf32> to vector<16x128xbf16>
    %c2_302 = arith.constant 2 : index
    %c2_303 = arith.constant 2 : index
    %c1_304 = arith.constant 1 : index
    %c0_305 = arith.constant 0 : index
    %379 = vector.load %arg11[%c2_302, %c2_303, %c1_304, %c0_305] : memref<32x6x6x128xf32, #tpu.memory_space<vmem>>, vector<1x4x4x128xf32>
    %380 = vector.shape_cast %379 : vector<1x4x4x128xf32> to vector<4x4x128xf32>
    %381 = vector.shape_cast %380 : vector<4x4x128xf32> to vector<16x128xf32>
    %382 = arith.truncf %381 : vector<16x128xf32> to vector<16x128xbf16>
    %383 = tpu.concatenate %322, %326, %330, %334, %338, %342, %346, %350, %354, %358, %362, %366, %370, %374, %378, %382 in 1 : vector<16x128xbf16>, vector<16x128xbf16>, vector<16x128xbf16>, vector<16x128xbf16>, vector<16x128xbf16>, vector<16x128xbf16>, vector<16x128xbf16>, vector<16x128xbf16>, vector<16x128xbf16>, vector<16x128xbf16>, vector<16x128xbf16>, vector<16x128xbf16>, vector<16x128xbf16>, vector<16x128xbf16>, vector<16x128xbf16>, vector<16x128xbf16> -> vector<16x2048xbf16>
    %c5_306 = arith.constant 5 : index
    %c1_307 = arith.constant 1 : index
    %c1_308 = arith.constant 1 : index
    %c0_309 = arith.constant 0 : index
    %384 = vector.load %arg11[%c5_306, %c1_307, %c1_308, %c0_309] : memref<32x6x6x128xf32, #tpu.memory_space<vmem>>, vector<1x4x4x128xf32>
    %385 = vector.shape_cast %384 : vector<1x4x4x128xf32> to vector<4x4x128xf32>
    %386 = vector.shape_cast %385 : vector<4x4x128xf32> to vector<16x128xf32>
    %387 = arith.truncf %386 : vector<16x128xf32> to vector<16x128xbf16>
    %c6_310 = arith.constant 6 : index
    %c1_311 = arith.constant 1 : index
    %c1_312 = arith.constant 1 : index
    %c0_313 = arith.constant 0 : index
    %388 = vector.load %arg11[%c6_310, %c1_311, %c1_312, %c0_313] : memref<32x6x6x128xf32, #tpu.memory_space<vmem>>, vector<1x4x4x128xf32>
    %389 = vector.shape_cast %388 : vector<1x4x4x128xf32> to vector<4x4x128xf32>
    %390 = vector.shape_cast %389 : vector<4x4x128xf32> to vector<16x128xf32>
    %391 = arith.truncf %390 : vector<16x128xf32> to vector<16x128xbf16>
    %c7_314 = arith.constant 7 : index
    %c1_315 = arith.constant 1 : index
    %c1_316 = arith.constant 1 : index
    %c0_317 = arith.constant 0 : index
    %392 = vector.load %arg11[%c7_314, %c1_315, %c1_316, %c0_317] : memref<32x6x6x128xf32, #tpu.memory_space<vmem>>, vector<1x4x4x128xf32>
    %393 = vector.shape_cast %392 : vector<1x4x4x128xf32> to vector<4x4x128xf32>
    %394 = vector.shape_cast %393 : vector<4x4x128xf32> to vector<16x128xf32>
    %395 = arith.truncf %394 : vector<16x128xf32> to vector<16x128xbf16>
    %c4_318 = arith.constant 4 : index
    %c1_319 = arith.constant 1 : index
    %c2_320 = arith.constant 2 : index
    %c0_321 = arith.constant 0 : index
    %396 = vector.load %arg11[%c4_318, %c1_319, %c2_320, %c0_321] : memref<32x6x6x128xf32, #tpu.memory_space<vmem>>, vector<1x4x4x128xf32>
    %397 = vector.shape_cast %396 : vector<1x4x4x128xf32> to vector<4x4x128xf32>
    %398 = vector.shape_cast %397 : vector<4x4x128xf32> to vector<16x128xf32>
    %399 = arith.truncf %398 : vector<16x128xf32> to vector<16x128xbf16>
    %c9_322 = arith.constant 9 : index
    %c1_323 = arith.constant 1 : index
    %c1_324 = arith.constant 1 : index
    %c0_325 = arith.constant 0 : index
    %400 = vector.load %arg11[%c9_322, %c1_323, %c1_324, %c0_325] : memref<32x6x6x128xf32, #tpu.memory_space<vmem>>, vector<1x4x4x128xf32>
    %401 = vector.shape_cast %400 : vector<1x4x4x128xf32> to vector<4x4x128xf32>
    %402 = vector.shape_cast %401 : vector<4x4x128xf32> to vector<16x128xf32>
    %403 = arith.truncf %402 : vector<16x128xf32> to vector<16x128xbf16>
    %c10_326 = arith.constant 10 : index
    %c1_327 = arith.constant 1 : index
    %c1_328 = arith.constant 1 : index
    %c0_329 = arith.constant 0 : index
    %404 = vector.load %arg11[%c10_326, %c1_327, %c1_328, %c0_329] : memref<32x6x6x128xf32, #tpu.memory_space<vmem>>, vector<1x4x4x128xf32>
    %405 = vector.shape_cast %404 : vector<1x4x4x128xf32> to vector<4x4x128xf32>
    %406 = vector.shape_cast %405 : vector<4x4x128xf32> to vector<16x128xf32>
    %407 = arith.truncf %406 : vector<16x128xf32> to vector<16x128xbf16>
    %c11_330 = arith.constant 11 : index
    %c1_331 = arith.constant 1 : index
    %c1_332 = arith.constant 1 : index
    %c0_333 = arith.constant 0 : index
    %408 = vector.load %arg11[%c11_330, %c1_331, %c1_332, %c0_333] : memref<32x6x6x128xf32, #tpu.memory_space<vmem>>, vector<1x4x4x128xf32>
    %409 = vector.shape_cast %408 : vector<1x4x4x128xf32> to vector<4x4x128xf32>
    %410 = vector.shape_cast %409 : vector<4x4x128xf32> to vector<16x128xf32>
    %411 = arith.truncf %410 : vector<16x128xf32> to vector<16x128xbf16>
    %c8_334 = arith.constant 8 : index
    %c1_335 = arith.constant 1 : index
    %c2_336 = arith.constant 2 : index
    %c0_337 = arith.constant 0 : index
    %412 = vector.load %arg11[%c8_334, %c1_335, %c2_336, %c0_337] : memref<32x6x6x128xf32, #tpu.memory_space<vmem>>, vector<1x4x4x128xf32>
    %413 = vector.shape_cast %412 : vector<1x4x4x128xf32> to vector<4x4x128xf32>
    %414 = vector.shape_cast %413 : vector<4x4x128xf32> to vector<16x128xf32>
    %415 = arith.truncf %414 : vector<16x128xf32> to vector<16x128xbf16>
    %c13_338 = arith.constant 13 : index
    %c1_339 = arith.constant 1 : index
    %c1_340 = arith.constant 1 : index
    %c0_341 = arith.constant 0 : index
    %416 = vector.load %arg11[%c13_338, %c1_339, %c1_340, %c0_341] : memref<32x6x6x128xf32, #tpu.memory_space<vmem>>, vector<1x4x4x128xf32>
    %417 = vector.shape_cast %416 : vector<1x4x4x128xf32> to vector<4x4x128xf32>
    %418 = vector.shape_cast %417 : vector<4x4x128xf32> to vector<16x128xf32>
    %419 = arith.truncf %418 : vector<16x128xf32> to vector<16x128xbf16>
    %c14_342 = arith.constant 14 : index
    %c1_343 = arith.constant 1 : index
    %c1_344 = arith.constant 1 : index
    %c0_345 = arith.constant 0 : index
    %420 = vector.load %arg11[%c14_342, %c1_343, %c1_344, %c0_345] : memref<32x6x6x128xf32, #tpu.memory_space<vmem>>, vector<1x4x4x128xf32>
    %421 = vector.shape_cast %420 : vector<1x4x4x128xf32> to vector<4x4x128xf32>
    %422 = vector.shape_cast %421 : vector<4x4x128xf32> to vector<16x128xf32>
    %423 = arith.truncf %422 : vector<16x128xf32> to vector<16x128xbf16>
    %c15_346 = arith.constant 15 : index
    %c1_347 = arith.constant 1 : index
    %c1_348 = arith.constant 1 : index
    %c0_349 = arith.constant 0 : index
    %424 = vector.load %arg11[%c15_346, %c1_347, %c1_348, %c0_349] : memref<32x6x6x128xf32, #tpu.memory_space<vmem>>, vector<1x4x4x128xf32>
    %425 = vector.shape_cast %424 : vector<1x4x4x128xf32> to vector<4x4x128xf32>
    %426 = vector.shape_cast %425 : vector<4x4x128xf32> to vector<16x128xf32>
    %427 = arith.truncf %426 : vector<16x128xf32> to vector<16x128xbf16>
    %c12_350 = arith.constant 12 : index
    %c1_351 = arith.constant 1 : index
    %c2_352 = arith.constant 2 : index
    %c0_353 = arith.constant 0 : index
    %428 = vector.load %arg11[%c12_350, %c1_351, %c2_352, %c0_353] : memref<32x6x6x128xf32, #tpu.memory_space<vmem>>, vector<1x4x4x128xf32>
    %429 = vector.shape_cast %428 : vector<1x4x4x128xf32> to vector<4x4x128xf32>
    %430 = vector.shape_cast %429 : vector<4x4x128xf32> to vector<16x128xf32>
    %431 = arith.truncf %430 : vector<16x128xf32> to vector<16x128xbf16>
    %c1_354 = arith.constant 1 : index
    %c2_355 = arith.constant 2 : index
    %c1_356 = arith.constant 1 : index
    %c0_357 = arith.constant 0 : index
    %432 = vector.load %arg11[%c1_354, %c2_355, %c1_356, %c0_357] : memref<32x6x6x128xf32, #tpu.memory_space<vmem>>, vector<1x4x4x128xf32>
    %433 = vector.shape_cast %432 : vector<1x4x4x128xf32> to vector<4x4x128xf32>
    %434 = vector.shape_cast %433 : vector<4x4x128xf32> to vector<16x128xf32>
    %435 = arith.truncf %434 : vector<16x128xf32> to vector<16x128xbf16>
    %c2_358 = arith.constant 2 : index
    %c2_359 = arith.constant 2 : index
    %c1_360 = arith.constant 1 : index
    %c0_361 = arith.constant 0 : index
    %436 = vector.load %arg11[%c2_358, %c2_359, %c1_360, %c0_361] : memref<32x6x6x128xf32, #tpu.memory_space<vmem>>, vector<1x4x4x128xf32>
    %437 = vector.shape_cast %436 : vector<1x4x4x128xf32> to vector<4x4x128xf32>
    %438 = vector.shape_cast %437 : vector<4x4x128xf32> to vector<16x128xf32>
    %439 = arith.truncf %438 : vector<16x128xf32> to vector<16x128xbf16>
    %c3_362 = arith.constant 3 : index
    %c2_363 = arith.constant 2 : index
    %c1_364 = arith.constant 1 : index
    %c0_365 = arith.constant 0 : index
    %440 = vector.load %arg11[%c3_362, %c2_363, %c1_364, %c0_365] : memref<32x6x6x128xf32, #tpu.memory_space<vmem>>, vector<1x4x4x128xf32>
    %441 = vector.shape_cast %440 : vector<1x4x4x128xf32> to vector<4x4x128xf32>
    %442 = vector.shape_cast %441 : vector<4x4x128xf32> to vector<16x128xf32>
    %443 = arith.truncf %442 : vector<16x128xf32> to vector<16x128xbf16>
    %c0_366 = arith.constant 0 : index
    %c2_367 = arith.constant 2 : index
    %c2_368 = arith.constant 2 : index
    %c0_369 = arith.constant 0 : index
    %444 = vector.load %arg11[%c0_366, %c2_367, %c2_368, %c0_369] : memref<32x6x6x128xf32, #tpu.memory_space<vmem>>, vector<1x4x4x128xf32>
    %445 = vector.shape_cast %444 : vector<1x4x4x128xf32> to vector<4x4x128xf32>
    %446 = vector.shape_cast %445 : vector<4x4x128xf32> to vector<16x128xf32>
    %447 = arith.truncf %446 : vector<16x128xf32> to vector<16x128xbf16>
    %448 = tpu.concatenate %387, %391, %395, %399, %403, %407, %411, %415, %419, %423, %427, %431, %435, %439, %443, %447 in 1 : vector<16x128xbf16>, vector<16x128xbf16>, vector<16x128xbf16>, vector<16x128xbf16>, vector<16x128xbf16>, vector<16x128xbf16>, vector<16x128xbf16>, vector<16x128xbf16>, vector<16x128xbf16>, vector<16x128xbf16>, vector<16x128xbf16>, vector<16x128xbf16>, vector<16x128xbf16>, vector<16x128xbf16>, vector<16x128xbf16>, vector<16x128xbf16> -> vector<16x2048xbf16>
    %c31_370 = arith.constant 31 : index
    %c0_371 = arith.constant 0 : index
    %c0_372 = arith.constant 0 : index
    %c0_373 = arith.constant 0 : index
    %449 = vector.load %arg11[%c31_370, %c0_371, %c0_372, %c0_373] : memref<32x6x6x128xf32, #tpu.memory_space<vmem>>, vector<1x4x4x128xf32>
    %450 = vector.shape_cast %449 : vector<1x4x4x128xf32> to vector<4x4x128xf32>
    %451 = vector.shape_cast %450 : vector<4x4x128xf32> to vector<16x128xf32>
    %452 = arith.truncf %451 : vector<16x128xf32> to vector<16x128xbf16>
    %c28_374 = arith.constant 28 : index
    %c0_375 = arith.constant 0 : index
    %c1_376 = arith.constant 1 : index
    %c0_377 = arith.constant 0 : index
    %453 = vector.load %arg11[%c28_374, %c0_375, %c1_376, %c0_377] : memref<32x6x6x128xf32, #tpu.memory_space<vmem>>, vector<1x4x4x128xf32>
    %454 = vector.shape_cast %453 : vector<1x4x4x128xf32> to vector<4x4x128xf32>
    %455 = vector.shape_cast %454 : vector<4x4x128xf32> to vector<16x128xf32>
    %456 = arith.truncf %455 : vector<16x128xf32> to vector<16x128xbf16>
    %c29_378 = arith.constant 29 : index
    %c0_379 = arith.constant 0 : index
    %c1_380 = arith.constant 1 : index
    %c0_381 = arith.constant 0 : index
    %457 = vector.load %arg11[%c29_378, %c0_379, %c1_380, %c0_381] : memref<32x6x6x128xf32, #tpu.memory_space<vmem>>, vector<1x4x4x128xf32>
    %458 = vector.shape_cast %457 : vector<1x4x4x128xf32> to vector<4x4x128xf32>
    %459 = vector.shape_cast %458 : vector<4x4x128xf32> to vector<16x128xf32>
    %460 = arith.truncf %459 : vector<16x128xf32> to vector<16x128xbf16>
    %c30_382 = arith.constant 30 : index
    %c0_383 = arith.constant 0 : index
    %c1_384 = arith.constant 1 : index
    %c0_385 = arith.constant 0 : index
    %461 = vector.load %arg11[%c30_382, %c0_383, %c1_384, %c0_385] : memref<32x6x6x128xf32, #tpu.memory_space<vmem>>, vector<1x4x4x128xf32>
    %462 = vector.shape_cast %461 : vector<1x4x4x128xf32> to vector<4x4x128xf32>
    %463 = vector.shape_cast %462 : vector<4x4x128xf32> to vector<16x128xf32>
    %464 = arith.truncf %463 : vector<16x128xf32> to vector<16x128xbf16>
    %c19_386 = arith.constant 19 : index
    %c1_387 = arith.constant 1 : index
    %c0_388 = arith.constant 0 : index
    %c0_389 = arith.constant 0 : index
    %465 = vector.load %arg11[%c19_386, %c1_387, %c0_388, %c0_389] : memref<32x6x6x128xf32, #tpu.memory_space<vmem>>, vector<1x4x4x128xf32>
    %466 = vector.shape_cast %465 : vector<1x4x4x128xf32> to vector<4x4x128xf32>
    %467 = vector.shape_cast %466 : vector<4x4x128xf32> to vector<16x128xf32>
    %468 = arith.truncf %467 : vector<16x128xf32> to vector<16x128xbf16>
    %c16_390 = arith.constant 16 : index
    %c1_391 = arith.constant 1 : index
    %c1_392 = arith.constant 1 : index
    %c0_393 = arith.constant 0 : index
    %469 = vector.load %arg11[%c16_390, %c1_391, %c1_392, %c0_393] : memref<32x6x6x128xf32, #tpu.memory_space<vmem>>, vector<1x4x4x128xf32>
    %470 = vector.shape_cast %469 : vector<1x4x4x128xf32> to vector<4x4x128xf32>
    %471 = vector.shape_cast %470 : vector<4x4x128xf32> to vector<16x128xf32>
    %472 = arith.truncf %471 : vector<16x128xf32> to vector<16x128xbf16>
    %c17_394 = arith.constant 17 : index
    %c1_395 = arith.constant 1 : index
    %c1_396 = arith.constant 1 : index
    %c0_397 = arith.constant 0 : index
    %473 = vector.load %arg11[%c17_394, %c1_395, %c1_396, %c0_397] : memref<32x6x6x128xf32, #tpu.memory_space<vmem>>, vector<1x4x4x128xf32>
    %474 = vector.shape_cast %473 : vector<1x4x4x128xf32> to vector<4x4x128xf32>
    %475 = vector.shape_cast %474 : vector<4x4x128xf32> to vector<16x128xf32>
    %476 = arith.truncf %475 : vector<16x128xf32> to vector<16x128xbf16>
    %c18_398 = arith.constant 18 : index
    %c1_399 = arith.constant 1 : index
    %c1_400 = arith.constant 1 : index
    %c0_401 = arith.constant 0 : index
    %477 = vector.load %arg11[%c18_398, %c1_399, %c1_400, %c0_401] : memref<32x6x6x128xf32, #tpu.memory_space<vmem>>, vector<1x4x4x128xf32>
    %478 = vector.shape_cast %477 : vector<1x4x4x128xf32> to vector<4x4x128xf32>
    %479 = vector.shape_cast %478 : vector<4x4x128xf32> to vector<16x128xf32>
    %480 = arith.truncf %479 : vector<16x128xf32> to vector<16x128xbf16>
    %c23_402 = arith.constant 23 : index
    %c1_403 = arith.constant 1 : index
    %c0_404 = arith.constant 0 : index
    %c0_405 = arith.constant 0 : index
    %481 = vector.load %arg11[%c23_402, %c1_403, %c0_404, %c0_405] : memref<32x6x6x128xf32, #tpu.memory_space<vmem>>, vector<1x4x4x128xf32>
    %482 = vector.shape_cast %481 : vector<1x4x4x128xf32> to vector<4x4x128xf32>
    %483 = vector.shape_cast %482 : vector<4x4x128xf32> to vector<16x128xf32>
    %484 = arith.truncf %483 : vector<16x128xf32> to vector<16x128xbf16>
    %c20_406 = arith.constant 20 : index
    %c1_407 = arith.constant 1 : index
    %c1_408 = arith.constant 1 : index
    %c0_409 = arith.constant 0 : index
    %485 = vector.load %arg11[%c20_406, %c1_407, %c1_408, %c0_409] : memref<32x6x6x128xf32, #tpu.memory_space<vmem>>, vector<1x4x4x128xf32>
    %486 = vector.shape_cast %485 : vector<1x4x4x128xf32> to vector<4x4x128xf32>
    %487 = vector.shape_cast %486 : vector<4x4x128xf32> to vector<16x128xf32>
    %488 = arith.truncf %487 : vector<16x128xf32> to vector<16x128xbf16>
    %c21_410 = arith.constant 21 : index
    %c1_411 = arith.constant 1 : index
    %c1_412 = arith.constant 1 : index
    %c0_413 = arith.constant 0 : index
    %489 = vector.load %arg11[%c21_410, %c1_411, %c1_412, %c0_413] : memref<32x6x6x128xf32, #tpu.memory_space<vmem>>, vector<1x4x4x128xf32>
    %490 = vector.shape_cast %489 : vector<1x4x4x128xf32> to vector<4x4x128xf32>
    %491 = vector.shape_cast %490 : vector<4x4x128xf32> to vector<16x128xf32>
    %492 = arith.truncf %491 : vector<16x128xf32> to vector<16x128xbf16>
    %c22_414 = arith.constant 22 : index
    %c1_415 = arith.constant 1 : index
    %c1_416 = arith.constant 1 : index
    %c0_417 = arith.constant 0 : index
    %493 = vector.load %arg11[%c22_414, %c1_415, %c1_416, %c0_417] : memref<32x6x6x128xf32, #tpu.memory_space<vmem>>, vector<1x4x4x128xf32>
    %494 = vector.shape_cast %493 : vector<1x4x4x128xf32> to vector<4x4x128xf32>
    %495 = vector.shape_cast %494 : vector<4x4x128xf32> to vector<16x128xf32>
    %496 = arith.truncf %495 : vector<16x128xf32> to vector<16x128xbf16>
    %c27_418 = arith.constant 27 : index
    %c1_419 = arith.constant 1 : index
    %c0_420 = arith.constant 0 : index
    %c0_421 = arith.constant 0 : index
    %497 = vector.load %arg11[%c27_418, %c1_419, %c0_420, %c0_421] : memref<32x6x6x128xf32, #tpu.memory_space<vmem>>, vector<1x4x4x128xf32>
    %498 = vector.shape_cast %497 : vector<1x4x4x128xf32> to vector<4x4x128xf32>
    %499 = vector.shape_cast %498 : vector<4x4x128xf32> to vector<16x128xf32>
    %500 = arith.truncf %499 : vector<16x128xf32> to vector<16x128xbf16>
    %c24_422 = arith.constant 24 : index
    %c1_423 = arith.constant 1 : index
    %c1_424 = arith.constant 1 : index
    %c0_425 = arith.constant 0 : index
    %501 = vector.load %arg11[%c24_422, %c1_423, %c1_424, %c0_425] : memref<32x6x6x128xf32, #tpu.memory_space<vmem>>, vector<1x4x4x128xf32>
    %502 = vector.shape_cast %501 : vector<1x4x4x128xf32> to vector<4x4x128xf32>
    %503 = vector.shape_cast %502 : vector<4x4x128xf32> to vector<16x128xf32>
    %504 = arith.truncf %503 : vector<16x128xf32> to vector<16x128xbf16>
    %c25_426 = arith.constant 25 : index
    %c1_427 = arith.constant 1 : index
    %c1_428 = arith.constant 1 : index
    %c0_429 = arith.constant 0 : index
    %505 = vector.load %arg11[%c25_426, %c1_427, %c1_428, %c0_429] : memref<32x6x6x128xf32, #tpu.memory_space<vmem>>, vector<1x4x4x128xf32>
    %506 = vector.shape_cast %505 : vector<1x4x4x128xf32> to vector<4x4x128xf32>
    %507 = vector.shape_cast %506 : vector<4x4x128xf32> to vector<16x128xf32>
    %508 = arith.truncf %507 : vector<16x128xf32> to vector<16x128xbf16>
    %c26_430 = arith.constant 26 : index
    %c1_431 = arith.constant 1 : index
    %c1_432 = arith.constant 1 : index
    %c0_433 = arith.constant 0 : index
    %509 = vector.load %arg11[%c26_430, %c1_431, %c1_432, %c0_433] : memref<32x6x6x128xf32, #tpu.memory_space<vmem>>, vector<1x4x4x128xf32>
    %510 = vector.shape_cast %509 : vector<1x4x4x128xf32> to vector<4x4x128xf32>
    %511 = vector.shape_cast %510 : vector<4x4x128xf32> to vector<16x128xf32>
    %512 = arith.truncf %511 : vector<16x128xf32> to vector<16x128xbf16>
    %513 = tpu.concatenate %452, %456, %460, %464, %468, %472, %476, %480, %484, %488, %492, %496, %500, %504, %508, %512 in 1 : vector<16x128xbf16>, vector<16x128xbf16>, vector<16x128xbf16>, vector<16x128xbf16>, vector<16x128xbf16>, vector<16x128xbf16>, vector<16x128xbf16>, vector<16x128xbf16>, vector<16x128xbf16>, vector<16x128xbf16>, vector<16x128xbf16>, vector<16x128xbf16>, vector<16x128xbf16>, vector<16x128xbf16>, vector<16x128xbf16>, vector<16x128xbf16> -> vector<16x2048xbf16>
    %c29_434 = arith.constant 29 : index
    %c0_435 = arith.constant 0 : index
    %c1_436 = arith.constant 1 : index
    %c0_437 = arith.constant 0 : index
    %514 = vector.load %arg11[%c29_434, %c0_435, %c1_436, %c0_437] : memref<32x6x6x128xf32, #tpu.memory_space<vmem>>, vector<1x4x4x128xf32>
    %515 = vector.shape_cast %514 : vector<1x4x4x128xf32> to vector<4x4x128xf32>
    %516 = vector.shape_cast %515 : vector<4x4x128xf32> to vector<16x128xf32>
    %517 = arith.truncf %516 : vector<16x128xf32> to vector<16x128xbf16>
    %c30_438 = arith.constant 30 : index
    %c0_439 = arith.constant 0 : index
    %c1_440 = arith.constant 1 : index
    %c0_441 = arith.constant 0 : index
    %518 = vector.load %arg11[%c30_438, %c0_439, %c1_440, %c0_441] : memref<32x6x6x128xf32, #tpu.memory_space<vmem>>, vector<1x4x4x128xf32>
    %519 = vector.shape_cast %518 : vector<1x4x4x128xf32> to vector<4x4x128xf32>
    %520 = vector.shape_cast %519 : vector<4x4x128xf32> to vector<16x128xf32>
    %521 = arith.truncf %520 : vector<16x128xf32> to vector<16x128xbf16>
    %c31_442 = arith.constant 31 : index
    %c0_443 = arith.constant 0 : index
    %c1_444 = arith.constant 1 : index
    %c0_445 = arith.constant 0 : index
    %522 = vector.load %arg11[%c31_442, %c0_443, %c1_444, %c0_445] : memref<32x6x6x128xf32, #tpu.memory_space<vmem>>, vector<1x4x4x128xf32>
    %523 = vector.shape_cast %522 : vector<1x4x4x128xf32> to vector<4x4x128xf32>
    %524 = vector.shape_cast %523 : vector<4x4x128xf32> to vector<16x128xf32>
    %525 = arith.truncf %524 : vector<16x128xf32> to vector<16x128xbf16>
    %c28_446 = arith.constant 28 : index
    %c0_447 = arith.constant 0 : index
    %c2_448 = arith.constant 2 : index
    %c0_449 = arith.constant 0 : index
    %526 = vector.load %arg11[%c28_446, %c0_447, %c2_448, %c0_449] : memref<32x6x6x128xf32, #tpu.memory_space<vmem>>, vector<1x4x4x128xf32>
    %527 = vector.shape_cast %526 : vector<1x4x4x128xf32> to vector<4x4x128xf32>
    %528 = vector.shape_cast %527 : vector<4x4x128xf32> to vector<16x128xf32>
    %529 = arith.truncf %528 : vector<16x128xf32> to vector<16x128xbf16>
    %c17_450 = arith.constant 17 : index
    %c1_451 = arith.constant 1 : index
    %c1_452 = arith.constant 1 : index
    %c0_453 = arith.constant 0 : index
    %530 = vector.load %arg11[%c17_450, %c1_451, %c1_452, %c0_453] : memref<32x6x6x128xf32, #tpu.memory_space<vmem>>, vector<1x4x4x128xf32>
    %531 = vector.shape_cast %530 : vector<1x4x4x128xf32> to vector<4x4x128xf32>
    %532 = vector.shape_cast %531 : vector<4x4x128xf32> to vector<16x128xf32>
    %533 = arith.truncf %532 : vector<16x128xf32> to vector<16x128xbf16>
    %c18_454 = arith.constant 18 : index
    %c1_455 = arith.constant 1 : index
    %c1_456 = arith.constant 1 : index
    %c0_457 = arith.constant 0 : index
    %534 = vector.load %arg11[%c18_454, %c1_455, %c1_456, %c0_457] : memref<32x6x6x128xf32, #tpu.memory_space<vmem>>, vector<1x4x4x128xf32>
    %535 = vector.shape_cast %534 : vector<1x4x4x128xf32> to vector<4x4x128xf32>
    %536 = vector.shape_cast %535 : vector<4x4x128xf32> to vector<16x128xf32>
    %537 = arith.truncf %536 : vector<16x128xf32> to vector<16x128xbf16>
    %c19_458 = arith.constant 19 : index
    %c1_459 = arith.constant 1 : index
    %c1_460 = arith.constant 1 : index
    %c0_461 = arith.constant 0 : index
    %538 = vector.load %arg11[%c19_458, %c1_459, %c1_460, %c0_461] : memref<32x6x6x128xf32, #tpu.memory_space<vmem>>, vector<1x4x4x128xf32>
    %539 = vector.shape_cast %538 : vector<1x4x4x128xf32> to vector<4x4x128xf32>
    %540 = vector.shape_cast %539 : vector<4x4x128xf32> to vector<16x128xf32>
    %541 = arith.truncf %540 : vector<16x128xf32> to vector<16x128xbf16>
    %c16_462 = arith.constant 16 : index
    %c1_463 = arith.constant 1 : index
    %c2_464 = arith.constant 2 : index
    %c0_465 = arith.constant 0 : index
    %542 = vector.load %arg11[%c16_462, %c1_463, %c2_464, %c0_465] : memref<32x6x6x128xf32, #tpu.memory_space<vmem>>, vector<1x4x4x128xf32>
    %543 = vector.shape_cast %542 : vector<1x4x4x128xf32> to vector<4x4x128xf32>
    %544 = vector.shape_cast %543 : vector<4x4x128xf32> to vector<16x128xf32>
    %545 = arith.truncf %544 : vector<16x128xf32> to vector<16x128xbf16>
    %c21_466 = arith.constant 21 : index
    %c1_467 = arith.constant 1 : index
    %c1_468 = arith.constant 1 : index
    %c0_469 = arith.constant 0 : index
    %546 = vector.load %arg11[%c21_466, %c1_467, %c1_468, %c0_469] : memref<32x6x6x128xf32, #tpu.memory_space<vmem>>, vector<1x4x4x128xf32>
    %547 = vector.shape_cast %546 : vector<1x4x4x128xf32> to vector<4x4x128xf32>
    %548 = vector.shape_cast %547 : vector<4x4x128xf32> to vector<16x128xf32>
    %549 = arith.truncf %548 : vector<16x128xf32> to vector<16x128xbf16>
    %c22_470 = arith.constant 22 : index
    %c1_471 = arith.constant 1 : index
    %c1_472 = arith.constant 1 : index
    %c0_473 = arith.constant 0 : index
    %550 = vector.load %arg11[%c22_470, %c1_471, %c1_472, %c0_473] : memref<32x6x6x128xf32, #tpu.memory_space<vmem>>, vector<1x4x4x128xf32>
    %551 = vector.shape_cast %550 : vector<1x4x4x128xf32> to vector<4x4x128xf32>
    %552 = vector.shape_cast %551 : vector<4x4x128xf32> to vector<16x128xf32>
    %553 = arith.truncf %552 : vector<16x128xf32> to vector<16x128xbf16>
    %c23_474 = arith.constant 23 : index
    %c1_475 = arith.constant 1 : index
    %c1_476 = arith.constant 1 : index
    %c0_477 = arith.constant 0 : index
    %554 = vector.load %arg11[%c23_474, %c1_475, %c1_476, %c0_477] : memref<32x6x6x128xf32, #tpu.memory_space<vmem>>, vector<1x4x4x128xf32>
    %555 = vector.shape_cast %554 : vector<1x4x4x128xf32> to vector<4x4x128xf32>
    %556 = vector.shape_cast %555 : vector<4x4x128xf32> to vector<16x128xf32>
    %557 = arith.truncf %556 : vector<16x128xf32> to vector<16x128xbf16>
    %c20_478 = arith.constant 20 : index
    %c1_479 = arith.constant 1 : index
    %c2_480 = arith.constant 2 : index
    %c0_481 = arith.constant 0 : index
    %558 = vector.load %arg11[%c20_478, %c1_479, %c2_480, %c0_481] : memref<32x6x6x128xf32, #tpu.memory_space<vmem>>, vector<1x4x4x128xf32>
    %559 = vector.shape_cast %558 : vector<1x4x4x128xf32> to vector<4x4x128xf32>
    %560 = vector.shape_cast %559 : vector<4x4x128xf32> to vector<16x128xf32>
    %561 = arith.truncf %560 : vector<16x128xf32> to vector<16x128xbf16>
    %c25_482 = arith.constant 25 : index
    %c1_483 = arith.constant 1 : index
    %c1_484 = arith.constant 1 : index
    %c0_485 = arith.constant 0 : index
    %562 = vector.load %arg11[%c25_482, %c1_483, %c1_484, %c0_485] : memref<32x6x6x128xf32, #tpu.memory_space<vmem>>, vector<1x4x4x128xf32>
    %563 = vector.shape_cast %562 : vector<1x4x4x128xf32> to vector<4x4x128xf32>
    %564 = vector.shape_cast %563 : vector<4x4x128xf32> to vector<16x128xf32>
    %565 = arith.truncf %564 : vector<16x128xf32> to vector<16x128xbf16>
    %c26_486 = arith.constant 26 : index
    %c1_487 = arith.constant 1 : index
    %c1_488 = arith.constant 1 : index
    %c0_489 = arith.constant 0 : index
    %566 = vector.load %arg11[%c26_486, %c1_487, %c1_488, %c0_489] : memref<32x6x6x128xf32, #tpu.memory_space<vmem>>, vector<1x4x4x128xf32>
    %567 = vector.shape_cast %566 : vector<1x4x4x128xf32> to vector<4x4x128xf32>
    %568 = vector.shape_cast %567 : vector<4x4x128xf32> to vector<16x128xf32>
    %569 = arith.truncf %568 : vector<16x128xf32> to vector<16x128xbf16>
    %c27_490 = arith.constant 27 : index
    %c1_491 = arith.constant 1 : index
    %c1_492 = arith.constant 1 : index
    %c0_493 = arith.constant 0 : index
    %570 = vector.load %arg11[%c27_490, %c1_491, %c1_492, %c0_493] : memref<32x6x6x128xf32, #tpu.memory_space<vmem>>, vector<1x4x4x128xf32>
    %571 = vector.shape_cast %570 : vector<1x4x4x128xf32> to vector<4x4x128xf32>
    %572 = vector.shape_cast %571 : vector<4x4x128xf32> to vector<16x128xf32>
    %573 = arith.truncf %572 : vector<16x128xf32> to vector<16x128xbf16>
    %c24_494 = arith.constant 24 : index
    %c1_495 = arith.constant 1 : index
    %c2_496 = arith.constant 2 : index
    %c0_497 = arith.constant 0 : index
    %574 = vector.load %arg11[%c24_494, %c1_495, %c2_496, %c0_497] : memref<32x6x6x128xf32, #tpu.memory_space<vmem>>, vector<1x4x4x128xf32>
    %575 = vector.shape_cast %574 : vector<1x4x4x128xf32> to vector<4x4x128xf32>
    %576 = vector.shape_cast %575 : vector<4x4x128xf32> to vector<16x128xf32>
    %577 = arith.truncf %576 : vector<16x128xf32> to vector<16x128xbf16>
    %578 = tpu.concatenate %517, %521, %525, %529, %533, %537, %541, %545, %549, %553, %557, %561, %565, %569, %573, %577 in 1 : vector<16x128xbf16>, vector<16x128xbf16>, vector<16x128xbf16>, vector<16x128xbf16>, vector<16x128xbf16>, vector<16x128xbf16>, vector<16x128xbf16>, vector<16x128xbf16>, vector<16x128xbf16>, vector<16x128xbf16>, vector<16x128xbf16>, vector<16x128xbf16>, vector<16x128xbf16>, vector<16x128xbf16>, vector<16x128xbf16>, vector<16x128xbf16> -> vector<16x2048xbf16>
    %c23_498 = arith.constant 23 : index
    %c1_499 = arith.constant 1 : index
    %c0_500 = arith.constant 0 : index
    %c0_501 = arith.constant 0 : index
    %579 = vector.load %arg11[%c23_498, %c1_499, %c0_500, %c0_501] : memref<32x6x6x128xf32, #tpu.memory_space<vmem>>, vector<1x4x4x128xf32>
    %580 = vector.shape_cast %579 : vector<1x4x4x128xf32> to vector<4x4x128xf32>
    %581 = vector.shape_cast %580 : vector<4x4x128xf32> to vector<16x128xf32>
    %582 = arith.truncf %581 : vector<16x128xf32> to vector<16x128xbf16>
    %c20_502 = arith.constant 20 : index
    %c1_503 = arith.constant 1 : index
    %c1_504 = arith.constant 1 : index
    %c0_505 = arith.constant 0 : index
    %583 = vector.load %arg11[%c20_502, %c1_503, %c1_504, %c0_505] : memref<32x6x6x128xf32, #tpu.memory_space<vmem>>, vector<1x4x4x128xf32>
    %584 = vector.shape_cast %583 : vector<1x4x4x128xf32> to vector<4x4x128xf32>
    %585 = vector.shape_cast %584 : vector<4x4x128xf32> to vector<16x128xf32>
    %586 = arith.truncf %585 : vector<16x128xf32> to vector<16x128xbf16>
    %c21_506 = arith.constant 21 : index
    %c1_507 = arith.constant 1 : index
    %c1_508 = arith.constant 1 : index
    %c0_509 = arith.constant 0 : index
    %587 = vector.load %arg11[%c21_506, %c1_507, %c1_508, %c0_509] : memref<32x6x6x128xf32, #tpu.memory_space<vmem>>, vector<1x4x4x128xf32>
    %588 = vector.shape_cast %587 : vector<1x4x4x128xf32> to vector<4x4x128xf32>
    %589 = vector.shape_cast %588 : vector<4x4x128xf32> to vector<16x128xf32>
    %590 = arith.truncf %589 : vector<16x128xf32> to vector<16x128xbf16>
    %c22_510 = arith.constant 22 : index
    %c1_511 = arith.constant 1 : index
    %c1_512 = arith.constant 1 : index
    %c0_513 = arith.constant 0 : index
    %591 = vector.load %arg11[%c22_510, %c1_511, %c1_512, %c0_513] : memref<32x6x6x128xf32, #tpu.memory_space<vmem>>, vector<1x4x4x128xf32>
    %592 = vector.shape_cast %591 : vector<1x4x4x128xf32> to vector<4x4x128xf32>
    %593 = vector.shape_cast %592 : vector<4x4x128xf32> to vector<16x128xf32>
    %594 = arith.truncf %593 : vector<16x128xf32> to vector<16x128xbf16>
    %c27_514 = arith.constant 27 : index
    %c1_515 = arith.constant 1 : index
    %c0_516 = arith.constant 0 : index
    %c0_517 = arith.constant 0 : index
    %595 = vector.load %arg11[%c27_514, %c1_515, %c0_516, %c0_517] : memref<32x6x6x128xf32, #tpu.memory_space<vmem>>, vector<1x4x4x128xf32>
    %596 = vector.shape_cast %595 : vector<1x4x4x128xf32> to vector<4x4x128xf32>
    %597 = vector.shape_cast %596 : vector<4x4x128xf32> to vector<16x128xf32>
    %598 = arith.truncf %597 : vector<16x128xf32> to vector<16x128xbf16>
    %c24_518 = arith.constant 24 : index
    %c1_519 = arith.constant 1 : index
    %c1_520 = arith.constant 1 : index
    %c0_521 = arith.constant 0 : index
    %599 = vector.load %arg11[%c24_518, %c1_519, %c1_520, %c0_521] : memref<32x6x6x128xf32, #tpu.memory_space<vmem>>, vector<1x4x4x128xf32>
    %600 = vector.shape_cast %599 : vector<1x4x4x128xf32> to vector<4x4x128xf32>
    %601 = vector.shape_cast %600 : vector<4x4x128xf32> to vector<16x128xf32>
    %602 = arith.truncf %601 : vector<16x128xf32> to vector<16x128xbf16>
    %c25_522 = arith.constant 25 : index
    %c1_523 = arith.constant 1 : index
    %c1_524 = arith.constant 1 : index
    %c0_525 = arith.constant 0 : index
    %603 = vector.load %arg11[%c25_522, %c1_523, %c1_524, %c0_525] : memref<32x6x6x128xf32, #tpu.memory_space<vmem>>, vector<1x4x4x128xf32>
    %604 = vector.shape_cast %603 : vector<1x4x4x128xf32> to vector<4x4x128xf32>
    %605 = vector.shape_cast %604 : vector<4x4x128xf32> to vector<16x128xf32>
    %606 = arith.truncf %605 : vector<16x128xf32> to vector<16x128xbf16>
    %c26_526 = arith.constant 26 : index
    %c1_527 = arith.constant 1 : index
    %c1_528 = arith.constant 1 : index
    %c0_529 = arith.constant 0 : index
    %607 = vector.load %arg11[%c26_526, %c1_527, %c1_528, %c0_529] : memref<32x6x6x128xf32, #tpu.memory_space<vmem>>, vector<1x4x4x128xf32>
    %608 = vector.shape_cast %607 : vector<1x4x4x128xf32> to vector<4x4x128xf32>
    %609 = vector.shape_cast %608 : vector<4x4x128xf32> to vector<16x128xf32>
    %610 = arith.truncf %609 : vector<16x128xf32> to vector<16x128xbf16>
    %c31_530 = arith.constant 31 : index
    %c1_531 = arith.constant 1 : index
    %c0_532 = arith.constant 0 : index
    %c0_533 = arith.constant 0 : index
    %611 = vector.load %arg11[%c31_530, %c1_531, %c0_532, %c0_533] : memref<32x6x6x128xf32, #tpu.memory_space<vmem>>, vector<1x4x4x128xf32>
    %612 = vector.shape_cast %611 : vector<1x4x4x128xf32> to vector<4x4x128xf32>
    %613 = vector.shape_cast %612 : vector<4x4x128xf32> to vector<16x128xf32>
    %614 = arith.truncf %613 : vector<16x128xf32> to vector<16x128xbf16>
    %c28_534 = arith.constant 28 : index
    %c1_535 = arith.constant 1 : index
    %c1_536 = arith.constant 1 : index
    %c0_537 = arith.constant 0 : index
    %615 = vector.load %arg11[%c28_534, %c1_535, %c1_536, %c0_537] : memref<32x6x6x128xf32, #tpu.memory_space<vmem>>, vector<1x4x4x128xf32>
    %616 = vector.shape_cast %615 : vector<1x4x4x128xf32> to vector<4x4x128xf32>
    %617 = vector.shape_cast %616 : vector<4x4x128xf32> to vector<16x128xf32>
    %618 = arith.truncf %617 : vector<16x128xf32> to vector<16x128xbf16>
    %c29_538 = arith.constant 29 : index
    %c1_539 = arith.constant 1 : index
    %c1_540 = arith.constant 1 : index
    %c0_541 = arith.constant 0 : index
    %619 = vector.load %arg11[%c29_538, %c1_539, %c1_540, %c0_541] : memref<32x6x6x128xf32, #tpu.memory_space<vmem>>, vector<1x4x4x128xf32>
    %620 = vector.shape_cast %619 : vector<1x4x4x128xf32> to vector<4x4x128xf32>
    %621 = vector.shape_cast %620 : vector<4x4x128xf32> to vector<16x128xf32>
    %622 = arith.truncf %621 : vector<16x128xf32> to vector<16x128xbf16>
    %c30_542 = arith.constant 30 : index
    %c1_543 = arith.constant 1 : index
    %c1_544 = arith.constant 1 : index
    %c0_545 = arith.constant 0 : index
    %623 = vector.load %arg11[%c30_542, %c1_543, %c1_544, %c0_545] : memref<32x6x6x128xf32, #tpu.memory_space<vmem>>, vector<1x4x4x128xf32>
    %624 = vector.shape_cast %623 : vector<1x4x4x128xf32> to vector<4x4x128xf32>
    %625 = vector.shape_cast %624 : vector<4x4x128xf32> to vector<16x128xf32>
    %626 = arith.truncf %625 : vector<16x128xf32> to vector<16x128xbf16>
    %c19_546 = arith.constant 19 : index
    %c2_547 = arith.constant 2 : index
    %c0_548 = arith.constant 0 : index
    %c0_549 = arith.constant 0 : index
    %627 = vector.load %arg11[%c19_546, %c2_547, %c0_548, %c0_549] : memref<32x6x6x128xf32, #tpu.memory_space<vmem>>, vector<1x4x4x128xf32>
    %628 = vector.shape_cast %627 : vector<1x4x4x128xf32> to vector<4x4x128xf32>
    %629 = vector.shape_cast %628 : vector<4x4x128xf32> to vector<16x128xf32>
    %630 = arith.truncf %629 : vector<16x128xf32> to vector<16x128xbf16>
    %c16_550 = arith.constant 16 : index
    %c2_551 = arith.constant 2 : index
    %c1_552 = arith.constant 1 : index
    %c0_553 = arith.constant 0 : index
    %631 = vector.load %arg11[%c16_550, %c2_551, %c1_552, %c0_553] : memref<32x6x6x128xf32, #tpu.memory_space<vmem>>, vector<1x4x4x128xf32>
    %632 = vector.shape_cast %631 : vector<1x4x4x128xf32> to vector<4x4x128xf32>
    %633 = vector.shape_cast %632 : vector<4x4x128xf32> to vector<16x128xf32>
    %634 = arith.truncf %633 : vector<16x128xf32> to vector<16x128xbf16>
    %c17_554 = arith.constant 17 : index
    %c2_555 = arith.constant 2 : index
    %c1_556 = arith.constant 1 : index
    %c0_557 = arith.constant 0 : index
    %635 = vector.load %arg11[%c17_554, %c2_555, %c1_556, %c0_557] : memref<32x6x6x128xf32, #tpu.memory_space<vmem>>, vector<1x4x4x128xf32>
    %636 = vector.shape_cast %635 : vector<1x4x4x128xf32> to vector<4x4x128xf32>
    %637 = vector.shape_cast %636 : vector<4x4x128xf32> to vector<16x128xf32>
    %638 = arith.truncf %637 : vector<16x128xf32> to vector<16x128xbf16>
    %c18_558 = arith.constant 18 : index
    %c2_559 = arith.constant 2 : index
    %c1_560 = arith.constant 1 : index
    %c0_561 = arith.constant 0 : index
    %639 = vector.load %arg11[%c18_558, %c2_559, %c1_560, %c0_561] : memref<32x6x6x128xf32, #tpu.memory_space<vmem>>, vector<1x4x4x128xf32>
    %640 = vector.shape_cast %639 : vector<1x4x4x128xf32> to vector<4x4x128xf32>
    %641 = vector.shape_cast %640 : vector<4x4x128xf32> to vector<16x128xf32>
    %642 = arith.truncf %641 : vector<16x128xf32> to vector<16x128xbf16>
    %643 = tpu.concatenate %582, %586, %590, %594, %598, %602, %606, %610, %614, %618, %622, %626, %630, %634, %638, %642 in 1 : vector<16x128xbf16>, vector<16x128xbf16>, vector<16x128xbf16>, vector<16x128xbf16>, vector<16x128xbf16>, vector<16x128xbf16>, vector<16x128xbf16>, vector<16x128xbf16>, vector<16x128xbf16>, vector<16x128xbf16>, vector<16x128xbf16>, vector<16x128xbf16>, vector<16x128xbf16>, vector<16x128xbf16>, vector<16x128xbf16>, vector<16x128xbf16> -> vector<16x2048xbf16>
    %c21_562 = arith.constant 21 : index
    %c1_563 = arith.constant 1 : index
    %c1_564 = arith.constant 1 : index
    %c0_565 = arith.constant 0 : index
    %644 = vector.load %arg11[%c21_562, %c1_563, %c1_564, %c0_565] : memref<32x6x6x128xf32, #tpu.memory_space<vmem>>, vector<1x4x4x128xf32>
    %645 = vector.shape_cast %644 : vector<1x4x4x128xf32> to vector<4x4x128xf32>
    %646 = vector.shape_cast %645 : vector<4x4x128xf32> to vector<16x128xf32>
    %647 = arith.truncf %646 : vector<16x128xf32> to vector<16x128xbf16>
    %c22_566 = arith.constant 22 : index
    %c1_567 = arith.constant 1 : index
    %c1_568 = arith.constant 1 : index
    %c0_569 = arith.constant 0 : index
    %648 = vector.load %arg11[%c22_566, %c1_567, %c1_568, %c0_569] : memref<32x6x6x128xf32, #tpu.memory_space<vmem>>, vector<1x4x4x128xf32>
    %649 = vector.shape_cast %648 : vector<1x4x4x128xf32> to vector<4x4x128xf32>
    %650 = vector.shape_cast %649 : vector<4x4x128xf32> to vector<16x128xf32>
    %651 = arith.truncf %650 : vector<16x128xf32> to vector<16x128xbf16>
    %c23_570 = arith.constant 23 : index
    %c1_571 = arith.constant 1 : index
    %c1_572 = arith.constant 1 : index
    %c0_573 = arith.constant 0 : index
    %652 = vector.load %arg11[%c23_570, %c1_571, %c1_572, %c0_573] : memref<32x6x6x128xf32, #tpu.memory_space<vmem>>, vector<1x4x4x128xf32>
    %653 = vector.shape_cast %652 : vector<1x4x4x128xf32> to vector<4x4x128xf32>
    %654 = vector.shape_cast %653 : vector<4x4x128xf32> to vector<16x128xf32>
    %655 = arith.truncf %654 : vector<16x128xf32> to vector<16x128xbf16>
    %c20_574 = arith.constant 20 : index
    %c1_575 = arith.constant 1 : index
    %c2_576 = arith.constant 2 : index
    %c0_577 = arith.constant 0 : index
    %656 = vector.load %arg11[%c20_574, %c1_575, %c2_576, %c0_577] : memref<32x6x6x128xf32, #tpu.memory_space<vmem>>, vector<1x4x4x128xf32>
    %657 = vector.shape_cast %656 : vector<1x4x4x128xf32> to vector<4x4x128xf32>
    %658 = vector.shape_cast %657 : vector<4x4x128xf32> to vector<16x128xf32>
    %659 = arith.truncf %658 : vector<16x128xf32> to vector<16x128xbf16>
    %c25_578 = arith.constant 25 : index
    %c1_579 = arith.constant 1 : index
    %c1_580 = arith.constant 1 : index
    %c0_581 = arith.constant 0 : index
    %660 = vector.load %arg11[%c25_578, %c1_579, %c1_580, %c0_581] : memref<32x6x6x128xf32, #tpu.memory_space<vmem>>, vector<1x4x4x128xf32>
    %661 = vector.shape_cast %660 : vector<1x4x4x128xf32> to vector<4x4x128xf32>
    %662 = vector.shape_cast %661 : vector<4x4x128xf32> to vector<16x128xf32>
    %663 = arith.truncf %662 : vector<16x128xf32> to vector<16x128xbf16>
    %c26_582 = arith.constant 26 : index
    %c1_583 = arith.constant 1 : index
    %c1_584 = arith.constant 1 : index
    %c0_585 = arith.constant 0 : index
    %664 = vector.load %arg11[%c26_582, %c1_583, %c1_584, %c0_585] : memref<32x6x6x128xf32, #tpu.memory_space<vmem>>, vector<1x4x4x128xf32>
    %665 = vector.shape_cast %664 : vector<1x4x4x128xf32> to vector<4x4x128xf32>
    %666 = vector.shape_cast %665 : vector<4x4x128xf32> to vector<16x128xf32>
    %667 = arith.truncf %666 : vector<16x128xf32> to vector<16x128xbf16>
    %c27_586 = arith.constant 27 : index
    %c1_587 = arith.constant 1 : index
    %c1_588 = arith.constant 1 : index
    %c0_589 = arith.constant 0 : index
    %668 = vector.load %arg11[%c27_586, %c1_587, %c1_588, %c0_589] : memref<32x6x6x128xf32, #tpu.memory_space<vmem>>, vector<1x4x4x128xf32>
    %669 = vector.shape_cast %668 : vector<1x4x4x128xf32> to vector<4x4x128xf32>
    %670 = vector.shape_cast %669 : vector<4x4x128xf32> to vector<16x128xf32>
    %671 = arith.truncf %670 : vector<16x128xf32> to vector<16x128xbf16>
    %c24_590 = arith.constant 24 : index
    %c1_591 = arith.constant 1 : index
    %c2_592 = arith.constant 2 : index
    %c0_593 = arith.constant 0 : index
    %672 = vector.load %arg11[%c24_590, %c1_591, %c2_592, %c0_593] : memref<32x6x6x128xf32, #tpu.memory_space<vmem>>, vector<1x4x4x128xf32>
    %673 = vector.shape_cast %672 : vector<1x4x4x128xf32> to vector<4x4x128xf32>
    %674 = vector.shape_cast %673 : vector<4x4x128xf32> to vector<16x128xf32>
    %675 = arith.truncf %674 : vector<16x128xf32> to vector<16x128xbf16>
    %c29_594 = arith.constant 29 : index
    %c1_595 = arith.constant 1 : index
    %c1_596 = arith.constant 1 : index
    %c0_597 = arith.constant 0 : index
    %676 = vector.load %arg11[%c29_594, %c1_595, %c1_596, %c0_597] : memref<32x6x6x128xf32, #tpu.memory_space<vmem>>, vector<1x4x4x128xf32>
    %677 = vector.shape_cast %676 : vector<1x4x4x128xf32> to vector<4x4x128xf32>
    %678 = vector.shape_cast %677 : vector<4x4x128xf32> to vector<16x128xf32>
    %679 = arith.truncf %678 : vector<16x128xf32> to vector<16x128xbf16>
    %c30_598 = arith.constant 30 : index
    %c1_599 = arith.constant 1 : index
    %c1_600 = arith.constant 1 : index
    %c0_601 = arith.constant 0 : index
    %680 = vector.load %arg11[%c30_598, %c1_599, %c1_600, %c0_601] : memref<32x6x6x128xf32, #tpu.memory_space<vmem>>, vector<1x4x4x128xf32>
    %681 = vector.shape_cast %680 : vector<1x4x4x128xf32> to vector<4x4x128xf32>
    %682 = vector.shape_cast %681 : vector<4x4x128xf32> to vector<16x128xf32>
    %683 = arith.truncf %682 : vector<16x128xf32> to vector<16x128xbf16>
    %c31_602 = arith.constant 31 : index
    %c1_603 = arith.constant 1 : index
    %c1_604 = arith.constant 1 : index
    %c0_605 = arith.constant 0 : index
    %684 = vector.load %arg11[%c31_602, %c1_603, %c1_604, %c0_605] : memref<32x6x6x128xf32, #tpu.memory_space<vmem>>, vector<1x4x4x128xf32>
    %685 = vector.shape_cast %684 : vector<1x4x4x128xf32> to vector<4x4x128xf32>
    %686 = vector.shape_cast %685 : vector<4x4x128xf32> to vector<16x128xf32>
    %687 = arith.truncf %686 : vector<16x128xf32> to vector<16x128xbf16>
    %c28_606 = arith.constant 28 : index
    %c1_607 = arith.constant 1 : index
    %c2_608 = arith.constant 2 : index
    %c0_609 = arith.constant 0 : index
    %688 = vector.load %arg11[%c28_606, %c1_607, %c2_608, %c0_609] : memref<32x6x6x128xf32, #tpu.memory_space<vmem>>, vector<1x4x4x128xf32>
    %689 = vector.shape_cast %688 : vector<1x4x4x128xf32> to vector<4x4x128xf32>
    %690 = vector.shape_cast %689 : vector<4x4x128xf32> to vector<16x128xf32>
    %691 = arith.truncf %690 : vector<16x128xf32> to vector<16x128xbf16>
    %c17_610 = arith.constant 17 : index
    %c2_611 = arith.constant 2 : index
    %c1_612 = arith.constant 1 : index
    %c0_613 = arith.constant 0 : index
    %692 = vector.load %arg11[%c17_610, %c2_611, %c1_612, %c0_613] : memref<32x6x6x128xf32, #tpu.memory_space<vmem>>, vector<1x4x4x128xf32>
    %693 = vector.shape_cast %692 : vector<1x4x4x128xf32> to vector<4x4x128xf32>
    %694 = vector.shape_cast %693 : vector<4x4x128xf32> to vector<16x128xf32>
    %695 = arith.truncf %694 : vector<16x128xf32> to vector<16x128xbf16>
    %c18_614 = arith.constant 18 : index
    %c2_615 = arith.constant 2 : index
    %c1_616 = arith.constant 1 : index
    %c0_617 = arith.constant 0 : index
    %696 = vector.load %arg11[%c18_614, %c2_615, %c1_616, %c0_617] : memref<32x6x6x128xf32, #tpu.memory_space<vmem>>, vector<1x4x4x128xf32>
    %697 = vector.shape_cast %696 : vector<1x4x4x128xf32> to vector<4x4x128xf32>
    %698 = vector.shape_cast %697 : vector<4x4x128xf32> to vector<16x128xf32>
    %699 = arith.truncf %698 : vector<16x128xf32> to vector<16x128xbf16>
    %c19_618 = arith.constant 19 : index
    %c2_619 = arith.constant 2 : index
    %c1_620 = arith.constant 1 : index
    %c0_621 = arith.constant 0 : index
    %700 = vector.load %arg11[%c19_618, %c2_619, %c1_620, %c0_621] : memref<32x6x6x128xf32, #tpu.memory_space<vmem>>, vector<1x4x4x128xf32>
    %701 = vector.shape_cast %700 : vector<1x4x4x128xf32> to vector<4x4x128xf32>
    %702 = vector.shape_cast %701 : vector<4x4x128xf32> to vector<16x128xf32>
    %703 = arith.truncf %702 : vector<16x128xf32> to vector<16x128xbf16>
    %c16_622 = arith.constant 16 : index
    %c2_623 = arith.constant 2 : index
    %c2_624 = arith.constant 2 : index
    %c0_625 = arith.constant 0 : index
    %704 = vector.load %arg11[%c16_622, %c2_623, %c2_624, %c0_625] : memref<32x6x6x128xf32, #tpu.memory_space<vmem>>, vector<1x4x4x128xf32>
    %705 = vector.shape_cast %704 : vector<1x4x4x128xf32> to vector<4x4x128xf32>
    %706 = vector.shape_cast %705 : vector<4x4x128xf32> to vector<16x128xf32>
    %707 = arith.truncf %706 : vector<16x128xf32> to vector<16x128xbf16>
    %708 = tpu.concatenate %647, %651, %655, %659, %663, %667, %671, %675, %679, %683, %687, %691, %695, %699, %703, %707 in 1 : vector<16x128xbf16>, vector<16x128xbf16>, vector<16x128xbf16>, vector<16x128xbf16>, vector<16x128xbf16>, vector<16x128xbf16>, vector<16x128xbf16>, vector<16x128xbf16>, vector<16x128xbf16>, vector<16x128xbf16>, vector<16x128xbf16>, vector<16x128xbf16>, vector<16x128xbf16>, vector<16x128xbf16>, vector<16x128xbf16>, vector<16x128xbf16> -> vector<16x2048xbf16>
    %709 = tpu.concatenate %253, %318, %383, %448, %513, %578, %643, %708 in 0 : vector<16x2048xbf16>, vector<16x2048xbf16>, vector<16x2048xbf16>, vector<16x2048xbf16>, vector<16x2048xbf16>, vector<16x2048xbf16>, vector<16x2048xbf16>, vector<16x2048xbf16> -> vector<128x2048xbf16>
    %c0_626 = arith.constant 0 : index
    %c0_627 = arith.constant 0 : index
    %710 = vector.load %arg3[%c0_626, %c0_627] : memref<2048x128xbf16, #tpu.memory_space<vmem>>, vector<2048x128xbf16>
    %cst_628 = arith.constant dense<0.000000e+00> : vector<128x128xf32>
    %711 = tpu.matmul %709, %710, %cst_628 {dimension_numbers = #tpu.dot_dimension_numbers<[1], [0], [0], [1], [0, 0, 1, 1], [], []>} : vector<128x2048xbf16>, vector<2048x128xbf16>, vector<128x128xf32> -> vector<128x128xf32>
    %c0_629 = arith.constant 0 : index
    %c0_630 = arith.constant 0 : index
    %712 = vector.load %arg4[%c0_629, %c0_630] : memref<1x128xf32, #tpu.memory_space<vmem>>, vector<1x128xf32>
    %713 = vector.broadcast %712 : vector<1x128xf32> to vector<128x128xf32>
    %714 = arith.addf %711, %713 : vector<128x128xf32>
    %cst_631 = arith.constant dense<0.000000e+00> : vector<128xf32>
    %715 = vector.multi_reduction <add>, %714, %cst_631 [0] : vector<128x128xf32> to vector<128xf32>
    %716 = vector.shape_cast %715 : vector<128xf32> to vector<1x128xf32>
    %cst_632 = arith.constant 7.812500e-03 : f32
    %717 = vector.broadcast %cst_632 : f32 to vector<1x128xf32>
    %718 = arith.mulf %716, %717 : vector<1x128xf32>
    %719 = vector.broadcast %718 : vector<1x128xf32> to vector<128x128xf32>
    %720 = arith.subf %714, %719 : vector<128x128xf32>
    %721 = arith.mulf %720, %720 : vector<128x128xf32>
    %cst_633 = arith.constant dense<0.000000e+00> : vector<128xf32>
    %722 = vector.multi_reduction <add>, %721, %cst_633 [0] : vector<128x128xf32> to vector<128xf32>
    %723 = vector.shape_cast %722 : vector<128xf32> to vector<1x128xf32>
    %cst_634 = arith.constant 7.812500e-03 : f32
    %724 = vector.broadcast %cst_634 : f32 to vector<1x128xf32>
    %725 = arith.mulf %723, %724 : vector<1x128xf32>
    %cst_635 = arith.constant 9.99999974E-6 : f32
    %726 = vector.broadcast %cst_635 : f32 to vector<1x128xf32>
    %727 = arith.addf %725, %726 : vector<1x128xf32>
    %728 = math.rsqrt %727 : vector<1x128xf32>
    %729 = vector.broadcast %728 : vector<1x128xf32> to vector<128x128xf32>
    %730 = arith.mulf %720, %729 : vector<128x128xf32>
    %cst_636 = arith.constant 0.000000e+00 : f32
    %731 = vector.broadcast %cst_636 : f32 to vector<128x128xf32>
    %732 = arith.cmpf ogt, %730, %731 : vector<128x128xf32>
    %cst_637 = arith.constant 2.000000e-01 : f32
    %733 = vector.broadcast %cst_637 : f32 to vector<128x128xf32>
    %734 = arith.mulf %733, %730 : vector<128x128xf32>
    %735 = arith.select %732, %730, %734 : vector<128x128xi1>, vector<128x128xf32>
    %cst_638 = arith.constant 0.000000e+00 : f32
    %736 = vector.broadcast %cst_638 : f32 to vector<8x5x5x128xf32>
    %c0_639 = arith.constant 0 : index
    %c0_640 = arith.constant 0 : index
    %c0_641 = arith.constant 0 : index
    %c0_642 = arith.constant 0 : index
    %737 = vector.load %arg12[%c0_639, %c0_640, %c0_641, %c0_642] : memref<8x5x5x128xf32, #tpu.memory_space<vmem>>, vector<8x5x5x128xf32>
    tpu.vector_store %arg12[%c0_639, %c0_640, %c0_641, %c0_642], %736 {strides = array<i32>} : memref<8x5x5x128xf32, #tpu.memory_space<vmem>>, vector<8x5x5x128xf32>,
    %738 = vector.extract_strided_slice %735 {offsets = [0, 0], sizes = [16, 128], strides = [1, 1]} : vector<128x128xf32> to vector<16x128xf32>
    %739 = vector.shape_cast %738 : vector<16x128xf32> to vector<4x4x128xf32>
    %c0_643 = arith.constant 0 : index
    %c1_644 = arith.constant 1 : index
    %c1_645 = arith.constant 1 : index
    %c0_646 = arith.constant 0 : index
    %740 = vector.load %arg12[%c0_643, %c1_644, %c1_645, %c0_646] : memref<8x5x5x128xf32, #tpu.memory_space<vmem>>, vector<1x4x4x128xf32>
    %741 = vector.shape_cast %740 : vector<1x4x4x128xf32> to vector<4x4x128xf32>
    %742 = vector.shape_cast %739 : vector<4x4x128xf32> to vector<1x4x4x128xf32>
    tpu.vector_store %arg12[%c0_643, %c1_644, %c1_645, %c0_646], %742 {strides = array<i32>} : memref<8x5x5x128xf32, #tpu.memory_space<vmem>>, vector<1x4x4x128xf32>,
    %743 = vector.extract_strided_slice %735 {offsets = [16, 0], sizes = [16, 128], strides = [1, 1]} : vector<128x128xf32> to vector<16x128xf32>
    %744 = vector.shape_cast %743 : vector<16x128xf32> to vector<4x4x128xf32>
    %c1_647 = arith.constant 1 : index
    %c1_648 = arith.constant 1 : index
    %c1_649 = arith.constant 1 : index
    %c0_650 = arith.constant 0 : index
    %745 = vector.load %arg12[%c1_647, %c1_648, %c1_649, %c0_650] : memref<8x5x5x128xf32, #tpu.memory_space<vmem>>, vector<1x4x4x128xf32>
    %746 = vector.shape_cast %745 : vector<1x4x4x128xf32> to vector<4x4x128xf32>
    %747 = vector.shape_cast %744 : vector<4x4x128xf32> to vector<1x4x4x128xf32>
    tpu.vector_store %arg12[%c1_647, %c1_648, %c1_649, %c0_650], %747 {strides = array<i32>} : memref<8x5x5x128xf32, #tpu.memory_space<vmem>>, vector<1x4x4x128xf32>,
    %748 = vector.extract_strided_slice %735 {offsets = [32, 0], sizes = [16, 128], strides = [1, 1]} : vector<128x128xf32> to vector<16x128xf32>
    %749 = vector.shape_cast %748 : vector<16x128xf32> to vector<4x4x128xf32>
    %c2_651 = arith.constant 2 : index
    %c1_652 = arith.constant 1 : index
    %c1_653 = arith.constant 1 : index
    %c0_654 = arith.constant 0 : index
    %750 = vector.load %arg12[%c2_651, %c1_652, %c1_653, %c0_654] : memref<8x5x5x128xf32, #tpu.memory_space<vmem>>, vector<1x4x4x128xf32>
    %751 = vector.shape_cast %750 : vector<1x4x4x128xf32> to vector<4x4x128xf32>
    %752 = vector.shape_cast %749 : vector<4x4x128xf32> to vector<1x4x4x128xf32>
    tpu.vector_store %arg12[%c2_651, %c1_652, %c1_653, %c0_654], %752 {strides = array<i32>} : memref<8x5x5x128xf32, #tpu.memory_space<vmem>>, vector<1x4x4x128xf32>,
    %753 = vector.extract_strided_slice %735 {offsets = [48, 0], sizes = [16, 128], strides = [1, 1]} : vector<128x128xf32> to vector<16x128xf32>
    %754 = vector.shape_cast %753 : vector<16x128xf32> to vector<4x4x128xf32>
    %c3_655 = arith.constant 3 : index
    %c1_656 = arith.constant 1 : index
    %c1_657 = arith.constant 1 : index
    %c0_658 = arith.constant 0 : index
    %755 = vector.load %arg12[%c3_655, %c1_656, %c1_657, %c0_658] : memref<8x5x5x128xf32, #tpu.memory_space<vmem>>, vector<1x4x4x128xf32>
    %756 = vector.shape_cast %755 : vector<1x4x4x128xf32> to vector<4x4x128xf32>
    %757 = vector.shape_cast %754 : vector<4x4x128xf32> to vector<1x4x4x128xf32>
    tpu.vector_store %arg12[%c3_655, %c1_656, %c1_657, %c0_658], %757 {strides = array<i32>} : memref<8x5x5x128xf32, #tpu.memory_space<vmem>>, vector<1x4x4x128xf32>,
    %758 = vector.extract_strided_slice %735 {offsets = [64, 0], sizes = [16, 128], strides = [1, 1]} : vector<128x128xf32> to vector<16x128xf32>
    %759 = vector.shape_cast %758 : vector<16x128xf32> to vector<4x4x128xf32>
    %c4_659 = arith.constant 4 : index
    %c1_660 = arith.constant 1 : index
    %c1_661 = arith.constant 1 : index
    %c0_662 = arith.constant 0 : index
    %760 = vector.load %arg12[%c4_659, %c1_660, %c1_661, %c0_662] : memref<8x5x5x128xf32, #tpu.memory_space<vmem>>, vector<1x4x4x128xf32>
    %761 = vector.shape_cast %760 : vector<1x4x4x128xf32> to vector<4x4x128xf32>
    %762 = vector.shape_cast %759 : vector<4x4x128xf32> to vector<1x4x4x128xf32>
    tpu.vector_store %arg12[%c4_659, %c1_660, %c1_661, %c0_662], %762 {strides = array<i32>} : memref<8x5x5x128xf32, #tpu.memory_space<vmem>>, vector<1x4x4x128xf32>,
    %763 = vector.extract_strided_slice %735 {offsets = [80, 0], sizes = [16, 128], strides = [1, 1]} : vector<128x128xf32> to vector<16x128xf32>
    %764 = vector.shape_cast %763 : vector<16x128xf32> to vector<4x4x128xf32>
    %c5_663 = arith.constant 5 : index
    %c1_664 = arith.constant 1 : index
    %c1_665 = arith.constant 1 : index
    %c0_666 = arith.constant 0 : index
    %765 = vector.load %arg12[%c5_663, %c1_664, %c1_665, %c0_666] : memref<8x5x5x128xf32, #tpu.memory_space<vmem>>, vector<1x4x4x128xf32>
    %766 = vector.shape_cast %765 : vector<1x4x4x128xf32> to vector<4x4x128xf32>
    %767 = vector.shape_cast %764 : vector<4x4x128xf32> to vector<1x4x4x128xf32>
    tpu.vector_store %arg12[%c5_663, %c1_664, %c1_665, %c0_666], %767 {strides = array<i32>} : memref<8x5x5x128xf32, #tpu.memory_space<vmem>>, vector<1x4x4x128xf32>,
    %768 = vector.extract_strided_slice %735 {offsets = [96, 0], sizes = [16, 128], strides = [1, 1]} : vector<128x128xf32> to vector<16x128xf32>
    %769 = vector.shape_cast %768 : vector<16x128xf32> to vector<4x4x128xf32>
    %c6_667 = arith.constant 6 : index
    %c1_668 = arith.constant 1 : index
    %c1_669 = arith.constant 1 : index
    %c0_670 = arith.constant 0 : index
    %770 = vector.load %arg12[%c6_667, %c1_668, %c1_669, %c0_670] : memref<8x5x5x128xf32, #tpu.memory_space<vmem>>, vector<1x4x4x128xf32>
    %771 = vector.shape_cast %770 : vector<1x4x4x128xf32> to vector<4x4x128xf32>
    %772 = vector.shape_cast %769 : vector<4x4x128xf32> to vector<1x4x4x128xf32>
    tpu.vector_store %arg12[%c6_667, %c1_668, %c1_669, %c0_670], %772 {strides = array<i32>} : memref<8x5x5x128xf32, #tpu.memory_space<vmem>>, vector<1x4x4x128xf32>,
    %773 = vector.extract_strided_slice %735 {offsets = [112, 0], sizes = [16, 128], strides = [1, 1]} : vector<128x128xf32> to vector<16x128xf32>
    %774 = vector.shape_cast %773 : vector<16x128xf32> to vector<4x4x128xf32>
    %c7_671 = arith.constant 7 : index
    %c1_672 = arith.constant 1 : index
    %c1_673 = arith.constant 1 : index
    %c0_674 = arith.constant 0 : index
    %775 = vector.load %arg12[%c7_671, %c1_672, %c1_673, %c0_674] : memref<8x5x5x128xf32, #tpu.memory_space<vmem>>, vector<1x4x4x128xf32>
    %776 = vector.shape_cast %775 : vector<1x4x4x128xf32> to vector<4x4x128xf32>
    %777 = vector.shape_cast %774 : vector<4x4x128xf32> to vector<1x4x4x128xf32>
    tpu.vector_store %arg12[%c7_671, %c1_672, %c1_673, %c0_674], %777 {strides = array<i32>} : memref<8x5x5x128xf32, #tpu.memory_space<vmem>>, vector<1x4x4x128xf32>,
    %c3_675 = arith.constant 3 : index
    %c0_676 = arith.constant 0 : index
    %c0_677 = arith.constant 0 : index
    %c0_678 = arith.constant 0 : index
    %778 = vector.load %arg12[%c3_675, %c0_676, %c0_677, %c0_678] : memref<8x5x5x128xf32, #tpu.memory_space<vmem>>, vector<1x4x4x128xf32>
    %779 = vector.shape_cast %778 : vector<1x4x4x128xf32> to vector<4x4x128xf32>
    %780 = vector.shape_cast %779 : vector<4x4x128xf32> to vector<16x128xf32>
    %781 = arith.truncf %780 : vector<16x128xf32> to vector<16x128xbf16>
    %c2_679 = arith.constant 2 : index
    %c0_680 = arith.constant 0 : index
    %c1_681 = arith.constant 1 : index
    %c0_682 = arith.constant 0 : index
    %782 = vector.load %arg12[%c2_679, %c0_680, %c1_681, %c0_682] : memref<8x5x5x128xf32, #tpu.memory_space<vmem>>, vector<1x4x4x128xf32>
    %783 = vector.shape_cast %782 : vector<1x4x4x128xf32> to vector<4x4x128xf32>
    %784 = vector.shape_cast %783 : vector<4x4x128xf32> to vector<16x128xf32>
    %785 = arith.truncf %784 : vector<16x128xf32> to vector<16x128xbf16>
    %c3_683 = arith.constant 3 : index
    %c0_684 = arith.constant 0 : index
    %c1_685 = arith.constant 1 : index
    %c0_686 = arith.constant 0 : index
    %786 = vector.load %arg12[%c3_683, %c0_684, %c1_685, %c0_686] : memref<8x5x5x128xf32, #tpu.memory_space<vmem>>, vector<1x4x4x128xf32>
    %787 = vector.shape_cast %786 : vector<1x4x4x128xf32> to vector<4x4x128xf32>
    %788 = vector.shape_cast %787 : vector<4x4x128xf32> to vector<16x128xf32>
    %789 = arith.truncf %788 : vector<16x128xf32> to vector<16x128xbf16>
    %c1_687 = arith.constant 1 : index
    %c1_688 = arith.constant 1 : index
    %c0_689 = arith.constant 0 : index
    %c0_690 = arith.constant 0 : index
    %790 = vector.load %arg12[%c1_687, %c1_688, %c0_689, %c0_690] : memref<8x5x5x128xf32, #tpu.memory_space<vmem>>, vector<1x4x4x128xf32>
    %791 = vector.shape_cast %790 : vector<1x4x4x128xf32> to vector<4x4x128xf32>
    %792 = vector.shape_cast %791 : vector<4x4x128xf32> to vector<16x128xf32>
    %793 = arith.truncf %792 : vector<16x128xf32> to vector<16x128xbf16>
    %c0_691 = arith.constant 0 : index
    %c1_692 = arith.constant 1 : index
    %c1_693 = arith.constant 1 : index
    %c0_694 = arith.constant 0 : index
    %794 = vector.load %arg12[%c0_691, %c1_692, %c1_693, %c0_694] : memref<8x5x5x128xf32, #tpu.memory_space<vmem>>, vector<1x4x4x128xf32>
    %795 = vector.shape_cast %794 : vector<1x4x4x128xf32> to vector<4x4x128xf32>
    %796 = vector.shape_cast %795 : vector<4x4x128xf32> to vector<16x128xf32>
    %797 = arith.truncf %796 : vector<16x128xf32> to vector<16x128xbf16>
    %c1_695 = arith.constant 1 : index
    %c1_696 = arith.constant 1 : index
    %c1_697 = arith.constant 1 : index
    %c0_698 = arith.constant 0 : index
    %798 = vector.load %arg12[%c1_695, %c1_696, %c1_697, %c0_698] : memref<8x5x5x128xf32, #tpu.memory_space<vmem>>, vector<1x4x4x128xf32>
    %799 = vector.shape_cast %798 : vector<1x4x4x128xf32> to vector<4x4x128xf32>
    %800 = vector.shape_cast %799 : vector<4x4x128xf32> to vector<16x128xf32>
    %801 = arith.truncf %800 : vector<16x128xf32> to vector<16x128xbf16>
    %c3_699 = arith.constant 3 : index
    %c1_700 = arith.constant 1 : index
    %c0_701 = arith.constant 0 : index
    %c0_702 = arith.constant 0 : index
    %802 = vector.load %arg12[%c3_699, %c1_700, %c0_701, %c0_702] : memref<8x5x5x128xf32, #tpu.memory_space<vmem>>, vector<1x4x4x128xf32>
    %803 = vector.shape_cast %802 : vector<1x4x4x128xf32> to vector<4x4x128xf32>
    %804 = vector.shape_cast %803 : vector<4x4x128xf32> to vector<16x128xf32>
    %805 = arith.truncf %804 : vector<16x128xf32> to vector<16x128xbf16>
    %c2_703 = arith.constant 2 : index
    %c1_704 = arith.constant 1 : index
    %c1_705 = arith.constant 1 : index
    %c0_706 = arith.constant 0 : index
    %806 = vector.load %arg12[%c2_703, %c1_704, %c1_705, %c0_706] : memref<8x5x5x128xf32, #tpu.memory_space<vmem>>, vector<1x4x4x128xf32>
    %807 = vector.shape_cast %806 : vector<1x4x4x128xf32> to vector<4x4x128xf32>
    %808 = vector.shape_cast %807 : vector<4x4x128xf32> to vector<16x128xf32>
    %809 = arith.truncf %808 : vector<16x128xf32> to vector<16x128xbf16>
    %c3_707 = arith.constant 3 : index
    %c1_708 = arith.constant 1 : index
    %c1_709 = arith.constant 1 : index
    %c0_710 = arith.constant 0 : index
    %810 = vector.load %arg12[%c3_707, %c1_708, %c1_709, %c0_710] : memref<8x5x5x128xf32, #tpu.memory_space<vmem>>, vector<1x4x4x128xf32>
    %811 = vector.shape_cast %810 : vector<1x4x4x128xf32> to vector<4x4x128xf32>
    %812 = vector.shape_cast %811 : vector<4x4x128xf32> to vector<16x128xf32>
    %813 = arith.truncf %812 : vector<16x128xf32> to vector<16x128xbf16>
    %814 = tpu.concatenate %781, %785, %789, %793, %797, %801, %805, %809, %813 in 1 : vector<16x128xbf16>, vector<16x128xbf16>, vector<16x128xbf16>, vector<16x128xbf16>, vector<16x128xbf16>, vector<16x128xbf16>, vector<16x128xbf16>, vector<16x128xbf16>, vector<16x128xbf16> -> vector<16x1152xbf16>
    %c7_711 = arith.constant 7 : index
    %c0_712 = arith.constant 0 : index
    %c0_713 = arith.constant 0 : index
    %c0_714 = arith.constant 0 : index
    %815 = vector.load %arg12[%c7_711, %c0_712, %c0_713, %c0_714] : memref<8x5x5x128xf32, #tpu.memory_space<vmem>>, vector<1x4x4x128xf32>
    %816 = vector.shape_cast %815 : vector<1x4x4x128xf32> to vector<4x4x128xf32>
    %817 = vector.shape_cast %816 : vector<4x4x128xf32> to vector<16x128xf32>
    %818 = arith.truncf %817 : vector<16x128xf32> to vector<16x128xbf16>
    %c6_715 = arith.constant 6 : index
    %c0_716 = arith.constant 0 : index
    %c1_717 = arith.constant 1 : index
    %c0_718 = arith.constant 0 : index
    %819 = vector.load %arg12[%c6_715, %c0_716, %c1_717, %c0_718] : memref<8x5x5x128xf32, #tpu.memory_space<vmem>>, vector<1x4x4x128xf32>
    %820 = vector.shape_cast %819 : vector<1x4x4x128xf32> to vector<4x4x128xf32>
    %821 = vector.shape_cast %820 : vector<4x4x128xf32> to vector<16x128xf32>
    %822 = arith.truncf %821 : vector<16x128xf32> to vector<16x128xbf16>
    %c7_719 = arith.constant 7 : index
    %c0_720 = arith.constant 0 : index
    %c1_721 = arith.constant 1 : index
    %c0_722 = arith.constant 0 : index
    %823 = vector.load %arg12[%c7_719, %c0_720, %c1_721, %c0_722] : memref<8x5x5x128xf32, #tpu.memory_space<vmem>>, vector<1x4x4x128xf32>
    %824 = vector.shape_cast %823 : vector<1x4x4x128xf32> to vector<4x4x128xf32>
    %825 = vector.shape_cast %824 : vector<4x4x128xf32> to vector<16x128xf32>
    %826 = arith.truncf %825 : vector<16x128xf32> to vector<16x128xbf16>
    %c5_723 = arith.constant 5 : index
    %c1_724 = arith.constant 1 : index
    %c0_725 = arith.constant 0 : index
    %c0_726 = arith.constant 0 : index
    %827 = vector.load %arg12[%c5_723, %c1_724, %c0_725, %c0_726] : memref<8x5x5x128xf32, #tpu.memory_space<vmem>>, vector<1x4x4x128xf32>
    %828 = vector.shape_cast %827 : vector<1x4x4x128xf32> to vector<4x4x128xf32>
    %829 = vector.shape_cast %828 : vector<4x4x128xf32> to vector<16x128xf32>
    %830 = arith.truncf %829 : vector<16x128xf32> to vector<16x128xbf16>
    %c4_727 = arith.constant 4 : index
    %c1_728 = arith.constant 1 : index
    %c1_729 = arith.constant 1 : index
    %c0_730 = arith.constant 0 : index
    %831 = vector.load %arg12[%c4_727, %c1_728, %c1_729, %c0_730] : memref<8x5x5x128xf32, #tpu.memory_space<vmem>>, vector<1x4x4x128xf32>
    %832 = vector.shape_cast %831 : vector<1x4x4x128xf32> to vector<4x4x128xf32>
    %833 = vector.shape_cast %832 : vector<4x4x128xf32> to vector<16x128xf32>
    %834 = arith.truncf %833 : vector<16x128xf32> to vector<16x128xbf16>
    %c5_731 = arith.constant 5 : index
    %c1_732 = arith.constant 1 : index
    %c1_733 = arith.constant 1 : index
    %c0_734 = arith.constant 0 : index
    %835 = vector.load %arg12[%c5_731, %c1_732, %c1_733, %c0_734] : memref<8x5x5x128xf32, #tpu.memory_space<vmem>>, vector<1x4x4x128xf32>
    %836 = vector.shape_cast %835 : vector<1x4x4x128xf32> to vector<4x4x128xf32>
    %837 = vector.shape_cast %836 : vector<4x4x128xf32> to vector<16x128xf32>
    %838 = arith.truncf %837 : vector<16x128xf32> to vector<16x128xbf16>
    %c7_735 = arith.constant 7 : index
    %c1_736 = arith.constant 1 : index
    %c0_737 = arith.constant 0 : index
    %c0_738 = arith.constant 0 : index
    %839 = vector.load %arg12[%c7_735, %c1_736, %c0_737, %c0_738] : memref<8x5x5x128xf32, #tpu.memory_space<vmem>>, vector<1x4x4x128xf32>
    %840 = vector.shape_cast %839 : vector<1x4x4x128xf32> to vector<4x4x128xf32>
    %841 = vector.shape_cast %840 : vector<4x4x128xf32> to vector<16x128xf32>
    %842 = arith.truncf %841 : vector<16x128xf32> to vector<16x128xbf16>
    %c6_739 = arith.constant 6 : index
    %c1_740 = arith.constant 1 : index
    %c1_741 = arith.constant 1 : index
    %c0_742 = arith.constant 0 : index
    %843 = vector.load %arg12[%c6_739, %c1_740, %c1_741, %c0_742] : memref<8x5x5x128xf32, #tpu.memory_space<vmem>>, vector<1x4x4x128xf32>
    %844 = vector.shape_cast %843 : vector<1x4x4x128xf32> to vector<4x4x128xf32>
    %845 = vector.shape_cast %844 : vector<4x4x128xf32> to vector<16x128xf32>
    %846 = arith.truncf %845 : vector<16x128xf32> to vector<16x128xbf16>
    %c7_743 = arith.constant 7 : index
    %c1_744 = arith.constant 1 : index
    %c1_745 = arith.constant 1 : index
    %c0_746 = arith.constant 0 : index
    %847 = vector.load %arg12[%c7_743, %c1_744, %c1_745, %c0_746] : memref<8x5x5x128xf32, #tpu.memory_space<vmem>>, vector<1x4x4x128xf32>
    %848 = vector.shape_cast %847 : vector<1x4x4x128xf32> to vector<4x4x128xf32>
    %849 = vector.shape_cast %848 : vector<4x4x128xf32> to vector<16x128xf32>
    %850 = arith.truncf %849 : vector<16x128xf32> to vector<16x128xbf16>
    %851 = tpu.concatenate %818, %822, %826, %830, %834, %838, %842, %846, %850 in 1 : vector<16x128xbf16>, vector<16x128xbf16>, vector<16x128xbf16>, vector<16x128xbf16>, vector<16x128xbf16>, vector<16x128xbf16>, vector<16x128xbf16>, vector<16x128xbf16>, vector<16x128xbf16> -> vector<16x1152xbf16>
    %852 = tpu.concatenate %814, %851 in 0 : vector<16x1152xbf16>, vector<16x1152xbf16> -> vector<32x1152xbf16>
    %c0_747 = arith.constant 0 : index
    %c0_748 = arith.constant 0 : index
    %853 = vector.load %arg5[%c0_747, %c0_748] : memref<1152x128xbf16, #tpu.memory_space<vmem>>, vector<1152x128xbf16>
    %cst_749 = arith.constant dense<0.000000e+00> : vector<32x128xf32>
    %854 = tpu.matmul %852, %853, %cst_749 {dimension_numbers = #tpu.dot_dimension_numbers<[1], [0], [0], [1], [0, 0, 1, 1], [], []>} : vector<32x1152xbf16>, vector<1152x128xbf16>, vector<32x128xf32> -> vector<32x128xf32>
    %c0_750 = arith.constant 0 : index
    %c0_751 = arith.constant 0 : index
    %855 = vector.load %arg6[%c0_750, %c0_751] : memref<1x128xf32, #tpu.memory_space<vmem>>, vector<1x128xf32>
    %856 = vector.broadcast %855 : vector<1x128xf32> to vector<32x128xf32>
    %857 = arith.addf %854, %856 : vector<32x128xf32>
    %cst_752 = arith.constant dense<0.000000e+00> : vector<128xf32>
    %858 = vector.multi_reduction <add>, %857, %cst_752 [0] : vector<32x128xf32> to vector<128xf32>
    %859 = vector.shape_cast %858 : vector<128xf32> to vector<1x128xf32>
    %cst_753 = arith.constant 3.125000e-02 : f32
    %860 = vector.broadcast %cst_753 : f32 to vector<1x128xf32>
    %861 = arith.mulf %859, %860 : vector<1x128xf32>
    %862 = vector.broadcast %861 : vector<1x128xf32> to vector<32x128xf32>
    %863 = arith.subf %857, %862 : vector<32x128xf32>
    %864 = arith.mulf %863, %863 : vector<32x128xf32>
    %cst_754 = arith.constant dense<0.000000e+00> : vector<128xf32>
    %865 = vector.multi_reduction <add>, %864, %cst_754 [0] : vector<32x128xf32> to vector<128xf32>
    %866 = vector.shape_cast %865 : vector<128xf32> to vector<1x128xf32>
    %cst_755 = arith.constant 3.125000e-02 : f32
    %867 = vector.broadcast %cst_755 : f32 to vector<1x128xf32>
    %868 = arith.mulf %866, %867 : vector<1x128xf32>
    %cst_756 = arith.constant 9.99999974E-6 : f32
    %869 = vector.broadcast %cst_756 : f32 to vector<1x128xf32>
    %870 = arith.addf %868, %869 : vector<1x128xf32>
    %871 = math.rsqrt %870 : vector<1x128xf32>
    %872 = vector.broadcast %871 : vector<1x128xf32> to vector<32x128xf32>
    %873 = arith.mulf %863, %872 : vector<32x128xf32>
    %cst_757 = arith.constant 0.000000e+00 : f32
    %874 = vector.broadcast %cst_757 : f32 to vector<32x128xf32>
    %875 = arith.cmpf ogt, %873, %874 : vector<32x128xf32>
    %cst_758 = arith.constant 2.000000e-01 : f32
    %876 = vector.broadcast %cst_758 : f32 to vector<32x128xf32>
    %877 = arith.mulf %876, %873 : vector<32x128xf32>
    %878 = arith.select %875, %873, %877 : vector<32x128xi1>, vector<32x128xf32>
    %c0_759 = arith.constant 0 : index
    %c0_760 = arith.constant 0 : index
    %879 = vector.load %arg9[%c0_759, %c0_760] : memref<32x128xf32, #tpu.memory_space<vmem>>, vector<32x128xf32>
    tpu.vector_store %arg9[%c0_759, %c0_760], %878 {strides = array<i32>} : memref<32x128xf32, #tpu.memory_space<vmem>>, vector<32x128xf32>,
    %880 = vector.shape_cast %878 : vector<32x128xf32> to vector<2x16x128xf32>
    %c0_761 = arith.constant 0 : index
    %c0_762 = arith.constant 0 : index
    %881 = vector.load %arg7[%c0_761, %c0_762] : memref<16x128xf32, #tpu.memory_space<vmem>>, vector<16x128xf32>
    %882 = vector.shape_cast %881 : vector<16x128xf32> to vector<1x16x128xf32>
    %883 = vector.broadcast %882 : vector<1x16x128xf32> to vector<2x16x128xf32>
    %884 = arith.mulf %880, %883 : vector<2x16x128xf32>
    %cst_763 = arith.constant dense<0.000000e+00> : vector<2x16xf32>
    %885 = vector.multi_reduction <add>, %884, %cst_763 [2] : vector<2x16x128xf32> to vector<2x16xf32>
    %cst_764 = arith.constant dense<0.000000e+00> : vector<2xf32>
    %886 = vector.multi_reduction <add>, %885, %cst_764 [1] : vector<2x16xf32> to vector<2xf32>
    %887 = vector.shape_cast %886 : vector<2xf32> to vector<2x1xf32>
    %c0_765 = arith.constant 0 : index
    %c0_766 = arith.constant 0 : index
    %888 = vector.load %arg8[%c0_765, %c0_766] : memref<1x1xf32, #tpu.memory_space<vmem>>, vector<1x1xf32>
    %889 = vector.broadcast %888 : vector<1x1xf32> to vector<2x1xf32>
    %890 = arith.addf %887, %889 : vector<2x1xf32>
    %891 = arith.negf %890 : vector<2x1xf32>
    %892 = math.exp %891 : vector<2x1xf32>
    %cst_767 = arith.constant 1.000000e+00 : f32
    %893 = vector.broadcast %cst_767 : f32 to vector<2x1xf32>
    %894 = arith.addf %893, %892 : vector<2x1xf32>
    %895 = arith.divf %893, %894 : vector<2x1xf32>
    %c0_768 = arith.constant 0 : index
    %c0_769 = arith.constant 0 : index
    %896 = vector.load %arg10[%c0_768, %c0_769] : memref<2x1xf32, #tpu.memory_space<vmem>>, vector<2x1xf32>
    tpu.vector_store %arg10[%c0_768, %c0_769], %895 {strides = array<i32>} : memref<2x1xf32, #tpu.memory_space<vmem>>, vector<2x1xf32>,
    return
  }
}

</mosaic_0001>

<llo_original>
// kernel: dc_discriminator_forward.1
$region0: #{dc_discriminator_forward.1}
  #allocation0 [shape = 'u32[]', space=smem, size = 0x4, offset = 0x4, fixed_abs, tag = 'smem constant byte address 0x4 - core index']
  #allocation1 [shape = 'u32[144,128]{1,0:T(1,128)}', space=vmem, size = 0x12000, scoped, tag = 'internal scratch']
  #allocation2 [shape = 'f32[32,6,6,128]{3,2,1,0:T(8,128)}', space=vmem, size = 0xc0000, scoped, tag = 'scratch operand']
  #allocation3 [shape = 'f32[8,5,5,128]{3,2,1,0:T(8,128)}', space=vmem, size = 0x28000, scoped, tag = 'scratch operand']
  #allocation4 [shape = 'f32[1,1]{1,0:T(1,128)S(1)}', space=vmem, size = 0x200, scoped, tag = 'scoped memory for dc_discriminator_forward.1']
  %s0 = inlined_call_operand.vmem [shape: bf16[512,128], index: 0, kind: input, shape index: {}]
  %s1 = inlined_call_operand.vmem [shape: bf16[128,128], index: 1, kind: input, shape index: {}]
  %s2 = inlined_call_operand.vmem [shape: f32[1,128], index: 2, kind: input, shape index: {}]
  %s3 = inlined_call_operand.vmem [shape: bf16[2048,128], index: 3, kind: input, shape index: {}]
  %s4 = inlined_call_operand.vmem [shape: f32[1,128], index: 4, kind: input, shape index: {}]
  %s5 = inlined_call_operand.vmem [shape: bf16[1152,128], index: 5, kind: input, shape index: {}]
  %s6 = inlined_call_operand.vmem [shape: f32[1,128], index: 6, kind: input, shape index: {}]
  %s7 = inlined_call_operand.vmem [shape: f32[16,128], index: 7, kind: input, shape index: {}]
  %s8 = inlined_call_operand.<no memory space> [shape: f32[1,1], index: 8, kind: input, shape index: {}]
  %s9 = inlined_call_operand.vmem [shape: f32[32,128], index: 9, kind: output, shape index: {0}]
  %s10 = inlined_call_operand.vmem [shape: f32[2,1], index: 10, kind: output, shape index: {1}]
  %11 = xla_tuple %s9, %s10
  %s12 = sld [smem:[#allocation0]]
  $region54: #{dc_discriminator_forward.1} parent=0
    _
  %s14 = ssub.s32 1, %s12
  %s15 = scalar_select 0, %s14, %s12
  %v16 = vstv %s8
  %17 = vst [vmem:[#allocation4] sm:$0x1] %v16
  // Predicated region
  $region2: #{dc_discriminator_forward.1} parent=0 // pred_check
    _
  $region3: #{dc_discriminator_forward.1} parent=0 // pred_check_branch
    %19 = sbr.rel (0) target = $region5
  $region4: #{dc_discriminator_forward.1} parent=0 // pred_region
    _
  $region5: #{dc_discriminator_forward.1} parent=0 // pred_fallthru
    _
  // Predicated region
  $region6: #{dc_discriminator_forward.1} parent=0 // pred_check
    _
  $region7: #{dc_discriminator_forward.1} parent=0 // pred_check_branch
    %21 = sbr.rel (0) target = $region9
  $region8: #{dc_discriminator_forward.1} parent=0 // pred_region
    _
  $region9: #{dc_discriminator_forward.1} parent=0 // pred_fallthru
    _
  // Predicated region
  $region10: #{dc_discriminator_forward.1} parent=0 // pred_check
    _
  $region11: #{dc_discriminator_forward.1} parent=0 // pred_check_branch
    %23 = sbr.rel (0) target = $region13
  $region12: #{dc_discriminator_forward.1} parent=0 // pred_region
    _
  $region13: #{dc_discriminator_forward.1} parent=0 // pred_fallthru
    _
  // Predicated region
  $region14: #{dc_discriminator_forward.1} parent=0 // pred_check
    _
  $region15: #{dc_discriminator_forward.1} parent=0 // pred_check_branch
    %25 = sbr.rel (0) target = $region17
  $region16: #{dc_discriminator_forward.1} parent=0 // pred_region
    _
  $region17: #{dc_discriminator_forward.1} parent=0 // pred_fallthru
    _
  // Predicated region
  $region18: #{dc_discriminator_forward.1} parent=0 // pred_check
    _
  $region19: #{dc_discriminator_forward.1} parent=0 // pred_check_branch
    %27 = sbr.rel (0) target = $region21
  $region20: #{dc_discriminator_forward.1} parent=0 // pred_region
    _
  $region21: #{dc_discriminator_forward.1} parent=0 // pred_fallthru
    _
  // Predicated region
  $region22: #{dc_discriminator_forward.1} parent=0 // pred_check
    _
  $region23: #{dc_discriminator_forward.1} parent=0 // pred_check_branch
    %29 = sbr.rel (0) target = $region25
  $region24: #{dc_discriminator_forward.1} parent=0 // pred_region
    _
  $region25: #{dc_discriminator_forward.1} parent=0 // pred_fallthru
    _
  // Predicated region
  $region26: #{dc_discriminator_forward.1} parent=0 // pred_check
    _
  $region27: #{dc_discriminator_forward.1} parent=0 // pred_check_branch
    %31 = sbr.rel (0) target = $region29
  $region28: #{dc_discriminator_forward.1} parent=0 // pred_region
    _
  $region29: #{dc_discriminator_forward.1} parent=0 // pred_fallthru
    _
  // Predicated region
  $region30: #{dc_discriminator_forward.1} parent=0 // pred_check
    _
  $region31: #{dc_discriminator_forward.1} parent=0 // pred_check_branch
    %33 = sbr.rel (0) target = $region33
  $region32: #{dc_discriminator_forward.1} parent=0 // pred_region
    _
  $region33: #{dc_discriminator_forward.1} parent=0 // pred_fallthru
    _
  // Predicated region
  $region34: #{dc_discriminator_forward.1} parent=0 // pred_check
    _
  $region35: #{dc_discriminator_forward.1} parent=0 // pred_check_branch
    %35 = sbr.rel (0) target = $region37
  $region36: #{dc_discriminator_forward.1} parent=0 // pred_region
    _
  $region37: #{dc_discriminator_forward.1} parent=0 // pred_fallthru
    _
  %v37 = vld [vmem:[%s0] sm:$0xf]
  %v38 = vld [vmem:[%s0 + $0x4] sm:$0xf]
  %v39 = vld [vmem:[%s0 + $0x8] sm:$0xf]
  %v40 = vld [vmem:[%s0 + $0xc] sm:$0xf]
  %v41 = vld [vmem:[%s0 + $0x10] sm:$0xf]
  %v42 = vld [vmem:[%s0 + $0x14] sm:$0xf]
  %v43 = vld [vmem:[%s0 + $0x18] sm:$0xf]
  %v44 = vld [vmem:[%s0 + $0x1c] sm:$0xf]
  %v45 = vld [vmem:[%s0 + $0x20] sm:$0xf]
  %v46 = vld [vmem:[%s0 + $0x24] sm:$0xf]
  %v47 = vld [vmem:[%s0 + $0x28] sm:$0xf]
  %v48 = vld [vmem:[%s0 + $0x2c] sm:$0xf]
  %v49 = vld [vmem:[%s0 + $0x30] sm:$0xf]
  %v50 = vld [vmem:[%s0 + $0x34] sm:$0xf]
  %v51 = vld [vmem:[%s0 + $0x38] sm:$0xf]
  %v52 = vld [vmem:[%s0 + $0x3c] sm:$0xf]
  %v53 = vld [vmem:[%s0 + $0x40] sm:$0xf]
  %v54 = vld [vmem:[%s0 + $0x44] sm:$0xf]
  %v55 = vld [vmem:[%s0 + $0x48] sm:$0xf]
  %v56 = vld [vmem:[%s0 + $0x4c] sm:$0xf]
  %v57 = vld [vmem:[%s0 + $0x50] sm:$0xf]
  %v58 = vld [vmem:[%s0 + $0x54] sm:$0xf]
  %v59 = vld [vmem:[%s0 + $0x58] sm:$0xf]
  %v60 = vld [vmem:[%s0 + $0x5c] sm:$0xf]
  %v61 = vld [vmem:[%s0 + $0x60] sm:$0xf]
  %v62 = vld [vmem:[%s0 + $0x64] sm:$0xf]
  %v63 = vld [vmem:[%s0 + $0x68] sm:$0xf]
  %v64 = vld [vmem:[%s0 + $0x6c] sm:$0xf]
  %v65 = vld [vmem:[%s0 + $0x70] sm:$0xf]
  %v66 = vld [vmem:[%s0 + $0x74] sm:$0xf]
  %v67 = vld [vmem:[%s0 + $0x78] sm:$0xf]
  %v68 = vld [vmem:[%s0 + $0x7c] sm:$0xf]
  %v69 = vld [vmem:[%s0 + $0x80] sm:$0xf]
  %v70 = vld [vmem:[%s0 + $0x84] sm:$0xf]
  %v71 = vld [vmem:[%s0 + $0x88] sm:$0xf]
  %v72 = vld [vmem:[%s0 + $0x8c] sm:$0xf]
  %v73 = vld [vmem:[%s0 + $0x90] sm:$0xf]
  %v74 = vld [vmem:[%s0 + $0x94] sm:$0xf]
  %v75 = vld [vmem:[%s0 + $0x98] sm:$0xf]
  %v76 = vld [vmem:[%s0 + $0x9c] sm:$0xf]
  %v77 = vld [vmem:[%s0 + $0xa0] sm:$0xf]
  %v78 = vld [vmem:[%s0 + $0xa4] sm:$0xf]
  %v79 = vld [vmem:[%s0 + $0xa8] sm:$0xf]
  %v80 = vld [vmem:[%s0 + $0xac] sm:$0xf]
  %v81 = vld [vmem:[%s0 + $0xb0] sm:$0xf]
  %v82 = vld [vmem:[%s0 + $0xb4] sm:$0xf]
  %v83 = vld [vmem:[%s0 + $0xb8] sm:$0xf]
  %v84 = vld [vmem:[%s0 + $0xbc] sm:$0xf]
  %v85 = vld [vmem:[%s0 + $0xc0] sm:$0xf]
  %v86 = vld [vmem:[%s0 + $0xc4] sm:$0xf]
  %v87 = vld [vmem:[%s0 + $0xc8] sm:$0xf]
  %v88 = vld [vmem:[%s0 + $0xcc] sm:$0xf]
  %v89 = vld [vmem:[%s0 + $0xd0] sm:$0xf]
  %v90 = vld [vmem:[%s0 + $0xd4] sm:$0xf]
  %v91 = vld [vmem:[%s0 + $0xd8] sm:$0xf]
  %v92 = vld [vmem:[%s0 + $0xdc] sm:$0xf]
  %v93 = vld [vmem:[%s0 + $0xe0] sm:$0xf]
  %v94 = vld [vmem:[%s0 + $0xe4] sm:$0xf]
  %v95 = vld [vmem:[%s0 + $0xe8] sm:$0xf]
  %v96 = vld [vmem:[%s0 + $0xec] sm:$0xf]
  %v97 = vld [vmem:[%s0 + $0xf0] sm:$0xf]
  %v98 = vld [vmem:[%s0 + $0xf4] sm:$0xf]
  %v99 = vld [vmem:[%s0 + $0xf8] sm:$0xf]
  %v100 = vld [vmem:[%s0 + $0xfc] sm:$0xf]
  %v101 = vld [vmem:[%s1] sm:$0xf]
  %v102 = vld [vmem:[%s1 + $0x4] sm:$0xf]
  %v103 = vld [vmem:[%s1 + $0x8] sm:$0xf]
  %v104 = vld [vmem:[%s1 + $0xc] sm:$0xf]
  %v105 = vld [vmem:[%s1 + $0x10] sm:$0xf]
  %v106 = vld [vmem:[%s1 + $0x14] sm:$0xf]
  %v107 = vld [vmem:[%s1 + $0x18] sm:$0xf]
  %v108 = vld [vmem:[%s1 + $0x1c] sm:$0xf]
  %v109 = vld [vmem:[%s1 + $0x20] sm:$0xf]
  %v110 = vld [vmem:[%s1 + $0x24] sm:$0xf]
  %v111 = vld [vmem:[%s1 + $0x28] sm:$0xf]
  %v112 = vld [vmem:[%s1 + $0x2c] sm:$0xf]
  %v113 = vld [vmem:[%s1 + $0x30] sm:$0xf]
  %v114 = vld [vmem:[%s1 + $0x34] sm:$0xf]
  %v115 = vld [vmem:[%s1 + $0x38] sm:$0xf]
  %v116 = vld [vmem:[%s1 + $0x3c] sm:$0xf]
  %v117 = vld [vmem:[%s2] sm:$0x1]
  %v119 = vlaneseq
  %v120 = vshrl.u32 %v119, 7
  %v121 = vsub.s32 0, %v120
  %v122 = vrot.slane %v117, %v121
  %v188 = vunpack.c.l.b16 %v37
  %v189 = vunpack.c.l.b16 %v38
  %v190 = vunpack.c.l.b16 %v39
  %v191 = vunpack.c.l.b16 %v40
  %v192 = vunpack.c.l.b16 %v41
  %v193 = vunpack.c.l.b16 %v42
  %v194 = vunpack.c.l.b16 %v43
  %v195 = vunpack.c.l.b16 %v44
  %v196 = vunpack.c.l.b16 %v45
  %v197 = vunpack.c.l.b16 %v46
  %v198 = vunpack.c.l.b16 %v47
  %v199 = vunpack.c.l.b16 %v48
  %v200 = vunpack.c.l.b16 %v49
  %v201 = vunpack.c.l.b16 %v50
  %v202 = vunpack.c.l.b16 %v51
  %v203 = vunpack.c.l.b16 %v52
  %v204 = vunpack.c.l.b16 %v53
  %v205 = vunpack.c.l.b16 %v54
  %v206 = vunpack.c.l.b16 %v55
  %v207 = vunpack.c.l.b16 %v56
  %v208 = vunpack.c.l.b16 %v57
  %v209 = vunpack.c.l.b16 %v58
  %v210 = vunpack.c.l.b16 %v59
  %v211 = vunpack.c.l.b16 %v60
  %v212 = vunpack.c.l.b16 %v61
  %v213 = vunpack.c.l.b16 %v62
  %v214 = vunpack.c.l.b16 %v63
  %v215 = vunpack.c.l.b16 %v64
  %v216 = vunpack.c.l.b16 %v65
  %v217 = vunpack.c.l.b16 %v66
  %v218 = vunpack.c.l.b16 %v67
  %v219 = vunpack.c.l.b16 %v68
  %v220 = vunpack.c.l.b16 %v69
  %v221 = vunpack.c.l.b16 %v70
  %v222 = vunpack.c.l.b16 %v71
  %v223 = vunpack.c.l.b16 %v72
  %v224 = vunpack.c.l.b16 %v73
  %v225 = vunpack.c.l.b16 %v74
  %v226 = vunpack.c.l.b16 %v75
  %v227 = vunpack.c.l.b16 %v76
  %v228 = vunpack.c.l.b16 %v77
  %v229 = vunpack.c.l.b16 %v78
  %v230 = vunpack.c.l.b16 %v79
  %v231 = vunpack.c.l.b16 %v80
  %v232 = vunpack.c.l.b16 %v81
  %v233 = vunpack.c.l.b16 %v82
  %v234 = vunpack.c.l.b16 %v83
  %v235 = vunpack.c.l.b16 %v84
  %v236 = vunpack.c.l.b16 %v85
  %v237 = vunpack.c.l.b16 %v86
  %v238 = vunpack.c.l.b16 %v87
  %v239 = vunpack.c.l.b16 %v88
  %v240 = vunpack.c.l.b16 %v89
  %v241 = vunpack.c.l.b16 %v90
  %v242 = vunpack.c.l.b16 %v91
  %v243 = vunpack.c.l.b16 %v92
  %v244 = vunpack.c.l.b16 %v93
  %v245 = vunpack.c.l.b16 %v94
  %v246 = vunpack.c.l.b16 %v95
  %v247 = vunpack.c.l.b16 %v96
  %v248 = vunpack.c.l.b16 %v97
  %v249 = vunpack.c.l.b16 %v98
  %v250 = vunpack.c.l.b16 %v99
  %v251 = vunpack.c.l.b16 %v100
  %v252 = vpack.c.b16 %v189, %v188
  %v253 = vpack.c.b16 %v191, %v190
  %v254 = vpack.c.b16 %v193, %v192
  %v255 = vpack.c.b16 %v195, %v194
  %v256 = vpack.c.b16 %v197, %v196
  %v257 = vpack.c.b16 %v199, %v198
  %v258 = vpack.c.b16 %v201, %v200
  %v259 = vpack.c.b16 %v203, %v202
  %v260 = vpack.c.b16 %v205, %v204
  %v261 = vpack.c.b16 %v207, %v206
  %v262 = vpack.c.b16 %v209, %v208
  %v263 = vpack.c.b16 %v211, %v210
  %v264 = vpack.c.b16 %v213, %v212
  %v265 = vpack.c.b16 %v215, %v214
  %v266 = vpack.c.b16 %v217, %v216
  %v267 = vpack.c.b16 %v219, %v218
  %v268 = vpack.c.b16 %v221, %v220
  %v269 = vpack.c.b16 %v223, %v222
  %v270 = vpack.c.b16 %v225, %v224
  %v271 = vpack.c.b16 %v227, %v226
  %v272 = vpack.c.b16 %v229, %v228
  %v273 = vpack.c.b16 %v231, %v230
  %v274 = vpack.c.b16 %v233, %v232
  %v275 = vpack.c.b16 %v235, %v234
  %v276 = vpack.c.b16 %v237, %v236
  %v277 = vpack.c.b16 %v239, %v238
  %v278 = vpack.c.b16 %v241, %v240
  %v279 = vpack.c.b16 %v243, %v242
  %v280 = vpack.c.b16 %v245, %v244
  %v281 = vpack.c.b16 %v247, %v246
  %v282 = vpack.c.b16 %v249, %v248
  %v283 = vpack.c.b16 %v251, %v250
  %v332 = vunpack.c.l.b16 %v101
  %v333 = vunpack.c.l.b16 %v102
  %v334 = vunpack.c.l.b16 %v103
  %v335 = vunpack.c.l.b16 %v104
  %v336 = vunpack.c.l.b16 %v105
  %v337 = vunpack.c.l.b16 %v106
  %v338 = vunpack.c.l.b16 %v107
  %v339 = vunpack.c.l.b16 %v108
  %v340 = vunpack.c.l.b16 %v109
  %v341 = vunpack.c.l.b16 %v110
  %v342 = vunpack.c.l.b16 %v111
  %v343 = vunpack.c.l.b16 %v112
  %v344 = vunpack.c.l.b16 %v113
  %v345 = vunpack.c.l.b16 %v114
  %v346 = vunpack.c.l.b16 %v115
  %v347 = vunpack.c.l.b16 %v116
  %v348 = vpack.c.b16 %v333, %v332
  %v349 = vpack.c.b16 %v335, %v334
  %v350 = vpack.c.b16 %v337, %v336
  %v351 = vpack.c.b16 %v339, %v338
  %v352 = vpack.c.b16 %v341, %v340
  %v353 = vpack.c.b16 %v343, %v342
  %v354 = vpack.c.b16 %v345, %v344
  %v355 = vpack.c.b16 %v347, %v346
  %364 = vmatprep.subr.bf16.mxu0 0
  %365 = vmatpush1.bf16.msra.mxu0 %v348
  %366 = vmatprep.subr.bf16.mxu0 0
  %367 = vmatpush1.bf16.msra.mxu0 %v349
  %368 = vmatprep.subr.bf16.mxu0 0
  %369 = vmatpush1.bf16.msra.mxu0 %v350
  %370 = vmatprep.subr.bf16.mxu0 0
  %371 = vmatpush1.bf16.msra.mxu0 %v351
  %372 = vmatprep.subr.bf16.mxu0 0
  %373 = vmatpush1.bf16.msra.mxu0 %v352
  %374 = vmatprep.subr.bf16.mxu0 0
  %375 = vmatpush1.bf16.msra.mxu0 %v353
  %376 = vmatprep.subr.bf16.mxu0 0
  %377 = vmatpush1.bf16.msra.mxu0 %v354
  %378 = vmatprep.subr.bf16.mxu0 0
  %379 = vmatpush1.bf16.msra.mxu0 %v355
  %380 = vmatprep.subr.bf16.mxu0 0
  %381 = vmatpush1.bf16.msra.mxu0 0
  %382 = vmatprep.subr.bf16.mxu0 0
  %383 = vmatpush1.bf16.msra.mxu0 0
  %384 = vmatprep.subr.bf16.mxu0 0
  %385 = vmatpush1.bf16.msra.mxu0 0
  %386 = vmatprep.subr.bf16.mxu0 0
  %387 = vmatpush1.bf16.msra.mxu0 0
  %388 = vmatprep.subr.bf16.mxu0 0
  %389 = vmatpush1.bf16.msra.mxu0 0
  %390 = vmatprep.subr.bf16.mxu0 0
  %391 = vmatpush1.bf16.msra.mxu0 0
  %392 = vmatprep.subr.bf16.mxu0 0
  %393 = vmatpush1.bf16.msra.mxu0 0
  %394 = vmatprep.subr.bf16.mxu0 0
  %395 = vmatpush1.bf16.msra.mxu0 0
  %396 = vmatprep.mubr.bf16.mxu0 0
  %397 = vmatmul.mubr.bf16.gmra.mrb[0].mxu0 %v252
  %v398 = vpop.f32.mrb[0].mxu0
  %v399 = vadd.f32 %v122, %v398
  %v400 = vpop.f32.mrb[0].mxu0
  %v401 = vpop.f32.mrb[0].mxu0
  %v402 = vadd.f32 %v122, %v401
  %v403 = vpop.f32.mrb[0].mxu0
  %404 = vmatprep.mubr.bf16.mxu0 0
  %405 = vmatmul.mubr.bf16.gmra.mrb[0].mxu0 %v253
  %v406 = vpop.f32.mrb[0].mxu0
  %v407 = vadd.f32 %v122, %v406
  %v408 = vpop.f32.mrb[0].mxu0
  %v409 = vpop.f32.mrb[0].mxu0
  %v410 = vadd.f32 %v122, %v409
  %v411 = vpop.f32.mrb[0].mxu0
  %412 = vmatprep.mubr.bf16.mxu0 0
  %413 = vmatmul.mubr.bf16.gmra.mrb[0].mxu0 %v254
  %v414 = vpop.f32.mrb[0].mxu0
  %v415 = vadd.f32 %v122, %v414
  %v416 = vpop.f32.mrb[0].mxu0
  %v417 = vpop.f32.mrb[0].mxu0
  %v418 = vadd.f32 %v122, %v417
  %v419 = vpop.f32.mrb[0].mxu0
  %420 = vmatprep.mubr.bf16.mxu0 0
  %421 = vmatmul.mubr.bf16.gmra.mrb[0].mxu0 %v255
  %v422 = vpop.f32.mrb[0].mxu0
  %v423 = vadd.f32 %v122, %v422
  %v424 = vpop.f32.mrb[0].mxu0
  %v425 = vpop.f32.mrb[0].mxu0
  %v426 = vadd.f32 %v122, %v425
  %v427 = vpop.f32.mrb[0].mxu0
  %428 = vmatprep.mubr.bf16.mxu0 0
  %429 = vmatmul.mubr.bf16.gmra.mrb[0].mxu0 %v256
  %v430 = vpop.f32.mrb[0].mxu0
  %v431 = vadd.f32 %v122, %v430
  %v432 = vpop.f32.mrb[0].mxu0
  %v433 = vpop.f32.mrb[0].mxu0
  %v434 = vadd.f32 %v122, %v433
  %v435 = vpop.f32.mrb[0].mxu0
  %436 = vmatprep.mubr.bf16.mxu0 0
  %437 = vmatmul.mubr.bf16.gmra.mrb[0].mxu0 %v257
  %v438 = vpop.f32.mrb[0].mxu0
  %v439 = vadd.f32 %v122, %v438
  %v440 = vpop.f32.mrb[0].mxu0
  %v441 = vpop.f32.mrb[0].mxu0
  %v442 = vadd.f32 %v122, %v441
  %v443 = vpop.f32.mrb[0].mxu0
  %444 = vmatprep.mubr.bf16.mxu0 0
  %445 = vmatmul.mubr.bf16.gmra.mrb[0].mxu0 %v258
  %v446 = vpop.f32.mrb[0].mxu0
  %v447 = vadd.f32 %v122, %v446
  %v448 = vpop.f32.mrb[0].mxu0
  %v449 = vpop.f32.mrb[0].mxu0
  %v450 = vadd.f32 %v122, %v449
  %v451 = vpop.f32.mrb[0].mxu0
  %452 = vmatprep.mubr.bf16.mxu0 0
  %453 = vmatmul.mubr.bf16.gmra.mrb[0].mxu0 %v259
  %v454 = vpop.f32.mrb[0].mxu0
  %v455 = vadd.f32 %v122, %v454
  %v456 = vpop.f32.mrb[0].mxu0
  %v457 = vpop.f32.mrb[0].mxu0
  %v458 = vadd.f32 %v122, %v457
  %v459 = vpop.f32.mrb[0].mxu0
  %460 = vmatprep.mubr.bf16.mxu0 0
  %461 = vmatmul.mubr.bf16.gmra.mrb[0].mxu0 %v260
  %v462 = vpop.f32.mrb[0].mxu0
  %v463 = vadd.f32 %v122, %v462
  %v464 = vpop.f32.mrb[0].mxu0
  %v465 = vpop.f32.mrb[0].mxu0
  %v466 = vadd.f32 %v122, %v465
  %v467 = vpop.f32.mrb[0].mxu0
  %468 = vmatprep.mubr.bf16.mxu0 0
  %469 = vmatmul.mubr.bf16.gmra.mrb[0].mxu0 %v261
  %v470 = vpop.f32.mrb[0].mxu0
  %v471 = vadd.f32 %v122, %v470
  %v472 = vpop.f32.mrb[0].mxu0
  %v473 = vpop.f32.mrb[0].mxu0
  %v474 = vadd.f32 %v122, %v473
  %v475 = vpop.f32.mrb[0].mxu0
  %476 = vmatprep.mubr.bf16.mxu0 0
  %477 = vmatmul.mubr.bf16.gmra.mrb[0].mxu0 %v262
  %v478 = vpop.f32.mrb[0].mxu0
  %v479 = vadd.f32 %v122, %v478
  %v480 = vpop.f32.mrb[0].mxu0
  %v481 = vpop.f32.mrb[0].mxu0
  %v482 = vadd.f32 %v122, %v481
  %v483 = vpop.f32.mrb[0].mxu0
  %484 = vmatprep.mubr.bf16.mxu0 0
  %485 = vmatmul.mubr.bf16.gmra.mrb[0].mxu0 %v263
  %v486 = vpop.f32.mrb[0].mxu0
  %v487 = vadd.f32 %v122, %v486
  %v488 = vpop.f32.mrb[0].mxu0
  %v489 = vpop.f32.mrb[0].mxu0
  %v490 = vadd.f32 %v122, %v489
  %v491 = vpop.f32.mrb[0].mxu0
  %492 = vmatprep.mubr.bf16.mxu0 0
  %493 = vmatmul.mubr.bf16.gmra.mrb[0].mxu0 %v264
  %v494 = vpop.f32.mrb[0].mxu0
  %v495 = vadd.f32 %v122, %v494
  %v496 = vpop.f32.mrb[0].mxu0
  %v497 = vpop.f32.mrb[0].mxu0
  %v498 = vadd.f32 %v122, %v497
  %v499 = vpop.f32.mrb[0].mxu0
  %500 = vmatprep.mubr.bf16.mxu0 0
  %501 = vmatmul.mubr.bf16.gmra.mrb[0].mxu0 %v265
  %v502 = vpop.f32.mrb[0].mxu0
  %v503 = vadd.f32 %v122, %v502
  %v504 = vpop.f32.mrb[0].mxu0
  %v505 = vpop.f32.mrb[0].mxu0
  %v506 = vadd.f32 %v122, %v505
  %v507 = vpop.f32.mrb[0].mxu0
  %508 = vmatprep.mubr.bf16.mxu0 0
  %509 = vmatmul.mubr.bf16.gmra.mrb[0].mxu0 %v266
  %v510 = vpop.f32.mrb[0].mxu0
  %v511 = vadd.f32 %v122, %v510
  %v512 = vpop.f32.mrb[0].mxu0
  %v513 = vpop.f32.mrb[0].mxu0
  %v514 = vadd.f32 %v122, %v513
  %v515 = vpop.f32.mrb[0].mxu0
  %516 = vmatprep.mubr.bf16.mxu0 0
  %517 = vmatmul.mubr.bf16.gmra.mrb[0].mxu0 %v267
  %v518 = vpop.f32.mrb[0].mxu0
  %v519 = vadd.f32 %v122, %v518
  %v520 = vpop.f32.mrb[0].mxu0
  %v521 = vpop.f32.mrb[0].mxu0
  %v522 = vadd.f32 %v122, %v521
  %v523 = vpop.f32.mrb[0].mxu0
  %524 = vmatprep.mubr.bf16.mxu0 0
  %525 = vmatmul.mubr.bf16.gmra.mrb[0].mxu0 %v268
  %v526 = vpop.f32.mrb[0].mxu0
  %v527 = vadd.f32 %v122, %v526
  %v528 = vpop.f32.mrb[0].mxu0
  %v529 = vpop.f32.mrb[0].mxu0
  %v530 = vadd.f32 %v122, %v529
  %v531 = vpop.f32.mrb[0].mxu0
  %532 = vmatprep.mubr.bf16.mxu0 0
  %533 = vmatmul.mubr.bf16.gmra.mrb[0].mxu0 %v269
  %v534 = vpop.f32.mrb[0].mxu0
  %v535 = vadd.f32 %v122, %v534
  %v536 = vpop.f32.mrb[0].mxu0
  %v537 = vpop.f32.mrb[0].mxu0
  %v538 = vadd.f32 %v122, %v537
  %v539 = vpop.f32.mrb[0].mxu0
  %540 = vmatprep.mubr.bf16.mxu0 0
  %541 = vmatmul.mubr.bf16.gmra.mrb[0].mxu0 %v270
  %v542 = vpop.f32.mrb[0].mxu0
  %v543 = vadd.f32 %v122, %v542
  %v544 = vpop.f32.mrb[0].mxu0
  %v545 = vpop.f32.mrb[0].mxu0
  %v546 = vadd.f32 %v122, %v545
  %v547 = vpop.f32.mrb[0].mxu0
  %548 = vmatprep.mubr.bf16.mxu0 0
  %549 = vmatmul.mubr.bf16.gmra.mrb[0].mxu0 %v271
  %v550 = vpop.f32.mrb[0].mxu0
  %v551 = vadd.f32 %v122, %v550
  %v552 = vpop.f32.mrb[0].mxu0
  %v553 = vpop.f32.mrb[0].mxu0
  %v554 = vadd.f32 %v122, %v553
  %v555 = vpop.f32.mrb[0].mxu0
  %556 = vmatprep.mubr.bf16.mxu0 0
  %557 = vmatmul.mubr.bf16.gmra.mrb[0].mxu0 %v272
  %v558 = vpop.f32.mrb[0].mxu0
  %v559 = vadd.f32 %v122, %v558
  %v560 = vpop.f32.mrb[0].mxu0
  %v561 = vpop.f32.mrb[0].mxu0
  %v562 = vadd.f32 %v122, %v561
  %v563 = vpop.f32.mrb[0].mxu0
  %564 = vmatprep.mubr.bf16.mxu0 0
  %565 = vmatmul.mubr.bf16.gmra.mrb[0].mxu0 %v273
  %v566 = vpop.f32.mrb[0].mxu0
  %v567 = vadd.f32 %v122, %v566
  %v568 = vpop.f32.mrb[0].mxu0
  %v569 = vpop.f32.mrb[0].mxu0
  %v570 = vadd.f32 %v122, %v569
  %v571 = vpop.f32.mrb[0].mxu0
  %572 = vmatprep.mubr.bf16.mxu0 0
  %573 = vmatmul.mubr.bf16.gmra.mrb[0].mxu0 %v274
  %v574 = vpop.f32.mrb[0].mxu0
  %v575 = vadd.f32 %v122, %v574
  %v576 = vpop.f32.mrb[0].mxu0
  %v577 = vpop.f32.mrb[0].mxu0
  %v578 = vadd.f32 %v122, %v577
  %v579 = vpop.f32.mrb[0].mxu0
  %580 = vmatprep.mubr.bf16.mxu0 0
  %581 = vmatmul.mubr.bf16.gmra.mrb[0].mxu0 %v275
  %v582 = vpop.f32.mrb[0].mxu0
  %v583 = vadd.f32 %v122, %v582
  %v584 = vpop.f32.mrb[0].mxu0
  %v585 = vpop.f32.mrb[0].mxu0
  %v586 = vadd.f32 %v122, %v585
  %v587 = vpop.f32.mrb[0].mxu0
  %588 = vmatprep.mubr.bf16.mxu0 0
  %589 = vmatmul.mubr.bf16.gmra.mrb[0].mxu0 %v276
  %v590 = vpop.f32.mrb[0].mxu0
  %v591 = vadd.f32 %v122, %v590
  %v592 = vpop.f32.mrb[0].mxu0
  %v593 = vpop.f32.mrb[0].mxu0
  %v594 = vadd.f32 %v122, %v593
  %v595 = vpop.f32.mrb[0].mxu0
  %596 = vmatprep.mubr.bf16.mxu0 0
  %597 = vmatmul.mubr.bf16.gmra.mrb[0].mxu0 %v277
  %v598 = vpop.f32.mrb[0].mxu0
  %v599 = vadd.f32 %v122, %v598
  %v600 = vpop.f32.mrb[0].mxu0
  %v601 = vpop.f32.mrb[0].mxu0
  %v602 = vadd.f32 %v122, %v601
  %v603 = vpop.f32.mrb[0].mxu0
  %604 = vmatprep.mubr.bf16.mxu0 0
  %605 = vmatmul.mubr.bf16.gmra.mrb[0].mxu0 %v278
  %v606 = vpop.f32.mrb[0].mxu0
  %v607 = vadd.f32 %v122, %v606
  %v608 = vpop.f32.mrb[0].mxu0
  %v609 = vpop.f32.mrb[0].mxu0
  %v610 = vadd.f32 %v122, %v609
  %v611 = vpop.f32.mrb[0].mxu0
  %612 = vmatprep.mubr.bf16.mxu0 0
  %613 = vmatmul.mubr.bf16.gmra.mrb[0].mxu0 %v279
  %v614 = vpop.f32.mrb[0].mxu0
  %v615 = vadd.f32 %v122, %v614
  %v616 = vpop.f32.mrb[0].mxu0
  %v617 = vpop.f32.mrb[0].mxu0
  %v618 = vadd.f32 %v122, %v617
  %v619 = vpop.f32.mrb[0].mxu0
  %620 = vmatprep.mubr.bf16.mxu0 0
  %621 = vmatmul.mubr.bf16.gmra.mrb[0].mxu0 %v280
  %v622 = vpop.f32.mrb[0].mxu0
  %v623 = vadd.f32 %v122, %v622
  %v624 = vpop.f32.mrb[0].mxu0
  %v625 = vpop.f32.mrb[0].mxu0
  %v626 = vadd.f32 %v122, %v625
  %v627 = vpop.f32.mrb[0].mxu0
  %628 = vmatprep.mubr.bf16.mxu0 0
  %629 = vmatmul.mubr.bf16.gmra.mrb[0].mxu0 %v281
  %v630 = vpop.f32.mrb[0].mxu0
  %v631 = vadd.f32 %v122, %v630
  %v632 = vpop.f32.mrb[0].mxu0
  %v633 = vpop.f32.mrb[0].mxu0
  %v634 = vadd.f32 %v122, %v633
  %v635 = vpop.f32.mrb[0].mxu0
  %636 = vmatprep.mubr.bf16.mxu0 0
  %637 = vmatmul.mubr.bf16.gmra.mrb[0].mxu0 %v282
  %v638 = vpop.f32.mrb[0].mxu0
  %v639 = vadd.f32 %v122, %v638
  %v640 = vpop.f32.mrb[0].mxu0
  %v641 = vpop.f32.mrb[0].mxu0
  %v642 = vadd.f32 %v122, %v641
  %v643 = vpop.f32.mrb[0].mxu0
  %644 = vmatprep.mubr.bf16.mxu0 0
  %645 = vmatmul.mubr.bf16.gmra.mrb[0].mxu0 %v283
  %v646 = vpop.f32.mrb[0].mxu0
  %v647 = vadd.f32 %v122, %v646
  %v648 = vpop.f32.mrb[0].mxu0
  %v649 = vpop.f32.mrb[0].mxu0
  %v650 = vadd.f32 %v122, %v649
  %v651 = vpop.f32.mrb[0].mxu0
  %652 = vdwg.mxu0
  %v653 = vadd.f32 %v399, %v402
  %v654 = vadd.f32 %v653, %v407
  %v655 = vadd.f32 %v654, %v410
  %v656 = vadd.f32 %v655, %v415
  %v657 = vadd.f32 %v656, %v418
  %v658 = vadd.f32 %v657, %v423
  %v659 = vadd.f32 %v658, %v426
  %v660 = vadd.f32 %v659, %v431
  %v661 = vadd.f32 %v660, %v434
  %v662 = vadd.f32 %v661, %v439
  %v663 = vadd.f32 %v662, %v442
  %v664 = vadd.f32 %v663, %v447
  %v665 = vadd.f32 %v664, %v450
  %v666 = vadd.f32 %v665, %v455
  %v667 = vadd.f32 %v666, %v458
  %v668 = vadd.f32 %v667, %v463
  %v669 = vadd.f32 %v668, %v466
  %v670 = vadd.f32 %v669, %v471
  %v671 = vadd.f32 %v670, %v474
  %v672 = vadd.f32 %v671, %v479
  %v673 = vadd.f32 %v672, %v482
  %v674 = vadd.f32 %v673, %v487
  %v675 = vadd.f32 %v674, %v490
  %v676 = vadd.f32 %v675, %v495
  %v677 = vadd.f32 %v676, %v498
  %v678 = vadd.f32 %v677, %v503
  %v679 = vadd.f32 %v678, %v506
  %v680 = vadd.f32 %v679, %v511
  %v681 = vadd.f32 %v680, %v514
  %v682 = vadd.f32 %v681, %v519
  %v683 = vadd.f32 %v682, %v522
  %v684 = vadd.f32 %v683, %v527
  %v685 = vadd.f32 %v684, %v530
  %v686 = vadd.f32 %v685, %v535
  %v687 = vadd.f32 %v686, %v538
  %v688 = vadd.f32 %v687, %v543
  %v689 = vadd.f32 %v688, %v546
  %v690 = vadd.f32 %v689, %v551
  %v691 = vadd.f32 %v690, %v554
  %v692 = vadd.f32 %v691, %v559
  %v693 = vadd.f32 %v692, %v562
  %v694 = vadd.f32 %v693, %v567
  %v695 = vadd.f32 %v694, %v570
  %v696 = vadd.f32 %v695, %v575
  %v697 = vadd.f32 %v696, %v578
  %v698 = vadd.f32 %v697, %v583
  %v699 = vadd.f32 %v698, %v586
  %v700 = vadd.f32 %v699, %v591
  %v701 = vadd.f32 %v700, %v594
  %v702 = vadd.f32 %v701, %v599
  %v703 = vadd.f32 %v702, %v602
  %v704 = vadd.f32 %v703, %v607
  %v705 = vadd.f32 %v704, %v610
  %v706 = vadd.f32 %v705, %v615
  %v707 = vadd.f32 %v706, %v618
  %v708 = vadd.f32 %v707, %v623
  %v709 = vadd.f32 %v708, %v626
  %v710 = vadd.f32 %v709, %v631
  %v711 = vadd.f32 %v710, %v634
  %v712 = vadd.f32 %v711, %v639
  %v713 = vadd.f32 %v712, %v642
  %v714 = vadd.f32 %v713, %v647
  %v715 = vadd.f32 %v714, %v650
  %v716 = vrot.slane %v715, 4
  %v717 = vadd.f32 %v715, %v716
  %v718 = vrot.slane %v717, 2
  %v719 = vadd.f32 %v717, %v718
  %v720 = vrot.slane %v719, 1
  %v721 = vadd.f32 %v719, %v720
  %v722 = vmul.f32 %v721, 0.001953125
  %v723 = vsub.f32 %v399, %v722
  %v724 = vsub.f32 %v402, %v722
  %v725 = vsub.f32 %v407, %v722
  %v726 = vsub.f32 %v410, %v722
  %v727 = vsub.f32 %v415, %v722
  %v728 = vsub.f32 %v418, %v722
  %v729 = vsub.f32 %v423, %v722
  %v730 = vsub.f32 %v426, %v722
  %v731 = vsub.f32 %v431, %v722
  %v732 = vsub.f32 %v434, %v722
  %v733 = vsub.f32 %v439, %v722
  %v734 = vsub.f32 %v442, %v722
  %v735 = vsub.f32 %v447, %v722
  %v736 = vsub.f32 %v450, %v722
  %v737 = vsub.f32 %v455, %v722
  %v738 = vsub.f32 %v458, %v722
  %v739 = vsub.f32 %v463, %v722
  %v740 = vsub.f32 %v466, %v722
  %v741 = vsub.f32 %v471, %v722
  %v742 = vsub.f32 %v474, %v722
  %v743 = vsub.f32 %v479, %v722
  %v744 = vsub.f32 %v482, %v722
  %v745 = vsub.f32 %v487, %v722
  %v746 = vsub.f32 %v490, %v722
  %v747 = vsub.f32 %v495, %v722
  %v748 = vsub.f32 %v498, %v722
  %v749 = vsub.f32 %v503, %v722
  %v750 = vsub.f32 %v506, %v722
  %v751 = vsub.f32 %v511, %v722
  %v752 = vsub.f32 %v514, %v722
  %v753 = vsub.f32 %v519, %v722
  %v754 = vsub.f32 %v522, %v722
  %v755 = vsub.f32 %v527, %v722
  %v756 = vsub.f32 %v530, %v722
  %v757 = vsub.f32 %v535, %v722
  %v758 = vsub.f32 %v538, %v722
  %v759 = vsub.f32 %v543, %v722
  %v760 = vsub.f32 %v546, %v722
  %v761 = vsub.f32 %v551, %v722
  %v762 = vsub.f32 %v554, %v722
  %v763 = vsub.f32 %v559, %v722
  %v764 = vsub.f32 %v562, %v722
  %v765 = vsub.f32 %v567, %v722
  %v766 = vsub.f32 %v570, %v722
  %v767 = vsub.f32 %v575, %v722
  %v768 = vsub.f32 %v578, %v722
  %v769 = vsub.f32 %v583, %v722
  %v770 = vsub.f32 %v586, %v722
  %v771 = vsub.f32 %v591, %v722
  %v772 = vsub.f32 %v594, %v722
  %v773 = vsub.f32 %v599, %v722
  %v774 = vsub.f32 %v602, %v722
  %v775 = vsub.f32 %v607, %v722
  %v776 = vsub.f32 %v610, %v722
  %v777 = vsub.f32 %v615, %v722
  %v778 = vsub.f32 %v618, %v722
  %v779 = vsub.f32 %v623, %v722
  %v780 = vsub.f32 %v626, %v722
  %v781 = vsub.f32 %v631, %v722
  %v782 = vsub.f32 %v634, %v722
  %v783 = vsub.f32 %v639, %v722
  %v784 = vsub.f32 %v642, %v722
  %v785 = vsub.f32 %v647, %v722
  %v786 = vsub.f32 %v650, %v722
  %v787 = vmul.f32 %v723, %v723
  %v788 = vmul.f32 %v724, %v724
  %v789 = vmul.f32 %v725, %v725
  %v790 = vmul.f32 %v726, %v726
  %v791 = vmul.f32 %v727, %v727
  %v792 = vmul.f32 %v728, %v728
  %v793 = vmul.f32 %v729, %v729
  %v794 = vmul.f32 %v730, %v730
  %v795 = vmul.f32 %v731, %v731
  %v796 = vmul.f32 %v732, %v732
  %v797 = vmul.f32 %v733, %v733
  %v798 = vmul.f32 %v734, %v734
  %v799 = vmul.f32 %v735, %v735
  %v800 = vmul.f32 %v736, %v736
  %v801 = vmul.f32 %v737, %v737
  %v802 = vmul.f32 %v738, %v738
  %v803 = vmul.f32 %v739, %v739
  %v804 = vmul.f32 %v740, %v740
  %v805 = vmul.f32 %v741, %v741
  %v806 = vmul.f32 %v742, %v742
  %v807 = vmul.f32 %v743, %v743
  %v808 = vmul.f32 %v744, %v744
  %v809 = vmul.f32 %v745, %v745
  %v810 = vmul.f32 %v746, %v746
  %v811 = vmul.f32 %v747, %v747
  %v812 = vmul.f32 %v748, %v748
  %v813 = vmul.f32 %v749, %v749
  %v814 = vmul.f32 %v750, %v750
  %v815 = vmul.f32 %v751, %v751
  %v816 = vmul.f32 %v752, %v752
  %v817 = vmul.f32 %v753, %v753
  %v818 = vmul.f32 %v754, %v754
  %v819 = vmul.f32 %v755, %v755
  %v820 = vmul.f32 %v756, %v756
  %v821 = vmul.f32 %v757, %v757
  %v822 = vmul.f32 %v758, %v758
  %v823 = vmul.f32 %v759, %v759
  %v824 = vmul.f32 %v760, %v760
  %v825 = vmul.f32 %v761, %v761
  %v826 = vmul.f32 %v762, %v762
  %v827 = vmul.f32 %v763, %v763
  %v828 = vmul.f32 %v764, %v764
  %v829 = vmul.f32 %v765, %v765
  %v830 = vmul.f32 %v766, %v766
  %v831 = vmul.f32 %v767, %v767
  %v832 = vmul.f32 %v768, %v768
  %v833 = vmul.f32 %v769, %v769
  %v834 = vmul.f32 %v770, %v770
  %v835 = vmul.f32 %v771, %v771
  %v836 = vmul.f32 %v772, %v772
  %v837 = vmul.f32 %v773, %v773
  %v838 = vmul.f32 %v774, %v774
  %v839 = vmul.f32 %v775, %v775
  %v840 = vmul.f32 %v776, %v776
  %v841 = vmul.f32 %v777, %v777
  %v842 = vmul.f32 %v778, %v778
  %v843 = vmul.f32 %v779, %v779
  %v844 = vmul.f32 %v780, %v780
  %v845 = vmul.f32 %v781, %v781
  %v846 = vmul.f32 %v782, %v782
  %v847 = vmul.f32 %v783, %v783
  %v848 = vmul.f32 %v784, %v784
  %v849 = vmul.f32 %v785, %v785
  %v850 = vmul.f32 %v786, %v786
  %v851 = vadd.f32 %v787, %v788
  %v852 = vadd.f32 %v851, %v789
  %v853 = vadd.f32 %v852, %v790
  %v854 = vadd.f32 %v853, %v791
  %v855 = vadd.f32 %v854, %v792
  %v856 = vadd.f32 %v855, %v793
  %v857 = vadd.f32 %v856, %v794
  %v858 = vadd.f32 %v857, %v795
  %v859 = vadd.f32 %v858, %v796
  %v860 = vadd.f32 %v859, %v797
  %v861 = vadd.f32 %v860, %v798
  %v862 = vadd.f32 %v861, %v799
  %v863 = vadd.f32 %v862, %v800
  %v864 = vadd.f32 %v863, %v801
  %v865 = vadd.f32 %v864, %v802
  %v866 = vadd.f32 %v865, %v803
  %v867 = vadd.f32 %v866, %v804
  %v868 = vadd.f32 %v867, %v805
  %v869 = vadd.f32 %v868, %v806
  %v870 = vadd.f32 %v869, %v807
  %v871 = vadd.f32 %v870, %v808
  %v872 = vadd.f32 %v871, %v809
  %v873 = vadd.f32 %v872, %v810
  %v874 = vadd.f32 %v873, %v811
  %v875 = vadd.f32 %v874, %v812
  %v876 = vadd.f32 %v875, %v813
  %v877 = vadd.f32 %v876, %v814
  %v878 = vadd.f32 %v877, %v815
  %v879 = vadd.f32 %v878, %v816
  %v880 = vadd.f32 %v879, %v817
  %v881 = vadd.f32 %v880, %v818
  %v882 = vadd.f32 %v881, %v819
  %v883 = vadd.f32 %v882, %v820
  %v884 = vadd.f32 %v883, %v821
  %v885 = vadd.f32 %v884, %v822
  %v886 = vadd.f32 %v885, %v823
  %v887 = vadd.f32 %v886, %v824
  %v888 = vadd.f32 %v887, %v825
  %v889 = vadd.f32 %v888, %v826
  %v890 = vadd.f32 %v889, %v827
  %v891 = vadd.f32 %v890, %v828
  %v892 = vadd.f32 %v891, %v829
  %v893 = vadd.f32 %v892, %v830
  %v894 = vadd.f32 %v893, %v831
  %v895 = vadd.f32 %v894, %v832
  %v896 = vadd.f32 %v895, %v833
  %v897 = vadd.f32 %v896, %v834
  %v898 = vadd.f32 %v897, %v835
  %v899 = vadd.f32 %v898, %v836
  %v900 = vadd.f32 %v899, %v837
  %v901 = vadd.f32 %v900, %v838
  %v902 = vadd.f32 %v901, %v839
  %v903 = vadd.f32 %v902, %v840
  %v904 = vadd.f32 %v903, %v841
  %v905 = vadd.f32 %v904, %v842
  %v906 = vadd.f32 %v905, %v843
  %v907 = vadd.f32 %v906, %v844
  %v908 = vadd.f32 %v907, %v845
  %v909 = vadd.f32 %v908, %v846
  %v910 = vadd.f32 %v909, %v847
  %v911 = vadd.f32 %v910, %v848
  %v912 = vadd.f32 %v911, %v849
  %v913 = vadd.f32 %v912, %v850
  %v914 = vrot.slane %v913, 4
  %v915 = vadd.f32 %v913, %v914
  %v916 = vrot.slane %v915, 2
  %v917 = vadd.f32 %v915, %v916
  %v918 = vrot.slane %v917, 1
  %v919 = vadd.f32 %v917, %v918
  %v920 = vmul.f32 %v919, 0.001953125
  %v921 = vadd.f32 %v920, 1e-05
  %v922 = vrsqrt.pop %v921
  %v923 = vmul.f32 %v723, %v922
  %v924 = vmul.f32 %v724, %v922
  %v925 = vmul.f32 %v725, %v922
  %v926 = vmul.f32 %v726, %v922
  %v927 = vmul.f32 %v727, %v922
  %v928 = vmul.f32 %v728, %v922
  %v929 = vmul.f32 %v729, %v922
  %v930 = vmul.f32 %v730, %v922
  %v931 = vmul.f32 %v731, %v922
  %v932 = vmul.f32 %v732, %v922
  %v933 = vmul.f32 %v733, %v922
  %v934 = vmul.f32 %v734, %v922
  %v935 = vmul.f32 %v735, %v922
  %v936 = vmul.f32 %v736, %v922
  %v937 = vmul.f32 %v737, %v922
  %v938 = vmul.f32 %v738, %v922
  %v939 = vmul.f32 %v739, %v922
  %v940 = vmul.f32 %v740, %v922
  %v941 = vmul.f32 %v741, %v922
  %v942 = vmul.f32 %v742, %v922
  %v943 = vmul.f32 %v743, %v922
  %v944 = vmul.f32 %v744, %v922
  %v945 = vmul.f32 %v745, %v922
  %v946 = vmul.f32 %v746, %v922
  %v947 = vmul.f32 %v747, %v922
  %v948 = vmul.f32 %v748, %v922
  %v949 = vmul.f32 %v749, %v922
  %v950 = vmul.f32 %v750, %v922
  %v951 = vmul.f32 %v751, %v922
  %v952 = vmul.f32 %v752, %v922
  %v953 = vmul.f32 %v753, %v922
  %v954 = vmul.f32 %v754, %v922
  %v955 = vmul.f32 %v755, %v922
  %v956 = vmul.f32 %v756, %v922
  %v957 = vmul.f32 %v757, %v922
  %v958 = vmul.f32 %v758, %v922
  %v959 = vmul.f32 %v759, %v922
  %v960 = vmul.f32 %v760, %v922
  %v961 = vmul.f32 %v761, %v922
  %v962 = vmul.f32 %v762, %v922
  %v963 = vmul.f32 %v763, %v922
  %v964 = vmul.f32 %v764, %v922
  %v965 = vmul.f32 %v765, %v922
  %v966 = vmul.f32 %v766, %v922
  %v967 = vmul.f32 %v767, %v922
  %v968 = vmul.f32 %v768, %v922
  %v969 = vmul.f32 %v769, %v922
  %v970 = vmul.f32 %v770, %v922
  %v971 = vmul.f32 %v771, %v922
  %v972 = vmul.f32 %v772, %v922
  %v973 = vmul.f32 %v773, %v922
  %v974 = vmul.f32 %v774, %v922
  %v975 = vmul.f32 %v775, %v922
  %v976 = vmul.f32 %v776, %v922
  %v977 = vmul.f32 %v777, %v922
  %v978 = vmul.f32 %v778, %v922
  %v979 = vmul.f32 %v779, %v922
  %v980 = vmul.f32 %v780, %v922
  %v981 = vmul.f32 %v781, %v922
  %v982 = vmul.f32 %v782, %v922
  %v983 = vmul.f32 %v783, %v922
  %v984 = vmul.f32 %v784, %v922
  %v985 = vmul.f32 %v785, %v922
  %v986 = vmul.f32 %v786, %v922
  %vm987 = vcmp.gt.f32.partialorder %v923, 0.0
  %vm988 = vcmp.gt.f32.partialorder %v924, 0.0
  %vm989 = vcmp.gt.f32.partialorder %v925, 0.0
  %vm990 = vcmp.gt.f32.partialorder %v926, 0.0
  %vm991 = vcmp.gt.f32.partialorder %v927, 0.0
  %vm992 = vcmp.gt.f32.partialorder %v928, 0.0
  %vm993 = vcmp.gt.f32.partialorder %v929, 0.0
  %vm994 = vcmp.gt.f32.partialorder %v930, 0.0
  %vm995 = vcmp.gt.f32.partialorder %v931, 0.0
  %vm996 = vcmp.gt.f32.partialorder %v932, 0.0
  %vm997 = vcmp.gt.f32.partialorder %v933, 0.0
  %vm998 = vcmp.gt.f32.partialorder %v934, 0.0
  %vm999 = vcmp.gt.f32.partialorder %v935, 0.0
  %vm1000 = vcmp.gt.f32.partialorder %v936, 0.0
  %vm1001 = vcmp.gt.f32.partialorder %v937, 0.0
  %vm1002 = vcmp.gt.f32.partialorder %v938, 0.0
  %vm1003 = vcmp.gt.f32.partialorder %v939, 0.0
  %vm1004 = vcmp.gt.f32.partialorder %v940, 0.0
  %vm1005 = vcmp.gt.f32.partialorder %v941, 0.0
  %vm1006 = vcmp.gt.f32.partialorder %v942, 0.0
  %vm1007 = vcmp.gt.f32.partialorder %v943, 0.0
  %vm1008 = vcmp.gt.f32.partialorder %v944, 0.0
  %vm1009 = vcmp.gt.f32.partialorder %v945, 0.0
  %vm1010 = vcmp.gt.f32.partialorder %v946, 0.0
  %vm1011 = vcmp.gt.f32.partialorder %v947, 0.0
  %vm1012 = vcmp.gt.f32.partialorder %v948, 0.0
  %vm1013 = vcmp.gt.f32.partialorder %v949, 0.0
  %vm1014 = vcmp.gt.f32.partialorder %v950, 0.0
  %vm1015 = vcmp.gt.f32.partialorder %v951, 0.0
  %vm1016 = vcmp.gt.f32.partialorder %v952, 0.0
  %vm1017 = vcmp.gt.f32.partialorder %v953, 0.0
  %vm1018 = vcmp.gt.f32.partialorder %v954, 0.0
  %vm1019 = vcmp.gt.f32.partialorder %v955, 0.0
  %vm1020 = vcmp.gt.f32.partialorder %v956, 0.0
  %vm1021 = vcmp.gt.f32.partialorder %v957, 0.0
  %vm1022 = vcmp.gt.f32.partialorder %v958, 0.0
  %vm1023 = vcmp.gt.f32.partialorder %v959, 0.0
  %vm1024 = vcmp.gt.f32.partialorder %v960, 0.0
  %vm1025 = vcmp.gt.f32.partialorder %v961, 0.0
  %vm1026 = vcmp.gt.f32.partialorder %v962, 0.0
  %vm1027 = vcmp.gt.f32.partialorder %v963, 0.0
  %vm1028 = vcmp.gt.f32.partialorder %v964, 0.0
  %vm1029 = vcmp.gt.f32.partialorder %v965, 0.0
  %vm1030 = vcmp.gt.f32.partialorder %v966, 0.0
  %vm1031 = vcmp.gt.f32.partialorder %v967, 0.0
  %vm1032 = vcmp.gt.f32.partialorder %v968, 0.0
  %vm1033 = vcmp.gt.f32.partialorder %v969, 0.0
  %vm1034 = vcmp.gt.f32.partialorder %v970, 0.0
  %vm1035 = vcmp.gt.f32.partialorder %v971, 0.0
  %vm1036 = vcmp.gt.f32.partialorder %v972, 0.0
  %vm1037 = vcmp.gt.f32.partialorder %v973, 0.0
  %vm1038 = vcmp.gt.f32.partialorder %v974, 0.0
  %vm1039 = vcmp.gt.f32.partialorder %v975, 0.0
  %vm1040 = vcmp.gt.f32.partialorder %v976, 0.0
  %vm1041 = vcmp.gt.f32.partialorder %v977, 0.0
  %vm1042 = vcmp.gt.f32.partialorder %v978, 0.0
  %vm1043 = vcmp.gt.f32.partialorder %v979, 0.0
  %vm1044 = vcmp.gt.f32.partialorder %v980, 0.0
  %vm1045 = vcmp.gt.f32.partialorder %v981, 0.0
  %vm1046 = vcmp.gt.f32.partialorder %v982, 0.0
  %vm1047 = vcmp.gt.f32.partialorder %v983, 0.0
  %vm1048 = vcmp.gt.f32.partialorder %v984, 0.0
  %vm1049 = vcmp.gt.f32.partialorder %v985, 0.0
  %vm1050 = vcmp.gt.f32.partialorder %v986, 0.0
  %v1051 = vmul.f32 %v923, 0.2
  %v1052 = vmul.f32 %v924, 0.2
  %v1053 = vmul.f32 %v925, 0.2
  %v1054 = vmul.f32 %v926, 0.2
  %v1055 = vmul.f32 %v927, 0.2
  %v1056 = vmul.f32 %v928, 0.2
  %v1057 = vmul.f32 %v929, 0.2
  %v1058 = vmul.f32 %v930, 0.2
  %v1059 = vmul.f32 %v931, 0.2
  %v1060 = vmul.f32 %v932, 0.2
  %v1061 = vmul.f32 %v933, 0.2
  %v1062 = vmul.f32 %v934, 0.2
  %v1063 = vmul.f32 %v935, 0.2
  %v1064 = vmul.f32 %v936, 0.2
  %v1065 = vmul.f32 %v937, 0.2
  %v1066 = vmul.f32 %v938, 0.2
  %v1067 = vmul.f32 %v939, 0.2
  %v1068 = vmul.f32 %v940, 0.2
  %v1069 = vmul.f32 %v941, 0.2
  %v1070 = vmul.f32 %v942, 0.2
  %v1071 = vmul.f32 %v943, 0.2
  %v1072 = vmul.f32 %v944, 0.2
  %v1073 = vmul.f32 %v945, 0.2
  %v1074 = vmul.f32 %v946, 0.2
  %v1075 = vmul.f32 %v947, 0.2
  %v1076 = vmul.f32 %v948, 0.2
  %v1077 = vmul.f32 %v949, 0.2
  %v1078 = vmul.f32 %v950, 0.2
  %v1079 = vmul.f32 %v951, 0.2
  %v1080 = vmul.f32 %v952, 0.2
  %v1081 = vmul.f32 %v953, 0.2
  %v1082 = vmul.f32 %v954, 0.2
  %v1083 = vmul.f32 %v955, 0.2
  %v1084 = vmul.f32 %v956, 0.2
  %v1085 = vmul.f32 %v957, 0.2
  %v1086 = vmul.f32 %v958, 0.2
  %v1087 = vmul.f32 %v959, 0.2
  %v1088 = vmul.f32 %v960, 0.2
  %v1089 = vmul.f32 %v961, 0.2
  %v1090 = vmul.f32 %v962, 0.2
  %v1091 = vmul.f32 %v963, 0.2
  %v1092 = vmul.f32 %v964, 0.2
  %v1093 = vmul.f32 %v965, 0.2
  %v1094 = vmul.f32 %v966, 0.2
  %v1095 = vmul.f32 %v967, 0.2
  %v1096 = vmul.f32 %v968, 0.2
  %v1097 = vmul.f32 %v969, 0.2
  %v1098 = vmul.f32 %v970, 0.2
  %v1099 = vmul.f32 %v971, 0.2
  %v1100 = vmul.f32 %v972, 0.2
  %v1101 = vmul.f32 %v973, 0.2
  %v1102 = vmul.f32 %v974, 0.2
  %v1103 = vmul.f32 %v975, 0.2
  %v1104 = vmul.f32 %v976, 0.2
  %v1105 = vmul.f32 %v977, 0.2
  %v1106 = vmul.f32 %v978, 0.2
  %v1107 = vmul.f32 %v979, 0.2
  %v1108 = vmul.f32 %v980, 0.2
  %v1109 = vmul.f32 %v981, 0.2
  %v1110 = vmul.f32 %v982, 0.2
  %v1111 = vmul.f32 %v983, 0.2
  %v1112 = vmul.f32 %v984, 0.2
  %v1113 = vmul.f32 %v985, 0.2
  %v1114 = vmul.f32 %v986, 0.2
  %v1115 = vsel %vm987, %v923, %v1051
  %v1116 = vsel %vm988, %v924, %v1052
  %v1117 = vsel %vm989, %v925, %v1053
  %v1118 = vsel %vm990, %v926, %v1054
  %v1119 = vsel %vm991, %v927, %v1055
  %v1120 = vsel %vm992, %v928, %v1056
  %v1121 = vsel %vm993, %v929, %v1057
  %v1122 = vsel %vm994, %v930, %v1058
  %v1123 = vsel %vm995, %v931, %v1059
  %v1124 = vsel %vm996, %v932, %v1060
  %v1125 = vsel %vm997, %v933, %v1061
  %v1126 = vsel %vm998, %v934, %v1062
  %v1127 = vsel %vm999, %v935, %v1063
  %v1128 = vsel %vm1000, %v936, %v1064
  %v1129 = vsel %vm1001, %v937, %v1065
  %v1130 = vsel %vm1002, %v938, %v1066
  %v1131 = vsel %vm1003, %v939, %v1067
  %v1132 = vsel %vm1004, %v940, %v1068
  %v1133 = vsel %vm1005, %v941, %v1069
  %v1134 = vsel %vm1006, %v942, %v1070
  %v1135 = vsel %vm1007, %v943, %v1071
  %v1136 = vsel %vm1008, %v944, %v1072
  %v1137 = vsel %vm1009, %v945, %v1073
  %v1138 = vsel %vm1010, %v946, %v1074
  %v1139 = vsel %vm1011, %v947, %v1075
  %v1140 = vsel %vm1012, %v948, %v1076
  %v1141 = vsel %vm1013, %v949, %v1077
  %v1142 = vsel %vm1014, %v950, %v1078
  %v1143 = vsel %vm1015, %v951, %v1079
  %v1144 = vsel %vm1016, %v952, %v1080
  %v1145 = vsel %vm1017, %v953, %v1081
  %v1146 = vsel %vm1018, %v954, %v1082
  %v1147 = vsel %vm1019, %v955, %v1083
  %v1148 = vsel %vm1020, %v956, %v1084
  %v1149 = vsel %vm1021, %v957, %v1085
  %v1150 = vsel %vm1022, %v958, %v1086
  %v1151 = vsel %vm1023, %v959, %v1087
  %v1152 = vsel %vm1024, %v960, %v1088
  %v1153 = vsel %vm1025, %v961, %v1089
  %v1154 = vsel %vm1026, %v962, %v1090
  %v1155 = vsel %vm1027, %v963, %v1091
  %v1156 = vsel %vm1028, %v964, %v1092
  %v1157 = vsel %vm1029, %v965, %v1093
  %v1158 = vsel %vm1030, %v966, %v1094
  %v1159 = vsel %vm1031, %v967, %v1095
  %v1160 = vsel %vm1032, %v968, %v1096
  %v1161 = vsel %vm1033, %v969, %v1097
  %v1162 = vsel %vm1034, %v970, %v1098
  %v1163 = vsel %vm1035, %v971, %v1099
  %v1164 = vsel %vm1036, %v972, %v1100
  %v1165 = vsel %vm1037, %v973, %v1101
  %v1166 = vsel %vm1038, %v974, %v1102
  %v1167 = vsel %vm1039, %v975, %v1103
  %v1168 = vsel %vm1040, %v976, %v1104
  %v1169 = vsel %vm1041, %v977, %v1105
  %v1170 = vsel %vm1042, %v978, %v1106
  %v1171 = vsel %vm1043, %v979, %v1107
  %v1172 = vsel %vm1044, %v980, %v1108
  %v1173 = vsel %vm1045, %v981, %v1109
  %v1174 = vsel %vm1046, %v982, %v1110
  %v1175 = vsel %vm1047, %v983, %v1111
  %v1176 = vsel %vm1048, %v984, %v1112
  %v1177 = vsel %vm1049, %v985, %v1113
  %v1178 = vsel %vm1050, %v986, %v1114
  %1179 = vst [vmem:[#allocation2] sm:$0x3f] 0.0
  %1180 = vst [vmem:[#allocation2 + $0x8] sm:$0x3f] 0.0
  %1181 = vst [vmem:[#allocation2 + $0x10] sm:$0x3f] 0.0
  %1182 = vst [vmem:[#allocation2 + $0x18] sm:$0x3f] 0.0
  %1183 = vst [vmem:[#allocation2 + $0x20] sm:$0x3f] 0.0
  %1184 = vst [vmem:[#allocation2 + $0x28] sm:$0x3f] 0.0
  %1185 = vst [vmem:[#allocation2 + $0x30] sm:$0x3f] 0.0
  %1186 = vst [vmem:[#allocation2 + $0x38] sm:$0x3f] 0.0
  %1187 = vst [vmem:[#allocation2 + $0x40] sm:$0x3f] 0.0
  %1188 = vst [vmem:[#allocation2 + $0x48] sm:$0x3f] 0.0
  %1189 = vst [vmem:[#allocation2 + $0x50] sm:$0x3f] 0.0
  %1190 = vst [vmem:[#allocation2 + $0x58] sm:$0x3f] 0.0
  %1191 = vst [vmem:[#allocation2 + $0x60] sm:$0x3f] 0.0
  %1192 = vst [vmem:[#allocation2 + $0x68] sm:$0x3f] 0.0
  %1193 = vst [vmem:[#allocation2 + $0x70] sm:$0x3f] 0.0
  %1194 = vst [vmem:[#allocation2 + $0x78] sm:$0x3f] 0.0
  %1195 = vst [vmem:[#allocation2 + $0x80] sm:$0x3f] 0.0
  %1196 = vst [vmem:[#allocation2 + $0x88] sm:$0x3f] 0.0
  %1197 = vst [vmem:[#allocation2 + $0x90] sm:$0x3f] 0.0
  %1198 = vst [vmem:[#allocation2 + $0x98] sm:$0x3f] 0.0
  %1199 = vst [vmem:[#allocation2 + $0xa0] sm:$0x3f] 0.0
  %1200 = vst [vmem:[#allocation2 + $0xa8] sm:$0x3f] 0.0
  %1201 = vst [vmem:[#allocation2 + $0xb0] sm:$0x3f] 0.0
  %1202 = vst [vmem:[#allocation2 + $0xb8] sm:$0x3f] 0.0
  %1203 = vst [vmem:[#allocation2 + $0xc0] sm:$0x3f] 0.0
  %1204 = vst [vmem:[#allocation2 + $0xc8] sm:$0x3f] 0.0
  %1205 = vst [vmem:[#allocation2 + $0xd0] sm:$0x3f] 0.0
  %1206 = vst [vmem:[#allocation2 + $0xd8] sm:$0x3f] 0.0
  %1207 = vst [vmem:[#allocation2 + $0xe0] sm:$0x3f] 0.0
  %1208 = vst [vmem:[#allocation2 + $0xe8] sm:$0x3f] 0.0
  %1209 = vst [vmem:[#allocation2 + $0xf0] sm:$0x3f] 0.0
  %1210 = vst [vmem:[#allocation2 + $0xf8] sm:$0x3f] 0.0
  %1211 = vst [vmem:[#allocation2 + $0x100] sm:$0x3f] 0.0
  %1212 = vst [vmem:[#allocation2 + $0x108] sm:$0x3f] 0.0
  %1213 = vst [vmem:[#allocation2 + $0x110] sm:$0x3f] 0.0
  %1214 = vst [vmem:[#allocation2 + $0x118] sm:$0x3f] 0.0
  %1215 = vst [vmem:[#allocation2 + $0x120] sm:$0x3f] 0.0
  %1216 = vst [vmem:[#allocation2 + $0x128] sm:$0x3f] 0.0
  %1217 = vst [vmem:[#allocation2 + $0x130] sm:$0x3f] 0.0
  %1218 = vst [vmem:[#allocation2 + $0x138] sm:$0x3f] 0.0
  %1219 = vst [vmem:[#allocation2 + $0x140] sm:$0x3f] 0.0
  %1220 = vst [vmem:[#allocation2 + $0x148] sm:$0x3f] 0.0
  %1221 = vst [vmem:[#allocation2 + $0x150] sm:$0x3f] 0.0
  %1222 = vst [vmem:[#allocation2 + $0x158] sm:$0x3f] 0.0
  %1223 = vst [vmem:[#allocation2 + $0x160] sm:$0x3f] 0.0
  %1224 = vst [vmem:[#allocation2 + $0x168] sm:$0x3f] 0.0
  %1225 = vst [vmem:[#allocation2 + $0x170] sm:$0x3f] 0.0
  %1226 = vst [vmem:[#allocation2 + $0x178] sm:$0x3f] 0.0
  %1227 = vst [vmem:[#allocation2 + $0x180] sm:$0x3f] 0.0
  %1228 = vst [vmem:[#allocation2 + $0x188] sm:$0x3f] 0.0
  %1229 = vst [vmem:[#allocation2 + $0x190] sm:$0x3f] 0.0
  %1230 = vst [vmem:[#allocation2 + $0x198] sm:$0x3f] 0.0
  %1231 = vst [vmem:[#allocation2 + $0x1a0] sm:$0x3f] 0.0
  %1232 = vst [vmem:[#allocation2 + $0x1a8] sm:$0x3f] 0.0
  %1233 = vst [vmem:[#allocation2 + $0x1b0] sm:$0x3f] 0.0
  %1234 = vst [vmem:[#allocation2 + $0x1b8] sm:$0x3f] 0.0
  %1235 = vst [vmem:[#allocation2 + $0x1c0] sm:$0x3f] 0.0
  %1236 = vst [vmem:[#allocation2 + $0x1c8] sm:$0x3f] 0.0
  %1237 = vst [vmem:[#allocation2 + $0x1d0] sm:$0x3f] 0.0
  %1238 = vst [vmem:[#allocation2 + $0x1d8] sm:$0x3f] 0.0
  %1239 = vst [vmem:[#allocation2 + $0x1e0] sm:$0x3f] 0.0
  %1240 = vst [vmem:[#allocation2 + $0x1e8] sm:$0x3f] 0.0
  %1241 = vst [vmem:[#allocation2 + $0x1f0] sm:$0x3f] 0.0
  %1242 = vst [vmem:[#allocation2 + $0x1f8] sm:$0x3f] 0.0
  %1243 = vst [vmem:[#allocation2 + $0x200] sm:$0x3f] 0.0
  %1244 = vst [vmem:[#allocation2 + $0x208] sm:$0x3f] 0.0
  %1245 = vst [vmem:[#allocation2 + $0x210] sm:$0x3f] 0.0
  %1246 = vst [vmem:[#allocation2 + $0x218] sm:$0x3f] 0.0
  %1247 = vst [vmem:[#allocation2 + $0x220] sm:$0x3f] 0.0
  %1248 = vst [vmem:[#allocation2 + $0x228] sm:$0x3f] 0.0
  %1249 = vst [vmem:[#allocation2 + $0x230] sm:$0x3f] 0.0
  %1250 = vst [vmem:[#allocation2 + $0x238] sm:$0x3f] 0.0
  %1251 = vst [vmem:[#allocation2 + $0x240] sm:$0x3f] 0.0
  %1252 = vst [vmem:[#allocation2 + $0x248] sm:$0x3f] 0.0
  %1253 = vst [vmem:[#allocation2 + $0x250] sm:$0x3f] 0.0
  %1254 = vst [vmem:[#allocation2 + $0x258] sm:$0x3f] 0.0
  %1255 = vst [vmem:[#allocation2 + $0x260] sm:$0x3f] 0.0
  %1256 = vst [vmem:[#allocation2 + $0x268] sm:$0x3f] 0.0
  %1257 = vst [vmem:[#allocation2 + $0x270] sm:$0x3f] 0.0
  %1258 = vst [vmem:[#allocation2 + $0x278] sm:$0x3f] 0.0
  %1259 = vst [vmem:[#allocation2 + $0x280] sm:$0x3f] 0.0
  %1260 = vst [vmem:[#allocation2 + $0x288] sm:$0x3f] 0.0
  %1261 = vst [vmem:[#allocation2 + $0x290] sm:$0x3f] 0.0
  %1262 = vst [vmem:[#allocation2 + $0x298] sm:$0x3f] 0.0
  %1263 = vst [vmem:[#allocation2 + $0x2a0] sm:$0x3f] 0.0
  %1264 = vst [vmem:[#allocation2 + $0x2a8] sm:$0x3f] 0.0
  %1265 = vst [vmem:[#allocation2 + $0x2b0] sm:$0x3f] 0.0
  %1266 = vst [vmem:[#allocation2 + $0x2b8] sm:$0x3f] 0.0
  %1267 = vst [vmem:[#allocation2 + $0x2c0] sm:$0x3f] 0.0
  %1268 = vst [vmem:[#allocation2 + $0x2c8] sm:$0x3f] 0.0
  %1269 = vst [vmem:[#allocation2 + $0x2d0] sm:$0x3f] 0.0
  %1270 = vst [vmem:[#allocation2 + $0x2d8] sm:$0x3f] 0.0
  %1271 = vst [vmem:[#allocation2 + $0x2e0] sm:$0x3f] 0.0
  %1272 = vst [vmem:[#allocation2 + $0x2e8] sm:$0x3f] 0.0
  %1273 = vst [vmem:[#allocation2 + $0x2f0] sm:$0x3f] 0.0
  %1274 = vst [vmem:[#allocation2 + $0x2f8] sm:$0x3f] 0.0
  %1275 = vst [vmem:[#allocation2 + $0x300] sm:$0x3f] 0.0
  %1276 = vst [vmem:[#allocation2 + $0x308] sm:$0x3f] 0.0
  %1277 = vst [vmem:[#allocation2 + $0x310] sm:$0x3f] 0.0
  %1278 = vst [vmem:[#allocation2 + $0x318] sm:$0x3f] 0.0
  %1279 = vst [vmem:[#allocation2 + $0x320] sm:$0x3f] 0.0
  %1280 = vst [vmem:[#allocation2 + $0x328] sm:$0x3f] 0.0
  %1281 = vst [vmem:[#allocation2 + $0x330] sm:$0x3f] 0.0
  %1282 = vst [vmem:[#allocation2 + $0x338] sm:$0x3f] 0.0
  %1283 = vst [vmem:[#allocation2 + $0x340] sm:$0x3f] 0.0
  %1284 = vst [vmem:[#allocation2 + $0x348] sm:$0x3f] 0.0
  %1285 = vst [vmem:[#allocation2 + $0x350] sm:$0x3f] 0.0
  %1286 = vst [vmem:[#allocation2 + $0x358] sm:$0x3f] 0.0
  %1287 = vst [vmem:[#allocation2 + $0x360] sm:$0x3f] 0.0
  %1288 = vst [vmem:[#allocation2 + $0x368] sm:$0x3f] 0.0
  %1289 = vst [vmem:[#allocation2 + $0x370] sm:$0x3f] 0.0
  %1290 = vst [vmem:[#allocation2 + $0x378] sm:$0x3f] 0.0
  %1291 = vst [vmem:[#allocation2 + $0x380] sm:$0x3f] 0.0
  %1292 = vst [vmem:[#allocation2 + $0x388] sm:$0x3f] 0.0
  %1293 = vst [vmem:[#allocation2 + $0x390] sm:$0x3f] 0.0
  %1294 = vst [vmem:[#allocation2 + $0x398] sm:$0x3f] 0.0
  %1295 = vst [vmem:[#allocation2 + $0x3a0] sm:$0x3f] 0.0
  %1296 = vst [vmem:[#allocation2 + $0x3a8] sm:$0x3f] 0.0
  %1297 = vst [vmem:[#allocation2 + $0x3b0] sm:$0x3f] 0.0
  %1298 = vst [vmem:[#allocation2 + $0x3b8] sm:$0x3f] 0.0
  %1299 = vst [vmem:[#allocation2 + $0x3c0] sm:$0x3f] 0.0
  %1300 = vst [vmem:[#allocation2 + $0x3c8] sm:$0x3f] 0.0
  %1301 = vst [vmem:[#allocation2 + $0x3d0] sm:$0x3f] 0.0
  %1302 = vst [vmem:[#allocation2 + $0x3d8] sm:$0x3f] 0.0
  %1303 = vst [vmem:[#allocation2 + $0x3e0] sm:$0x3f] 0.0
  %1304 = vst [vmem:[#allocation2 + $0x3e8] sm:$0x3f] 0.0
  %1305 = vst [vmem:[#allocation2 + $0x3f0] sm:$0x3f] 0.0
  %1306 = vst [vmem:[#allocation2 + $0x3f8] sm:$0x3f] 0.0
  %1307 = vst [vmem:[#allocation2 + $0x400] sm:$0x3f] 0.0
  %1308 = vst [vmem:[#allocation2 + $0x408] sm:$0x3f] 0.0
  %1309 = vst [vmem:[#allocation2 + $0x410] sm:$0x3f] 0.0
  %1310 = vst [vmem:[#allocation2 + $0x418] sm:$0x3f] 0.0
  %1311 = vst [vmem:[#allocation2 + $0x420] sm:$0x3f] 0.0
  %1312 = vst [vmem:[#allocation2 + $0x428] sm:$0x3f] 0.0
  %1313 = vst [vmem:[#allocation2 + $0x430] sm:$0x3f] 0.0
  %1314 = vst [vmem:[#allocation2 + $0x438] sm:$0x3f] 0.0
  %1315 = vst [vmem:[#allocation2 + $0x440] sm:$0x3f] 0.0
  %1316 = vst [vmem:[#allocation2 + $0x448] sm:$0x3f] 0.0
  %1317 = vst [vmem:[#allocation2 + $0x450] sm:$0x3f] 0.0
  %1318 = vst [vmem:[#allocation2 + $0x458] sm:$0x3f] 0.0
  %1319 = vst [vmem:[#allocation2 + $0x460] sm:$0x3f] 0.0
  %1320 = vst [vmem:[#allocation2 + $0x468] sm:$0x3f] 0.0
  %1321 = vst [vmem:[#allocation2 + $0x470] sm:$0x3f] 0.0
  %1322 = vst [vmem:[#allocation2 + $0x478] sm:$0x3f] 0.0
  %1323 = vst [vmem:[#allocation2 + $0x480] sm:$0x3f] 0.0
  %1324 = vst [vmem:[#allocation2 + $0x488] sm:$0x3f] 0.0
  %1325 = vst [vmem:[#allocation2 + $0x490] sm:$0x3f] 0.0
  %1326 = vst [vmem:[#allocation2 + $0x498] sm:$0x3f] 0.0
  %1327 = vst [vmem:[#allocation2 + $0x4a0] sm:$0x3f] 0.0
  %1328 = vst [vmem:[#allocation2 + $0x4a8] sm:$0x3f] 0.0
  %1329 = vst [vmem:[#allocation2 + $0x4b0] sm:$0x3f] 0.0
  %1330 = vst [vmem:[#allocation2 + $0x4b8] sm:$0x3f] 0.0
  %1331 = vst [vmem:[#allocation2 + $0x4c0] sm:$0x3f] 0.0
  %1332 = vst [vmem:[#allocation2 + $0x4c8] sm:$0x3f] 0.0
  %1333 = vst [vmem:[#allocation2 + $0x4d0] sm:$0x3f] 0.0
  %1334 = vst [vmem:[#allocation2 + $0x4d8] sm:$0x3f] 0.0
  %1335 = vst [vmem:[#allocation2 + $0x4e0] sm:$0x3f] 0.0
  %1336 = vst [vmem:[#allocation2 + $0x4e8] sm:$0x3f] 0.0
  %1337 = vst [vmem:[#allocation2 + $0x4f0] sm:$0x3f] 0.0
  %1338 = vst [vmem:[#allocation2 + $0x4f8] sm:$0x3f] 0.0
  %1339 = vst [vmem:[#allocation2 + $0x500] sm:$0x3f] 0.0
  %1340 = vst [vmem:[#allocation2 + $0x508] sm:$0x3f] 0.0
  %1341 = vst [vmem:[#allocation2 + $0x510] sm:$0x3f] 0.0
  %1342 = vst [vmem:[#allocation2 + $0x518] sm:$0x3f] 0.0
  %1343 = vst [vmem:[#allocation2 + $0x520] sm:$0x3f] 0.0
  %1344 = vst [vmem:[#allocation2 + $0x528] sm:$0x3f] 0.0
  %1345 = vst [vmem:[#allocation2 + $0x530] sm:$0x3f] 0.0
  %1346 = vst [vmem:[#allocation2 + $0x538] sm:$0x3f] 0.0
  %1347 = vst [vmem:[#allocation2 + $0x540] sm:$0x3f] 0.0
  %1348 = vst [vmem:[#allocation2 + $0x548] sm:$0x3f] 0.0
  %1349 = vst [vmem:[#allocation2 + $0x550] sm:$0x3f] 0.0
  %1350 = vst [vmem:[#allocation2 + $0x558] sm:$0x3f] 0.0
  %1351 = vst [vmem:[#allocation2 + $0x560] sm:$0x3f] 0.0
  %1352 = vst [vmem:[#allocation2 + $0x568] sm:$0x3f] 0.0
  %1353 = vst [vmem:[#allocation2 + $0x570] sm:$0x3f] 0.0
  %1354 = vst [vmem:[#allocation2 + $0x578] sm:$0x3f] 0.0
  %1355 = vst [vmem:[#allocation2 + $0x580] sm:$0x3f] 0.0
  %1356 = vst [vmem:[#allocation2 + $0x588] sm:$0x3f] 0.0
  %1357 = vst [vmem:[#allocation2 + $0x590] sm:$0x3f] 0.0
  %1358 = vst [vmem:[#allocation2 + $0x598] sm:$0x3f] 0.0
  %1359 = vst [vmem:[#allocation2 + $0x5a0] sm:$0x3f] 0.0
  %1360 = vst [vmem:[#allocation2 + $0x5a8] sm:$0x3f] 0.0
  %1361 = vst [vmem:[#allocation2 + $0x5b0] sm:$0x3f] 0.0
  %1362 = vst [vmem:[#allocation2 + $0x5b8] sm:$0x3f] 0.0
  %1363 = vst [vmem:[#allocation2 + $0x5c0] sm:$0x3f] 0.0
  %1364 = vst [vmem:[#allocation2 + $0x5c8] sm:$0x3f] 0.0
  %1365 = vst [vmem:[#allocation2 + $0x5d0] sm:$0x3f] 0.0
  %1366 = vst [vmem:[#allocation2 + $0x5d8] sm:$0x3f] 0.0
  %1367 = vst [vmem:[#allocation2 + $0x5e0] sm:$0x3f] 0.0
  %1368 = vst [vmem:[#allocation2 + $0x5e8] sm:$0x3f] 0.0
  %1369 = vst [vmem:[#allocation2 + $0x5f0] sm:$0x3f] 0.0
  %1370 = vst [vmem:[#allocation2 + $0x5f8] sm:$0x3f] 0.0
  %v1373 = vcombine.high %v1115, %v1115
  %v1374 = vcombine.high %v1116, %v1116
  %s1377 = scalar_lea.vmem [#allocation2], 8
  %1378 = vst [vmem:[%s1377 + $0x1] sm:$0xf] %v1115
  %1379 = vst [vmem:[%s1377 + $0x9] sm:$0xf] %v1373
  %1380 = vst [vmem:[%s1377 + $0x11] sm:$0xf] %v1116
  %1381 = vst [vmem:[%s1377 + $0x19] sm:$0xf] %v1374
  %v1384 = vcombine.high %v1117, %v1117
  %v1385 = vcombine.high %v1118, %v1118
  %s1388 = scalar_lea.vmem [#allocation2], 56
  %1389 = vst [vmem:[%s1388 + $0x1] sm:$0xf] %v1117
  %1390 = vst [vmem:[%s1388 + $0x9] sm:$0xf] %v1384
  %1391 = vst [vmem:[%s1388 + $0x11] sm:$0xf] %v1118
  %1392 = vst [vmem:[%s1388 + $0x19] sm:$0xf] %v1385
  %v1395 = vcombine.high %v1119, %v1119
  %v1396 = vcombine.high %v1120, %v1120
  %s1399 = scalar_lea.vmem [#allocation2], 104
  %1400 = vst [vmem:[%s1399 + $0x1] sm:$0xf] %v1119
  %1401 = vst [vmem:[%s1399 + $0x9] sm:$0xf] %v1395
  %1402 = vst [vmem:[%s1399 + $0x11] sm:$0xf] %v1120
  %1403 = vst [vmem:[%s1399 + $0x19] sm:$0xf] %v1396
  %v1406 = vcombine.high %v1121, %v1121
  %v1407 = vcombine.high %v1122, %v1122
  %s1410 = scalar_lea.vmem [#allocation2], 152
  %1411 = vst [vmem:[%s1410 + $0x1] sm:$0xf] %v1121
  %1412 = vst [vmem:[%s1410 + $0x9] sm:$0xf] %v1406
  %1413 = vst [vmem:[%s1410 + $0x11] sm:$0xf] %v1122
  %1414 = vst [vmem:[%s1410 + $0x19] sm:$0xf] %v1407
  %v1417 = vcombine.high %v1123, %v1123
  %v1418 = vcombine.high %v1124, %v1124
  %s1421 = scalar_lea.vmem [#allocation2], 200
  %1422 = vst [vmem:[%s1421 + $0x1] sm:$0xf] %v1123
  %1423 = vst [vmem:[%s1421 + $0x9] sm:$0xf] %v1417
  %1424 = vst [vmem:[%s1421 + $0x11] sm:$0xf] %v1124
  %1425 = vst [vmem:[%s1421 + $0x19] sm:$0xf] %v1418
  %v1428 = vcombine.high %v1125, %v1125
  %v1429 = vcombine.high %v1126, %v1126
  %s1432 = scalar_lea.vmem [#allocation2], 248
  %1433 = vst [vmem:[%s1432 + $0x1] sm:$0xf] %v1125
  %1434 = vst [vmem:[%s1432 + $0x9] sm:$0xf] %v1428
  %1435 = vst [vmem:[%s1432 + $0x11] sm:$0xf] %v1126
  %1436 = vst [vmem:[%s1432 + $0x19] sm:$0xf] %v1429
  %v1439 = vcombine.high %v1127, %v1127
  %v1440 = vcombine.high %v1128, %v1128
  %s1443 = scalar_lea.vmem [#allocation2], 296
  %1444 = vst [vmem:[%s1443 + $0x1] sm:$0xf] %v1127
  %1445 = vst [vmem:[%s1443 + $0x9] sm:$0xf] %v1439
  %1446 = vst [vmem:[%s1443 + $0x11] sm:$0xf] %v1128
  %1447 = vst [vmem:[%s1443 + $0x19] sm:$0xf] %v1440
  %v1450 = vcombine.high %v1129, %v1129
  %v1451 = vcombine.high %v1130, %v1130
  %s1454 = scalar_lea.vmem [#allocation2], 344
  %1455 = vst [vmem:[%s1454 + $0x1] sm:$0xf] %v1129
  %1456 = vst [vmem:[%s1454 + $0x9] sm:$0xf] %v1450
  %1457 = vst [vmem:[%s1454 + $0x11] sm:$0xf] %v1130
  %1458 = vst [vmem:[%s1454 + $0x19] sm:$0xf] %v1451
  %v1461 = vcombine.high %v1131, %v1131
  %v1462 = vcombine.high %v1132, %v1132
  %s1465 = scalar_lea.vmem [#allocation2], 392
  %1466 = vst [vmem:[%s1465 + $0x1] sm:$0xf] %v1131
  %1467 = vst [vmem:[%s1465 + $0x9] sm:$0xf] %v1461
  %1468 = vst [vmem:[%s1465 + $0x11] sm:$0xf] %v1132
  %1469 = vst [vmem:[%s1465 + $0x19] sm:$0xf] %v1462
  %v1472 = vcombine.high %v1133, %v1133
  %v1473 = vcombine.high %v1134, %v1134
  %s1476 = scalar_lea.vmem [#allocation2], 440
  %1477 = vst [vmem:[%s1476 + $0x1] sm:$0xf] %v1133
  %1478 = vst [vmem:[%s1476 + $0x9] sm:$0xf] %v1472
  %1479 = vst [vmem:[%s1476 + $0x11] sm:$0xf] %v1134
  %1480 = vst [vmem:[%s1476 + $0x19] sm:$0xf] %v1473
  %v1483 = vcombine.high %v1135, %v1135
  %v1484 = vcombine.high %v1136, %v1136
  %s1487 = scalar_lea.vmem [#allocation2], 488
  %1488 = vst [vmem:[%s1487 + $0x1] sm:$0xf] %v1135
  %1489 = vst [vmem:[%s1487 + $0x9] sm:$0xf] %v1483
  %1490 = vst [vmem:[%s1487 + $0x11] sm:$0xf] %v1136
  %1491 = vst [vmem:[%s1487 + $0x19] sm:$0xf] %v1484
  %v1494 = vcombine.high %v1137, %v1137
  %v1495 = vcombine.high %v1138, %v1138
  %s1498 = scalar_lea.vmem [#allocation2], 536
  %1499 = vst [vmem:[%s1498 + $0x1] sm:$0xf] %v1137
  %1500 = vst [vmem:[%s1498 + $0x9] sm:$0xf] %v1494
  %1501 = vst [vmem:[%s1498 + $0x11] sm:$0xf] %v1138
  %1502 = vst [vmem:[%s1498 + $0x19] sm:$0xf] %v1495
  %v1505 = vcombine.high %v1139, %v1139
  %v1506 = vcombine.high %v1140, %v1140
  %s1509 = scalar_lea.vmem [#allocation2], 584
  %1510 = vst [vmem:[%s1509 + $0x1] sm:$0xf] %v1139
  %1511 = vst [vmem:[%s1509 + $0x9] sm:$0xf] %v1505
  %1512 = vst [vmem:[%s1509 + $0x11] sm:$0xf] %v1140
  %1513 = vst [vmem:[%s1509 + $0x19] sm:$0xf] %v1506
  %v1516 = vcombine.high %v1141, %v1141
  %v1517 = vcombine.high %v1142, %v1142
  %s1520 = scalar_lea.vmem [#allocation2], 632
  %1521 = vst [vmem:[%s1520 + $0x1] sm:$0xf] %v1141
  %1522 = vst [vmem:[%s1520 + $0x9] sm:$0xf] %v1516
  %1523 = vst [vmem:[%s1520 + $0x11] sm:$0xf] %v1142
  %1524 = vst [vmem:[%s1520 + $0x19] sm:$0xf] %v1517
  %v1527 = vcombine.high %v1143, %v1143
  %v1528 = vcombine.high %v1144, %v1144
  %s1531 = scalar_lea.vmem [#allocation2], 680
  %1532 = vst [vmem:[%s1531 + $0x1] sm:$0xf] %v1143
  %1533 = vst [vmem:[%s1531 + $0x9] sm:$0xf] %v1527
  %1534 = vst [vmem:[%s1531 + $0x11] sm:$0xf] %v1144
  %1535 = vst [vmem:[%s1531 + $0x19] sm:$0xf] %v1528
  %v1538 = vcombine.high %v1145, %v1145
  %v1539 = vcombine.high %v1146, %v1146
  %s1542 = scalar_lea.vmem [#allocation2], 728
  %1543 = vst [vmem:[%s1542 + $0x1] sm:$0xf] %v1145
  %1544 = vst [vmem:[%s1542 + $0x9] sm:$0xf] %v1538
  %1545 = vst [vmem:[%s1542 + $0x11] sm:$0xf] %v1146
  %1546 = vst [vmem:[%s1542 + $0x19] sm:$0xf] %v1539
  %v1549 = vcombine.high %v1147, %v1147
  %v1550 = vcombine.high %v1148, %v1148
  %s1553 = scalar_lea.vmem [#allocation2], 776
  %1554 = vst [vmem:[%s1553 + $0x1] sm:$0xf] %v1147
  %1555 = vst [vmem:[%s1553 + $0x9] sm:$0xf] %v1549
  %1556 = vst [vmem:[%s1553 + $0x11] sm:$0xf] %v1148
  %1557 = vst [vmem:[%s1553 + $0x19] sm:$0xf] %v1550
  %v1560 = vcombine.high %v1149, %v1149
  %v1561 = vcombine.high %v1150, %v1150
  %s1564 = scalar_lea.vmem [#allocation2], 824
  %1565 = vst [vmem:[%s1564 + $0x1] sm:$0xf] %v1149
  %1566 = vst [vmem:[%s1564 + $0x9] sm:$0xf] %v1560
  %1567 = vst [vmem:[%s1564 + $0x11] sm:$0xf] %v1150
  %1568 = vst [vmem:[%s1564 + $0x19] sm:$0xf] %v1561
  %v1571 = vcombine.high %v1151, %v1151
  %v1572 = vcombine.high %v1152, %v1152
  %s1575 = scalar_lea.vmem [#allocation2], 872
  %1576 = vst [vmem:[%s1575 + $0x1] sm:$0xf] %v1151
  %1577 = vst [vmem:[%s1575 + $0x9] sm:$0xf] %v1571
  %1578 = vst [vmem:[%s1575 + $0x11] sm:$0xf] %v1152
  %1579 = vst [vmem:[%s1575 + $0x19] sm:$0xf] %v1572
  %v1582 = vcombine.high %v1153, %v1153
  %v1583 = vcombine.high %v1154, %v1154
  %s1586 = scalar_lea.vmem [#allocation2], 920
  %1587 = vst [vmem:[%s1586 + $0x1] sm:$0xf] %v1153
  %1588 = vst [vmem:[%s1586 + $0x9] sm:$0xf] %v1582
  %1589 = vst [vmem:[%s1586 + $0x11] sm:$0xf] %v1154
  %1590 = vst [vmem:[%s1586 + $0x19] sm:$0xf] %v1583
  %v1593 = vcombine.high %v1155, %v1155
  %v1594 = vcombine.high %v1156, %v1156
  %s1597 = scalar_lea.vmem [#allocation2], 968
  %1598 = vst [vmem:[%s1597 + $0x1] sm:$0xf] %v1155
  %1599 = vst [vmem:[%s1597 + $0x9] sm:$0xf] %v1593
  %1600 = vst [vmem:[%s1597 + $0x11] sm:$0xf] %v1156
  %1601 = vst [vmem:[%s1597 + $0x19] sm:$0xf] %v1594
  %v1604 = vcombine.high %v1157, %v1157
  %v1605 = vcombine.high %v1158, %v1158
  %s1608 = scalar_lea.vmem [#allocation2], 1016
  %1609 = vst [vmem:[%s1608 + $0x1] sm:$0xf] %v1157
  %1610 = vst [vmem:[%s1608 + $0x9] sm:$0xf] %v1604
  %1611 = vst [vmem:[%s1608 + $0x11] sm:$0xf] %v1158
  %1612 = vst [vmem:[%s1608 + $0x19] sm:$0xf] %v1605
  %v1615 = vcombine.high %v1159, %v1159
  %v1616 = vcombine.high %v1160, %v1160
  %s1619 = scalar_lea.vmem [#allocation2], 1064
  %1620 = vst [vmem:[%s1619 + $0x1] sm:$0xf] %v1159
  %1621 = vst [vmem:[%s1619 + $0x9] sm:$0xf] %v1615
  %1622 = vst [vmem:[%s1619 + $0x11] sm:$0xf] %v1160
  %1623 = vst [vmem:[%s1619 + $0x19] sm:$0xf] %v1616
  %v1626 = vcombine.high %v1161, %v1161
  %v1627 = vcombine.high %v1162, %v1162
  %s1630 = scalar_lea.vmem [#allocation2], 1112
  %1631 = vst [vmem:[%s1630 + $0x1] sm:$0xf] %v1161
  %1632 = vst [vmem:[%s1630 + $0x9] sm:$0xf] %v1626
  %1633 = vst [vmem:[%s1630 + $0x11] sm:$0xf] %v1162
  %1634 = vst [vmem:[%s1630 + $0x19] sm:$0xf] %v1627
  %v1637 = vcombine.high %v1163, %v1163
  %v1638 = vcombine.high %v1164, %v1164
  %s1641 = scalar_lea.vmem [#allocation2], 1160
  %1642 = vst [vmem:[%s1641 + $0x1] sm:$0xf] %v1163
  %1643 = vst [vmem:[%s1641 + $0x9] sm:$0xf] %v1637
  %1644 = vst [vmem:[%s1641 + $0x11] sm:$0xf] %v1164
  %1645 = vst [vmem:[%s1641 + $0x19] sm:$0xf] %v1638
  %v1648 = vcombine.high %v1165, %v1165
  %v1649 = vcombine.high %v1166, %v1166
  %s1652 = scalar_lea.vmem [#allocation2], 1208
  %1653 = vst [vmem:[%s1652 + $0x1] sm:$0xf] %v1165
  %1654 = vst [vmem:[%s1652 + $0x9] sm:$0xf] %v1648
  %1655 = vst [vmem:[%s1652 + $0x11] sm:$0xf] %v1166
  %1656 = vst [vmem:[%s1652 + $0x19] sm:$0xf] %v1649
  %v1659 = vcombine.high %v1167, %v1167
  %v1660 = vcombine.high %v1168, %v1168
  %s1663 = scalar_lea.vmem [#allocation2], 1256
  %1664 = vst [vmem:[%s1663 + $0x1] sm:$0xf] %v1167
  %1665 = vst [vmem:[%s1663 + $0x9] sm:$0xf] %v1659
  %1666 = vst [vmem:[%s1663 + $0x11] sm:$0xf] %v1168
  %1667 = vst [vmem:[%s1663 + $0x19] sm:$0xf] %v1660
  %v1670 = vcombine.high %v1169, %v1169
  %v1671 = vcombine.high %v1170, %v1170
  %s1674 = scalar_lea.vmem [#allocation2], 1304
  %1675 = vst [vmem:[%s1674 + $0x1] sm:$0xf] %v1169
  %1676 = vst [vmem:[%s1674 + $0x9] sm:$0xf] %v1670
  %1677 = vst [vmem:[%s1674 + $0x11] sm:$0xf] %v1170
  %1678 = vst [vmem:[%s1674 + $0x19] sm:$0xf] %v1671
  %v1681 = vcombine.high %v1171, %v1171
  %v1682 = vcombine.high %v1172, %v1172
  %s1685 = scalar_lea.vmem [#allocation2], 1352
  %1686 = vst [vmem:[%s1685 + $0x1] sm:$0xf] %v1171
  %1687 = vst [vmem:[%s1685 + $0x9] sm:$0xf] %v1681
  %1688 = vst [vmem:[%s1685 + $0x11] sm:$0xf] %v1172
  %1689 = vst [vmem:[%s1685 + $0x19] sm:$0xf] %v1682
  %v1692 = vcombine.high %v1173, %v1173
  %v1693 = vcombine.high %v1174, %v1174
  %s1696 = scalar_lea.vmem [#allocation2], 1400
  %1697 = vst [vmem:[%s1696 + $0x1] sm:$0xf] %v1173
  %1698 = vst [vmem:[%s1696 + $0x9] sm:$0xf] %v1692
  %1699 = vst [vmem:[%s1696 + $0x11] sm:$0xf] %v1174
  %1700 = vst [vmem:[%s1696 + $0x19] sm:$0xf] %v1693
  %v1703 = vcombine.high %v1175, %v1175
  %v1704 = vcombine.high %v1176, %v1176
  %s1707 = scalar_lea.vmem [#allocation2], 1448
  %1708 = vst [vmem:[%s1707 + $0x1] sm:$0xf] %v1175
  %1709 = vst [vmem:[%s1707 + $0x9] sm:$0xf] %v1703
  %1710 = vst [vmem:[%s1707 + $0x11] sm:$0xf] %v1176
  %1711 = vst [vmem:[%s1707 + $0x19] sm:$0xf] %v1704
  %v1714 = vcombine.high %v1177, %v1177
  %v1715 = vcombine.high %v1178, %v1178
  %s1718 = scalar_lea.vmem [#allocation2], 1496
  %1719 = vst [vmem:[%s1718 + $0x1] sm:$0xf] %v1177
  %1720 = vst [vmem:[%s1718 + $0x9] sm:$0xf] %v1714
  %1721 = vst [vmem:[%s1718 + $0x11] sm:$0xf] %v1178
  %1722 = vst [vmem:[%s1718 + $0x19] sm:$0xf] %v1715
  %s1723 = scalar_lea.vmem [#allocation2], 720
  %v1724 = vld [vmem:[%s1723] sm:$0xf]
  %v1725 = vld [vmem:[%s1723 + $0x8] sm:$0xf]
  %v1726 = vld [vmem:[%s1723 + $0x10] sm:$0xf]
  %v1727 = vld [vmem:[%s1723 + $0x18] sm:$0xf]
  %v1732 = vcombine.low %v1724, %v1725
  %v1733 = vcombine.low %v1726, %v1727
  %v1736 = vpack.c.bf16 %v1733, %v1732
  %s1737 = scalar_lea.vmem [#allocation2], 576
  %v1738 = vld [vmem:[%s1737 + $0x1] sm:$0xf]
  %v1739 = vld [vmem:[%s1737 + $0x9] sm:$0xf]
  %v1740 = vld [vmem:[%s1737 + $0x11] sm:$0xf]
  %v1741 = vld [vmem:[%s1737 + $0x19] sm:$0xf]
  %v1746 = vcombine.low %v1738, %v1739
  %v1747 = vcombine.low %v1740, %v1741
  %v1750 = vpack.c.bf16 %v1747, %v1746
  %s1751 = scalar_lea.vmem [#allocation2], 624
  %v1752 = vld [vmem:[%s1751 + $0x1] sm:$0xf]
  %v1753 = vld [vmem:[%s1751 + $0x9] sm:$0xf]
  %v1754 = vld [vmem:[%s1751 + $0x11] sm:$0xf]
  %v1755 = vld [vmem:[%s1751 + $0x19] sm:$0xf]
  %v1760 = vcombine.low %v1752, %v1753
  %v1761 = vcombine.low %v1754, %v1755
  %v1764 = vpack.c.bf16 %v1761, %v1760
  %s1765 = scalar_lea.vmem [#allocation2], 672
  %v1766 = vld [vmem:[%s1765 + $0x1] sm:$0xf]
  %v1767 = vld [vmem:[%s1765 + $0x9] sm:$0xf]
  %v1768 = vld [vmem:[%s1765 + $0x11] sm:$0xf]
  %v1769 = vld [vmem:[%s1765 + $0x19] sm:$0xf]
  %v1774 = vcombine.low %v1766, %v1767
  %v1775 = vcombine.low %v1768, %v1769
  %v1778 = vpack.c.bf16 %v1775, %v1774
  %v1779 = vld [vmem:[%s1410] sm:$0xf]
  %v1780 = vld [vmem:[%s1410 + $0x8] sm:$0xf]
  %v1781 = vld [vmem:[%s1410 + $0x10] sm:$0xf]
  %v1782 = vld [vmem:[%s1410 + $0x18] sm:$0xf]
  %v1787 = vcombine.low %v1779, %v1780
  %v1788 = vcombine.low %v1781, %v1782
  %v1791 = vpack.c.bf16 %v1788, %v1787
  %v1792 = vld [vmem:[%s1377 + $0x1] sm:$0xf]
  %v1793 = vld [vmem:[%s1377 + $0x9] sm:$0xf]
  %v1794 = vld [vmem:[%s1377 + $0x11] sm:$0xf]
  %v1795 = vld [vmem:[%s1377 + $0x19] sm:$0xf]
  %v1800 = vcombine.low %v1792, %v1793
  %v1801 = vcombine.low %v1794, %v1795
  %v1804 = vpack.c.bf16 %v1801, %v1800
  %v1805 = vld [vmem:[%s1388 + $0x1] sm:$0xf]
  %v1806 = vld [vmem:[%s1388 + $0x9] sm:$0xf]
  %v1807 = vld [vmem:[%s1388 + $0x11] sm:$0xf]
  %v1808 = vld [vmem:[%s1388 + $0x19] sm:$0xf]
  %v1813 = vcombine.low %v1805, %v1806
  %v1814 = vcombine.low %v1807, %v1808
  %v1817 = vpack.c.bf16 %v1814, %v1813
  %v1818 = vld [vmem:[%s1399 + $0x1] sm:$0xf]
  %v1819 = vld [vmem:[%s1399 + $0x9] sm:$0xf]
  %v1820 = vld [vmem:[%s1399 + $0x11] sm:$0xf]
  %v1821 = vld [vmem:[%s1399 + $0x19] sm:$0xf]
  %v1826 = vcombine.low %v1818, %v1819
  %v1827 = vcombine.low %v1820, %v1821
  %v1830 = vpack.c.bf16 %v1827, %v1826
  %v1831 = vld [vmem:[%s1454] sm:$0xf]
  %v1832 = vld [vmem:[%s1454 + $0x8] sm:$0xf]
  %v1833 = vld [vmem:[%s1454 + $0x10] sm:$0xf]
  %v1834 = vld [vmem:[%s1454 + $0x18] sm:$0xf]
  %v1839 = vcombine.low %v1831, %v1832
  %v1840 = vcombine.low %v1833, %v1834
  %v1843 = vpack.c.bf16 %v1840, %v1839
  %v1844 = vld [vmem:[%s1421 + $0x1] sm:$0xf]
  %v1845 = vld [vmem:[%s1421 + $0x9] sm:$0xf]
  %v1846 = vld [vmem:[%s1421 + $0x11] sm:$0xf]
  %v1847 = vld [vmem:[%s1421 + $0x19] sm:$0xf]
  %v1852 = vcombine.low %v1844, %v1845
  %v1853 = vcombine.low %v1846, %v1847
  %v1856 = vpack.c.bf16 %v1853, %v1852
  %v1857 = vld [vmem:[%s1432 + $0x1] sm:$0xf]
  %v1858 = vld [vmem:[%s1432 + $0x9] sm:$0xf]
  %v1859 = vld [vmem:[%s1432 + $0x11] sm:$0xf]
  %v1860 = vld [vmem:[%s1432 + $0x19] sm:$0xf]
  %v1865 = vcombine.low %v1857, %v1858
  %v1866 = vcombine.low %v1859, %v1860
  %v1869 = vpack.c.bf16 %v1866, %v1865
  %v1870 = vld [vmem:[%s1443 + $0x1] sm:$0xf]
  %v1871 = vld [vmem:[%s1443 + $0x9] sm:$0xf]
  %v1872 = vld [vmem:[%s1443 + $0x11] sm:$0xf]
  %v1873 = vld [vmem:[%s1443 + $0x19] sm:$0xf]
  %v1878 = vcombine.low %v1870, %v1871
  %v1879 = vcombine.low %v1872, %v1873
  %v1882 = vpack.c.bf16 %v1879, %v1878
  %v1883 = vld [vmem:[%s1498] sm:$0xf]
  %v1884 = vld [vmem:[%s1498 + $0x8] sm:$0xf]
  %v1885 = vld [vmem:[%s1498 + $0x10] sm:$0xf]
  %v1886 = vld [vmem:[%s1498 + $0x18] sm:$0xf]
  %v1891 = vcombine.low %v1883, %v1884
  %v1892 = vcombine.low %v1885, %v1886
  %v1895 = vpack.c.bf16 %v1892, %v1891
  %v1896 = vld [vmem:[%s1465 + $0x1] sm:$0xf]
  %v1897 = vld [vmem:[%s1465 + $0x9] sm:$0xf]
  %v1898 = vld [vmem:[%s1465 + $0x11] sm:$0xf]
  %v1899 = vld [vmem:[%s1465 + $0x19] sm:$0xf]
  %v1904 = vcombine.low %v1896, %v1897
  %v1905 = vcombine.low %v1898, %v1899
  %v1908 = vpack.c.bf16 %v1905, %v1904
  %v1909 = vld [vmem:[%s1476 + $0x1] sm:$0xf]
  %v1910 = vld [vmem:[%s1476 + $0x9] sm:$0xf]
  %v1911 = vld [vmem:[%s1476 + $0x11] sm:$0xf]
  %v1912 = vld [vmem:[%s1476 + $0x19] sm:$0xf]
  %v1917 = vcombine.low %v1909, %v1910
  %v1918 = vcombine.low %v1911, %v1912
  %v1921 = vpack.c.bf16 %v1918, %v1917
  %v1922 = vld [vmem:[%s1487 + $0x1] sm:$0xf]
  %v1923 = vld [vmem:[%s1487 + $0x9] sm:$0xf]
  %v1924 = vld [vmem:[%s1487 + $0x11] sm:$0xf]
  %v1925 = vld [vmem:[%s1487 + $0x19] sm:$0xf]
  %v1930 = vcombine.low %v1922, %v1923
  %v1931 = vcombine.low %v1924, %v1925
  %v1934 = vpack.c.bf16 %v1931, %v1930
  %v1935 = vld [vmem:[%s1723 + $0x1] sm:$0xf]
  %v1936 = vld [vmem:[%s1723 + $0x9] sm:$0xf]
  %v1937 = vld [vmem:[%s1723 + $0x11] sm:$0xf]
  %v1938 = vld [vmem:[%s1723 + $0x19] sm:$0xf]
  %v1943 = vcombine.low %v1935, %v1936
  %v1944 = vcombine.low %v1937, %v1938
  %v1947 = vpack.c.bf16 %v1944, %v1943
  %v1948 = vld [vmem:[%s1737 + $0x2] sm:$0xf]
  %v1949 = vld [vmem:[%s1737 + $0xa] sm:$0xf]
  %v1950 = vld [vmem:[%s1737 + $0x12] sm:$0xf]
  %v1951 = vld [vmem:[%s1737 + $0x1a] sm:$0xf]
  %v1956 = vcombine.low %v1948, %v1949
  %v1957 = vcombine.low %v1950, %v1951
  %v1960 = vpack.c.bf16 %v1957, %v1956
  %v1961 = vld [vmem:[%s1410 + $0x1] sm:$0xf]
  %v1962 = vld [vmem:[%s1410 + $0x9] sm:$0xf]
  %v1963 = vld [vmem:[%s1410 + $0x11] sm:$0xf]
  %v1964 = vld [vmem:[%s1410 + $0x19] sm:$0xf]
  %v1969 = vcombine.low %v1961, %v1962
  %v1970 = vcombine.low %v1963, %v1964
  %v1973 = vpack.c.bf16 %v1970, %v1969
  %v1974 = vld [vmem:[%s1377 + $0x2] sm:$0xf]
  %v1975 = vld [vmem:[%s1377 + $0xa] sm:$0xf]
  %v1976 = vld [vmem:[%s1377 + $0x12] sm:$0xf]
  %v1977 = vld [vmem:[%s1377 + $0x1a] sm:$0xf]
  %v1982 = vcombine.low %v1974, %v1975
  %v1983 = vcombine.low %v1976, %v1977
  %v1986 = vpack.c.bf16 %v1983, %v1982
  %v1987 = vld [vmem:[%s1454 + $0x1] sm:$0xf]
  %v1988 = vld [vmem:[%s1454 + $0x9] sm:$0xf]
  %v1989 = vld [vmem:[%s1454 + $0x11] sm:$0xf]
  %v1990 = vld [vmem:[%s1454 + $0x19] sm:$0xf]
  %v1995 = vcombine.low %v1987, %v1988
  %v1996 = vcombine.low %v1989, %v1990
  %v1999 = vpack.c.bf16 %v1996, %v1995
  %v2000 = vld [vmem:[%s1421 + $0x2] sm:$0xf]
  %v2001 = vld [vmem:[%s1421 + $0xa] sm:$0xf]
  %v2002 = vld [vmem:[%s1421 + $0x12] sm:$0xf]
  %v2003 = vld [vmem:[%s1421 + $0x1a] sm:$0xf]
  %v2008 = vcombine.low %v2000, %v2001
  %v2009 = vcombine.low %v2002, %v2003
  %v2012 = vpack.c.bf16 %v2009, %v2008
  %v2013 = vld [vmem:[%s1498 + $0x1] sm:$0xf]
  %v2014 = vld [vmem:[%s1498 + $0x9] sm:$0xf]
  %v2015 = vld [vmem:[%s1498 + $0x11] sm:$0xf]
  %v2016 = vld [vmem:[%s1498 + $0x19] sm:$0xf]
  %v2021 = vcombine.low %v2013, %v2014
  %v2022 = vcombine.low %v2015, %v2016
  %v2025 = vpack.c.bf16 %v2022, %v2021
  %v2026 = vld [vmem:[%s1465 + $0x2] sm:$0xf]
  %v2027 = vld [vmem:[%s1465 + $0xa] sm:$0xf]
  %v2028 = vld [vmem:[%s1465 + $0x12] sm:$0xf]
  %v2029 = vld [vmem:[%s1465 + $0x1a] sm:$0xf]
  %v2034 = vcombine.low %v2026, %v2027
  %v2035 = vcombine.low %v2028, %v2029
  %v2038 = vpack.c.bf16 %v2035, %v2034
  %v2039 = vld [vmem:[%s1542] sm:$0xf]
  %v2040 = vld [vmem:[%s1542 + $0x8] sm:$0xf]
  %v2041 = vld [vmem:[%s1542 + $0x10] sm:$0xf]
  %v2042 = vld [vmem:[%s1542 + $0x18] sm:$0xf]
  %v2047 = vcombine.low %v2039, %v2040
  %v2048 = vcombine.low %v2041, %v2042
  %v2051 = vpack.c.bf16 %v2048, %v2047
  %v2052 = vld [vmem:[%s1509 + $0x1] sm:$0xf]
  %v2053 = vld [vmem:[%s1509 + $0x9] sm:$0xf]
  %v2054 = vld [vmem:[%s1509 + $0x11] sm:$0xf]
  %v2055 = vld [vmem:[%s1509 + $0x19] sm:$0xf]
  %v2060 = vcombine.low %v2052, %v2053
  %v2061 = vcombine.low %v2054, %v2055
  %v2064 = vpack.c.bf16 %v2061, %v2060
  %v2065 = vld [vmem:[%s1520 + $0x1] sm:$0xf]
  %v2066 = vld [vmem:[%s1520 + $0x9] sm:$0xf]
  %v2067 = vld [vmem:[%s1520 + $0x11] sm:$0xf]
  %v2068 = vld [vmem:[%s1520 + $0x19] sm:$0xf]
  %v2073 = vcombine.low %v2065, %v2066
  %v2074 = vcombine.low %v2067, %v2068
  %v2077 = vpack.c.bf16 %v2074, %v2073
  %v2078 = vld [vmem:[%s1531 + $0x1] sm:$0xf]
  %v2079 = vld [vmem:[%s1531 + $0x9] sm:$0xf]
  %v2080 = vld [vmem:[%s1531 + $0x11] sm:$0xf]
  %v2081 = vld [vmem:[%s1531 + $0x19] sm:$0xf]
  %v2086 = vcombine.low %v2078, %v2079
  %v2087 = vcombine.low %v2080, %v2081
  %v2090 = vpack.c.bf16 %v2087, %v2086
  %s2091 = scalar_lea.vmem [#allocation2], 160
  %v2092 = vld [vmem:[%s2091] sm:$0xf]
  %v2093 = vld [vmem:[%s2091 + $0x8] sm:$0xf]
  %v2094 = vld [vmem:[%s2091 + $0x10] sm:$0xf]
  %v2095 = vld [vmem:[%s2091 + $0x18] sm:$0xf]
  %v2100 = vcombine.low %v2092, %v2093
  %v2101 = vcombine.low %v2094, %v2095
  %v2104 = vpack.c.bf16 %v2101, %v2100
  %s2105 = scalar_lea.vmem [#allocation2], 16
  %v2106 = vld [vmem:[%s2105 + $0x1] sm:$0xf]
  %v2107 = vld [vmem:[%s2105 + $0x9] sm:$0xf]
  %v2108 = vld [vmem:[%s2105 + $0x11] sm:$0xf]
  %v2109 = vld [vmem:[%s2105 + $0x19] sm:$0xf]
  %v2114 = vcombine.low %v2106, %v2107
  %v2115 = vcombine.low %v2108, %v2109
  %v2118 = vpack.c.bf16 %v2115, %v2114
  %s2119 = scalar_lea.vmem [#allocation2], 64
  %v2120 = vld [vmem:[%s2119 + $0x1] sm:$0xf]
  %v2121 = vld [vmem:[%s2119 + $0x9] sm:$0xf]
  %v2122 = vld [vmem:[%s2119 + $0x11] sm:$0xf]
  %v2123 = vld [vmem:[%s2119 + $0x19] sm:$0xf]
  %v2128 = vcombine.low %v2120, %v2121
  %v2129 = vcombine.low %v2122, %v2123
  %v2132 = vpack.c.bf16 %v2129, %v2128
  %s2133 = scalar_lea.vmem [#allocation2], 112
  %v2134 = vld [vmem:[%s2133 + $0x1] sm:$0xf]
  %v2135 = vld [vmem:[%s2133 + $0x9] sm:$0xf]
  %v2136 = vld [vmem:[%s2133 + $0x11] sm:$0xf]
  %v2137 = vld [vmem:[%s2133 + $0x19] sm:$0xf]
  %v2142 = vcombine.low %v2134, %v2135
  %v2143 = vcombine.low %v2136, %v2137
  %v2146 = vpack.c.bf16 %v2143, %v2142
  %v2147 = vld [vmem:[%s1542 + $0x1] sm:$0xf]
  %v2148 = vld [vmem:[%s1542 + $0x9] sm:$0xf]
  %v2149 = vld [vmem:[%s1542 + $0x11] sm:$0xf]
  %v2150 = vld [vmem:[%s1542 + $0x19] sm:$0xf]
  %v2155 = vcombine.low %v2147, %v2148
  %v2156 = vcombine.low %v2149, %v2150
  %v2159 = vpack.c.bf16 %v2156, %v2155
  %v2160 = vld [vmem:[%s1509 + $0x2] sm:$0xf]
  %v2161 = vld [vmem:[%s1509 + $0xa] sm:$0xf]
  %v2162 = vld [vmem:[%s1509 + $0x12] sm:$0xf]
  %v2163 = vld [vmem:[%s1509 + $0x1a] sm:$0xf]
  %v2168 = vcombine.low %v2160, %v2161
  %v2169 = vcombine.low %v2162, %v2163
  %v2172 = vpack.c.bf16 %v2169, %v2168
  %v2173 = vld [vmem:[%s2091 + $0x1] sm:$0xf]
  %v2174 = vld [vmem:[%s2091 + $0x9] sm:$0xf]
  %v2175 = vld [vmem:[%s2091 + $0x11] sm:$0xf]
  %v2176 = vld [vmem:[%s2091 + $0x19] sm:$0xf]
  %v2181 = vcombine.low %v2173, %v2174
  %v2182 = vcombine.low %v2175, %v2176
  %v2185 = vpack.c.bf16 %v2182, %v2181
  %v2186 = vld [vmem:[%s2105 + $0x2] sm:$0xf]
  %v2187 = vld [vmem:[%s2105 + $0xa] sm:$0xf]
  %v2188 = vld [vmem:[%s2105 + $0x12] sm:$0xf]
  %v2189 = vld [vmem:[%s2105 + $0x1a] sm:$0xf]
  %v2194 = vcombine.low %v2186, %v2187
  %v2195 = vcombine.low %v2188, %v2189
  %v2198 = vpack.c.bf16 %v2195, %v2194
  %s2199 = scalar_lea.vmem [#allocation2], 1488
  %v2200 = vld [vmem:[%s2199] sm:$0xf]
  %v2201 = vld [vmem:[%s2199 + $0x8] sm:$0xf]
  %v2202 = vld [vmem:[%s2199 + $0x10] sm:$0xf]
  %v2203 = vld [vmem:[%s2199 + $0x18] sm:$0xf]
  %v2208 = vcombine.low %v2200, %v2201
  %v2209 = vcombine.low %v2202, %v2203
  %v2212 = vpack.c.bf16 %v2209, %v2208
  %s2213 = scalar_lea.vmem [#allocation2], 1344
  %v2214 = vld [vmem:[%s2213 + $0x1] sm:$0xf]
  %v2215 = vld [vmem:[%s2213 + $0x9] sm:$0xf]
  %v2216 = vld [vmem:[%s2213 + $0x11] sm:$0xf]
  %v2217 = vld [vmem:[%s2213 + $0x19] sm:$0xf]
  %v2222 = vcombine.low %v2214, %v2215
  %v2223 = vcombine.low %v2216, %v2217
  %v2226 = vpack.c.bf16 %v2223, %v2222
  %s2227 = scalar_lea.vmem [#allocation2], 1392
  %v2228 = vld [vmem:[%s2227 + $0x1] sm:$0xf]
  %v2229 = vld [vmem:[%s2227 + $0x9] sm:$0xf]
  %v2230 = vld [vmem:[%s2227 + $0x11] sm:$0xf]
  %v2231 = vld [vmem:[%s2227 + $0x19] sm:$0xf]
  %v2236 = vcombine.low %v2228, %v2229
  %v2237 = vcombine.low %v2230, %v2231
  %v2240 = vpack.c.bf16 %v2237, %v2236
  %s2241 = scalar_lea.vmem [#allocation2], 1440
  %v2242 = vld [vmem:[%s2241 + $0x1] sm:$0xf]
  %v2243 = vld [vmem:[%s2241 + $0x9] sm:$0xf]
  %v2244 = vld [vmem:[%s2241 + $0x11] sm:$0xf]
  %v2245 = vld [vmem:[%s2241 + $0x19] sm:$0xf]
  %v2250 = vcombine.low %v2242, %v2243
  %v2251 = vcombine.low %v2244, %v2245
  %v2254 = vpack.c.bf16 %v2251, %v2250
  %v2255 = vld [vmem:[%s1586] sm:$0xf]
  %v2256 = vld [vmem:[%s1586 + $0x8] sm:$0xf]
  %v2257 = vld [vmem:[%s1586 + $0x10] sm:$0xf]
  %v2258 = vld [vmem:[%s1586 + $0x18] sm:$0xf]
  %v2263 = vcombine.low %v2255, %v2256
  %v2264 = vcombine.low %v2257, %v2258
  %v2267 = vpack.c.bf16 %v2264, %v2263
  %v2268 = vld [vmem:[%s1553 + $0x1] sm:$0xf]
  %v2269 = vld [vmem:[%s1553 + $0x9] sm:$0xf]
  %v2270 = vld [vmem:[%s1553 + $0x11] sm:$0xf]
  %v2271 = vld [vmem:[%s1553 + $0x19] sm:$0xf]
  %v2276 = vcombine.low %v2268, %v2269
  %v2277 = vcombine.low %v2270, %v2271
  %v2280 = vpack.c.bf16 %v2277, %v2276
  %v2281 = vld [vmem:[%s1564 + $0x1] sm:$0xf]
  %v2282 = vld [vmem:[%s1564 + $0x9] sm:$0xf]
  %v2283 = vld [vmem:[%s1564 + $0x11] sm:$0xf]
  %v2284 = vld [vmem:[%s1564 + $0x19] sm:$0xf]
  %v2289 = vcombine.low %v2281, %v2282
  %v2290 = vcombine.low %v2283, %v2284
  %v2293 = vpack.c.bf16 %v2290, %v2289
  %v2294 = vld [vmem:[%s1575 + $0x1] sm:$0xf]
  %v2295 = vld [vmem:[%s1575 + $0x9] sm:$0xf]
  %v2296 = vld [vmem:[%s1575 + $0x11] sm:$0xf]
  %v2297 = vld [vmem:[%s1575 + $0x19] sm:$0xf]
  %v2302 = vcombine.low %v2294, %v2295
  %v2303 = vcombine.low %v2296, %v2297
  %v2306 = vpack.c.bf16 %v2303, %v2302
  %v2307 = vld [vmem:[%s1630] sm:$0xf]
  %v2308 = vld [vmem:[%s1630 + $0x8] sm:$0xf]
  %v2309 = vld [vmem:[%s1630 + $0x10] sm:$0xf]
  %v2310 = vld [vmem:[%s1630 + $0x18] sm:$0xf]
  %v2315 = vcombine.low %v2307, %v2308
  %v2316 = vcombine.low %v2309, %v2310
  %v2319 = vpack.c.bf16 %v2316, %v2315
  %v2320 = vld [vmem:[%s1597 + $0x1] sm:$0xf]
  %v2321 = vld [vmem:[%s1597 + $0x9] sm:$0xf]
  %v2322 = vld [vmem:[%s1597 + $0x11] sm:$0xf]
  %v2323 = vld [vmem:[%s1597 + $0x19] sm:$0xf]
  %v2328 = vcombine.low %v2320, %v2321
  %v2329 = vcombine.low %v2322, %v2323
  %v2332 = vpack.c.bf16 %v2329, %v2328
  %v2333 = vld [vmem:[%s1608 + $0x1] sm:$0xf]
  %v2334 = vld [vmem:[%s1608 + $0x9] sm:$0xf]
  %v2335 = vld [vmem:[%s1608 + $0x11] sm:$0xf]
  %v2336 = vld [vmem:[%s1608 + $0x19] sm:$0xf]
  %v2341 = vcombine.low %v2333, %v2334
  %v2342 = vcombine.low %v2335, %v2336
  %v2345 = vpack.c.bf16 %v2342, %v2341
  %v2346 = vld [vmem:[%s1619 + $0x1] sm:$0xf]
  %v2347 = vld [vmem:[%s1619 + $0x9] sm:$0xf]
  %v2348 = vld [vmem:[%s1619 + $0x11] sm:$0xf]
  %v2349 = vld [vmem:[%s1619 + $0x19] sm:$0xf]
  %v2354 = vcombine.low %v2346, %v2347
  %v2355 = vcombine.low %v2348, %v2349
  %v2358 = vpack.c.bf16 %v2355, %v2354
  %v2359 = vld [vmem:[%s1674] sm:$0xf]
  %v2360 = vld [vmem:[%s1674 + $0x8] sm:$0xf]
  %v2361 = vld [vmem:[%s1674 + $0x10] sm:$0xf]
  %v2362 = vld [vmem:[%s1674 + $0x18] sm:$0xf]
  %v2367 = vcombine.low %v2359, %v2360
  %v2368 = vcombine.low %v2361, %v2362
  %v2371 = vpack.c.bf16 %v2368, %v2367
  %v2372 = vld [vmem:[%s1641 + $0x1] sm:$0xf]
  %v2373 = vld [vmem:[%s1641 + $0x9] sm:$0xf]
  %v2374 = vld [vmem:[%s1641 + $0x11] sm:$0xf]
  %v2375 = vld [vmem:[%s1641 + $0x19] sm:$0xf]
  %v2380 = vcombine.low %v2372, %v2373
  %v2381 = vcombine.low %v2374, %v2375
  %v2384 = vpack.c.bf16 %v2381, %v2380
  %v2385 = vld [vmem:[%s1652 + $0x1] sm:$0xf]
  %v2386 = vld [vmem:[%s1652 + $0x9] sm:$0xf]
  %v2387 = vld [vmem:[%s1652 + $0x11] sm:$0xf]
  %v2388 = vld [vmem:[%s1652 + $0x19] sm:$0xf]
  %v2393 = vcombine.low %v2385, %v2386
  %v2394 = vcombine.low %v2387, %v2388
  %v2397 = vpack.c.bf16 %v2394, %v2393
  %v2398 = vld [vmem:[%s1663 + $0x1] sm:$0xf]
  %v2399 = vld [vmem:[%s1663 + $0x9] sm:$0xf]
  %v2400 = vld [vmem:[%s1663 + $0x11] sm:$0xf]
  %v2401 = vld [vmem:[%s1663 + $0x19] sm:$0xf]
  %v2406 = vcombine.low %v2398, %v2399
  %v2407 = vcombine.low %v2400, %v2401
  %v2410 = vpack.c.bf16 %v2407, %v2406
  %v2411 = vld [vmem:[%s2199 + $0x1] sm:$0xf]
  %v2412 = vld [vmem:[%s2199 + $0x9] sm:$0xf]
  %v2413 = vld [vmem:[%s2199 + $0x11] sm:$0xf]
  %v2414 = vld [vmem:[%s2199 + $0x19] sm:$0xf]
  %v2419 = vcombine.low %v2411, %v2412
  %v2420 = vcombine.low %v2413, %v2414
  %v2423 = vpack.c.bf16 %v2420, %v2419
  %v2424 = vld [vmem:[%s2213 + $0x2] sm:$0xf]
  %v2425 = vld [vmem:[%s2213 + $0xa] sm:$0xf]
  %v2426 = vld [vmem:[%s2213 + $0x12] sm:$0xf]
  %v2427 = vld [vmem:[%s2213 + $0x1a] sm:$0xf]
  %v2432 = vcombine.low %v2424, %v2425
  %v2433 = vcombine.low %v2426, %v2427
  %v2436 = vpack.c.bf16 %v2433, %v2432
  %v2437 = vld [vmem:[%s1586 + $0x1] sm:$0xf]
  %v2438 = vld [vmem:[%s1586 + $0x9] sm:$0xf]
  %v2439 = vld [vmem:[%s1586 + $0x11] sm:$0xf]
  %v2440 = vld [vmem:[%s1586 + $0x19] sm:$0xf]
  %v2445 = vcombine.low %v2437, %v2438
  %v2446 = vcombine.low %v2439, %v2440
  %v2449 = vpack.c.bf16 %v2446, %v2445
  %v2450 = vld [vmem:[%s1553 + $0x2] sm:$0xf]
  %v2451 = vld [vmem:[%s1553 + $0xa] sm:$0xf]
  %v2452 = vld [vmem:[%s1553 + $0x12] sm:$0xf]
  %v2453 = vld [vmem:[%s1553 + $0x1a] sm:$0xf]
  %v2458 = vcombine.low %v2450, %v2451
  %v2459 = vcombine.low %v2452, %v2453
  %v2462 = vpack.c.bf16 %v2459, %v2458
  %v2463 = vld [vmem:[%s1630 + $0x1] sm:$0xf]
  %v2464 = vld [vmem:[%s1630 + $0x9] sm:$0xf]
  %v2465 = vld [vmem:[%s1630 + $0x11] sm:$0xf]
  %v2466 = vld [vmem:[%s1630 + $0x19] sm:$0xf]
  %v2471 = vcombine.low %v2463, %v2464
  %v2472 = vcombine.low %v2465, %v2466
  %v2475 = vpack.c.bf16 %v2472, %v2471
  %v2476 = vld [vmem:[%s1597 + $0x2] sm:$0xf]
  %v2477 = vld [vmem:[%s1597 + $0xa] sm:$0xf]
  %v2478 = vld [vmem:[%s1597 + $0x12] sm:$0xf]
  %v2479 = vld [vmem:[%s1597 + $0x1a] sm:$0xf]
  %v2484 = vcombine.low %v2476, %v2477
  %v2485 = vcombine.low %v2478, %v2479
  %v2488 = vpack.c.bf16 %v2485, %v2484
  %v2489 = vld [vmem:[%s1674 + $0x1] sm:$0xf]
  %v2490 = vld [vmem:[%s1674 + $0x9] sm:$0xf]
  %v2491 = vld [vmem:[%s1674 + $0x11] sm:$0xf]
  %v2492 = vld [vmem:[%s1674 + $0x19] sm:$0xf]
  %v2497 = vcombine.low %v2489, %v2490
  %v2498 = vcombine.low %v2491, %v2492
  %v2501 = vpack.c.bf16 %v2498, %v2497
  %v2502 = vld [vmem:[%s1641 + $0x2] sm:$0xf]
  %v2503 = vld [vmem:[%s1641 + $0xa] sm:$0xf]
  %v2504 = vld [vmem:[%s1641 + $0x12] sm:$0xf]
  %v2505 = vld [vmem:[%s1641 + $0x1a] sm:$0xf]
  %v2510 = vcombine.low %v2502, %v2503
  %v2511 = vcombine.low %v2504, %v2505
  %v2514 = vpack.c.bf16 %v2511, %v2510
  %v2515 = vld [vmem:[%s1718] sm:$0xf]
  %v2516 = vld [vmem:[%s1718 + $0x8] sm:$0xf]
  %v2517 = vld [vmem:[%s1718 + $0x10] sm:$0xf]
  %v2518 = vld [vmem:[%s1718 + $0x18] sm:$0xf]
  %v2523 = vcombine.low %v2515, %v2516
  %v2524 = vcombine.low %v2517, %v2518
  %v2527 = vpack.c.bf16 %v2524, %v2523
  %v2528 = vld [vmem:[%s1685 + $0x1] sm:$0xf]
  %v2529 = vld [vmem:[%s1685 + $0x9] sm:$0xf]
  %v2530 = vld [vmem:[%s1685 + $0x11] sm:$0xf]
  %v2531 = vld [vmem:[%s1685 + $0x19] sm:$0xf]
  %v2536 = vcombine.low %v2528, %v2529
  %v2537 = vcombine.low %v2530, %v2531
  %v2540 = vpack.c.bf16 %v2537, %v2536
  %v2541 = vld [vmem:[%s1696 + $0x1] sm:$0xf]
  %v2542 = vld [vmem:[%s1696 + $0x9] sm:$0xf]
  %v2543 = vld [vmem:[%s1696 + $0x11] sm:$0xf]
  %v2544 = vld [vmem:[%s1696 + $0x19] sm:$0xf]
  %v2549 = vcombine.low %v2541, %v2542
  %v2550 = vcombine.low %v2543, %v2544
  %v2553 = vpack.c.bf16 %v2550, %v2549
  %v2554 = vld [vmem:[%s1707 + $0x1] sm:$0xf]
  %v2555 = vld [vmem:[%s1707 + $0x9] sm:$0xf]
  %v2556 = vld [vmem:[%s1707 + $0x11] sm:$0xf]
  %v2557 = vld [vmem:[%s1707 + $0x19] sm:$0xf]
  %v2562 = vcombine.low %v2554, %v2555
  %v2563 = vcombine.low %v2556, %v2557
  %v2566 = vpack.c.bf16 %v2563, %v2562
  %s2567 = scalar_lea.vmem [#allocation2], 928
  %v2568 = vld [vmem:[%s2567] sm:$0xf]
  %v2569 = vld [vmem:[%s2567 + $0x8] sm:$0xf]
  %v2570 = vld [vmem:[%s2567 + $0x10] sm:$0xf]
  %v2571 = vld [vmem:[%s2567 + $0x18] sm:$0xf]
  %v2576 = vcombine.low %v2568, %v2569
  %v2577 = vcombine.low %v2570, %v2571
  %v2580 = vpack.c.bf16 %v2577, %v2576
  %s2581 = scalar_lea.vmem [#allocation2], 784
  %v2582 = vld [vmem:[%s2581 + $0x1] sm:$0xf]
  %v2583 = vld [vmem:[%s2581 + $0x9] sm:$0xf]
  %v2584 = vld [vmem:[%s2581 + $0x11] sm:$0xf]
  %v2585 = vld [vmem:[%s2581 + $0x19] sm:$0xf]
  %v2590 = vcombine.low %v2582, %v2583
  %v2591 = vcombine.low %v2584, %v2585
  %v2594 = vpack.c.bf16 %v2591, %v2590
  %s2595 = scalar_lea.vmem [#allocation2], 832
  %v2596 = vld [vmem:[%s2595 + $0x1] sm:$0xf]
  %v2597 = vld [vmem:[%s2595 + $0x9] sm:$0xf]
  %v2598 = vld [vmem:[%s2595 + $0x11] sm:$0xf]
  %v2599 = vld [vmem:[%s2595 + $0x19] sm:$0xf]
  %v2604 = vcombine.low %v2596, %v2597
  %v2605 = vcombine.low %v2598, %v2599
  %v2608 = vpack.c.bf16 %v2605, %v2604
  %s2609 = scalar_lea.vmem [#allocation2], 880
  %v2610 = vld [vmem:[%s2609 + $0x1] sm:$0xf]
  %v2611 = vld [vmem:[%s2609 + $0x9] sm:$0xf]
  %v2612 = vld [vmem:[%s2609 + $0x11] sm:$0xf]
  %v2613 = vld [vmem:[%s2609 + $0x19] sm:$0xf]
  %v2618 = vcombine.low %v2610, %v2611
  %v2619 = vcombine.low %v2612, %v2613
  %v2622 = vpack.c.bf16 %v2619, %v2618
  %v2623 = vld [vmem:[%s1718 + $0x1] sm:$0xf]
  %v2624 = vld [vmem:[%s1718 + $0x9] sm:$0xf]
  %v2625 = vld [vmem:[%s1718 + $0x11] sm:$0xf]
  %v2626 = vld [vmem:[%s1718 + $0x19] sm:$0xf]
  %v2631 = vcombine.low %v2623, %v2624
  %v2632 = vcombine.low %v2625, %v2626
  %v2635 = vpack.c.bf16 %v2632, %v2631
  %v2636 = vld [vmem:[%s1685 + $0x2] sm:$0xf]
  %v2637 = vld [vmem:[%s1685 + $0xa] sm:$0xf]
  %v2638 = vld [vmem:[%s1685 + $0x12] sm:$0xf]
  %v2639 = vld [vmem:[%s1685 + $0x1a] sm:$0xf]
  %v2644 = vcombine.low %v2636, %v2637
  %v2645 = vcombine.low %v2638, %v2639
  %v2648 = vpack.c.bf16 %v2645, %v2644
  %v2649 = vld [vmem:[%s2567 + $0x1] sm:$0xf]
  %v2650 = vld [vmem:[%s2567 + $0x9] sm:$0xf]
  %v2651 = vld [vmem:[%s2567 + $0x11] sm:$0xf]
  %v2652 = vld [vmem:[%s2567 + $0x19] sm:$0xf]
  %v2657 = vcombine.low %v2649, %v2650
  %v2658 = vcombine.low %v2651, %v2652
  %v2661 = vpack.c.bf16 %v2658, %v2657
  %v2662 = vld [vmem:[%s2581 + $0x2] sm:$0xf]
  %v2663 = vld [vmem:[%s2581 + $0xa] sm:$0xf]
  %v2664 = vld [vmem:[%s2581 + $0x12] sm:$0xf]
  %v2665 = vld [vmem:[%s2581 + $0x1a] sm:$0xf]
  %v2670 = vcombine.low %v2662, %v2663
  %v2671 = vcombine.low %v2664, %v2665
  %v2674 = vpack.c.bf16 %v2671, %v2670
  %v2675 = vld [vmem:[%s3] sm:$0xf]
  %v2676 = vld [vmem:[%s3 + $0x4] sm:$0xf]
  %v2677 = vld [vmem:[%s3 + $0x8] sm:$0xf]
  %v2678 = vld [vmem:[%s3 + $0xc] sm:$0xf]
  %v2679 = vld [vmem:[%s3 + $0x10] sm:$0xf]
  %v2680 = vld [vmem:[%s3 + $0x14] sm:$0xf]
  %v2681 = vld [vmem:[%s3 + $0x18] sm:$0xf]
  %v2682 = vld [vmem:[%s3 + $0x1c] sm:$0xf]
  %v2683 = vld [vmem:[%s3 + $0x20] sm:$0xf]
  %v2684 = vld [vmem:[%s3 + $0x24] sm:$0xf]
  %v2685 = vld [vmem:[%s3 + $0x28] sm:$0xf]
  %v2686 = vld [vmem:[%s3 + $0x2c] sm:$0xf]
  %v2687 = vld [vmem:[%s3 + $0x30] sm:$0xf]
  %v2688 = vld [vmem:[%s3 + $0x34] sm:$0xf]
  %v2689 = vld [vmem:[%s3 + $0x38] sm:$0xf]
  %v2690 = vld [vmem:[%s3 + $0x3c] sm:$0xf]
  %v2691 = vld [vmem:[%s3 + $0x40] sm:$0xf]
  %v2692 = vld [vmem:[%s3 + $0x44] sm:$0xf]
  %v2693 = vld [vmem:[%s3 + $0x48] sm:$0xf]
  %v2694 = vld [vmem:[%s3 + $0x4c] sm:$0xf]
  %v2695 = vld [vmem:[%s3 + $0x50] sm:$0xf]
  %v2696 = vld [vmem:[%s3 + $0x54] sm:$0xf]
  %v2697 = vld [vmem:[%s3 + $0x58] sm:$0xf]
  %v2698 = vld [vmem:[%s3 + $0x5c] sm:$0xf]
  %v2699 = vld [vmem:[%s3 + $0x60] sm:$0xf]
  %v2700 = vld [vmem:[%s3 + $0x64] sm:$0xf]
  %v2701 = vld [vmem:[%s3 + $0x68] sm:$0xf]
  %v2702 = vld [vmem:[%s3 + $0x6c] sm:$0xf]
  %v2703 = vld [vmem:[%s3 + $0x70] sm:$0xf]
  %v2704 = vld [vmem:[%s3 + $0x74] sm:$0xf]
  %v2705 = vld [vmem:[%s3 + $0x78] sm:$0xf]
  %v2706 = vld [vmem:[%s3 + $0x7c] sm:$0xf]
  %v2707 = vld [vmem:[%s3 + $0x80] sm:$0xf]
  %v2708 = vld [vmem:[%s3 + $0x84] sm:$0xf]
  %v2709 = vld [vmem:[%s3 + $0x88] sm:$0xf]
  %v2710 = vld [vmem:[%s3 + $0x8c] sm:$0xf]
  %v2711 = vld [vmem:[%s3 + $0x90] sm:$0xf]
  %v2712 = vld [vmem:[%s3 + $0x94] sm:$0xf]
  %v2713 = vld [vmem:[%s3 + $0x98] sm:$0xf]
  %v2714 = vld [vmem:[%s3 + $0x9c] sm:$0xf]
  %v2715 = vld [vmem:[%s3 + $0xa0] sm:$0xf]
  %v2716 = vld [vmem:[%s3 + $0xa4] sm:$0xf]
  %v2717 = vld [vmem:[%s3 + $0xa8] sm:$0xf]
  %v2718 = vld [vmem:[%s3 + $0xac] sm:$0xf]
  %v2719 = vld [vmem:[%s3 + $0xb0] sm:$0xf]
  %v2720 = vld [vmem:[%s3 + $0xb4] sm:$0xf]
  %v2721 = vld [vmem:[%s3 + $0xb8] sm:$0xf]
  %v2722 = vld [vmem:[%s3 + $0xbc] sm:$0xf]
  %v2723 = vld [vmem:[%s3 + $0xc0] sm:$0xf]
  %v2724 = vld [vmem:[%s3 + $0xc4] sm:$0xf]
  %v2725 = vld [vmem:[%s3 + $0xc8] sm:$0xf]
  %v2726 = vld [vmem:[%s3 + $0xcc] sm:$0xf]
  %v2727 = vld [vmem:[%s3 + $0xd0] sm:$0xf]
  %v2728 = vld [vmem:[%s3 + $0xd4] sm:$0xf]
  %v2729 = vld [vmem:[%s3 + $0xd8] sm:$0xf]
  %v2730 = vld [vmem:[%s3 + $0xdc] sm:$0xf]
  %v2731 = vld [vmem:[%s3 + $0xe0] sm:$0xf]
  %v2732 = vld [vmem:[%s3 + $0xe4] sm:$0xf]
  %v2733 = vld [vmem:[%s3 + $0xe8] sm:$0xf]
  %v2734 = vld [vmem:[%s3 + $0xec] sm:$0xf]
  %v2735 = vld [vmem:[%s3 + $0xf0] sm:$0xf]
  %v2736 = vld [vmem:[%s3 + $0xf4] sm:$0xf]
  %v2737 = vld [vmem:[%s3 + $0xf8] sm:$0xf]
  %v2738 = vld [vmem:[%s3 + $0xfc] sm:$0xf]
  %v2739 = vld [vmem:[%s3 + $0x100] sm:$0xf]
  %v2740 = vld [vmem:[%s3 + $0x104] sm:$0xf]
  %v2741 = vld [vmem:[%s3 + $0x108] sm:$0xf]
  %v2742 = vld [vmem:[%s3 + $0x10c] sm:$0xf]
  %v2743 = vld [vmem:[%s3 + $0x110] sm:$0xf]
  %v2744 = vld [vmem:[%s3 + $0x114] sm:$0xf]
  %v2745 = vld [vmem:[%s3 + $0x118] sm:$0xf]
  %v2746 = vld [vmem:[%s3 + $0x11c] sm:$0xf]
  %v2747 = vld [vmem:[%s3 + $0x120] sm:$0xf]
  %v2748 = vld [vmem:[%s3 + $0x124] sm:$0xf]
  %v2749 = vld [vmem:[%s3 + $0x128] sm:$0xf]
  %v2750 = vld [vmem:[%s3 + $0x12c] sm:$0xf]
  %v2751 = vld [vmem:[%s3 + $0x130] sm:$0xf]
  %v2752 = vld [vmem:[%s3 + $0x134] sm:$0xf]
  %v2753 = vld [vmem:[%s3 + $0x138] sm:$0xf]
  %v2754 = vld [vmem:[%s3 + $0x13c] sm:$0xf]
  %v2755 = vld [vmem:[%s3 + $0x140] sm:$0xf]
  %v2756 = vld [vmem:[%s3 + $0x144] sm:$0xf]
  %v2757 = vld [vmem:[%s3 + $0x148] sm:$0xf]
  %v2758 = vld [vmem:[%s3 + $0x14c] sm:$0xf]
  %v2759 = vld [vmem:[%s3 + $0x150] sm:$0xf]
  %v2760 = vld [vmem:[%s3 + $0x154] sm:$0xf]
  %v2761 = vld [vmem:[%s3 + $0x158] sm:$0xf]
  %v2762 = vld [vmem:[%s3 + $0x15c] sm:$0xf]
  %v2763 = vld [vmem:[%s3 + $0x160] sm:$0xf]
  %v2764 = vld [vmem:[%s3 + $0x164] sm:$0xf]
  %v2765 = vld [vmem:[%s3 + $0x168] sm:$0xf]
  %v2766 = vld [vmem:[%s3 + $0x16c] sm:$0xf]
  %v2767 = vld [vmem:[%s3 + $0x170] sm:$0xf]
  %v2768 = vld [vmem:[%s3 + $0x174] sm:$0xf]
  %v2769 = vld [vmem:[%s3 + $0x178] sm:$0xf]
  %v2770 = vld [vmem:[%s3 + $0x17c] sm:$0xf]
  %v2771 = vld [vmem:[%s3 + $0x180] sm:$0xf]
  %v2772 = vld [vmem:[%s3 + $0x184] sm:$0xf]
  %v2773 = vld [vmem:[%s3 + $0x188] sm:$0xf]
  %v2774 = vld [vmem:[%s3 + $0x18c] sm:$0xf]
  %v2775 = vld [vmem:[%s3 + $0x190] sm:$0xf]
  %v2776 = vld [vmem:[%s3 + $0x194] sm:$0xf]
  %v2777 = vld [vmem:[%s3 + $0x198] sm:$0xf]
  %v2778 = vld [vmem:[%s3 + $0x19c] sm:$0xf]
  %v2779 = vld [vmem:[%s3 + $0x1a0] sm:$0xf]
  %v2780 = vld [vmem:[%s3 + $0x1a4] sm:$0xf]
  %v2781 = vld [vmem:[%s3 + $0x1a8] sm:$0xf]
  %v2782 = vld [vmem:[%s3 + $0x1ac] sm:$0xf]
  %v2783 = vld [vmem:[%s3 + $0x1b0] sm:$0xf]
  %v2784 = vld [vmem:[%s3 + $0x1b4] sm:$0xf]
  %v2785 = vld [vmem:[%s3 + $0x1b8] sm:$0xf]
  %v2786 = vld [vmem:[%s3 + $0x1bc] sm:$0xf]
  %v2787 = vld [vmem:[%s3 + $0x1c0] sm:$0xf]
  %v2788 = vld [vmem:[%s3 + $0x1c4] sm:$0xf]
  %v2789 = vld [vmem:[%s3 + $0x1c8] sm:$0xf]
  %v2790 = vld [vmem:[%s3 + $0x1cc] sm:$0xf]
  %v2791 = vld [vmem:[%s3 + $0x1d0] sm:$0xf]
  %v2792 = vld [vmem:[%s3 + $0x1d4] sm:$0xf]
  %v2793 = vld [vmem:[%s3 + $0x1d8] sm:$0xf]
  %v2794 = vld [vmem:[%s3 + $0x1dc] sm:$0xf]
  %v2795 = vld [vmem:[%s3 + $0x1e0] sm:$0xf]
  %v2796 = vld [vmem:[%s3 + $0x1e4] sm:$0xf]
  %v2797 = vld [vmem:[%s3 + $0x1e8] sm:$0xf]
  %v2798 = vld [vmem:[%s3 + $0x1ec] sm:$0xf]
  %v2799 = vld [vmem:[%s3 + $0x1f0] sm:$0xf]
  %v2800 = vld [vmem:[%s3 + $0x1f4] sm:$0xf]
  %v2801 = vld [vmem:[%s3 + $0x1f8] sm:$0xf]
  %v2802 = vld [vmem:[%s3 + $0x1fc] sm:$0xf]
  %v2803 = vld [vmem:[%s3 + $0x200] sm:$0xf]
  %v2804 = vld [vmem:[%s3 + $0x204] sm:$0xf]
  %v2805 = vld [vmem:[%s3 + $0x208] sm:$0xf]
  %v2806 = vld [vmem:[%s3 + $0x20c] sm:$0xf]
  %v2807 = vld [vmem:[%s3 + $0x210] sm:$0xf]
  %v2808 = vld [vmem:[%s3 + $0x214] sm:$0xf]
  %v2809 = vld [vmem:[%s3 + $0x218] sm:$0xf]
  %v2810 = vld [vmem:[%s3 + $0x21c] sm:$0xf]
  %v2811 = vld [vmem:[%s3 + $0x220] sm:$0xf]
  %v2812 = vld [vmem:[%s3 + $0x224] sm:$0xf]
  %v2813 = vld [vmem:[%s3 + $0x228] sm:$0xf]
  %v2814 = vld [vmem:[%s3 + $0x22c] sm:$0xf]
  %v2815 = vld [vmem:[%s3 + $0x230] sm:$0xf]
  %v2816 = vld [vmem:[%s3 + $0x234] sm:$0xf]
  %v2817 = vld [vmem:[%s3 + $0x238] sm:$0xf]
  %v2818 = vld [vmem:[%s3 + $0x23c] sm:$0xf]
  %v2819 = vld [vmem:[%s3 + $0x240] sm:$0xf]
  %v2820 = vld [vmem:[%s3 + $0x244] sm:$0xf]
  %v2821 = vld [vmem:[%s3 + $0x248] sm:$0xf]
  %v2822 = vld [vmem:[%s3 + $0x24c] sm:$0xf]
  %v2823 = vld [vmem:[%s3 + $0x250] sm:$0xf]
  %v2824 = vld [vmem:[%s3 + $0x254] sm:$0xf]
  %v2825 = vld [vmem:[%s3 + $0x258] sm:$0xf]
  %v2826 = vld [vmem:[%s3 + $0x25c] sm:$0xf]
  %v2827 = vld [vmem:[%s3 + $0x260] sm:$0xf]
  %v2828 = vld [vmem:[%s3 + $0x264] sm:$0xf]
  %v2829 = vld [vmem:[%s3 + $0x268] sm:$0xf]
  %v2830 = vld [vmem:[%s3 + $0x26c] sm:$0xf]
  %v2831 = vld [vmem:[%s3 + $0x270] sm:$0xf]
  %v2832 = vld [vmem:[%s3 + $0x274] sm:$0xf]
  %v2833 = vld [vmem:[%s3 + $0x278] sm:$0xf]
  %v2834 = vld [vmem:[%s3 + $0x27c] sm:$0xf]
  %v2835 = vld [vmem:[%s3 + $0x280] sm:$0xf]
  %v2836 = vld [vmem:[%s3 + $0x284] sm:$0xf]
  %v2837 = vld [vmem:[%s3 + $0x288] sm:$0xf]
  %v2838 = vld [vmem:[%s3 + $0x28c] sm:$0xf]
  %v2839 = vld [vmem:[%s3 + $0x290] sm:$0xf]
  %v2840 = vld [vmem:[%s3 + $0x294] sm:$0xf]
  %v2841 = vld [vmem:[%s3 + $0x298] sm:$0xf]
  %v2842 = vld [vmem:[%s3 + $0x29c] sm:$0xf]
  %v2843 = vld [vmem:[%s3 + $0x2a0] sm:$0xf]
  %v2844 = vld [vmem:[%s3 + $0x2a4] sm:$0xf]
  %v2845 = vld [vmem:[%s3 + $0x2a8] sm:$0xf]
  %v2846 = vld [vmem:[%s3 + $0x2ac] sm:$0xf]
  %v2847 = vld [vmem:[%s3 + $0x2b0] sm:$0xf]
  %v2848 = vld [vmem:[%s3 + $0x2b4] sm:$0xf]
  %v2849 = vld [vmem:[%s3 + $0x2b8] sm:$0xf]
  %v2850 = vld [vmem:[%s3 + $0x2bc] sm:$0xf]
  %v2851 = vld [vmem:[%s3 + $0x2c0] sm:$0xf]
  %v2852 = vld [vmem:[%s3 + $0x2c4] sm:$0xf]
  %v2853 = vld [vmem:[%s3 + $0x2c8] sm:$0xf]
  %v2854 = vld [vmem:[%s3 + $0x2cc] sm:$0xf]
  %v2855 = vld [vmem:[%s3 + $0x2d0] sm:$0xf]
  %v2856 = vld [vmem:[%s3 + $0x2d4] sm:$0xf]
  %v2857 = vld [vmem:[%s3 + $0x2d8] sm:$0xf]
  %v2858 = vld [vmem:[%s3 + $0x2dc] sm:$0xf]
  %v2859 = vld [vmem:[%s3 + $0x2e0] sm:$0xf]
  %v2860 = vld [vmem:[%s3 + $0x2e4] sm:$0xf]
  %v2861 = vld [vmem:[%s3 + $0x2e8] sm:$0xf]
  %v2862 = vld [vmem:[%s3 + $0x2ec] sm:$0xf]
  %v2863 = vld [vmem:[%s3 + $0x2f0] sm:$0xf]
  %v2864 = vld [vmem:[%s3 + $0x2f4] sm:$0xf]
  %v2865 = vld [vmem:[%s3 + $0x2f8] sm:$0xf]
  %v2866 = vld [vmem:[%s3 + $0x2fc] sm:$0xf]
  %v2867 = vld [vmem:[%s3 + $0x300] sm:$0xf]
  %v2868 = vld [vmem:[%s3 + $0x304] sm:$0xf]
  %v2869 = vld [vmem:[%s3 + $0x308] sm:$0xf]
  %v2870 = vld [vmem:[%s3 + $0x30c] sm:$0xf]
  %v2871 = vld [vmem:[%s3 + $0x310] sm:$0xf]
  %v2872 = vld [vmem:[%s3 + $0x314] sm:$0xf]
  %v2873 = vld [vmem:[%s3 + $0x318] sm:$0xf]
  %v2874 = vld [vmem:[%s3 + $0x31c] sm:$0xf]
  %v2875 = vld [vmem:[%s3 + $0x320] sm:$0xf]
  %v2876 = vld [vmem:[%s3 + $0x324] sm:$0xf]
  %v2877 = vld [vmem:[%s3 + $0x328] sm:$0xf]
  %v2878 = vld [vmem:[%s3 + $0x32c] sm:$0xf]
  %v2879 = vld [vmem:[%s3 + $0x330] sm:$0xf]
  %v2880 = vld [vmem:[%s3 + $0x334] sm:$0xf]
  %v2881 = vld [vmem:[%s3 + $0x338] sm:$0xf]
  %v2882 = vld [vmem:[%s3 + $0x33c] sm:$0xf]
  %v2883 = vld [vmem:[%s3 + $0x340] sm:$0xf]
  %v2884 = vld [vmem:[%s3 + $0x344] sm:$0xf]
  %v2885 = vld [vmem:[%s3 + $0x348] sm:$0xf]
  %v2886 = vld [vmem:[%s3 + $0x34c] sm:$0xf]
  %v2887 = vld [vmem:[%s3 + $0x350] sm:$0xf]
  %v2888 = vld [vmem:[%s3 + $0x354] sm:$0xf]
  %v2889 = vld [vmem:[%s3 + $0x358] sm:$0xf]
  %v2890 = vld [vmem:[%s3 + $0x35c] sm:$0xf]
  %v2891 = vld [vmem:[%s3 + $0x360] sm:$0xf]
  %v2892 = vld [vmem:[%s3 + $0x364] sm:$0xf]
  %v2893 = vld [vmem:[%s3 + $0x368] sm:$0xf]
  %v2894 = vld [vmem:[%s3 + $0x36c] sm:$0xf]
  %v2895 = vld [vmem:[%s3 + $0x370] sm:$0xf]
  %v2896 = vld [vmem:[%s3 + $0x374] sm:$0xf]
  %v2897 = vld [vmem:[%s3 + $0x378] sm:$0xf]
  %v2898 = vld [vmem:[%s3 + $0x37c] sm:$0xf]
  %v2899 = vld [vmem:[%s3 + $0x380] sm:$0xf]
  %v2900 = vld [vmem:[%s3 + $0x384] sm:$0xf]
  %v2901 = vld [vmem:[%s3 + $0x388] sm:$0xf]
  %v2902 = vld [vmem:[%s3 + $0x38c] sm:$0xf]
  %v2903 = vld [vmem:[%s3 + $0x390] sm:$0xf]
  %v2904 = vld [vmem:[%s3 + $0x394] sm:$0xf]
  %v2905 = vld [vmem:[%s3 + $0x398] sm:$0xf]
  %v2906 = vld [vmem:[%s3 + $0x39c] sm:$0xf]
  %v2907 = vld [vmem:[%s3 + $0x3a0] sm:$0xf]
  %v2908 = vld [vmem:[%s3 + $0x3a4] sm:$0xf]
  %v2909 = vld [vmem:[%s3 + $0x3a8] sm:$0xf]
  %v2910 = vld [vmem:[%s3 + $0x3ac] sm:$0xf]
  %v2911 = vld [vmem:[%s3 + $0x3b0] sm:$0xf]
  %v2912 = vld [vmem:[%s3 + $0x3b4] sm:$0xf]
  %v2913 = vld [vmem:[%s3 + $0x3b8] sm:$0xf]
  %v2914 = vld [vmem:[%s3 + $0x3bc] sm:$0xf]
  %v2915 = vld [vmem:[%s3 + $0x3c0] sm:$0xf]
  %v2916 = vld [vmem:[%s3 + $0x3c4] sm:$0xf]
  %v2917 = vld [vmem:[%s3 + $0x3c8] sm:$0xf]
  %v2918 = vld [vmem:[%s3 + $0x3cc] sm:$0xf]
  %v2919 = vld [vmem:[%s3 + $0x3d0] sm:$0xf]
  %v2920 = vld [vmem:[%s3 + $0x3d4] sm:$0xf]
  %v2921 = vld [vmem:[%s3 + $0x3d8] sm:$0xf]
  %v2922 = vld [vmem:[%s3 + $0x3dc] sm:$0xf]
  %v2923 = vld [vmem:[%s3 + $0x3e0] sm:$0xf]
  %v2924 = vld [vmem:[%s3 + $0x3e4] sm:$0xf]
  %v2925 = vld [vmem:[%s3 + $0x3e8] sm:$0xf]
  %v2926 = vld [vmem:[%s3 + $0x3ec] sm:$0xf]
  %v2927 = vld [vmem:[%s3 + $0x3f0] sm:$0xf]
  %v2928 = vld [vmem:[%s3 + $0x3f4] sm:$0xf]
  %v2929 = vld [vmem:[%s3 + $0x3f8] sm:$0xf]
  %v2930 = vld [vmem:[%s3 + $0x3fc] sm:$0xf]
  %v2931 = vld [vmem:[%s4] sm:$0x1]
  %v2933 = vlaneseq
  %v2934 = vshrl.u32 %v2933, 7
  %v2935 = vsub.s32 0, %v2934
  %v2936 = vrot.slane %v2931, %v2935
  %v3194 = vunpack.c.l.b16 %v2675
  %v3195 = vunpack.c.l.b16 %v2676
  %v3196 = vunpack.c.l.b16 %v2677
  %v3197 = vunpack.c.l.b16 %v2678
  %v3198 = vunpack.c.l.b16 %v2679
  %v3199 = vunpack.c.l.b16 %v2680
  %v3200 = vunpack.c.l.b16 %v2681
  %v3201 = vunpack.c.l.b16 %v2682
  %v3202 = vunpack.c.l.b16 %v2683
  %v3203 = vunpack.c.l.b16 %v2684
  %v3204 = vunpack.c.l.b16 %v2685
  %v3205 = vunpack.c.l.b16 %v2686
  %v3206 = vunpack.c.l.b16 %v2687
  %v3207 = vunpack.c.l.b16 %v2688
  %v3208 = vunpack.c.l.b16 %v2689
  %v3209 = vunpack.c.l.b16 %v2690
  %v3210 = vunpack.c.l.b16 %v2691
  %v3211 = vunpack.c.l.b16 %v2692
  %v3212 = vunpack.c.l.b16 %v2693
  %v3213 = vunpack.c.l.b16 %v2694
  %v3214 = vunpack.c.l.b16 %v2695
  %v3215 = vunpack.c.l.b16 %v2696
  %v3216 = vunpack.c.l.b16 %v2697
  %v3217 = vunpack.c.l.b16 %v2698
  %v3218 = vunpack.c.l.b16 %v2699
  %v3219 = vunpack.c.l.b16 %v2700
  %v3220 = vunpack.c.l.b16 %v2701
  %v3221 = vunpack.c.l.b16 %v2702
  %v3222 = vunpack.c.l.b16 %v2703
  %v3223 = vunpack.c.l.b16 %v2704
  %v3224 = vunpack.c.l.b16 %v2705
  %v3225 = vunpack.c.l.b16 %v2706
  %v3226 = vunpack.c.l.b16 %v2707
  %v3227 = vunpack.c.l.b16 %v2708
  %v3228 = vunpack.c.l.b16 %v2709
  %v3229 = vunpack.c.l.b16 %v2710
  %v3230 = vunpack.c.l.b16 %v2711
  %v3231 = vunpack.c.l.b16 %v2712
  %v3232 = vunpack.c.l.b16 %v2713
  %v3233 = vunpack.c.l.b16 %v2714
  %v3234 = vunpack.c.l.b16 %v2715
  %v3235 = vunpack.c.l.b16 %v2716
  %v3236 = vunpack.c.l.b16 %v2717
  %v3237 = vunpack.c.l.b16 %v2718
  %v3238 = vunpack.c.l.b16 %v2719
  %v3239 = vunpack.c.l.b16 %v2720
  %v3240 = vunpack.c.l.b16 %v2721
  %v3241 = vunpack.c.l.b16 %v2722
  %v3242 = vunpack.c.l.b16 %v2723
  %v3243 = vunpack.c.l.b16 %v2724
  %v3244 = vunpack.c.l.b16 %v2725
  %v3245 = vunpack.c.l.b16 %v2726
  %v3246 = vunpack.c.l.b16 %v2727
  %v3247 = vunpack.c.l.b16 %v2728
  %v3248 = vunpack.c.l.b16 %v2729
  %v3249 = vunpack.c.l.b16 %v2730
  %v3250 = vunpack.c.l.b16 %v2731
  %v3251 = vunpack.c.l.b16 %v2732
  %v3252 = vunpack.c.l.b16 %v2733
  %v3253 = vunpack.c.l.b16 %v2734
  %v3254 = vunpack.c.l.b16 %v2735
  %v3255 = vunpack.c.l.b16 %v2736
  %v3256 = vunpack.c.l.b16 %v2737
  %v3257 = vunpack.c.l.b16 %v2738
  %v3258 = vunpack.c.l.b16 %v2739
  %v3259 = vunpack.c.l.b16 %v2740
  %v3260 = vunpack.c.l.b16 %v2741
  %v3261 = vunpack.c.l.b16 %v2742
  %v3262 = vunpack.c.l.b16 %v2743
  %v3263 = vunpack.c.l.b16 %v2744
  %v3264 = vunpack.c.l.b16 %v2745
  %v3265 = vunpack.c.l.b16 %v2746
  %v3266 = vunpack.c.l.b16 %v2747
  %v3267 = vunpack.c.l.b16 %v2748
  %v3268 = vunpack.c.l.b16 %v2749
  %v3269 = vunpack.c.l.b16 %v2750
  %v3270 = vunpack.c.l.b16 %v2751
  %v3271 = vunpack.c.l.b16 %v2752
  %v3272 = vunpack.c.l.b16 %v2753
  %v3273 = vunpack.c.l.b16 %v2754
  %v3274 = vunpack.c.l.b16 %v2755
  %v3275 = vunpack.c.l.b16 %v2756
  %v3276 = vunpack.c.l.b16 %v2757
  %v3277 = vunpack.c.l.b16 %v2758
  %v3278 = vunpack.c.l.b16 %v2759
  %v3279 = vunpack.c.l.b16 %v2760
  %v3280 = vunpack.c.l.b16 %v2761
  %v3281 = vunpack.c.l.b16 %v2762
  %v3282 = vunpack.c.l.b16 %v2763
  %v3283 = vunpack.c.l.b16 %v2764
  %v3284 = vunpack.c.l.b16 %v2765
  %v3285 = vunpack.c.l.b16 %v2766
  %v3286 = vunpack.c.l.b16 %v2767
  %v3287 = vunpack.c.l.b16 %v2768
  %v3288 = vunpack.c.l.b16 %v2769
  %v3289 = vunpack.c.l.b16 %v2770
  %v3290 = vunpack.c.l.b16 %v2771
  %v3291 = vunpack.c.l.b16 %v2772
  %v3292 = vunpack.c.l.b16 %v2773
  %v3293 = vunpack.c.l.b16 %v2774
  %v3294 = vunpack.c.l.b16 %v2775
  %v3295 = vunpack.c.l.b16 %v2776
  %v3296 = vunpack.c.l.b16 %v2777
  %v3297 = vunpack.c.l.b16 %v2778
  %v3298 = vunpack.c.l.b16 %v2779
  %v3299 = vunpack.c.l.b16 %v2780
  %v3300 = vunpack.c.l.b16 %v2781
  %v3301 = vunpack.c.l.b16 %v2782
  %v3302 = vunpack.c.l.b16 %v2783
  %v3303 = vunpack.c.l.b16 %v2784
  %v3304 = vunpack.c.l.b16 %v2785
  %v3305 = vunpack.c.l.b16 %v2786
  %v3306 = vunpack.c.l.b16 %v2787
  %v3307 = vunpack.c.l.b16 %v2788
  %v3308 = vunpack.c.l.b16 %v2789
  %v3309 = vunpack.c.l.b16 %v2790
  %v3310 = vunpack.c.l.b16 %v2791
  %v3311 = vunpack.c.l.b16 %v2792
  %v3312 = vunpack.c.l.b16 %v2793
  %v3313 = vunpack.c.l.b16 %v2794
  %v3314 = vunpack.c.l.b16 %v2795
  %v3315 = vunpack.c.l.b16 %v2796
  %v3316 = vunpack.c.l.b16 %v2797
  %v3317 = vunpack.c.l.b16 %v2798
  %v3318 = vunpack.c.l.b16 %v2799
  %v3319 = vunpack.c.l.b16 %v2800
  %v3320 = vunpack.c.l.b16 %v2801
  %v3321 = vunpack.c.l.b16 %v2802
  %v3322 = vunpack.c.l.b16 %v2803
  %v3323 = vunpack.c.l.b16 %v2804
  %v3324 = vunpack.c.l.b16 %v2805
  %v3325 = vunpack.c.l.b16 %v2806
  %v3326 = vunpack.c.l.b16 %v2807
  %v3327 = vunpack.c.l.b16 %v2808
  %v3328 = vunpack.c.l.b16 %v2809
  %v3329 = vunpack.c.l.b16 %v2810
  %v3330 = vunpack.c.l.b16 %v2811
  %v3331 = vunpack.c.l.b16 %v2812
  %v3332 = vunpack.c.l.b16 %v2813
  %v3333 = vunpack.c.l.b16 %v2814
  %v3334 = vunpack.c.l.b16 %v2815
  %v3335 = vunpack.c.l.b16 %v2816
  %v3336 = vunpack.c.l.b16 %v2817
  %v3337 = vunpack.c.l.b16 %v2818
  %v3338 = vunpack.c.l.b16 %v2819
  %v3339 = vunpack.c.l.b16 %v2820
  %v3340 = vunpack.c.l.b16 %v2821
  %v3341 = vunpack.c.l.b16 %v2822
  %v3342 = vunpack.c.l.b16 %v2823
  %v3343 = vunpack.c.l.b16 %v2824
  %v3344 = vunpack.c.l.b16 %v2825
  %v3345 = vunpack.c.l.b16 %v2826
  %v3346 = vunpack.c.l.b16 %v2827
  %v3347 = vunpack.c.l.b16 %v2828
  %v3348 = vunpack.c.l.b16 %v2829
  %v3349 = vunpack.c.l.b16 %v2830
  %v3350 = vunpack.c.l.b16 %v2831
  %v3351 = vunpack.c.l.b16 %v2832
  %v3352 = vunpack.c.l.b16 %v2833
  %v3353 = vunpack.c.l.b16 %v2834
  %v3354 = vunpack.c.l.b16 %v2835
  %v3355 = vunpack.c.l.b16 %v2836
  %v3356 = vunpack.c.l.b16 %v2837
  %v3357 = vunpack.c.l.b16 %v2838
  %v3358 = vunpack.c.l.b16 %v2839
  %v3359 = vunpack.c.l.b16 %v2840
  %v3360 = vunpack.c.l.b16 %v2841
  %v3361 = vunpack.c.l.b16 %v2842
  %v3362 = vunpack.c.l.b16 %v2843
  %v3363 = vunpack.c.l.b16 %v2844
  %v3364 = vunpack.c.l.b16 %v2845
  %v3365 = vunpack.c.l.b16 %v2846
  %v3366 = vunpack.c.l.b16 %v2847
  %v3367 = vunpack.c.l.b16 %v2848
  %v3368 = vunpack.c.l.b16 %v2849
  %v3369 = vunpack.c.l.b16 %v2850
  %v3370 = vunpack.c.l.b16 %v2851
  %v3371 = vunpack.c.l.b16 %v2852
  %v3372 = vunpack.c.l.b16 %v2853
  %v3373 = vunpack.c.l.b16 %v2854
  %v3374 = vunpack.c.l.b16 %v2855
  %v3375 = vunpack.c.l.b16 %v2856
  %v3376 = vunpack.c.l.b16 %v2857
  %v3377 = vunpack.c.l.b16 %v2858
  %v3378 = vunpack.c.l.b16 %v2859
  %v3379 = vunpack.c.l.b16 %v2860
  %v3380 = vunpack.c.l.b16 %v2861
  %v3381 = vunpack.c.l.b16 %v2862
  %v3382 = vunpack.c.l.b16 %v2863
  %v3383 = vunpack.c.l.b16 %v2864
  %v3384 = vunpack.c.l.b16 %v2865
  %v3385 = vunpack.c.l.b16 %v2866
  %v3386 = vunpack.c.l.b16 %v2867
  %v3387 = vunpack.c.l.b16 %v2868
  %v3388 = vunpack.c.l.b16 %v2869
  %v3389 = vunpack.c.l.b16 %v2870
  %v3390 = vunpack.c.l.b16 %v2871
  %v3391 = vunpack.c.l.b16 %v2872
  %v3392 = vunpack.c.l.b16 %v2873
  %v3393 = vunpack.c.l.b16 %v2874
  %v3394 = vunpack.c.l.b16 %v2875
  %v3395 = vunpack.c.l.b16 %v2876
  %v3396 = vunpack.c.l.b16 %v2877
  %v3397 = vunpack.c.l.b16 %v2878
  %v3398 = vunpack.c.l.b16 %v2879
  %v3399 = vunpack.c.l.b16 %v2880
  %v3400 = vunpack.c.l.b16 %v2881
  %v3401 = vunpack.c.l.b16 %v2882
  %v3402 = vunpack.c.l.b16 %v2883
  %v3403 = vunpack.c.l.b16 %v2884
  %v3404 = vunpack.c.l.b16 %v2885
  %v3405 = vunpack.c.l.b16 %v2886
  %v3406 = vunpack.c.l.b16 %v2887
  %v3407 = vunpack.c.l.b16 %v2888
  %v3408 = vunpack.c.l.b16 %v2889
  %v3409 = vunpack.c.l.b16 %v2890
  %v3410 = vunpack.c.l.b16 %v2891
  %v3411 = vunpack.c.l.b16 %v2892
  %v3412 = vunpack.c.l.b16 %v2893
  %v3413 = vunpack.c.l.b16 %v2894
  %v3414 = vunpack.c.l.b16 %v2895
  %v3415 = vunpack.c.l.b16 %v2896
  %v3416 = vunpack.c.l.b16 %v2897
  %v3417 = vunpack.c.l.b16 %v2898
  %v3418 = vunpack.c.l.b16 %v2899
  %v3419 = vunpack.c.l.b16 %v2900
  %v3420 = vunpack.c.l.b16 %v2901
  %v3421 = vunpack.c.l.b16 %v2902
  %v3422 = vunpack.c.l.b16 %v2903
  %v3423 = vunpack.c.l.b16 %v2904
  %v3424 = vunpack.c.l.b16 %v2905
  %v3425 = vunpack.c.l.b16 %v2906
  %v3426 = vunpack.c.l.b16 %v2907
  %v3427 = vunpack.c.l.b16 %v2908
  %v3428 = vunpack.c.l.b16 %v2909
  %v3429 = vunpack.c.l.b16 %v2910
  %v3430 = vunpack.c.l.b16 %v2911
  %v3431 = vunpack.c.l.b16 %v2912
  %v3432 = vunpack.c.l.b16 %v2913
  %v3433 = vunpack.c.l.b16 %v2914
  %v3434 = vunpack.c.l.b16 %v2915
  %v3435 = vunpack.c.l.b16 %v2916
  %v3436 = vunpack.c.l.b16 %v2917
  %v3437 = vunpack.c.l.b16 %v2918
  %v3438 = vunpack.c.l.b16 %v2919
  %v3439 = vunpack.c.l.b16 %v2920
  %v3440 = vunpack.c.l.b16 %v2921
  %v3441 = vunpack.c.l.b16 %v2922
  %v3442 = vunpack.c.l.b16 %v2923
  %v3443 = vunpack.c.l.b16 %v2924
  %v3444 = vunpack.c.l.b16 %v2925
  %v3445 = vunpack.c.l.b16 %v2926
  %v3446 = vunpack.c.l.b16 %v2927
  %v3447 = vunpack.c.l.b16 %v2928
  %v3448 = vunpack.c.l.b16 %v2929
  %v3449 = vunpack.c.l.b16 %v2930
  %v3450 = vpack.c.b16 %v3195, %v3194
  %v3451 = vpack.c.b16 %v3197, %v3196
  %v3452 = vpack.c.b16 %v3199, %v3198
  %v3453 = vpack.c.b16 %v3201, %v3200
  %v3454 = vpack.c.b16 %v3203, %v3202
  %v3455 = vpack.c.b16 %v3205, %v3204
  %v3456 = vpack.c.b16 %v3207, %v3206
  %v3457 = vpack.c.b16 %v3209, %v3208
  %v3458 = vpack.c.b16 %v3211, %v3210
  %v3459 = vpack.c.b16 %v3213, %v3212
  %v3460 = vpack.c.b16 %v3215, %v3214
  %v3461 = vpack.c.b16 %v3217, %v3216
  %v3462 = vpack.c.b16 %v3219, %v3218
  %v3463 = vpack.c.b16 %v3221, %v3220
  %v3464 = vpack.c.b16 %v3223, %v3222
  %v3465 = vpack.c.b16 %v3225, %v3224
  %v3466 = vpack.c.b16 %v3227, %v3226
  %v3467 = vpack.c.b16 %v3229, %v3228
  %v3468 = vpack.c.b16 %v3231, %v3230
  %v3469 = vpack.c.b16 %v3233, %v3232
  %v3470 = vpack.c.b16 %v3235, %v3234
  %v3471 = vpack.c.b16 %v3237, %v3236
  %v3472 = vpack.c.b16 %v3239, %v3238
  %v3473 = vpack.c.b16 %v3241, %v3240
  %v3474 = vpack.c.b16 %v3243, %v3242
  %v3475 = vpack.c.b16 %v3245, %v3244
  %v3476 = vpack.c.b16 %v3247, %v3246
  %v3477 = vpack.c.b16 %v3249, %v3248
  %v3478 = vpack.c.b16 %v3251, %v3250
  %v3479 = vpack.c.b16 %v3253, %v3252
  %v3480 = vpack.c.b16 %v3255, %v3254
  %v3481 = vpack.c.b16 %v3257, %v3256
  %v3482 = vpack.c.b16 %v3259, %v3258
  %v3483 = vpack.c.b16 %v3261, %v3260
  %v3484 = vpack.c.b16 %v3263, %v3262
  %v3485 = vpack.c.b16 %v3265, %v3264
  %v3486 = vpack.c.b16 %v3267, %v3266
  %v3487 = vpack.c.b16 %v3269, %v3268
  %v3488 = vpack.c.b16 %v3271, %v3270
  %v3489 = vpack.c.b16 %v3273, %v3272
  %v3490 = vpack.c.b16 %v3275, %v3274
  %v3491 = vpack.c.b16 %v3277, %v3276
  %v3492 = vpack.c.b16 %v3279, %v3278
  %v3493 = vpack.c.b16 %v3281, %v3280
  %v3494 = vpack.c.b16 %v3283, %v3282
  %v3495 = vpack.c.b16 %v3285, %v3284
  %v3496 = vpack.c.b16 %v3287, %v3286
  %v3497 = vpack.c.b16 %v3289, %v3288
  %v3498 = vpack.c.b16 %v3291, %v3290
  %v3499 = vpack.c.b16 %v3293, %v3292
  %v3500 = vpack.c.b16 %v3295, %v3294
  %v3501 = vpack.c.b16 %v3297, %v3296
  %v3502 = vpack.c.b16 %v3299, %v3298
  %v3503 = vpack.c.b16 %v3301, %v3300
  %v3504 = vpack.c.b16 %v3303, %v3302
  %v3505 = vpack.c.b16 %v3305, %v3304
  %v3506 = vpack.c.b16 %v3307, %v3306
  %v3507 = vpack.c.b16 %v3309, %v3308
  %v3508 = vpack.c.b16 %v3311, %v3310
  %v3509 = vpack.c.b16 %v3313, %v3312
  %v3510 = vpack.c.b16 %v3315, %v3314
  %v3511 = vpack.c.b16 %v3317, %v3316
  %v3512 = vpack.c.b16 %v3319, %v3318
  %v3513 = vpack.c.b16 %v3321, %v3320
  %v3514 = vpack.c.b16 %v3323, %v3322
  %v3515 = vpack.c.b16 %v3325, %v3324
  %v3516 = vpack.c.b16 %v3327, %v3326
  %v3517 = vpack.c.b16 %v3329, %v3328
  %v3518 = vpack.c.b16 %v3331, %v3330
  %v3519 = vpack.c.b16 %v3333, %v3332
  %v3520 = vpack.c.b16 %v3335, %v3334
  %v3521 = vpack.c.b16 %v3337, %v3336
  %v3522 = vpack.c.b16 %v3339, %v3338
  %v3523 = vpack.c.b16 %v3341, %v3340
  %v3524 = vpack.c.b16 %v3343, %v3342
  %v3525 = vpack.c.b16 %v3345, %v3344
  %v3526 = vpack.c.b16 %v3347, %v3346
  %v3527 = vpack.c.b16 %v3349, %v3348
  %v3528 = vpack.c.b16 %v3351, %v3350
  %v3529 = vpack.c.b16 %v3353, %v3352
  %v3530 = vpack.c.b16 %v3355, %v3354
  %v3531 = vpack.c.b16 %v3357, %v3356
  %v3532 = vpack.c.b16 %v3359, %v3358
  %v3533 = vpack.c.b16 %v3361, %v3360
  %v3534 = vpack.c.b16 %v3363, %v3362
  %v3535 = vpack.c.b16 %v3365, %v3364
  %v3536 = vpack.c.b16 %v3367, %v3366
  %v3537 = vpack.c.b16 %v3369, %v3368
  %v3538 = vpack.c.b16 %v3371, %v3370
  %v3539 = vpack.c.b16 %v3373, %v3372
  %v3540 = vpack.c.b16 %v3375, %v3374
  %v3541 = vpack.c.b16 %v3377, %v3376
  %v3542 = vpack.c.b16 %v3379, %v3378
  %v3543 = vpack.c.b16 %v3381, %v3380
  %v3544 = vpack.c.b16 %v3383, %v3382
  %v3545 = vpack.c.b16 %v3385, %v3384
  %v3546 = vpack.c.b16 %v3387, %v3386
  %v3547 = vpack.c.b16 %v3389, %v3388
  %v3548 = vpack.c.b16 %v3391, %v3390
  %v3549 = vpack.c.b16 %v3393, %v3392
  %v3550 = vpack.c.b16 %v3395, %v3394
  %v3551 = vpack.c.b16 %v3397, %v3396
  %v3552 = vpack.c.b16 %v3399, %v3398
  %v3553 = vpack.c.b16 %v3401, %v3400
  %v3554 = vpack.c.b16 %v3403, %v3402
  %v3555 = vpack.c.b16 %v3405, %v3404
  %v3556 = vpack.c.b16 %v3407, %v3406
  %v3557 = vpack.c.b16 %v3409, %v3408
  %v3558 = vpack.c.b16 %v3411, %v3410
  %v3559 = vpack.c.b16 %v3413, %v3412
  %v3560 = vpack.c.b16 %v3415, %v3414
  %v3561 = vpack.c.b16 %v3417, %v3416
  %v3562 = vpack.c.b16 %v3419, %v3418
  %v3563 = vpack.c.b16 %v3421, %v3420
  %v3564 = vpack.c.b16 %v3423, %v3422
  %v3565 = vpack.c.b16 %v3425, %v3424
  %v3566 = vpack.c.b16 %v3427, %v3426
  %v3567 = vpack.c.b16 %v3429, %v3428
  %v3568 = vpack.c.b16 %v3431, %v3430
  %v3569 = vpack.c.b16 %v3433, %v3432
  %v3570 = vpack.c.b16 %v3435, %v3434
  %v3571 = vpack.c.b16 %v3437, %v3436
  %v3572 = vpack.c.b16 %v3439, %v3438
  %v3573 = vpack.c.b16 %v3441, %v3440
  %v3574 = vpack.c.b16 %v3443, %v3442
  %v3575 = vpack.c.b16 %v3445, %v3444
  %v3576 = vpack.c.b16 %v3447, %v3446
  %v3577 = vpack.c.b16 %v3449, %v3448
  %3706 = vmatprep.subr.bf16.mxu0 0
  %3707 = vmatpush1.bf16.msra.mxu0 %v3450
  %3708 = vmatprep.subr.bf16.mxu0 0
  %3709 = vmatpush1.bf16.msra.mxu0 %v3451
  %3710 = vmatprep.subr.bf16.mxu0 0
  %3711 = vmatpush1.bf16.msra.mxu0 %v3452
  %3712 = vmatprep.subr.bf16.mxu0 0
  %3713 = vmatpush1.bf16.msra.mxu0 %v3453
  %3714 = vmatprep.subr.bf16.mxu0 0
  %3715 = vmatpush1.bf16.msra.mxu0 %v3454
  %3716 = vmatprep.subr.bf16.mxu0 0
  %3717 = vmatpush1.bf16.msra.mxu0 %v3455
  %3718 = vmatprep.subr.bf16.mxu0 0
  %3719 = vmatpush1.bf16.msra.mxu0 %v3456
  %3720 = vmatprep.subr.bf16.mxu0 0
  %3721 = vmatpush1.bf16.msra.mxu0 %v3457
  %3722 = vmatprep.subr.bf16.mxu0 0
  %3723 = vmatpush1.bf16.msra.mxu0 %v3458
  %3724 = vmatprep.subr.bf16.mxu0 0
  %3725 = vmatpush1.bf16.msra.mxu0 %v3459
  %3726 = vmatprep.subr.bf16.mxu0 0
  %3727 = vmatpush1.bf16.msra.mxu0 %v3460
  %3728 = vmatprep.subr.bf16.mxu0 0
  %3729 = vmatpush1.bf16.msra.mxu0 %v3461
  %3730 = vmatprep.subr.bf16.mxu0 0
  %3731 = vmatpush1.bf16.msra.mxu0 %v3462
  %3732 = vmatprep.subr.bf16.mxu0 0
  %3733 = vmatpush1.bf16.msra.mxu0 %v3463
  %3734 = vmatprep.subr.bf16.mxu0 0
  %3735 = vmatpush1.bf16.msra.mxu0 %v3464
  %3736 = vmatprep.subr.bf16.mxu0 0
  %3737 = vmatpush1.bf16.msra.mxu0 %v3465
  %3738 = vmatprep.mubr.bf16.mxu0 %v1750
  %3739 = vmatmul.mubr.bf16.gmra.mrb[0].mxu0 %v1736
  %v3740 = vpop.f32.mrb[0].mxu0
  %v3741 = vadd.f32 %v2936, %v3740
  %v3742 = vpop.f32.mrb[0].mxu0
  %v3743 = vpop.f32.mrb[0].mxu0
  %v3744 = vadd.f32 %v2936, %v3743
  %v3745 = vpop.f32.mrb[0].mxu0
  %3746 = vmatprep.mubr.bf16.mxu0 %v1778
  %3747 = vmatmul.mubr.bf16.gmra.mrb[0].mxu0 %v1764
  %v3748 = vpop.f32.mrb[0].mxu0
  %v3749 = vadd.f32 %v2936, %v3748
  %v3750 = vpop.f32.mrb[0].mxu0
  %v3751 = vpop.f32.mrb[0].mxu0
  %v3752 = vadd.f32 %v2936, %v3751
  %v3753 = vpop.f32.mrb[0].mxu0
  %3754 = vmatprep.mubr.bf16.mxu0 %v1856
  %3755 = vmatmul.mubr.bf16.gmra.mrb[0].mxu0 %v1843
  %v3756 = vpop.f32.mrb[0].mxu0
  %v3757 = vadd.f32 %v2936, %v3756
  %v3758 = vpop.f32.mrb[0].mxu0
  %v3759 = vpop.f32.mrb[0].mxu0
  %v3760 = vadd.f32 %v2936, %v3759
  %v3761 = vpop.f32.mrb[0].mxu0
  %3762 = vmatprep.mubr.bf16.mxu0 %v1882
  %3763 = vmatmul.mubr.bf16.gmra.mrb[0].mxu0 %v1869
  %v3764 = vpop.f32.mrb[0].mxu0
  %v3765 = vadd.f32 %v2936, %v3764
  %v3766 = vpop.f32.mrb[0].mxu0
  %v3767 = vpop.f32.mrb[0].mxu0
  %v3768 = vadd.f32 %v2936, %v3767
  %v3769 = vpop.f32.mrb[0].mxu0
  %3770 = vmatprep.mubr.bf16.mxu0 %v2226
  %3771 = vmatmul.mubr.bf16.gmra.mrb[0].mxu0 %v2212
  %v3772 = vpop.f32.mrb[0].mxu0
  %v3773 = vadd.f32 %v2936, %v3772
  %v3774 = vpop.f32.mrb[0].mxu0
  %v3775 = vpop.f32.mrb[0].mxu0
  %v3776 = vadd.f32 %v2936, %v3775
  %v3777 = vpop.f32.mrb[0].mxu0
  %3778 = vmatprep.mubr.bf16.mxu0 %v2254
  %3779 = vmatmul.mubr.bf16.gmra.mrb[0].mxu0 %v2240
  %v3780 = vpop.f32.mrb[0].mxu0
  %v3781 = vadd.f32 %v2936, %v3780
  %v3782 = vpop.f32.mrb[0].mxu0
  %v3783 = vpop.f32.mrb[0].mxu0
  %v3784 = vadd.f32 %v2936, %v3783
  %v3785 = vpop.f32.mrb[0].mxu0
  %3786 = vmatprep.mubr.bf16.mxu0 %v2332
  %3787 = vmatmul.mubr.bf16.gmra.mrb[0].mxu0 %v2319
  %v3788 = vpop.f32.mrb[0].mxu0
  %v3789 = vadd.f32 %v2936, %v3788
  %v3790 = vpop.f32.mrb[0].mxu0
  %v3791 = vpop.f32.mrb[0].mxu0
  %v3792 = vadd.f32 %v2936, %v3791
  %v3793 = vpop.f32.mrb[0].mxu0
  %3794 = vmatprep.mubr.bf16.mxu0 %v2358
  %3795 = vmatmul.mubr.bf16.gmra.mrb[0].mxu0 %v2345
  %v3796 = vpop.f32.mrb[0].mxu0
  %v3797 = vadd.f32 %v2936, %v3796
  %v3798 = vpop.f32.mrb[0].mxu0
  %v3799 = vpop.f32.mrb[0].mxu0
  %v3800 = vadd.f32 %v2936, %v3799
  %v3801 = vpop.f32.mrb[0].mxu0
  %3802 = vdwg.mxu0
  %3803 = vmatprep.subr.bf16.mxu0 0
  %3804 = vmatpush1.bf16.msra.mxu0 %v3466
  %3805 = vmatprep.subr.bf16.mxu0 0
  %3806 = vmatpush1.bf16.msra.mxu0 %v3467
  %3807 = vmatprep.subr.bf16.mxu0 0
  %3808 = vmatpush1.bf16.msra.mxu0 %v3468
  %3809 = vmatprep.subr.bf16.mxu0 0
  %3810 = vmatpush1.bf16.msra.mxu0 %v3469
  %3811 = vmatprep.subr.bf16.mxu0 0
  %3812 = vmatpush1.bf16.msra.mxu0 %v3470
  %3813 = vmatprep.subr.bf16.mxu0 0
  %3814 = vmatpush1.bf16.msra.mxu0 %v3471
  %3815 = vmatprep.subr.bf16.mxu0 0
  %3816 = vmatpush1.bf16.msra.mxu0 %v3472
  %3817 = vmatprep.subr.bf16.mxu0 0
  %3818 = vmatpush1.bf16.msra.mxu0 %v3473
  %3819 = vmatprep.subr.bf16.mxu0 0
  %3820 = vmatpush1.bf16.msra.mxu0 %v3474
  %3821 = vmatprep.subr.bf16.mxu0 0
  %3822 = vmatpush1.bf16.msra.mxu0 %v3475
  %3823 = vmatprep.subr.bf16.mxu0 0
  %3824 = vmatpush1.bf16.msra.mxu0 %v3476
  %3825 = vmatprep.subr.bf16.mxu0 0
  %3826 = vmatpush1.bf16.msra.mxu0 %v3477
  %3827 = vmatprep.subr.bf16.mxu0 0
  %3828 = vmatpush1.bf16.msra.mxu0 %v3478
  %3829 = vmatprep.subr.bf16.mxu0 0
  %3830 = vmatpush1.bf16.msra.mxu0 %v3479
  %3831 = vmatprep.subr.bf16.mxu0 0
  %3832 = vmatpush1.bf16.msra.mxu0 %v3480
  %3833 = vmatprep.subr.bf16.mxu0 0
  %3834 = vmatpush1.bf16.msra.mxu0 %v3481
  %3835 = vmatprep.mubr.bf16.mxu0 %v1778
  %3836 = vmatmul.mubr.bf16.gmra.mrb[0].mxu0 %v1764
  %v3837 = vpop.f32.mrb[0].mxu0
  %v3838 = vadd.f32 %v3741, %v3837
  %v3839 = vpop.f32.mrb[0].mxu0
  %v3840 = vpop.f32.mrb[0].mxu0
  %v3841 = vadd.f32 %v3744, %v3840
  %v3842 = vpop.f32.mrb[0].mxu0
  %3843 = vmatprep.mubr.bf16.mxu0 %v1960
  %3844 = vmatmul.mubr.bf16.gmra.mrb[0].mxu0 %v1947
  %v3845 = vpop.f32.mrb[0].mxu0
  %v3846 = vadd.f32 %v3749, %v3845
  %v3847 = vpop.f32.mrb[0].mxu0
  %v3848 = vpop.f32.mrb[0].mxu0
  %v3849 = vadd.f32 %v3752, %v3848
  %v3850 = vpop.f32.mrb[0].mxu0
  %3851 = vmatprep.mubr.bf16.mxu0 %v1882
  %3852 = vmatmul.mubr.bf16.gmra.mrb[0].mxu0 %v1869
  %v3853 = vpop.f32.mrb[0].mxu0
  %v3854 = vadd.f32 %v3757, %v3853
  %v3855 = vpop.f32.mrb[0].mxu0
  %v3856 = vpop.f32.mrb[0].mxu0
  %v3857 = vadd.f32 %v3760, %v3856
  %v3858 = vpop.f32.mrb[0].mxu0
  %3859 = vmatprep.mubr.bf16.mxu0 %v2012
  %3860 = vmatmul.mubr.bf16.gmra.mrb[0].mxu0 %v1999
  %v3861 = vpop.f32.mrb[0].mxu0
  %v3862 = vadd.f32 %v3765, %v3861
  %v3863 = vpop.f32.mrb[0].mxu0
  %v3864 = vpop.f32.mrb[0].mxu0
  %v3865 = vadd.f32 %v3768, %v3864
  %v3866 = vpop.f32.mrb[0].mxu0
  %3867 = vmatprep.mubr.bf16.mxu0 %v2254
  %3868 = vmatmul.mubr.bf16.gmra.mrb[0].mxu0 %v2240
  %v3869 = vpop.f32.mrb[0].mxu0
  %v3870 = vadd.f32 %v3773, %v3869
  %v3871 = vpop.f32.mrb[0].mxu0
  %v3872 = vpop.f32.mrb[0].mxu0
  %v3873 = vadd.f32 %v3776, %v3872
  %v3874 = vpop.f32.mrb[0].mxu0
  %3875 = vmatprep.mubr.bf16.mxu0 %v2436
  %3876 = vmatmul.mubr.bf16.gmra.mrb[0].mxu0 %v2423
  %v3877 = vpop.f32.mrb[0].mxu0
  %v3878 = vadd.f32 %v3781, %v3877
  %v3879 = vpop.f32.mrb[0].mxu0
  %v3880 = vpop.f32.mrb[0].mxu0
  %v3881 = vadd.f32 %v3784, %v3880
  %v3882 = vpop.f32.mrb[0].mxu0
  %3883 = vmatprep.mubr.bf16.mxu0 %v2358
  %3884 = vmatmul.mubr.bf16.gmra.mrb[0].mxu0 %v2345
  %v3885 = vpop.f32.mrb[0].mxu0
  %v3886 = vadd.f32 %v3789, %v3885
  %v3887 = vpop.f32.mrb[0].mxu0
  %v3888 = vpop.f32.mrb[0].mxu0
  %v3889 = vadd.f32 %v3792, %v3888
  %v3890 = vpop.f32.mrb[0].mxu0
  %3891 = vmatprep.mubr.bf16.mxu0 %v2488
  %3892 = vmatmul.mubr.bf16.gmra.mrb[0].mxu0 %v2475
  %v3893 = vpop.f32.mrb[0].mxu0
  %v3894 = vadd.f32 %v3797, %v3893
  %v3895 = vpop.f32.mrb[0].mxu0
  %v3896 = vpop.f32.mrb[0].mxu0
  %v3897 = vadd.f32 %v3800, %v3896
  %v3898 = vpop.f32.mrb[0].mxu0
  %3899 = vdwg.mxu0
  %3900 = vmatprep.subr.bf16.mxu0 0
  %3901 = vmatpush1.bf16.msra.mxu0 %v3482
  %3902 = vmatprep.subr.bf16.mxu0 0
  %3903 = vmatpush1.bf16.msra.mxu0 %v3483
  %3904 = vmatprep.subr.bf16.mxu0 0
  %3905 = vmatpush1.bf16.msra.mxu0 %v3484
  %3906 = vmatprep.subr.bf16.mxu0 0
  %3907 = vmatpush1.bf16.msra.mxu0 %v3485
  %3908 = vmatprep.subr.bf16.mxu0 0
  %3909 = vmatpush1.bf16.msra.mxu0 %v3486
  %3910 = vmatprep.subr.bf16.mxu0 0
  %3911 = vmatpush1.bf16.msra.mxu0 %v3487
  %3912 = vmatprep.subr.bf16.mxu0 0
  %3913 = vmatpush1.bf16.msra.mxu0 %v3488
  %3914 = vmatprep.subr.bf16.mxu0 0
  %3915 = vmatpush1.bf16.msra.mxu0 %v3489
  %3916 = vmatprep.subr.bf16.mxu0 0
  %3917 = vmatpush1.bf16.msra.mxu0 %v3490
  %3918 = vmatprep.subr.bf16.mxu0 0
  %3919 = vmatpush1.bf16.msra.mxu0 %v3491
  %3920 = vmatprep.subr.bf16.mxu0 0
  %3921 = vmatpush1.bf16.msra.mxu0 %v3492
  %3922 = vmatprep.subr.bf16.mxu0 0
  %3923 = vmatpush1.bf16.msra.mxu0 %v3493
  %3924 = vmatprep.subr.bf16.mxu0 0
  %3925 = vmatpush1.bf16.msra.mxu0 %v3494
  %3926 = vmatprep.subr.bf16.mxu0 0
  %3927 = vmatpush1.bf16.msra.mxu0 %v3495
  %3928 = vmatprep.subr.bf16.mxu0 0
  %3929 = vmatpush1.bf16.msra.mxu0 %v3496
  %3930 = vmatprep.subr.bf16.mxu0 0
  %3931 = vmatpush1.bf16.msra.mxu0 %v3497
  %3932 = vmatprep.mubr.bf16.mxu0 %v1804
  %3933 = vmatmul.mubr.bf16.gmra.mrb[0].mxu0 %v1791
  %v3934 = vpop.f32.mrb[0].mxu0
  %v3935 = vadd.f32 %v3838, %v3934
  %v3936 = vpop.f32.mrb[0].mxu0
  %v3937 = vpop.f32.mrb[0].mxu0
  %v3938 = vadd.f32 %v3841, %v3937
  %v3939 = vpop.f32.mrb[0].mxu0
  %3940 = vmatprep.mubr.bf16.mxu0 %v1830
  %3941 = vmatmul.mubr.bf16.gmra.mrb[0].mxu0 %v1817
  %v3942 = vpop.f32.mrb[0].mxu0
  %v3943 = vadd.f32 %v3846, %v3942
  %v3944 = vpop.f32.mrb[0].mxu0
  %v3945 = vpop.f32.mrb[0].mxu0
  %v3946 = vadd.f32 %v3849, %v3945
  %v3947 = vpop.f32.mrb[0].mxu0
  %3948 = vmatprep.mubr.bf16.mxu0 %v1908
  %3949 = vmatmul.mubr.bf16.gmra.mrb[0].mxu0 %v1895
  %v3950 = vpop.f32.mrb[0].mxu0
  %v3951 = vadd.f32 %v3854, %v3950
  %v3952 = vpop.f32.mrb[0].mxu0
  %v3953 = vpop.f32.mrb[0].mxu0
  %v3954 = vadd.f32 %v3857, %v3953
  %v3955 = vpop.f32.mrb[0].mxu0
  %3956 = vmatprep.mubr.bf16.mxu0 %v1934
  %3957 = vmatmul.mubr.bf16.gmra.mrb[0].mxu0 %v1921
  %v3958 = vpop.f32.mrb[0].mxu0
  %v3959 = vadd.f32 %v3862, %v3958
  %v3960 = vpop.f32.mrb[0].mxu0
  %v3961 = vpop.f32.mrb[0].mxu0
  %v3962 = vadd.f32 %v3865, %v3961
  %v3963 = vpop.f32.mrb[0].mxu0
  %3964 = vmatprep.mubr.bf16.mxu0 %v2280
  %3965 = vmatmul.mubr.bf16.gmra.mrb[0].mxu0 %v2267
  %v3966 = vpop.f32.mrb[0].mxu0
  %v3967 = vadd.f32 %v3870, %v3966
  %v3968 = vpop.f32.mrb[0].mxu0
  %v3969 = vpop.f32.mrb[0].mxu0
  %v3970 = vadd.f32 %v3873, %v3969
  %v3971 = vpop.f32.mrb[0].mxu0
  %3972 = vmatprep.mubr.bf16.mxu0 %v2306
  %3973 = vmatmul.mubr.bf16.gmra.mrb[0].mxu0 %v2293
  %v3974 = vpop.f32.mrb[0].mxu0
  %v3975 = vadd.f32 %v3878, %v3974
  %v3976 = vpop.f32.mrb[0].mxu0
  %v3977 = vpop.f32.mrb[0].mxu0
  %v3978 = vadd.f32 %v3881, %v3977
  %v3979 = vpop.f32.mrb[0].mxu0
  %3980 = vmatprep.mubr.bf16.mxu0 %v2384
  %3981 = vmatmul.mubr.bf16.gmra.mrb[0].mxu0 %v2371
  %v3982 = vpop.f32.mrb[0].mxu0
  %v3983 = vadd.f32 %v3886, %v3982
  %v3984 = vpop.f32.mrb[0].mxu0
  %v3985 = vpop.f32.mrb[0].mxu0
  %v3986 = vadd.f32 %v3889, %v3985
  %v3987 = vpop.f32.mrb[0].mxu0
  %3988 = vmatprep.mubr.bf16.mxu0 %v2410
  %3989 = vmatmul.mubr.bf16.gmra.mrb[0].mxu0 %v2397
  %v3990 = vpop.f32.mrb[0].mxu0
  %v3991 = vadd.f32 %v3894, %v3990
  %v3992 = vpop.f32.mrb[0].mxu0
  %v3993 = vpop.f32.mrb[0].mxu0
  %v3994 = vadd.f32 %v3897, %v3993
  %v3995 = vpop.f32.mrb[0].mxu0
  %3996 = vdwg.mxu0
  %3997 = vmatprep.subr.bf16.mxu0 0
  %3998 = vmatpush1.bf16.msra.mxu0 %v3498
  %3999 = vmatprep.subr.bf16.mxu0 0
  %4000 = vmatpush1.bf16.msra.mxu0 %v3499
  %4001 = vmatprep.subr.bf16.mxu0 0
  %4002 = vmatpush1.bf16.msra.mxu0 %v3500
  %4003 = vmatprep.subr.bf16.mxu0 0
  %4004 = vmatpush1.bf16.msra.mxu0 %v3501
  %4005 = vmatprep.subr.bf16.mxu0 0
  %4006 = vmatpush1.bf16.msra.mxu0 %v3502
  %4007 = vmatprep.subr.bf16.mxu0 0
  %4008 = vmatpush1.bf16.msra.mxu0 %v3503
  %4009 = vmatprep.subr.bf16.mxu0 0
  %4010 = vmatpush1.bf16.msra.mxu0 %v3504
  %4011 = vmatprep.subr.bf16.mxu0 0
  %4012 = vmatpush1.bf16.msra.mxu0 %v3505
  %4013 = vmatprep.subr.bf16.mxu0 0
  %4014 = vmatpush1.bf16.msra.mxu0 %v3506
  %4015 = vmatprep.subr.bf16.mxu0 0
  %4016 = vmatpush1.bf16.msra.mxu0 %v3507
  %4017 = vmatprep.subr.bf16.mxu0 0
  %4018 = vmatpush1.bf16.msra.mxu0 %v3508
  %4019 = vmatprep.subr.bf16.mxu0 0
  %4020 = vmatpush1.bf16.msra.mxu0 %v3509
  %4021 = vmatprep.subr.bf16.mxu0 0
  %4022 = vmatpush1.bf16.msra.mxu0 %v3510
  %4023 = vmatprep.subr.bf16.mxu0 0
  %4024 = vmatpush1.bf16.msra.mxu0 %v3511
  %4025 = vmatprep.subr.bf16.mxu0 0
  %4026 = vmatpush1.bf16.msra.mxu0 %v3512
  %4027 = vmatprep.subr.bf16.mxu0 0
  %4028 = vmatpush1.bf16.msra.mxu0 %v3513
  %4029 = vmatprep.mubr.bf16.mxu0 %v1830
  %4030 = vmatmul.mubr.bf16.gmra.mrb[0].mxu0 %v1817
  %v4031 = vpop.f32.mrb[0].mxu0
  %v4032 = vadd.f32 %v3935, %v4031
  %v4033 = vpop.f32.mrb[0].mxu0
  %v4034 = vpop.f32.mrb[0].mxu0
  %v4035 = vadd.f32 %v3938, %v4034
  %v4036 = vpop.f32.mrb[0].mxu0
  %4037 = vmatprep.mubr.bf16.mxu0 %v1986
  %4038 = vmatmul.mubr.bf16.gmra.mrb[0].mxu0 %v1973
  %v4039 = vpop.f32.mrb[0].mxu0
  %v4040 = vadd.f32 %v3943, %v4039
  %v4041 = vpop.f32.mrb[0].mxu0
  %v4042 = vpop.f32.mrb[0].mxu0
  %v4043 = vadd.f32 %v3946, %v4042
  %v4044 = vpop.f32.mrb[0].mxu0
  %4045 = vmatprep.mubr.bf16.mxu0 %v1934
  %4046 = vmatmul.mubr.bf16.gmra.mrb[0].mxu0 %v1921
  %v4047 = vpop.f32.mrb[0].mxu0
  %v4048 = vadd.f32 %v3951, %v4047
  %v4049 = vpop.f32.mrb[0].mxu0
  %v4050 = vpop.f32.mrb[0].mxu0
  %v4051 = vadd.f32 %v3954, %v4050
  %v4052 = vpop.f32.mrb[0].mxu0
  %4053 = vmatprep.mubr.bf16.mxu0 %v2038
  %4054 = vmatmul.mubr.bf16.gmra.mrb[0].mxu0 %v2025
  %v4055 = vpop.f32.mrb[0].mxu0
  %v4056 = vadd.f32 %v3959, %v4055
  %v4057 = vpop.f32.mrb[0].mxu0
  %v4058 = vpop.f32.mrb[0].mxu0
  %v4059 = vadd.f32 %v3962, %v4058
  %v4060 = vpop.f32.mrb[0].mxu0
  %4061 = vmatprep.mubr.bf16.mxu0 %v2306
  %4062 = vmatmul.mubr.bf16.gmra.mrb[0].mxu0 %v2293
  %v4063 = vpop.f32.mrb[0].mxu0
  %v4064 = vadd.f32 %v3967, %v4063
  %v4065 = vpop.f32.mrb[0].mxu0
  %v4066 = vpop.f32.mrb[0].mxu0
  %v4067 = vadd.f32 %v3970, %v4066
  %v4068 = vpop.f32.mrb[0].mxu0
  %4069 = vmatprep.mubr.bf16.mxu0 %v2462
  %4070 = vmatmul.mubr.bf16.gmra.mrb[0].mxu0 %v2449
  %v4071 = vpop.f32.mrb[0].mxu0
  %v4072 = vadd.f32 %v3975, %v4071
  %v4073 = vpop.f32.mrb[0].mxu0
  %v4074 = vpop.f32.mrb[0].mxu0
  %v4075 = vadd.f32 %v3978, %v4074
  %v4076 = vpop.f32.mrb[0].mxu0
  %4077 = vmatprep.mubr.bf16.mxu0 %v2410
  %4078 = vmatmul.mubr.bf16.gmra.mrb[0].mxu0 %v2397
  %v4079 = vpop.f32.mrb[0].mxu0
  %v4080 = vadd.f32 %v3983, %v4079
  %v4081 = vpop.f32.mrb[0].mxu0
  %v4082 = vpop.f32.mrb[0].mxu0
  %v4083 = vadd.f32 %v3986, %v4082
  %v4084 = vpop.f32.mrb[0].mxu0
  %4085 = vmatprep.mubr.bf16.mxu0 %v2514
  %4086 = vmatmul.mubr.bf16.gmra.mrb[0].mxu0 %v2501
  %v4087 = vpop.f32.mrb[0].mxu0
  %v4088 = vadd.f32 %v3991, %v4087
  %v4089 = vpop.f32.mrb[0].mxu0
  %v4090 = vpop.f32.mrb[0].mxu0
  %v4091 = vadd.f32 %v3994, %v4090
  %v4092 = vpop.f32.mrb[0].mxu0
  %4093 = vdwg.mxu0
  %4094 = vmatprep.subr.bf16.mxu0 0
  %4095 = vmatpush1.bf16.msra.mxu0 %v3514
  %4096 = vmatprep.subr.bf16.mxu0 0
  %4097 = vmatpush1.bf16.msra.mxu0 %v3515
  %4098 = vmatprep.subr.bf16.mxu0 0
  %4099 = vmatpush1.bf16.msra.mxu0 %v3516
  %4100 = vmatprep.subr.bf16.mxu0 0
  %4101 = vmatpush1.bf16.msra.mxu0 %v3517
  %4102 = vmatprep.subr.bf16.mxu0 0
  %4103 = vmatpush1.bf16.msra.mxu0 %v3518
  %4104 = vmatprep.subr.bf16.mxu0 0
  %4105 = vmatpush1.bf16.msra.mxu0 %v3519
  %4106 = vmatprep.subr.bf16.mxu0 0
  %4107 = vmatpush1.bf16.msra.mxu0 %v3520
  %4108 = vmatprep.subr.bf16.mxu0 0
  %4109 = vmatpush1.bf16.msra.mxu0 %v3521
  %4110 = vmatprep.subr.bf16.mxu0 0
  %4111 = vmatpush1.bf16.msra.mxu0 %v3522
  %4112 = vmatprep.subr.bf16.mxu0 0
  %4113 = vmatpush1.bf16.msra.mxu0 %v3523
  %4114 = vmatprep.subr.bf16.mxu0 0
  %4115 = vmatpush1.bf16.msra.mxu0 %v3524
  %4116 = vmatprep.subr.bf16.mxu0 0
  %4117 = vmatpush1.bf16.msra.mxu0 %v3525
  %4118 = vmatprep.subr.bf16.mxu0 0
  %4119 = vmatpush1.bf16.msra.mxu0 %v3526
  %4120 = vmatprep.subr.bf16.mxu0 0
  %4121 = vmatpush1.bf16.msra.mxu0 %v3527
  %4122 = vmatprep.subr.bf16.mxu0 0
  %4123 = vmatpush1.bf16.msra.mxu0 %v3528
  %4124 = vmatprep.subr.bf16.mxu0 0
  %4125 = vmatpush1.bf16.msra.mxu0 %v3529
  %4126 = vmatprep.mubr.bf16.mxu0 %v1856
  %4127 = vmatmul.mubr.bf16.gmra.mrb[0].mxu0 %v1843
  %v4128 = vpop.f32.mrb[0].mxu0
  %v4129 = vadd.f32 %v4032, %v4128
  %v4130 = vpop.f32.mrb[0].mxu0
  %v4131 = vpop.f32.mrb[0].mxu0
  %v4132 = vadd.f32 %v4035, %v4131
  %v4133 = vpop.f32.mrb[0].mxu0
  %4134 = vmatprep.mubr.bf16.mxu0 %v1882
  %4135 = vmatmul.mubr.bf16.gmra.mrb[0].mxu0 %v1869
  %v4136 = vpop.f32.mrb[0].mxu0
  %v4137 = vadd.f32 %v4040, %v4136
  %v4138 = vpop.f32.mrb[0].mxu0
  %v4139 = vpop.f32.mrb[0].mxu0
  %v4140 = vadd.f32 %v4043, %v4139
  %v4141 = vpop.f32.mrb[0].mxu0
  %4142 = vmatprep.mubr.bf16.mxu0 %v2064
  %4143 = vmatmul.mubr.bf16.gmra.mrb[0].mxu0 %v2051
  %v4144 = vpop.f32.mrb[0].mxu0
  %v4145 = vadd.f32 %v4048, %v4144
  %v4146 = vpop.f32.mrb[0].mxu0
  %v4147 = vpop.f32.mrb[0].mxu0
  %v4148 = vadd.f32 %v4051, %v4147
  %v4149 = vpop.f32.mrb[0].mxu0
  %4150 = vmatprep.mubr.bf16.mxu0 %v2090
  %4151 = vmatmul.mubr.bf16.gmra.mrb[0].mxu0 %v2077
  %v4152 = vpop.f32.mrb[0].mxu0
  %v4153 = vadd.f32 %v4056, %v4152
  %v4154 = vpop.f32.mrb[0].mxu0
  %v4155 = vpop.f32.mrb[0].mxu0
  %v4156 = vadd.f32 %v4059, %v4155
  %v4157 = vpop.f32.mrb[0].mxu0
  %4158 = vmatprep.mubr.bf16.mxu0 %v2332
  %4159 = vmatmul.mubr.bf16.gmra.mrb[0].mxu0 %v2319
  %v4160 = vpop.f32.mrb[0].mxu0
  %v4161 = vadd.f32 %v4064, %v4160
  %v4162 = vpop.f32.mrb[0].mxu0
  %v4163 = vpop.f32.mrb[0].mxu0
  %v4164 = vadd.f32 %v4067, %v4163
  %v4165 = vpop.f32.mrb[0].mxu0
  %4166 = vmatprep.mubr.bf16.mxu0 %v2358
  %4167 = vmatmul.mubr.bf16.gmra.mrb[0].mxu0 %v2345
  %v4168 = vpop.f32.mrb[0].mxu0
  %v4169 = vadd.f32 %v4072, %v4168
  %v4170 = vpop.f32.mrb[0].mxu0
  %v4171 = vpop.f32.mrb[0].mxu0
  %v4172 = vadd.f32 %v4075, %v4171
  %v4173 = vpop.f32.mrb[0].mxu0
  %4174 = vmatprep.mubr.bf16.mxu0 %v2540
  %4175 = vmatmul.mubr.bf16.gmra.mrb[0].mxu0 %v2527
  %v4176 = vpop.f32.mrb[0].mxu0
  %v4177 = vadd.f32 %v4080, %v4176
  %v4178 = vpop.f32.mrb[0].mxu0
  %v4179 = vpop.f32.mrb[0].mxu0
  %v4180 = vadd.f32 %v4083, %v4179
  %v4181 = vpop.f32.mrb[0].mxu0
  %4182 = vmatprep.mubr.bf16.mxu0 %v2566
  %4183 = vmatmul.mubr.bf16.gmra.mrb[0].mxu0 %v2553
  %v4184 = vpop.f32.mrb[0].mxu0
  %v4185 = vadd.f32 %v4088, %v4184
  %v4186 = vpop.f32.mrb[0].mxu0
  %v4187 = vpop.f32.mrb[0].mxu0
  %v4188 = vadd.f32 %v4091, %v4187
  %v4189 = vpop.f32.mrb[0].mxu0
  %4190 = vdwg.mxu0
  %4191 = vmatprep.subr.bf16.mxu0 0
  %4192 = vmatpush1.bf16.msra.mxu0 %v3530
  %4193 = vmatprep.subr.bf16.mxu0 0
  %4194 = vmatpush1.bf16.msra.mxu0 %v3531
  %4195 = vmatprep.subr.bf16.mxu0 0
  %4196 = vmatpush1.bf16.msra.mxu0 %v3532
  %4197 = vmatprep.subr.bf16.mxu0 0
  %4198 = vmatpush1.bf16.msra.mxu0 %v3533
  %4199 = vmatprep.subr.bf16.mxu0 0
  %4200 = vmatpush1.bf16.msra.mxu0 %v3534
  %4201 = vmatprep.subr.bf16.mxu0 0
  %4202 = vmatpush1.bf16.msra.mxu0 %v3535
  %4203 = vmatprep.subr.bf16.mxu0 0
  %4204 = vmatpush1.bf16.msra.mxu0 %v3536
  %4205 = vmatprep.subr.bf16.mxu0 0
  %4206 = vmatpush1.bf16.msra.mxu0 %v3537
  %4207 = vmatprep.subr.bf16.mxu0 0
  %4208 = vmatpush1.bf16.msra.mxu0 %v3538
  %4209 = vmatprep.subr.bf16.mxu0 0
  %4210 = vmatpush1.bf16.msra.mxu0 %v3539
  %4211 = vmatprep.subr.bf16.mxu0 0
  %4212 = vmatpush1.bf16.msra.mxu0 %v3540
  %4213 = vmatprep.subr.bf16.mxu0 0
  %4214 = vmatpush1.bf16.msra.mxu0 %v3541
  %4215 = vmatprep.subr.bf16.mxu0 0
  %4216 = vmatpush1.bf16.msra.mxu0 %v3542
  %4217 = vmatprep.subr.bf16.mxu0 0
  %4218 = vmatpush1.bf16.msra.mxu0 %v3543
  %4219 = vmatprep.subr.bf16.mxu0 0
  %4220 = vmatpush1.bf16.msra.mxu0 %v3544
  %4221 = vmatprep.subr.bf16.mxu0 0
  %4222 = vmatpush1.bf16.msra.mxu0 %v3545
  %4223 = vmatprep.mubr.bf16.mxu0 %v1882
  %4224 = vmatmul.mubr.bf16.gmra.mrb[0].mxu0 %v1869
  %v4225 = vpop.f32.mrb[0].mxu0
  %v4226 = vadd.f32 %v4129, %v4225
  %v4227 = vpop.f32.mrb[0].mxu0
  %v4228 = vpop.f32.mrb[0].mxu0
  %v4229 = vadd.f32 %v4132, %v4228
  %v4230 = vpop.f32.mrb[0].mxu0
  %4231 = vmatprep.mubr.bf16.mxu0 %v2012
  %4232 = vmatmul.mubr.bf16.gmra.mrb[0].mxu0 %v1999
  %v4233 = vpop.f32.mrb[0].mxu0
  %v4234 = vadd.f32 %v4137, %v4233
  %v4235 = vpop.f32.mrb[0].mxu0
  %v4236 = vpop.f32.mrb[0].mxu0
  %v4237 = vadd.f32 %v4140, %v4236
  %v4238 = vpop.f32.mrb[0].mxu0
  %4239 = vmatprep.mubr.bf16.mxu0 %v2090
  %4240 = vmatmul.mubr.bf16.gmra.mrb[0].mxu0 %v2077
  %v4241 = vpop.f32.mrb[0].mxu0
  %v4242 = vadd.f32 %v4145, %v4241
  %v4243 = vpop.f32.mrb[0].mxu0
  %v4244 = vpop.f32.mrb[0].mxu0
  %v4245 = vadd.f32 %v4148, %v4244
  %v4246 = vpop.f32.mrb[0].mxu0
  %4247 = vmatprep.mubr.bf16.mxu0 %v2172
  %4248 = vmatmul.mubr.bf16.gmra.mrb[0].mxu0 %v2159
  %v4249 = vpop.f32.mrb[0].mxu0
  %v4250 = vadd.f32 %v4153, %v4249
  %v4251 = vpop.f32.mrb[0].mxu0
  %v4252 = vpop.f32.mrb[0].mxu0
  %v4253 = vadd.f32 %v4156, %v4252
  %v4254 = vpop.f32.mrb[0].mxu0
  %4255 = vmatprep.mubr.bf16.mxu0 %v2358
  %4256 = vmatmul.mubr.bf16.gmra.mrb[0].mxu0 %v2345
  %v4257 = vpop.f32.mrb[0].mxu0
  %v4258 = vadd.f32 %v4161, %v4257
  %v4259 = vpop.f32.mrb[0].mxu0
  %v4260 = vpop.f32.mrb[0].mxu0
  %v4261 = vadd.f32 %v4164, %v4260
  %v4262 = vpop.f32.mrb[0].mxu0
  %4263 = vmatprep.mubr.bf16.mxu0 %v2488
  %4264 = vmatmul.mubr.bf16.gmra.mrb[0].mxu0 %v2475
  %v4265 = vpop.f32.mrb[0].mxu0
  %v4266 = vadd.f32 %v4169, %v4265
  %v4267 = vpop.f32.mrb[0].mxu0
  %v4268 = vpop.f32.mrb[0].mxu0
  %v4269 = vadd.f32 %v4172, %v4268
  %v4270 = vpop.f32.mrb[0].mxu0
  %4271 = vmatprep.mubr.bf16.mxu0 %v2566
  %4272 = vmatmul.mubr.bf16.gmra.mrb[0].mxu0 %v2553
  %v4273 = vpop.f32.mrb[0].mxu0
  %v4274 = vadd.f32 %v4177, %v4273
  %v4275 = vpop.f32.mrb[0].mxu0
  %v4276 = vpop.f32.mrb[0].mxu0
  %v4277 = vadd.f32 %v4180, %v4276
  %v4278 = vpop.f32.mrb[0].mxu0
  %4279 = vmatprep.mubr.bf16.mxu0 %v2648
  %4280 = vmatmul.mubr.bf16.gmra.mrb[0].mxu0 %v2635
  %v4281 = vpop.f32.mrb[0].mxu0
  %v4282 = vadd.f32 %v4185, %v4281
  %v4283 = vpop.f32.mrb[0].mxu0
  %v4284 = vpop.f32.mrb[0].mxu0
  %v4285 = vadd.f32 %v4188, %v4284
  %v4286 = vpop.f32.mrb[0].mxu0
  %4287 = vdwg.mxu0
  %4288 = vmatprep.subr.bf16.mxu0 0
  %4289 = vmatpush1.bf16.msra.mxu0 %v3546
  %4290 = vmatprep.subr.bf16.mxu0 0
  %4291 = vmatpush1.bf16.msra.mxu0 %v3547
  %4292 = vmatprep.subr.bf16.mxu0 0
  %4293 = vmatpush1.bf16.msra.mxu0 %v3548
  %4294 = vmatprep.subr.bf16.mxu0 0
  %4295 = vmatpush1.bf16.msra.mxu0 %v3549
  %4296 = vmatprep.subr.bf16.mxu0 0
  %4297 = vmatpush1.bf16.msra.mxu0 %v3550
  %4298 = vmatprep.subr.bf16.mxu0 0
  %4299 = vmatpush1.bf16.msra.mxu0 %v3551
  %4300 = vmatprep.subr.bf16.mxu0 0
  %4301 = vmatpush1.bf16.msra.mxu0 %v3552
  %4302 = vmatprep.subr.bf16.mxu0 0
  %4303 = vmatpush1.bf16.msra.mxu0 %v3553
  %4304 = vmatprep.subr.bf16.mxu0 0
  %4305 = vmatpush1.bf16.msra.mxu0 %v3554
  %4306 = vmatprep.subr.bf16.mxu0 0
  %4307 = vmatpush1.bf16.msra.mxu0 %v3555
  %4308 = vmatprep.subr.bf16.mxu0 0
  %4309 = vmatpush1.bf16.msra.mxu0 %v3556
  %4310 = vmatprep.subr.bf16.mxu0 0
  %4311 = vmatpush1.bf16.msra.mxu0 %v3557
  %4312 = vmatprep.subr.bf16.mxu0 0
  %4313 = vmatpush1.bf16.msra.mxu0 %v3558
  %4314 = vmatprep.subr.bf16.mxu0 0
  %4315 = vmatpush1.bf16.msra.mxu0 %v3559
  %4316 = vmatprep.subr.bf16.mxu0 0
  %4317 = vmatpush1.bf16.msra.mxu0 %v3560
  %4318 = vmatprep.subr.bf16.mxu0 0
  %4319 = vmatpush1.bf16.msra.mxu0 %v3561
  %4320 = vmatprep.mubr.bf16.mxu0 %v1908
  %4321 = vmatmul.mubr.bf16.gmra.mrb[0].mxu0 %v1895
  %v4322 = vpop.f32.mrb[0].mxu0
  %v4323 = vadd.f32 %v4226, %v4322
  %v4324 = vpop.f32.mrb[0].mxu0
  %v4325 = vpop.f32.mrb[0].mxu0
  %v4326 = vadd.f32 %v4229, %v4325
  %v4327 = vpop.f32.mrb[0].mxu0
  %4328 = vmatprep.mubr.bf16.mxu0 %v1934
  %4329 = vmatmul.mubr.bf16.gmra.mrb[0].mxu0 %v1921
  %v4330 = vpop.f32.mrb[0].mxu0
  %v4331 = vadd.f32 %v4234, %v4330
  %v4332 = vpop.f32.mrb[0].mxu0
  %v4333 = vpop.f32.mrb[0].mxu0
  %v4334 = vadd.f32 %v4237, %v4333
  %v4335 = vpop.f32.mrb[0].mxu0
  %4336 = vmatprep.mubr.bf16.mxu0 %v2118
  %4337 = vmatmul.mubr.bf16.gmra.mrb[0].mxu0 %v2104
  %v4338 = vpop.f32.mrb[0].mxu0
  %v4339 = vadd.f32 %v4242, %v4338
  %v4340 = vpop.f32.mrb[0].mxu0
  %v4341 = vpop.f32.mrb[0].mxu0
  %v4342 = vadd.f32 %v4245, %v4341
  %v4343 = vpop.f32.mrb[0].mxu0
  %4344 = vmatprep.mubr.bf16.mxu0 %v2146
  %4345 = vmatmul.mubr.bf16.gmra.mrb[0].mxu0 %v2132
  %v4346 = vpop.f32.mrb[0].mxu0
  %v4347 = vadd.f32 %v4250, %v4346
  %v4348 = vpop.f32.mrb[0].mxu0
  %v4349 = vpop.f32.mrb[0].mxu0
  %v4350 = vadd.f32 %v4253, %v4349
  %v4351 = vpop.f32.mrb[0].mxu0
  %4352 = vmatprep.mubr.bf16.mxu0 %v2384
  %4353 = vmatmul.mubr.bf16.gmra.mrb[0].mxu0 %v2371
  %v4354 = vpop.f32.mrb[0].mxu0
  %v4355 = vadd.f32 %v4258, %v4354
  %v4356 = vpop.f32.mrb[0].mxu0
  %v4357 = vpop.f32.mrb[0].mxu0
  %v4358 = vadd.f32 %v4261, %v4357
  %v4359 = vpop.f32.mrb[0].mxu0
  %4360 = vmatprep.mubr.bf16.mxu0 %v2410
  %4361 = vmatmul.mubr.bf16.gmra.mrb[0].mxu0 %v2397
  %v4362 = vpop.f32.mrb[0].mxu0
  %v4363 = vadd.f32 %v4266, %v4362
  %v4364 = vpop.f32.mrb[0].mxu0
  %v4365 = vpop.f32.mrb[0].mxu0
  %v4366 = vadd.f32 %v4269, %v4365
  %v4367 = vpop.f32.mrb[0].mxu0
  %4368 = vmatprep.mubr.bf16.mxu0 %v2594
  %4369 = vmatmul.mubr.bf16.gmra.mrb[0].mxu0 %v2580
  %v4370 = vpop.f32.mrb[0].mxu0
  %v4371 = vadd.f32 %v4274, %v4370
  %v4372 = vpop.f32.mrb[0].mxu0
  %v4373 = vpop.f32.mrb[0].mxu0
  %v4374 = vadd.f32 %v4277, %v4373
  %v4375 = vpop.f32.mrb[0].mxu0
  %4376 = vmatprep.mubr.bf16.mxu0 %v2622
  %4377 = vmatmul.mubr.bf16.gmra.mrb[0].mxu0 %v2608
  %v4378 = vpop.f32.mrb[0].mxu0
  %v4379 = vadd.f32 %v4282, %v4378
  %v4380 = vpop.f32.mrb[0].mxu0
  %v4381 = vpop.f32.mrb[0].mxu0
  %v4382 = vadd.f32 %v4285, %v4381
  %v4383 = vpop.f32.mrb[0].mxu0
  %4384 = vdwg.mxu0
  %4385 = vmatprep.subr.bf16.mxu0 0
  %4386 = vmatpush1.bf16.msra.mxu0 %v3562
  %4387 = vmatprep.subr.bf16.mxu0 0
  %4388 = vmatpush1.bf16.msra.mxu0 %v3563
  %4389 = vmatprep.subr.bf16.mxu0 0
  %4390 = vmatpush1.bf16.msra.mxu0 %v3564
  %4391 = vmatprep.subr.bf16.mxu0 0
  %4392 = vmatpush1.bf16.msra.mxu0 %v3565
  %4393 = vmatprep.subr.bf16.mxu0 0
  %4394 = vmatpush1.bf16.msra.mxu0 %v3566
  %4395 = vmatprep.subr.bf16.mxu0 0
  %4396 = vmatpush1.bf16.msra.mxu0 %v3567
  %4397 = vmatprep.subr.bf16.mxu0 0
  %4398 = vmatpush1.bf16.msra.mxu0 %v3568
  %4399 = vmatprep.subr.bf16.mxu0 0
  %4400 = vmatpush1.bf16.msra.mxu0 %v3569
  %4401 = vmatprep.subr.bf16.mxu0 0
  %4402 = vmatpush1.bf16.msra.mxu0 %v3570
  %4403 = vmatprep.subr.bf16.mxu0 0
  %4404 = vmatpush1.bf16.msra.mxu0 %v3571
  %4405 = vmatprep.subr.bf16.mxu0 0
  %4406 = vmatpush1.bf16.msra.mxu0 %v3572
  %4407 = vmatprep.subr.bf16.mxu0 0
  %4408 = vmatpush1.bf16.msra.mxu0 %v3573
  %4409 = vmatprep.subr.bf16.mxu0 0
  %4410 = vmatpush1.bf16.msra.mxu0 %v3574
  %4411 = vmatprep.subr.bf16.mxu0 0
  %4412 = vmatpush1.bf16.msra.mxu0 %v3575
  %4413 = vmatprep.subr.bf16.mxu0 0
  %4414 = vmatpush1.bf16.msra.mxu0 %v3576
  %4415 = vmatprep.subr.bf16.mxu0 0
  %4416 = vmatpush1.bf16.msra.mxu0 %v3577
  %4417 = vmatprep.mubr.bf16.mxu0 %v1934
  %4418 = vmatmul.mubr.bf16.gmra.mrb[0].mxu0 %v1921
  %v4419 = vpop.f32.mrb[0].mxu0
  %v4420 = vadd.f32 %v4323, %v4419
  %v4421 = vpop.f32.mrb[0].mxu0
  %v4422 = vpop.f32.mrb[0].mxu0
  %v4423 = vadd.f32 %v4326, %v4422
  %v4424 = vpop.f32.mrb[0].mxu0
  %4425 = vmatprep.mubr.bf16.mxu0 %v2038
  %4426 = vmatmul.mubr.bf16.gmra.mrb[0].mxu0 %v2025
  %v4427 = vpop.f32.mrb[0].mxu0
  %v4428 = vadd.f32 %v4331, %v4427
  %v4429 = vpop.f32.mrb[0].mxu0
  %v4430 = vpop.f32.mrb[0].mxu0
  %v4431 = vadd.f32 %v4334, %v4430
  %v4432 = vpop.f32.mrb[0].mxu0
  %4433 = vmatprep.mubr.bf16.mxu0 %v2146
  %4434 = vmatmul.mubr.bf16.gmra.mrb[0].mxu0 %v2132
  %v4435 = vpop.f32.mrb[0].mxu0
  %v4436 = vadd.f32 %v4339, %v4435
  %v4437 = vpop.f32.mrb[0].mxu0
  %v4438 = vpop.f32.mrb[0].mxu0
  %v4439 = vadd.f32 %v4342, %v4438
  %v4440 = vpop.f32.mrb[0].mxu0
  %4441 = vmatprep.mubr.bf16.mxu0 %v2198
  %4442 = vmatmul.mubr.bf16.gmra.mrb[0].mxu0 %v2185
  %v4443 = vpop.f32.mrb[0].mxu0
  %v4444 = vadd.f32 %v4347, %v4443
  %v4445 = vpop.f32.mrb[0].mxu0
  %v4446 = vpop.f32.mrb[0].mxu0
  %v4447 = vadd.f32 %v4350, %v4446
  %v4448 = vpop.f32.mrb[0].mxu0
  %4449 = vmatprep.mubr.bf16.mxu0 %v2410
  %4450 = vmatmul.mubr.bf16.gmra.mrb[0].mxu0 %v2397
  %v4451 = vpop.f32.mrb[0].mxu0
  %v4452 = vadd.f32 %v4355, %v4451
  %v4453 = vpop.f32.mrb[0].mxu0
  %v4454 = vpop.f32.mrb[0].mxu0
  %v4455 = vadd.f32 %v4358, %v4454
  %v4456 = vpop.f32.mrb[0].mxu0
  %4457 = vmatprep.mubr.bf16.mxu0 %v2514
  %4458 = vmatmul.mubr.bf16.gmra.mrb[0].mxu0 %v2501
  %v4459 = vpop.f32.mrb[0].mxu0
  %v4460 = vadd.f32 %v4363, %v4459
  %v4461 = vpop.f32.mrb[0].mxu0
  %v4462 = vpop.f32.mrb[0].mxu0
  %v4463 = vadd.f32 %v4366, %v4462
  %v4464 = vpop.f32.mrb[0].mxu0
  %4465 = vmatprep.mubr.bf16.mxu0 %v2622
  %4466 = vmatmul.mubr.bf16.gmra.mrb[0].mxu0 %v2608
  %v4467 = vpop.f32.mrb[0].mxu0
  %v4468 = vadd.f32 %v4371, %v4467
  %v4469 = vpop.f32.mrb[0].mxu0
  %v4470 = vpop.f32.mrb[0].mxu0
  %v4471 = vadd.f32 %v4374, %v4470
  %v4472 = vpop.f32.mrb[0].mxu0
  %4473 = vmatprep.mubr.bf16.mxu0 %v2674
  %4474 = vmatmul.mubr.bf16.gmra.mrb[0].mxu0 %v2661
  %v4475 = vpop.f32.mrb[0].mxu0
  %v4476 = vadd.f32 %v4379, %v4475
  %v4477 = vpop.f32.mrb[0].mxu0
  %v4478 = vpop.f32.mrb[0].mxu0
  %v4479 = vadd.f32 %v4382, %v4478
  %v4480 = vpop.f32.mrb[0].mxu0
  %4481 = vdwg.mxu0
  %v4482 = vadd.f32 %v4420, %v4423
  %v4483 = vadd.f32 %v4482, %v4428
  %v4484 = vadd.f32 %v4483, %v4431
  %v4485 = vadd.f32 %v4484, %v4436
  %v4486 = vadd.f32 %v4485, %v4439
  %v4487 = vadd.f32 %v4486, %v4444
  %v4488 = vadd.f32 %v4487, %v4447
  %v4489 = vadd.f32 %v4488, %v4452
  %v4490 = vadd.f32 %v4489, %v4455
  %v4491 = vadd.f32 %v4490, %v4460
  %v4492 = vadd.f32 %v4491, %v4463
  %v4493 = vadd.f32 %v4492, %v4468
  %v4494 = vadd.f32 %v4493, %v4471
  %v4495 = vadd.f32 %v4494, %v4476
  %v4496 = vadd.f32 %v4495, %v4479
  %v4497 = vrot.slane %v4496, 4
  %v4498 = vadd.f32 %v4496, %v4497
  %v4499 = vrot.slane %v4498, 2
  %v4500 = vadd.f32 %v4498, %v4499
  %v4501 = vrot.slane %v4500, 1
  %v4502 = vadd.f32 %v4500, %v4501
  %v4503 = vmul.f32 %v4502, 0.0078125
  %v4504 = vsub.f32 %v4420, %v4503
  %v4505 = vsub.f32 %v4423, %v4503
  %v4506 = vsub.f32 %v4428, %v4503
  %v4507 = vsub.f32 %v4431, %v4503
  %v4508 = vsub.f32 %v4436, %v4503
  %v4509 = vsub.f32 %v4439, %v4503
  %v4510 = vsub.f32 %v4444, %v4503
  %v4511 = vsub.f32 %v4447, %v4503
  %v4512 = vsub.f32 %v4452, %v4503
  %v4513 = vsub.f32 %v4455, %v4503
  %v4514 = vsub.f32 %v4460, %v4503
  %v4515 = vsub.f32 %v4463, %v4503
  %v4516 = vsub.f32 %v4468, %v4503
  %v4517 = vsub.f32 %v4471, %v4503
  %v4518 = vsub.f32 %v4476, %v4503
  %v4519 = vsub.f32 %v4479, %v4503
  %v4520 = vmul.f32 %v4504, %v4504
  %v4521 = vmul.f32 %v4505, %v4505
  %v4522 = vmul.f32 %v4506, %v4506
  %v4523 = vmul.f32 %v4507, %v4507
  %v4524 = vmul.f32 %v4508, %v4508
  %v4525 = vmul.f32 %v4509, %v4509
  %v4526 = vmul.f32 %v4510, %v4510
  %v4527 = vmul.f32 %v4511, %v4511
  %v4528 = vmul.f32 %v4512, %v4512
  %v4529 = vmul.f32 %v4513, %v4513
  %v4530 = vmul.f32 %v4514, %v4514
  %v4531 = vmul.f32 %v4515, %v4515
  %v4532 = vmul.f32 %v4516, %v4516
  %v4533 = vmul.f32 %v4517, %v4517
  %v4534 = vmul.f32 %v4518, %v4518
  %v4535 = vmul.f32 %v4519, %v4519
  %v4536 = vadd.f32 %v4520, %v4521
  %v4537 = vadd.f32 %v4536, %v4522
  %v4538 = vadd.f32 %v4537, %v4523
  %v4539 = vadd.f32 %v4538, %v4524
  %v4540 = vadd.f32 %v4539, %v4525
  %v4541 = vadd.f32 %v4540, %v4526
  %v4542 = vadd.f32 %v4541, %v4527
  %v4543 = vadd.f32 %v4542, %v4528
  %v4544 = vadd.f32 %v4543, %v4529
  %v4545 = vadd.f32 %v4544, %v4530
  %v4546 = vadd.f32 %v4545, %v4531
  %v4547 = vadd.f32 %v4546, %v4532
  %v4548 = vadd.f32 %v4547, %v4533
  %v4549 = vadd.f32 %v4548, %v4534
  %v4550 = vadd.f32 %v4549, %v4535
  %v4551 = vrot.slane %v4550, 4
  %v4552 = vadd.f32 %v4550, %v4551
  %v4553 = vrot.slane %v4552, 2
  %v4554 = vadd.f32 %v4552, %v4553
  %v4555 = vrot.slane %v4554, 1
  %v4556 = vadd.f32 %v4554, %v4555
  %v4557 = vmul.f32 %v4556, 0.0078125
  %v4558 = vadd.f32 %v4557, 1e-05
  %v4559 = vrsqrt.pop %v4558
  %v4560 = vmul.f32 %v4504, %v4559
  %v4561 = vmul.f32 %v4505, %v4559
  %v4562 = vmul.f32 %v4506, %v4559
  %v4563 = vmul.f32 %v4507, %v4559
  %v4564 = vmul.f32 %v4508, %v4559
  %v4565 = vmul.f32 %v4509, %v4559
  %v4566 = vmul.f32 %v4510, %v4559
  %v4567 = vmul.f32 %v4511, %v4559
  %v4568 = vmul.f32 %v4512, %v4559
  %v4569 = vmul.f32 %v4513, %v4559
  %v4570 = vmul.f32 %v4514, %v4559
  %v4571 = vmul.f32 %v4515, %v4559
  %v4572 = vmul.f32 %v4516, %v4559
  %v4573 = vmul.f32 %v4517, %v4559
  %v4574 = vmul.f32 %v4518, %v4559
  %v4575 = vmul.f32 %v4519, %v4559
  %vm4576 = vcmp.gt.f32.partialorder %v4560, 0.0
  %vm4577 = vcmp.gt.f32.partialorder %v4561, 0.0
  %vm4578 = vcmp.gt.f32.partialorder %v4562, 0.0
  %vm4579 = vcmp.gt.f32.partialorder %v4563, 0.0
  %vm4580 = vcmp.gt.f32.partialorder %v4564, 0.0
  %vm4581 = vcmp.gt.f32.partialorder %v4565, 0.0
  %vm4582 = vcmp.gt.f32.partialorder %v4566, 0.0
  %vm4583 = vcmp.gt.f32.partialorder %v4567, 0.0
  %vm4584 = vcmp.gt.f32.partialorder %v4568, 0.0
  %vm4585 = vcmp.gt.f32.partialorder %v4569, 0.0
  %vm4586 = vcmp.gt.f32.partialorder %v4570, 0.0
  %vm4587 = vcmp.gt.f32.partialorder %v4571, 0.0
  %vm4588 = vcmp.gt.f32.partialorder %v4572, 0.0
  %vm4589 = vcmp.gt.f32.partialorder %v4573, 0.0
  %vm4590 = vcmp.gt.f32.partialorder %v4574, 0.0
  %vm4591 = vcmp.gt.f32.partialorder %v4575, 0.0
  %v4592 = vmul.f32 %v4560, 0.2
  %v4593 = vmul.f32 %v4561, 0.2
  %v4594 = vmul.f32 %v4562, 0.2
  %v4595 = vmul.f32 %v4563, 0.2
  %v4596 = vmul.f32 %v4564, 0.2
  %v4597 = vmul.f32 %v4565, 0.2
  %v4598 = vmul.f32 %v4566, 0.2
  %v4599 = vmul.f32 %v4567, 0.2
  %v4600 = vmul.f32 %v4568, 0.2
  %v4601 = vmul.f32 %v4569, 0.2
  %v4602 = vmul.f32 %v4570, 0.2
  %v4603 = vmul.f32 %v4571, 0.2
  %v4604 = vmul.f32 %v4572, 0.2
  %v4605 = vmul.f32 %v4573, 0.2
  %v4606 = vmul.f32 %v4574, 0.2
  %v4607 = vmul.f32 %v4575, 0.2
  %v4608 = vsel %vm4576, %v4560, %v4592
  %v4609 = vsel %vm4577, %v4561, %v4593
  %v4610 = vsel %vm4578, %v4562, %v4594
  %v4611 = vsel %vm4579, %v4563, %v4595
  %v4612 = vsel %vm4580, %v4564, %v4596
  %v4613 = vsel %vm4581, %v4565, %v4597
  %v4614 = vsel %vm4582, %v4566, %v4598
  %v4615 = vsel %vm4583, %v4567, %v4599
  %v4616 = vsel %vm4584, %v4568, %v4600
  %v4617 = vsel %vm4585, %v4569, %v4601
  %v4618 = vsel %vm4586, %v4570, %v4602
  %v4619 = vsel %vm4587, %v4571, %v4603
  %v4620 = vsel %vm4588, %v4572, %v4604
  %v4621 = vsel %vm4589, %v4573, %v4605
  %v4622 = vsel %vm4590, %v4574, %v4606
  %v4623 = vsel %vm4591, %v4575, %v4607
  %4624 = vst [vmem:[#allocation3] sm:$0x1f] 0.0
  %4625 = vst [vmem:[#allocation3 + $0x8] sm:$0x1f] 0.0
  %4626 = vst [vmem:[#allocation3 + $0x10] sm:$0x1f] 0.0
  %4627 = vst [vmem:[#allocation3 + $0x18] sm:$0x1f] 0.0
  %4628 = vst [vmem:[#allocation3 + $0x20] sm:$0x1f] 0.0
  %4629 = vst [vmem:[#allocation3 + $0x28] sm:$0x1f] 0.0
  %4630 = vst [vmem:[#allocation3 + $0x30] sm:$0x1f] 0.0
  %4631 = vst [vmem:[#allocation3 + $0x38] sm:$0x1f] 0.0
  %4632 = vst [vmem:[#allocation3 + $0x40] sm:$0x1f] 0.0
  %4633 = vst [vmem:[#allocation3 + $0x48] sm:$0x1f] 0.0
  %4634 = vst [vmem:[#allocation3 + $0x50] sm:$0x1f] 0.0
  %4635 = vst [vmem:[#allocation3 + $0x58] sm:$0x1f] 0.0
  %4636 = vst [vmem:[#allocation3 + $0x60] sm:$0x1f] 0.0
  %4637 = vst [vmem:[#allocation3 + $0x68] sm:$0x1f] 0.0
  %4638 = vst [vmem:[#allocation3 + $0x70] sm:$0x1f] 0.0
  %4639 = vst [vmem:[#allocation3 + $0x78] sm:$0x1f] 0.0
  %4640 = vst [vmem:[#allocation3 + $0x80] sm:$0x1f] 0.0
  %4641 = vst [vmem:[#allocation3 + $0x88] sm:$0x1f] 0.0
  %4642 = vst [vmem:[#allocation3 + $0x90] sm:$0x1f] 0.0
  %4643 = vst [vmem:[#allocation3 + $0x98] sm:$0x1f] 0.0
  %4644 = vst [vmem:[#allocation3 + $0xa0] sm:$0x1f] 0.0
  %4645 = vst [vmem:[#allocation3 + $0xa8] sm:$0x1f] 0.0
  %4646 = vst [vmem:[#allocation3 + $0xb0] sm:$0x1f] 0.0
  %4647 = vst [vmem:[#allocation3 + $0xb8] sm:$0x1f] 0.0
  %4648 = vst [vmem:[#allocation3 + $0xc0] sm:$0x1f] 0.0
  %4649 = vst [vmem:[#allocation3 + $0xc8] sm:$0x1f] 0.0
  %4650 = vst [vmem:[#allocation3 + $0xd0] sm:$0x1f] 0.0
  %4651 = vst [vmem:[#allocation3 + $0xd8] sm:$0x1f] 0.0
  %4652 = vst [vmem:[#allocation3 + $0xe0] sm:$0x1f] 0.0
  %4653 = vst [vmem:[#allocation3 + $0xe8] sm:$0x1f] 0.0
  %4654 = vst [vmem:[#allocation3 + $0xf0] sm:$0x1f] 0.0
  %4655 = vst [vmem:[#allocation3 + $0xf8] sm:$0x1f] 0.0
  %4656 = vst [vmem:[#allocation3 + $0x100] sm:$0x1f] 0.0
  %4657 = vst [vmem:[#allocation3 + $0x108] sm:$0x1f] 0.0
  %4658 = vst [vmem:[#allocation3 + $0x110] sm:$0x1f] 0.0
  %4659 = vst [vmem:[#allocation3 + $0x118] sm:$0x1f] 0.0
  %4660 = vst [vmem:[#allocation3 + $0x120] sm:$0x1f] 0.0
  %4661 = vst [vmem:[#allocation3 + $0x128] sm:$0x1f] 0.0
  %4662 = vst [vmem:[#allocation3 + $0x130] sm:$0x1f] 0.0
  %4663 = vst [vmem:[#allocation3 + $0x138] sm:$0x1f] 0.0
  %v4666 = vcombine.high %v4608, %v4608
  %v4667 = vcombine.high %v4609, %v4609
  %s4670 = scalar_lea.vmem [#allocation3], 8
  %4671 = vst [vmem:[%s4670 + $0x1] sm:$0xf] %v4608
  %4672 = vst [vmem:[%s4670 + $0x9] sm:$0xf] %v4666
  %4673 = vst [vmem:[%s4670 + $0x11] sm:$0xf] %v4609
  %4674 = vst [vmem:[%s4670 + $0x19] sm:$0xf] %v4667
  %v4677 = vcombine.high %v4610, %v4610
  %v4678 = vcombine.high %v4611, %v4611
  %s4681 = scalar_lea.vmem [#allocation3], 48
  %4682 = vst [vmem:[%s4681 + $0x1] sm:$0xf] %v4610
  %4683 = vst [vmem:[%s4681 + $0x9] sm:$0xf] %v4677
  %4684 = vst [vmem:[%s4681 + $0x11] sm:$0xf] %v4611
  %4685 = vst [vmem:[%s4681 + $0x19] sm:$0xf] %v4678
  %v4688 = vcombine.high %v4612, %v4612
  %v4689 = vcombine.high %v4613, %v4613
  %s4692 = scalar_lea.vmem [#allocation3], 88
  %4693 = vst [vmem:[%s4692 + $0x1] sm:$0xf] %v4612
  %4694 = vst [vmem:[%s4692 + $0x9] sm:$0xf] %v4688
  %4695 = vst [vmem:[%s4692 + $0x11] sm:$0xf] %v4613
  %4696 = vst [vmem:[%s4692 + $0x19] sm:$0xf] %v4689
  %v4699 = vcombine.high %v4614, %v4614
  %v4700 = vcombine.high %v4615, %v4615
  %s4703 = scalar_lea.vmem [#allocation3], 128
  %4704 = vst [vmem:[%s4703 + $0x1] sm:$0xf] %v4614
  %4705 = vst [vmem:[%s4703 + $0x9] sm:$0xf] %v4699
  %4706 = vst [vmem:[%s4703 + $0x11] sm:$0xf] %v4615
  %4707 = vst [vmem:[%s4703 + $0x19] sm:$0xf] %v4700
  %v4710 = vcombine.high %v4616, %v4616
  %v4711 = vcombine.high %v4617, %v4617
  %s4714 = scalar_lea.vmem [#allocation3], 168
  %4715 = vst [vmem:[%s4714 + $0x1] sm:$0xf] %v4616
  %4716 = vst [vmem:[%s4714 + $0x9] sm:$0xf] %v4710
  %4717 = vst [vmem:[%s4714 + $0x11] sm:$0xf] %v4617
  %4718 = vst [vmem:[%s4714 + $0x19] sm:$0xf] %v4711
  %v4721 = vcombine.high %v4618, %v4618
  %v4722 = vcombine.high %v4619, %v4619
  %s4725 = scalar_lea.vmem [#allocation3], 208
  %4726 = vst [vmem:[%s4725 + $0x1] sm:$0xf] %v4618
  %4727 = vst [vmem:[%s4725 + $0x9] sm:$0xf] %v4721
  %4728 = vst [vmem:[%s4725 + $0x11] sm:$0xf] %v4619
  %4729 = vst [vmem:[%s4725 + $0x19] sm:$0xf] %v4722
  %v4732 = vcombine.high %v4620, %v4620
  %v4733 = vcombine.high %v4621, %v4621
  %s4736 = scalar_lea.vmem [#allocation3], 248
  %4737 = vst [vmem:[%s4736 + $0x1] sm:$0xf] %v4620
  %4738 = vst [vmem:[%s4736 + $0x9] sm:$0xf] %v4732
  %4739 = vst [vmem:[%s4736 + $0x11] sm:$0xf] %v4621
  %4740 = vst [vmem:[%s4736 + $0x19] sm:$0xf] %v4733
  %v4743 = vcombine.high %v4622, %v4622
  %v4744 = vcombine.high %v4623, %v4623
  %s4747 = scalar_lea.vmem [#allocation3], 288
  %4748 = vst [vmem:[%s4747 + $0x1] sm:$0xf] %v4622
  %4749 = vst [vmem:[%s4747 + $0x9] sm:$0xf] %v4743
  %4750 = vst [vmem:[%s4747 + $0x11] sm:$0xf] %v4623
  %4751 = vst [vmem:[%s4747 + $0x19] sm:$0xf] %v4744
  %s4752 = scalar_lea.vmem [#allocation3], 120
  %v4753 = vld [vmem:[%s4752] sm:$0xf]
  %v4754 = vld [vmem:[%s4752 + $0x8] sm:$0xf]
  %v4755 = vld [vmem:[%s4752 + $0x10] sm:$0xf]
  %v4756 = vld [vmem:[%s4752 + $0x18] sm:$0xf]
  %v4761 = vcombine.low %v4753, %v4754
  %v4762 = vcombine.low %v4755, %v4756
  %v4765 = vpack.c.bf16 %v4762, %v4761
  %s4766 = scalar_lea.vmem [#allocation3], 80
  %v4767 = vld [vmem:[%s4766 + $0x1] sm:$0xf]
  %v4768 = vld [vmem:[%s4766 + $0x9] sm:$0xf]
  %v4769 = vld [vmem:[%s4766 + $0x11] sm:$0xf]
  %v4770 = vld [vmem:[%s4766 + $0x19] sm:$0xf]
  %v4775 = vcombine.low %v4767, %v4768
  %v4776 = vcombine.low %v4769, %v4770
  %v4779 = vpack.c.bf16 %v4776, %v4775
  %v4780 = vld [vmem:[%s4752 + $0x1] sm:$0xf]
  %v4781 = vld [vmem:[%s4752 + $0x9] sm:$0xf]
  %v4782 = vld [vmem:[%s4752 + $0x11] sm:$0xf]
  %v4783 = vld [vmem:[%s4752 + $0x19] sm:$0xf]
  %v4788 = vcombine.low %v4780, %v4781
  %v4789 = vcombine.low %v4782, %v4783
  %v4792 = vpack.c.bf16 %v4789, %v4788
  %v4793 = vld [vmem:[%s4681] sm:$0xf]
  %v4794 = vld [vmem:[%s4681 + $0x8] sm:$0xf]
  %v4795 = vld [vmem:[%s4681 + $0x10] sm:$0xf]
  %v4796 = vld [vmem:[%s4681 + $0x18] sm:$0xf]
  %v4801 = vcombine.low %v4793, %v4794
  %v4802 = vcombine.low %v4795, %v4796
  %v4805 = vpack.c.bf16 %v4802, %v4801
  %v4806 = vld [vmem:[%s4670 + $0x1] sm:$0xf]
  %v4807 = vld [vmem:[%s4670 + $0x9] sm:$0xf]
  %v4808 = vld [vmem:[%s4670 + $0x11] sm:$0xf]
  %v4809 = vld [vmem:[%s4670 + $0x19] sm:$0xf]
  %v4814 = vcombine.low %v4806, %v4807
  %v4815 = vcombine.low %v4808, %v4809
  %v4818 = vpack.c.bf16 %v4815, %v4814
  %v4819 = vld [vmem:[%s4681 + $0x1] sm:$0xf]
  %v4820 = vld [vmem:[%s4681 + $0x9] sm:$0xf]
  %v4821 = vld [vmem:[%s4681 + $0x11] sm:$0xf]
  %v4822 = vld [vmem:[%s4681 + $0x19] sm:$0xf]
  %v4827 = vcombine.low %v4819, %v4820
  %v4828 = vcombine.low %v4821, %v4822
  %v4831 = vpack.c.bf16 %v4828, %v4827
  %v4832 = vld [vmem:[%s4703] sm:$0xf]
  %v4833 = vld [vmem:[%s4703 + $0x8] sm:$0xf]
  %v4834 = vld [vmem:[%s4703 + $0x10] sm:$0xf]
  %v4835 = vld [vmem:[%s4703 + $0x18] sm:$0xf]
  %v4840 = vcombine.low %v4832, %v4833
  %v4841 = vcombine.low %v4834, %v4835
  %v4844 = vpack.c.bf16 %v4841, %v4840
  %v4845 = vld [vmem:[%s4692 + $0x1] sm:$0xf]
  %v4846 = vld [vmem:[%s4692 + $0x9] sm:$0xf]
  %v4847 = vld [vmem:[%s4692 + $0x11] sm:$0xf]
  %v4848 = vld [vmem:[%s4692 + $0x19] sm:$0xf]
  %v4853 = vcombine.low %v4845, %v4846
  %v4854 = vcombine.low %v4847, %v4848
  %v4857 = vpack.c.bf16 %v4854, %v4853
  %v4858 = vld [vmem:[%s4703 + $0x1] sm:$0xf]
  %v4859 = vld [vmem:[%s4703 + $0x9] sm:$0xf]
  %v4860 = vld [vmem:[%s4703 + $0x11] sm:$0xf]
  %v4861 = vld [vmem:[%s4703 + $0x19] sm:$0xf]
  %v4866 = vcombine.low %v4858, %v4859
  %v4867 = vcombine.low %v4860, %v4861
  %v4870 = vpack.c.bf16 %v4867, %v4866
  %s4871 = scalar_lea.vmem [#allocation3], 280
  %v4872 = vld [vmem:[%s4871] sm:$0xf]
  %v4873 = vld [vmem:[%s4871 + $0x8] sm:$0xf]
  %v4874 = vld [vmem:[%s4871 + $0x10] sm:$0xf]
  %v4875 = vld [vmem:[%s4871 + $0x18] sm:$0xf]
  %v4880 = vcombine.low %v4872, %v4873
  %v4881 = vcombine.low %v4874, %v4875
  %v4884 = vpack.c.bf16 %v4881, %v4880
  %s4885 = scalar_lea.vmem [#allocation3], 240
  %v4886 = vld [vmem:[%s4885 + $0x1] sm:$0xf]
  %v4887 = vld [vmem:[%s4885 + $0x9] sm:$0xf]
  %v4888 = vld [vmem:[%s4885 + $0x11] sm:$0xf]
  %v4889 = vld [vmem:[%s4885 + $0x19] sm:$0xf]
  %v4894 = vcombine.low %v4886, %v4887
  %v4895 = vcombine.low %v4888, %v4889
  %v4898 = vpack.c.bf16 %v4895, %v4894
  %v4899 = vld [vmem:[%s4871 + $0x1] sm:$0xf]
  %v4900 = vld [vmem:[%s4871 + $0x9] sm:$0xf]
  %v4901 = vld [vmem:[%s4871 + $0x11] sm:$0xf]
  %v4902 = vld [vmem:[%s4871 + $0x19] sm:$0xf]
  %v4907 = vcombine.low %v4899, %v4900
  %v4908 = vcombine.low %v4901, %v4902
  %v4911 = vpack.c.bf16 %v4908, %v4907
  %v4912 = vld [vmem:[%s4725] sm:$0xf]
  %v4913 = vld [vmem:[%s4725 + $0x8] sm:$0xf]
  %v4914 = vld [vmem:[%s4725 + $0x10] sm:$0xf]
  %v4915 = vld [vmem:[%s4725 + $0x18] sm:$0xf]
  %v4920 = vcombine.low %v4912, %v4913
  %v4921 = vcombine.low %v4914, %v4915
  %v4924 = vpack.c.bf16 %v4921, %v4920
  %v4925 = vld [vmem:[%s4714 + $0x1] sm:$0xf]
  %v4926 = vld [vmem:[%s4714 + $0x9] sm:$0xf]
  %v4927 = vld [vmem:[%s4714 + $0x11] sm:$0xf]
  %v4928 = vld [vmem:[%s4714 + $0x19] sm:$0xf]
  %v4933 = vcombine.low %v4925, %v4926
  %v4934 = vcombine.low %v4927, %v4928
  %v4937 = vpack.c.bf16 %v4934, %v4933
  %v4938 = vld [vmem:[%s4725 + $0x1] sm:$0xf]
  %v4939 = vld [vmem:[%s4725 + $0x9] sm:$0xf]
  %v4940 = vld [vmem:[%s4725 + $0x11] sm:$0xf]
  %v4941 = vld [vmem:[%s4725 + $0x19] sm:$0xf]
  %v4946 = vcombine.low %v4938, %v4939
  %v4947 = vcombine.low %v4940, %v4941
  %v4950 = vpack.c.bf16 %v4947, %v4946
  %v4951 = vld [vmem:[%s4747] sm:$0xf]
  %v4952 = vld [vmem:[%s4747 + $0x8] sm:$0xf]
  %v4953 = vld [vmem:[%s4747 + $0x10] sm:$0xf]
  %v4954 = vld [vmem:[%s4747 + $0x18] sm:$0xf]
  %v4959 = vcombine.low %v4951, %v4952
  %v4960 = vcombine.low %v4953, %v4954
  %v4963 = vpack.c.bf16 %v4960, %v4959
  %v4964 = vld [vmem:[%s4736 + $0x1] sm:$0xf]
  %v4965 = vld [vmem:[%s4736 + $0x9] sm:$0xf]
  %v4966 = vld [vmem:[%s4736 + $0x11] sm:$0xf]
  %v4967 = vld [vmem:[%s4736 + $0x19] sm:$0xf]
  %v4972 = vcombine.low %v4964, %v4965
  %v4973 = vcombine.low %v4966, %v4967
  %v4976 = vpack.c.bf16 %v4973, %v4972
  %v4977 = vld [vmem:[%s4747 + $0x1] sm:$0xf]
  %v4978 = vld [vmem:[%s4747 + $0x9] sm:$0xf]
  %v4979 = vld [vmem:[%s4747 + $0x11] sm:$0xf]
  %v4980 = vld [vmem:[%s4747 + $0x19] sm:$0xf]
  %v4985 = vcombine.low %v4977, %v4978
  %v4986 = vcombine.low %v4979, %v4980
  %v4989 = vpack.c.bf16 %v4986, %v4985
  %v4990 = vld [vmem:[%s5] sm:$0xf]
  %v4991 = vld [vmem:[%s5 + $0x4] sm:$0xf]
  %v4992 = vld [vmem:[%s5 + $0x8] sm:$0xf]
  %v4993 = vld [vmem:[%s5 + $0xc] sm:$0xf]
  %v4994 = vld [vmem:[%s5 + $0x10] sm:$0xf]
  %v4995 = vld [vmem:[%s5 + $0x14] sm:$0xf]
  %v4996 = vld [vmem:[%s5 + $0x18] sm:$0xf]
  %v4997 = vld [vmem:[%s5 + $0x1c] sm:$0xf]
  %v4998 = vld [vmem:[%s5 + $0x20] sm:$0xf]
  %v4999 = vld [vmem:[%s5 + $0x24] sm:$0xf]
  %v5000 = vld [vmem:[%s5 + $0x28] sm:$0xf]
  %v5001 = vld [vmem:[%s5 + $0x2c] sm:$0xf]
  %v5002 = vld [vmem:[%s5 + $0x30] sm:$0xf]
  %v5003 = vld [vmem:[%s5 + $0x34] sm:$0xf]
  %v5004 = vld [vmem:[%s5 + $0x38] sm:$0xf]
  %v5005 = vld [vmem:[%s5 + $0x3c] sm:$0xf]
  %v5006 = vld [vmem:[%s5 + $0x40] sm:$0xf]
  %v5007 = vld [vmem:[%s5 + $0x44] sm:$0xf]
  %v5008 = vld [vmem:[%s5 + $0x48] sm:$0xf]
  %v5009 = vld [vmem:[%s5 + $0x4c] sm:$0xf]
  %v5010 = vld [vmem:[%s5 + $0x50] sm:$0xf]
  %v5011 = vld [vmem:[%s5 + $0x54] sm:$0xf]
  %v5012 = vld [vmem:[%s5 + $0x58] sm:$0xf]
  %v5013 = vld [vmem:[%s5 + $0x5c] sm:$0xf]
  %v5014 = vld [vmem:[%s5 + $0x60] sm:$0xf]
  %v5015 = vld [vmem:[%s5 + $0x64] sm:$0xf]
  %v5016 = vld [vmem:[%s5 + $0x68] sm:$0xf]
  %v5017 = vld [vmem:[%s5 + $0x6c] sm:$0xf]
  %v5018 = vld [vmem:[%s5 + $0x70] sm:$0xf]
  %v5019 = vld [vmem:[%s5 + $0x74] sm:$0xf]
  %v5020 = vld [vmem:[%s5 + $0x78] sm:$0xf]
  %v5021 = vld [vmem:[%s5 + $0x7c] sm:$0xf]
  %v5022 = vld [vmem:[%s5 + $0x80] sm:$0xf]
  %v5023 = vld [vmem:[%s5 + $0x84] sm:$0xf]
  %v5024 = vld [vmem:[%s5 + $0x88] sm:$0xf]
  %v5025 = vld [vmem:[%s5 + $0x8c] sm:$0xf]
  %v5026 = vld [vmem:[%s5 + $0x90] sm:$0xf]
  %v5027 = vld [vmem:[%s5 + $0x94] sm:$0xf]
  %v5028 = vld [vmem:[%s5 + $0x98] sm:$0xf]
  %v5029 = vld [vmem:[%s5 + $0x9c] sm:$0xf]
  %v5030 = vld [vmem:[%s5 + $0xa0] sm:$0xf]
  %v5031 = vld [vmem:[%s5 + $0xa4] sm:$0xf]
  %v5032 = vld [vmem:[%s5 + $0xa8] sm:$0xf]
  %v5033 = vld [vmem:[%s5 + $0xac] sm:$0xf]
  %v5034 = vld [vmem:[%s5 + $0xb0] sm:$0xf]
  %v5035 = vld [vmem:[%s5 + $0xb4] sm:$0xf]
  %v5036 = vld [vmem:[%s5 + $0xb8] sm:$0xf]
  %v5037 = vld [vmem:[%s5 + $0xbc] sm:$0xf]
  %v5038 = vld [vmem:[%s5 + $0xc0] sm:$0xf]
  %v5039 = vld [vmem:[%s5 + $0xc4] sm:$0xf]
  %v5040 = vld [vmem:[%s5 + $0xc8] sm:$0xf]
  %v5041 = vld [vmem:[%s5 + $0xcc] sm:$0xf]
  %v5042 = vld [vmem:[%s5 + $0xd0] sm:$0xf]
  %v5043 = vld [vmem:[%s5 + $0xd4] sm:$0xf]
  %v5044 = vld [vmem:[%s5 + $0xd8] sm:$0xf]
  %v5045 = vld [vmem:[%s5 + $0xdc] sm:$0xf]
  %v5046 = vld [vmem:[%s5 + $0xe0] sm:$0xf]
  %v5047 = vld [vmem:[%s5 + $0xe4] sm:$0xf]
  %v5048 = vld [vmem:[%s5 + $0xe8] sm:$0xf]
  %v5049 = vld [vmem:[%s5 + $0xec] sm:$0xf]
  %v5050 = vld [vmem:[%s5 + $0xf0] sm:$0xf]
  %v5051 = vld [vmem:[%s5 + $0xf4] sm:$0xf]
  %v5052 = vld [vmem:[%s5 + $0xf8] sm:$0xf]
  %v5053 = vld [vmem:[%s5 + $0xfc] sm:$0xf]
  %v5054 = vld [vmem:[%s5 + $0x100] sm:$0xf]
  %v5055 = vld [vmem:[%s5 + $0x104] sm:$0xf]
  %v5056 = vld [vmem:[%s5 + $0x108] sm:$0xf]
  %v5057 = vld [vmem:[%s5 + $0x10c] sm:$0xf]
  %v5058 = vld [vmem:[%s5 + $0x110] sm:$0xf]
  %v5059 = vld [vmem:[%s5 + $0x114] sm:$0xf]
  %v5060 = vld [vmem:[%s5 + $0x118] sm:$0xf]
  %v5061 = vld [vmem:[%s5 + $0x11c] sm:$0xf]
  %v5062 = vld [vmem:[%s5 + $0x120] sm:$0xf]
  %v5063 = vld [vmem:[%s5 + $0x124] sm:$0xf]
  %v5064 = vld [vmem:[%s5 + $0x128] sm:$0xf]
  %v5065 = vld [vmem:[%s5 + $0x12c] sm:$0xf]
  %v5066 = vld [vmem:[%s5 + $0x130] sm:$0xf]
  %v5067 = vld [vmem:[%s5 + $0x134] sm:$0xf]
  %v5068 = vld [vmem:[%s5 + $0x138] sm:$0xf]
  %v5069 = vld [vmem:[%s5 + $0x13c] sm:$0xf]
  %v5070 = vld [vmem:[%s5 + $0x140] sm:$0xf]
  %v5071 = vld [vmem:[%s5 + $0x144] sm:$0xf]
  %v5072 = vld [vmem:[%s5 + $0x148] sm:$0xf]
  %v5073 = vld [vmem:[%s5 + $0x14c] sm:$0xf]
  %v5074 = vld [vmem:[%s5 + $0x150] sm:$0xf]
  %v5075 = vld [vmem:[%s5 + $0x154] sm:$0xf]
  %v5076 = vld [vmem:[%s5 + $0x158] sm:$0xf]
  %v5077 = vld [vmem:[%s5 + $0x15c] sm:$0xf]
  %v5078 = vld [vmem:[%s5 + $0x160] sm:$0xf]
  %v5079 = vld [vmem:[%s5 + $0x164] sm:$0xf]
  %v5080 = vld [vmem:[%s5 + $0x168] sm:$0xf]
  %v5081 = vld [vmem:[%s5 + $0x16c] sm:$0xf]
  %v5082 = vld [vmem:[%s5 + $0x170] sm:$0xf]
  %v5083 = vld [vmem:[%s5 + $0x174] sm:$0xf]
  %v5084 = vld [vmem:[%s5 + $0x178] sm:$0xf]
  %v5085 = vld [vmem:[%s5 + $0x17c] sm:$0xf]
  %v5086 = vld [vmem:[%s5 + $0x180] sm:$0xf]
  %v5087 = vld [vmem:[%s5 + $0x184] sm:$0xf]
  %v5088 = vld [vmem:[%s5 + $0x188] sm:$0xf]
  %v5089 = vld [vmem:[%s5 + $0x18c] sm:$0xf]
  %v5090 = vld [vmem:[%s5 + $0x190] sm:$0xf]
  %v5091 = vld [vmem:[%s5 + $0x194] sm:$0xf]
  %v5092 = vld [vmem:[%s5 + $0x198] sm:$0xf]
  %v5093 = vld [vmem:[%s5 + $0x19c] sm:$0xf]
  %v5094 = vld [vmem:[%s5 + $0x1a0] sm:$0xf]
  %v5095 = vld [vmem:[%s5 + $0x1a4] sm:$0xf]
  %v5096 = vld [vmem:[%s5 + $0x1a8] sm:$0xf]
  %v5097 = vld [vmem:[%s5 + $0x1ac] sm:$0xf]
  %v5098 = vld [vmem:[%s5 + $0x1b0] sm:$0xf]
  %v5099 = vld [vmem:[%s5 + $0x1b4] sm:$0xf]
  %v5100 = vld [vmem:[%s5 + $0x1b8] sm:$0xf]
  %v5101 = vld [vmem:[%s5 + $0x1bc] sm:$0xf]
  %v5102 = vld [vmem:[%s5 + $0x1c0] sm:$0xf]
  %v5103 = vld [vmem:[%s5 + $0x1c4] sm:$0xf]
  %v5104 = vld [vmem:[%s5 + $0x1c8] sm:$0xf]
  %v5105 = vld [vmem:[%s5 + $0x1cc] sm:$0xf]
  %v5106 = vld [vmem:[%s5 + $0x1d0] sm:$0xf]
  %v5107 = vld [vmem:[%s5 + $0x1d4] sm:$0xf]
  %v5108 = vld [vmem:[%s5 + $0x1d8] sm:$0xf]
  %v5109 = vld [vmem:[%s5 + $0x1dc] sm:$0xf]
  %v5110 = vld [vmem:[%s5 + $0x1e0] sm:$0xf]
  %v5111 = vld [vmem:[%s5 + $0x1e4] sm:$0xf]
  %v5112 = vld [vmem:[%s5 + $0x1e8] sm:$0xf]
  %v5113 = vld [vmem:[%s5 + $0x1ec] sm:$0xf]
  %v5114 = vld [vmem:[%s5 + $0x1f0] sm:$0xf]
  %v5115 = vld [vmem:[%s5 + $0x1f4] sm:$0xf]
  %v5116 = vld [vmem:[%s5 + $0x1f8] sm:$0xf]
  %v5117 = vld [vmem:[%s5 + $0x1fc] sm:$0xf]
  %v5118 = vld [vmem:[%s5 + $0x200] sm:$0xf]
  %v5119 = vld [vmem:[%s5 + $0x204] sm:$0xf]
  %v5120 = vld [vmem:[%s5 + $0x208] sm:$0xf]
  %v5121 = vld [vmem:[%s5 + $0x20c] sm:$0xf]
  %v5122 = vld [vmem:[%s5 + $0x210] sm:$0xf]
  %v5123 = vld [vmem:[%s5 + $0x214] sm:$0xf]
  %v5124 = vld [vmem:[%s5 + $0x218] sm:$0xf]
  %v5125 = vld [vmem:[%s5 + $0x21c] sm:$0xf]
  %v5126 = vld [vmem:[%s5 + $0x220] sm:$0xf]
  %v5127 = vld [vmem:[%s5 + $0x224] sm:$0xf]
  %v5128 = vld [vmem:[%s5 + $0x228] sm:$0xf]
  %v5129 = vld [vmem:[%s5 + $0x22c] sm:$0xf]
  %v5130 = vld [vmem:[%s5 + $0x230] sm:$0xf]
  %v5131 = vld [vmem:[%s5 + $0x234] sm:$0xf]
  %v5132 = vld [vmem:[%s5 + $0x238] sm:$0xf]
  %v5133 = vld [vmem:[%s5 + $0x23c] sm:$0xf]
  %v5134 = vld [vmem:[%s6] sm:$0x1]
  %v5136 = vlaneseq
  %v5137 = vshrl.u32 %v5136, 7
  %v5138 = vsub.s32 0, %v5137
  %v5139 = vrot.slane %v5134, %v5138
  %v5285 = vunpack.c.l.b16 %v4990
  %v5286 = vunpack.c.l.b16 %v4991
  %v5287 = vunpack.c.l.b16 %v4992
  %v5288 = vunpack.c.l.b16 %v4993
  %v5289 = vunpack.c.l.b16 %v4994
  %v5290 = vunpack.c.l.b16 %v4995
  %v5291 = vunpack.c.l.b16 %v4996
  %v5292 = vunpack.c.l.b16 %v4997
  %v5293 = vunpack.c.l.b16 %v4998
  %v5294 = vunpack.c.l.b16 %v4999
  %v5295 = vunpack.c.l.b16 %v5000
  %v5296 = vunpack.c.l.b16 %v5001
  %v5297 = vunpack.c.l.b16 %v5002
  %v5298 = vunpack.c.l.b16 %v5003
  %v5299 = vunpack.c.l.b16 %v5004
  %v5300 = vunpack.c.l.b16 %v5005
  %v5301 = vunpack.c.l.b16 %v5006
  %v5302 = vunpack.c.l.b16 %v5007
  %v5303 = vunpack.c.l.b16 %v5008
  %v5304 = vunpack.c.l.b16 %v5009
  %v5305 = vunpack.c.l.b16 %v5010
  %v5306 = vunpack.c.l.b16 %v5011
  %v5307 = vunpack.c.l.b16 %v5012
  %v5308 = vunpack.c.l.b16 %v5013
  %v5309 = vunpack.c.l.b16 %v5014
  %v5310 = vunpack.c.l.b16 %v5015
  %v5311 = vunpack.c.l.b16 %v5016
  %v5312 = vunpack.c.l.b16 %v5017
  %v5313 = vunpack.c.l.b16 %v5018
  %v5314 = vunpack.c.l.b16 %v5019
  %v5315 = vunpack.c.l.b16 %v5020
  %v5316 = vunpack.c.l.b16 %v5021
  %v5317 = vunpack.c.l.b16 %v5022
  %v5318 = vunpack.c.l.b16 %v5023
  %v5319 = vunpack.c.l.b16 %v5024
  %v5320 = vunpack.c.l.b16 %v5025
  %v5321 = vunpack.c.l.b16 %v5026
  %v5322 = vunpack.c.l.b16 %v5027
  %v5323 = vunpack.c.l.b16 %v5028
  %v5324 = vunpack.c.l.b16 %v5029
  %v5325 = vunpack.c.l.b16 %v5030
  %v5326 = vunpack.c.l.b16 %v5031
  %v5327 = vunpack.c.l.b16 %v5032
  %v5328 = vunpack.c.l.b16 %v5033
  %v5329 = vunpack.c.l.b16 %v5034
  %v5330 = vunpack.c.l.b16 %v5035
  %v5331 = vunpack.c.l.b16 %v5036
  %v5332 = vunpack.c.l.b16 %v5037
  %v5333 = vunpack.c.l.b16 %v5038
  %v5334 = vunpack.c.l.b16 %v5039
  %v5335 = vunpack.c.l.b16 %v5040
  %v5336 = vunpack.c.l.b16 %v5041
  %v5337 = vunpack.c.l.b16 %v5042
  %v5338 = vunpack.c.l.b16 %v5043
  %v5339 = vunpack.c.l.b16 %v5044
  %v5340 = vunpack.c.l.b16 %v5045
  %v5341 = vunpack.c.l.b16 %v5046
  %v5342 = vunpack.c.l.b16 %v5047
  %v5343 = vunpack.c.l.b16 %v5048
  %v5344 = vunpack.c.l.b16 %v5049
  %v5345 = vunpack.c.l.b16 %v5050
  %v5346 = vunpack.c.l.b16 %v5051
  %v5347 = vunpack.c.l.b16 %v5052
  %v5348 = vunpack.c.l.b16 %v5053
  %v5349 = vunpack.c.l.b16 %v5054
  %v5350 = vunpack.c.l.b16 %v5055
  %v5351 = vunpack.c.l.b16 %v5056
  %v5352 = vunpack.c.l.b16 %v5057
  %v5353 = vunpack.c.l.b16 %v5058
  %v5354 = vunpack.c.l.b16 %v5059
  %v5355 = vunpack.c.l.b16 %v5060
  %v5356 = vunpack.c.l.b16 %v5061
  %v5357 = vunpack.c.l.b16 %v5062
  %v5358 = vunpack.c.l.b16 %v5063
  %v5359 = vunpack.c.l.b16 %v5064
  %v5360 = vunpack.c.l.b16 %v5065
  %v5361 = vunpack.c.l.b16 %v5066
  %v5362 = vunpack.c.l.b16 %v5067
  %v5363 = vunpack.c.l.b16 %v5068
  %v5364 = vunpack.c.l.b16 %v5069
  %v5365 = vunpack.c.l.b16 %v5070
  %v5366 = vunpack.c.l.b16 %v5071
  %v5367 = vunpack.c.l.b16 %v5072
  %v5368 = vunpack.c.l.b16 %v5073
  %v5369 = vunpack.c.l.b16 %v5074
  %v5370 = vunpack.c.l.b16 %v5075
  %v5371 = vunpack.c.l.b16 %v5076
  %v5372 = vunpack.c.l.b16 %v5077
  %v5373 = vunpack.c.l.b16 %v5078
  %v5374 = vunpack.c.l.b16 %v5079
  %v5375 = vunpack.c.l.b16 %v5080
  %v5376 = vunpack.c.l.b16 %v5081
  %v5377 = vunpack.c.l.b16 %v5082
  %v5378 = vunpack.c.l.b16 %v5083
  %v5379 = vunpack.c.l.b16 %v5084
  %v5380 = vunpack.c.l.b16 %v5085
  %v5381 = vunpack.c.l.b16 %v5086
  %v5382 = vunpack.c.l.b16 %v5087
  %v5383 = vunpack.c.l.b16 %v5088
  %v5384 = vunpack.c.l.b16 %v5089
  %v5385 = vunpack.c.l.b16 %v5090
  %v5386 = vunpack.c.l.b16 %v5091
  %v5387 = vunpack.c.l.b16 %v5092
  %v5388 = vunpack.c.l.b16 %v5093
  %v5389 = vunpack.c.l.b16 %v5094
  %v5390 = vunpack.c.l.b16 %v5095
  %v5391 = vunpack.c.l.b16 %v5096
  %v5392 = vunpack.c.l.b16 %v5097
  %v5393 = vunpack.c.l.b16 %v5098
  %v5394 = vunpack.c.l.b16 %v5099
  %v5395 = vunpack.c.l.b16 %v5100
  %v5396 = vunpack.c.l.b16 %v5101
  %v5397 = vunpack.c.l.b16 %v5102
  %v5398 = vunpack.c.l.b16 %v5103
  %v5399 = vunpack.c.l.b16 %v5104
  %v5400 = vunpack.c.l.b16 %v5105
  %v5401 = vunpack.c.l.b16 %v5106
  %v5402 = vunpack.c.l.b16 %v5107
  %v5403 = vunpack.c.l.b16 %v5108
  %v5404 = vunpack.c.l.b16 %v5109
  %v5405 = vunpack.c.l.b16 %v5110
  %v5406 = vunpack.c.l.b16 %v5111
  %v5407 = vunpack.c.l.b16 %v5112
  %v5408 = vunpack.c.l.b16 %v5113
  %v5409 = vunpack.c.l.b16 %v5114
  %v5410 = vunpack.c.l.b16 %v5115
  %v5411 = vunpack.c.l.b16 %v5116
  %v5412 = vunpack.c.l.b16 %v5117
  %v5413 = vunpack.c.l.b16 %v5118
  %v5414 = vunpack.c.l.b16 %v5119
  %v5415 = vunpack.c.l.b16 %v5120
  %v5416 = vunpack.c.l.b16 %v5121
  %v5417 = vunpack.c.l.b16 %v5122
  %v5418 = vunpack.c.l.b16 %v5123
  %v5419 = vunpack.c.l.b16 %v5124
  %v5420 = vunpack.c.l.b16 %v5125
  %v5421 = vunpack.c.l.b16 %v5126
  %v5422 = vunpack.c.l.b16 %v5127
  %v5423 = vunpack.c.l.b16 %v5128
  %v5424 = vunpack.c.l.b16 %v5129
  %v5425 = vunpack.c.l.b16 %v5130
  %v5426 = vunpack.c.l.b16 %v5131
  %v5427 = vunpack.c.l.b16 %v5132
  %v5428 = vunpack.c.l.b16 %v5133
  %v5429 = vpack.c.b16 %v5286, %v5285
  %v5430 = vpack.c.b16 %v5288, %v5287
  %v5431 = vpack.c.b16 %v5290, %v5289
  %v5432 = vpack.c.b16 %v5292, %v5291
  %v5433 = vpack.c.b16 %v5294, %v5293
  %v5434 = vpack.c.b16 %v5296, %v5295
  %v5435 = vpack.c.b16 %v5298, %v5297
  %v5436 = vpack.c.b16 %v5300, %v5299
  %v5437 = vpack.c.b16 %v5302, %v5301
  %v5438 = vpack.c.b16 %v5304, %v5303
  %v5439 = vpack.c.b16 %v5306, %v5305
  %v5440 = vpack.c.b16 %v5308, %v5307
  %v5441 = vpack.c.b16 %v5310, %v5309
  %v5442 = vpack.c.b16 %v5312, %v5311
  %v5443 = vpack.c.b16 %v5314, %v5313
  %v5444 = vpack.c.b16 %v5316, %v5315
  %v5445 = vpack.c.b16 %v5318, %v5317
  %v5446 = vpack.c.b16 %v5320, %v5319
  %v5447 = vpack.c.b16 %v5322, %v5321
  %v5448 = vpack.c.b16 %v5324, %v5323
  %v5449 = vpack.c.b16 %v5326, %v5325
  %v5450 = vpack.c.b16 %v5328, %v5327
  %v5451 = vpack.c.b16 %v5330, %v5329
  %v5452 = vpack.c.b16 %v5332, %v5331
  %v5453 = vpack.c.b16 %v5334, %v5333
  %v5454 = vpack.c.b16 %v5336, %v5335
  %v5455 = vpack.c.b16 %v5338, %v5337
  %v5456 = vpack.c.b16 %v5340, %v5339
  %v5457 = vpack.c.b16 %v5342, %v5341
  %v5458 = vpack.c.b16 %v5344, %v5343
  %v5459 = vpack.c.b16 %v5346, %v5345
  %v5460 = vpack.c.b16 %v5348, %v5347
  %v5461 = vpack.c.b16 %v5350, %v5349
  %v5462 = vpack.c.b16 %v5352, %v5351
  %v5463 = vpack.c.b16 %v5354, %v5353
  %v5464 = vpack.c.b16 %v5356, %v5355
  %v5465 = vpack.c.b16 %v5358, %v5357
  %v5466 = vpack.c.b16 %v5360, %v5359
  %v5467 = vpack.c.b16 %v5362, %v5361
  %v5468 = vpack.c.b16 %v5364, %v5363
  %v5469 = vpack.c.b16 %v5366, %v5365
  %v5470 = vpack.c.b16 %v5368, %v5367
  %v5471 = vpack.c.b16 %v5370, %v5369
  %v5472 = vpack.c.b16 %v5372, %v5371
  %v5473 = vpack.c.b16 %v5374, %v5373
  %v5474 = vpack.c.b16 %v5376, %v5375
  %v5475 = vpack.c.b16 %v5378, %v5377
  %v5476 = vpack.c.b16 %v5380, %v5379
  %v5477 = vpack.c.b16 %v5382, %v5381
  %v5478 = vpack.c.b16 %v5384, %v5383
  %v5479 = vpack.c.b16 %v5386, %v5385
  %v5480 = vpack.c.b16 %v5388, %v5387
  %v5481 = vpack.c.b16 %v5390, %v5389
  %v5482 = vpack.c.b16 %v5392, %v5391
  %v5483 = vpack.c.b16 %v5394, %v5393
  %v5484 = vpack.c.b16 %v5396, %v5395
  %v5485 = vpack.c.b16 %v5398, %v5397
  %v5486 = vpack.c.b16 %v5400, %v5399
  %v5487 = vpack.c.b16 %v5402, %v5401
  %v5488 = vpack.c.b16 %v5404, %v5403
  %v5489 = vpack.c.b16 %v5406, %v5405
  %v5490 = vpack.c.b16 %v5408, %v5407
  %v5491 = vpack.c.b16 %v5410, %v5409
  %v5492 = vpack.c.b16 %v5412, %v5411
  %v5493 = vpack.c.b16 %v5414, %v5413
  %v5494 = vpack.c.b16 %v5416, %v5415
  %v5495 = vpack.c.b16 %v5418, %v5417
  %v5496 = vpack.c.b16 %v5420, %v5419
  %v5497 = vpack.c.b16 %v5422, %v5421
  %v5498 = vpack.c.b16 %v5424, %v5423
  %v5499 = vpack.c.b16 %v5426, %v5425
  %v5500 = vpack.c.b16 %v5428, %v5427
  %5573 = vmatprep.subr.bf16.mxu0 0
  %5574 = vmatpush1.bf16.msra.mxu0 %v5429
  %5575 = vmatprep.subr.bf16.mxu0 0
  %5576 = vmatpush1.bf16.msra.mxu0 %v5430
  %5577 = vmatprep.subr.bf16.mxu0 0
  %5578 = vmatpush1.bf16.msra.mxu0 %v5431
  %5579 = vmatprep.subr.bf16.mxu0 0
  %5580 = vmatpush1.bf16.msra.mxu0 %v5432
  %5581 = vmatprep.subr.bf16.mxu0 0
  %5582 = vmatpush1.bf16.msra.mxu0 %v5433
  %5583 = vmatprep.subr.bf16.mxu0 0
  %5584 = vmatpush1.bf16.msra.mxu0 %v5434
  %5585 = vmatprep.subr.bf16.mxu0 0
  %5586 = vmatpush1.bf16.msra.mxu0 %v5435
  %5587 = vmatprep.subr.bf16.mxu0 0
  %5588 = vmatpush1.bf16.msra.mxu0 %v5436
  %5589 = vmatprep.subr.bf16.mxu0 0
  %5590 = vmatpush1.bf16.msra.mxu0 %v5437
  %5591 = vmatprep.subr.bf16.mxu0 0
  %5592 = vmatpush1.bf16.msra.mxu0 %v5438
  %5593 = vmatprep.subr.bf16.mxu0 0
  %5594 = vmatpush1.bf16.msra.mxu0 %v5439
  %5595 = vmatprep.subr.bf16.mxu0 0
  %5596 = vmatpush1.bf16.msra.mxu0 %v5440
  %5597 = vmatprep.subr.bf16.mxu0 0
  %5598 = vmatpush1.bf16.msra.mxu0 %v5441
  %5599 = vmatprep.subr.bf16.mxu0 0
  %5600 = vmatpush1.bf16.msra.mxu0 %v5442
  %5601 = vmatprep.subr.bf16.mxu0 0
  %5602 = vmatpush1.bf16.msra.mxu0 %v5443
  %5603 = vmatprep.subr.bf16.mxu0 0
  %5604 = vmatpush1.bf16.msra.mxu0 %v5444
  %5605 = vmatprep.mubr.bf16.mxu0 %v4779
  %5606 = vmatmul.mubr.bf16.gmra.mrb[0].mxu0 %v4765
  %v5607 = vpop.f32.mrb[0].mxu0
  %v5608 = vadd.f32 %v5139, %v5607
  %v5609 = vpop.f32.mrb[0].mxu0
  %v5610 = vpop.f32.mrb[0].mxu0
  %v5611 = vadd.f32 %v5139, %v5610
  %v5612 = vpop.f32.mrb[0].mxu0
  %5613 = vmatprep.mubr.bf16.mxu0 %v4898
  %5614 = vmatmul.mubr.bf16.gmra.mrb[0].mxu0 %v4884
  %v5615 = vpop.f32.mrb[0].mxu0
  %v5616 = vadd.f32 %v5139, %v5615
  %v5617 = vpop.f32.mrb[0].mxu0
  %v5618 = vpop.f32.mrb[0].mxu0
  %v5619 = vadd.f32 %v5139, %v5618
  %v5620 = vpop.f32.mrb[0].mxu0
  %5621 = vdwg.mxu0
  %5622 = vmatprep.subr.bf16.mxu0 0
  %5623 = vmatpush1.bf16.msra.mxu0 %v5445
  %5624 = vmatprep.subr.bf16.mxu0 0
  %5625 = vmatpush1.bf16.msra.mxu0 %v5446
  %5626 = vmatprep.subr.bf16.mxu0 0
  %5627 = vmatpush1.bf16.msra.mxu0 %v5447
  %5628 = vmatprep.subr.bf16.mxu0 0
  %5629 = vmatpush1.bf16.msra.mxu0 %v5448
  %5630 = vmatprep.subr.bf16.mxu0 0
  %5631 = vmatpush1.bf16.msra.mxu0 %v5449
  %5632 = vmatprep.subr.bf16.mxu0 0
  %5633 = vmatpush1.bf16.msra.mxu0 %v5450
  %5634 = vmatprep.subr.bf16.mxu0 0
  %5635 = vmatpush1.bf16.msra.mxu0 %v5451
  %5636 = vmatprep.subr.bf16.mxu0 0
  %5637 = vmatpush1.bf16.msra.mxu0 %v5452
  %5638 = vmatprep.subr.bf16.mxu0 0
  %5639 = vmatpush1.bf16.msra.mxu0 %v5453
  %5640 = vmatprep.subr.bf16.mxu0 0
  %5641 = vmatpush1.bf16.msra.mxu0 %v5454
  %5642 = vmatprep.subr.bf16.mxu0 0
  %5643 = vmatpush1.bf16.msra.mxu0 %v5455
  %5644 = vmatprep.subr.bf16.mxu0 0
  %5645 = vmatpush1.bf16.msra.mxu0 %v5456
  %5646 = vmatprep.subr.bf16.mxu0 0
  %5647 = vmatpush1.bf16.msra.mxu0 %v5457
  %5648 = vmatprep.subr.bf16.mxu0 0
  %5649 = vmatpush1.bf16.msra.mxu0 %v5458
  %5650 = vmatprep.subr.bf16.mxu0 0
  %5651 = vmatpush1.bf16.msra.mxu0 %v5459
  %5652 = vmatprep.subr.bf16.mxu0 0
  %5653 = vmatpush1.bf16.msra.mxu0 %v5460
  %5654 = vmatprep.mubr.bf16.mxu0 %v4805
  %5655 = vmatmul.mubr.bf16.gmra.mrb[0].mxu0 %v4792
  %v5656 = vpop.f32.mrb[0].mxu0
  %v5657 = vadd.f32 %v5608, %v5656
  %v5658 = vpop.f32.mrb[0].mxu0
  %v5659 = vpop.f32.mrb[0].mxu0
  %v5660 = vadd.f32 %v5611, %v5659
  %v5661 = vpop.f32.mrb[0].mxu0
  %5662 = vmatprep.mubr.bf16.mxu0 %v4924
  %5663 = vmatmul.mubr.bf16.gmra.mrb[0].mxu0 %v4911
  %v5664 = vpop.f32.mrb[0].mxu0
  %v5665 = vadd.f32 %v5616, %v5664
  %v5666 = vpop.f32.mrb[0].mxu0
  %v5667 = vpop.f32.mrb[0].mxu0
  %v5668 = vadd.f32 %v5619, %v5667
  %v5669 = vpop.f32.mrb[0].mxu0
  %5670 = vdwg.mxu0
  %5671 = vmatprep.subr.bf16.mxu0 0
  %5672 = vmatpush1.bf16.msra.mxu0 %v5461
  %5673 = vmatprep.subr.bf16.mxu0 0
  %5674 = vmatpush1.bf16.msra.mxu0 %v5462
  %5675 = vmatprep.subr.bf16.mxu0 0
  %5676 = vmatpush1.bf16.msra.mxu0 %v5463
  %5677 = vmatprep.subr.bf16.mxu0 0
  %5678 = vmatpush1.bf16.msra.mxu0 %v5464
  %5679 = vmatprep.subr.bf16.mxu0 0
  %5680 = vmatpush1.bf16.msra.mxu0 %v5465
  %5681 = vmatprep.subr.bf16.mxu0 0
  %5682 = vmatpush1.bf16.msra.mxu0 %v5466
  %5683 = vmatprep.subr.bf16.mxu0 0
  %5684 = vmatpush1.bf16.msra.mxu0 %v5467
  %5685 = vmatprep.subr.bf16.mxu0 0
  %5686 = vmatpush1.bf16.msra.mxu0 %v5468
  %5687 = vmatprep.subr.bf16.mxu0 0
  %5688 = vmatpush1.bf16.msra.mxu0 %v5469
  %5689 = vmatprep.subr.bf16.mxu0 0
  %5690 = vmatpush1.bf16.msra.mxu0 %v5470
  %5691 = vmatprep.subr.bf16.mxu0 0
  %5692 = vmatpush1.bf16.msra.mxu0 %v5471
  %5693 = vmatprep.subr.bf16.mxu0 0
  %5694 = vmatpush1.bf16.msra.mxu0 %v5472
  %5695 = vmatprep.subr.bf16.mxu0 0
  %5696 = vmatpush1.bf16.msra.mxu0 %v5473
  %5697 = vmatprep.subr.bf16.mxu0 0
  %5698 = vmatpush1.bf16.msra.mxu0 %v5474
  %5699 = vmatprep.subr.bf16.mxu0 0
  %5700 = vmatpush1.bf16.msra.mxu0 %v5475
  %5701 = vmatprep.subr.bf16.mxu0 0
  %5702 = vmatpush1.bf16.msra.mxu0 %v5476
  %5703 = vmatprep.mubr.bf16.mxu0 %v4831
  %5704 = vmatmul.mubr.bf16.gmra.mrb[0].mxu0 %v4818
  %v5705 = vpop.f32.mrb[0].mxu0
  %v5706 = vadd.f32 %v5657, %v5705
  %v5707 = vpop.f32.mrb[0].mxu0
  %v5708 = vpop.f32.mrb[0].mxu0
  %v5709 = vadd.f32 %v5660, %v5708
  %v5710 = vpop.f32.mrb[0].mxu0
  %5711 = vmatprep.mubr.bf16.mxu0 %v4950
  %5712 = vmatmul.mubr.bf16.gmra.mrb[0].mxu0 %v4937
  %v5713 = vpop.f32.mrb[0].mxu0
  %v5714 = vadd.f32 %v5665, %v5713
  %v5715 = vpop.f32.mrb[0].mxu0
  %v5716 = vpop.f32.mrb[0].mxu0
  %v5717 = vadd.f32 %v5668, %v5716
  %v5718 = vpop.f32.mrb[0].mxu0
  %5719 = vdwg.mxu0
  %5720 = vmatprep.subr.bf16.mxu0 0
  %5721 = vmatpush1.bf16.msra.mxu0 %v5477
  %5722 = vmatprep.subr.bf16.mxu0 0
  %5723 = vmatpush1.bf16.msra.mxu0 %v5478
  %5724 = vmatprep.subr.bf16.mxu0 0
  %5725 = vmatpush1.bf16.msra.mxu0 %v5479
  %5726 = vmatprep.subr.bf16.mxu0 0
  %5727 = vmatpush1.bf16.msra.mxu0 %v5480
  %5728 = vmatprep.subr.bf16.mxu0 0
  %5729 = vmatpush1.bf16.msra.mxu0 %v5481
  %5730 = vmatprep.subr.bf16.mxu0 0
  %5731 = vmatpush1.bf16.msra.mxu0 %v5482
  %5732 = vmatprep.subr.bf16.mxu0 0
  %5733 = vmatpush1.bf16.msra.mxu0 %v5483
  %5734 = vmatprep.subr.bf16.mxu0 0
  %5735 = vmatpush1.bf16.msra.mxu0 %v5484
  %5736 = vmatprep.subr.bf16.mxu0 0
  %5737 = vmatpush1.bf16.msra.mxu0 %v5485
  %5738 = vmatprep.subr.bf16.mxu0 0
  %5739 = vmatpush1.bf16.msra.mxu0 %v5486
  %5740 = vmatprep.subr.bf16.mxu0 0
  %5741 = vmatpush1.bf16.msra.mxu0 %v5487
  %5742 = vmatprep.subr.bf16.mxu0 0
  %5743 = vmatpush1.bf16.msra.mxu0 %v5488
  %5744 = vmatprep.subr.bf16.mxu0 0
  %5745 = vmatpush1.bf16.msra.mxu0 %v5489
  %5746 = vmatprep.subr.bf16.mxu0 0
  %5747 = vmatpush1.bf16.msra.mxu0 %v5490
  %5748 = vmatprep.subr.bf16.mxu0 0
  %5749 = vmatpush1.bf16.msra.mxu0 %v5491
  %5750 = vmatprep.subr.bf16.mxu0 0
  %5751 = vmatpush1.bf16.msra.mxu0 %v5492
  %5752 = vmatprep.mubr.bf16.mxu0 %v4857
  %5753 = vmatmul.mubr.bf16.gmra.mrb[0].mxu0 %v4844
  %v5754 = vpop.f32.mrb[0].mxu0
  %v5755 = vadd.f32 %v5706, %v5754
  %v5756 = vpop.f32.mrb[0].mxu0
  %v5757 = vpop.f32.mrb[0].mxu0
  %v5758 = vadd.f32 %v5709, %v5757
  %v5759 = vpop.f32.mrb[0].mxu0
  %5760 = vmatprep.mubr.bf16.mxu0 %v4976
  %5761 = vmatmul.mubr.bf16.gmra.mrb[0].mxu0 %v4963
  %v5762 = vpop.f32.mrb[0].mxu0
  %v5763 = vadd.f32 %v5714, %v5762
  %v5764 = vpop.f32.mrb[0].mxu0
  %v5765 = vpop.f32.mrb[0].mxu0
  %v5766 = vadd.f32 %v5717, %v5765
  %v5767 = vpop.f32.mrb[0].mxu0
  %5768 = vdwg.mxu0
  %5769 = vmatprep.subr.bf16.mxu0 0
  %5770 = vmatpush1.bf16.msra.mxu0 %v5493
  %5771 = vmatprep.subr.bf16.mxu0 0
  %5772 = vmatpush1.bf16.msra.mxu0 %v5494
  %5773 = vmatprep.subr.bf16.mxu0 0
  %5774 = vmatpush1.bf16.msra.mxu0 %v5495
  %5775 = vmatprep.subr.bf16.mxu0 0
  %5776 = vmatpush1.bf16.msra.mxu0 %v5496
  %5777 = vmatprep.subr.bf16.mxu0 0
  %5778 = vmatpush1.bf16.msra.mxu0 %v5497
  %5779 = vmatprep.subr.bf16.mxu0 0
  %5780 = vmatpush1.bf16.msra.mxu0 %v5498
  %5781 = vmatprep.subr.bf16.mxu0 0
  %5782 = vmatpush1.bf16.msra.mxu0 %v5499
  %5783 = vmatprep.subr.bf16.mxu0 0
  %5784 = vmatpush1.bf16.msra.mxu0 %v5500
  %5785 = vmatprep.subr.bf16.mxu0 0
  %5786 = vmatpush1.bf16.msra.mxu0 0
  %5787 = vmatprep.subr.bf16.mxu0 0
  %5788 = vmatpush1.bf16.msra.mxu0 0
  %5789 = vmatprep.subr.bf16.mxu0 0
  %5790 = vmatpush1.bf16.msra.mxu0 0
  %5791 = vmatprep.subr.bf16.mxu0 0
  %5792 = vmatpush1.bf16.msra.mxu0 0
  %5793 = vmatprep.subr.bf16.mxu0 0
  %5794 = vmatpush1.bf16.msra.mxu0 0
  %5795 = vmatprep.subr.bf16.mxu0 0
  %5796 = vmatpush1.bf16.msra.mxu0 0
  %5797 = vmatprep.subr.bf16.mxu0 0
  %5798 = vmatpush1.bf16.msra.mxu0 0
  %5799 = vmatprep.subr.bf16.mxu0 0
  %5800 = vmatpush1.bf16.msra.mxu0 0
  %5801 = vmatprep.mubr.bf16.mxu0 0
  %5802 = vmatmul.mubr.bf16.gmra.mrb[0].mxu0 %v4870
  %v5803 = vpop.f32.mrb[0].mxu0
  %v5804 = vadd.f32 %v5755, %v5803
  %v5805 = vpop.f32.mrb[0].mxu0
  %v5806 = vpop.f32.mrb[0].mxu0
  %v5807 = vadd.f32 %v5758, %v5806
  %v5808 = vpop.f32.mrb[0].mxu0
  %5809 = vmatprep.mubr.bf16.mxu0 0
  %5810 = vmatmul.mubr.bf16.gmra.mrb[0].mxu0 %v4989
  %v5811 = vpop.f32.mrb[0].mxu0
  %v5812 = vadd.f32 %v5763, %v5811
  %v5813 = vpop.f32.mrb[0].mxu0
  %v5814 = vpop.f32.mrb[0].mxu0
  %v5815 = vadd.f32 %v5766, %v5814
  %v5816 = vpop.f32.mrb[0].mxu0
  %5817 = vdwg.mxu0
  %v5818 = vadd.f32 %v5804, %v5807
  %v5819 = vadd.f32 %v5818, %v5812
  %v5820 = vadd.f32 %v5819, %v5815
  %v5821 = vrot.slane %v5820, 4
  %v5822 = vadd.f32 %v5820, %v5821
  %v5823 = vrot.slane %v5822, 2
  %v5824 = vadd.f32 %v5822, %v5823
  %v5825 = vrot.slane %v5824, 1
  %v5826 = vadd.f32 %v5824, %v5825
  %v5827 = vmul.f32 %v5826, 0.03125
  %v5828 = vsub.f32 %v5804, %v5827
  %v5829 = vsub.f32 %v5807, %v5827
  %v5830 = vsub.f32 %v5812, %v5827
  %v5831 = vsub.f32 %v5815, %v5827
  %v5832 = vmul.f32 %v5828, %v5828
  %v5833 = vmul.f32 %v5829, %v5829
  %v5834 = vmul.f32 %v5830, %v5830
  %v5835 = vmul.f32 %v5831, %v5831
  %v5836 = vadd.f32 %v5832, %v5833
  %v5837 = vadd.f32 %v5836, %v5834
  %v5838 = vadd.f32 %v5837, %v5835
  %v5839 = vrot.slane %v5838, 4
  %v5840 = vadd.f32 %v5838, %v5839
  %v5841 = vrot.slane %v5840, 2
  %v5842 = vadd.f32 %v5840, %v5841
  %v5843 = vrot.slane %v5842, 1
  %v5844 = vadd.f32 %v5842, %v5843
  %v5845 = vmul.f32 %v5844, 0.03125
  %v5846 = vadd.f32 %v5845, 1e-05
  %v5847 = vrsqrt.pop %v5846
  %v5848 = vmul.f32 %v5828, %v5847
  %v5849 = vmul.f32 %v5829, %v5847
  %v5850 = vmul.f32 %v5830, %v5847
  %v5851 = vmul.f32 %v5831, %v5847
  %vm5852 = vcmp.gt.f32.partialorder %v5848, 0.0
  %vm5853 = vcmp.gt.f32.partialorder %v5849, 0.0
  %vm5854 = vcmp.gt.f32.partialorder %v5850, 0.0
  %vm5855 = vcmp.gt.f32.partialorder %v5851, 0.0
  %v5856 = vmul.f32 %v5848, 0.2
  %v5857 = vmul.f32 %v5849, 0.2
  %v5858 = vmul.f32 %v5850, 0.2
  %v5859 = vmul.f32 %v5851, 0.2
  %v5860 = vsel %vm5852, %v5848, %v5856
  %v5861 = vsel %vm5853, %v5849, %v5857
  %v5862 = vsel %vm5854, %v5850, %v5858
  %v5863 = vsel %vm5855, %v5851, %v5859
  %5864 = vst [vmem:[%s9] sm:$0xff] %v5860
  %5865 = vst [vmem:[%s9 + $0x8] sm:$0xff] %v5861
  %5866 = vst [vmem:[%s9 + $0x10] sm:$0xff] %v5862
  %5867 = vst [vmem:[%s9 + $0x18] sm:$0xff] %v5863
  %v5868 = vld [vmem:[%s7] sm:$0xff]
  %v5869 = vld [vmem:[%s7 + $0x8] sm:$0xff]
  %v5870 = vmul.f32 %v5860, %v5868
  %v5871 = vmul.f32 %v5861, %v5869
  %v5872 = vmul.f32 %v5862, %v5868
  %v5873 = vmul.f32 %v5863, %v5869
  %5874 = vadd.xlane.f32.xlu0 %v5870
  %v5875 = vpop.xlane.xlu0 %5874
  %5876 = vadd.xlane.f32.xlu0 %v5871
  %v5877 = vpop.xlane.xlu0 %5876
  %5878 = vadd.xlane.f32.xlu0 %v5872
  %v5879 = vpop.xlane.xlu0 %5878
  %5880 = vadd.xlane.f32.xlu0 %v5873
  %v5881 = vpop.xlane.xlu0 %5880
  %v5886 = vlaneseq
  %v5887 = vand.u32 %v5886, 127
  %v5888 = vlaneseq
  %v5889 = vshrl.u32 %v5888, 7
  %v5890 = vsub.s32 %v5887, %v5889
  %v5891 = vrot.slane %v5875, %v5890
  %v5892 = vadd.s32 %v5887, 4294967288
  %v5893 = vlaneseq
  %v5894 = vshrl.u32 %v5893, 7
  %v5895 = vsub.s32 %v5892, %v5894
  %v5896 = vrot.slane %v5877, %v5895
  %vm5897 = vcmask 130112
  %v5898 = vsel %vm5897, %v5896, %v5891
  %v5899 = vlaneseq
  %v5900 = vshrl.u32 %v5899, 7
  %v5901 = vsub.s32 %v5887, %v5900
  %v5902 = vrot.slane %v5879, %v5901
  %v5903 = vlaneseq
  %v5904 = vshrl.u32 %v5903, 7
  %v5905 = vsub.s32 %v5892, %v5904
  %v5906 = vrot.slane %v5881, %v5905
  %v5907 = vsel %vm5897, %v5906, %v5902
  %vm5908 = vcmask 1041409
  %v5909 = vsel %vm5908, %v5907, %v5898
  %vm5911 = vcmask 123904
  %v5912 = vsel %vm5911, %v5909, 0.0
  %5913 = vadd.xlane.f32.xlu0 %v5912
  %v5914 = vpop.xlane.xlu0 %5913
  %v5915 = vld [vmem:[#allocation4] sm:$0x1]
  %v5917 = vlaneseq
  %v5918 = vshrl.u32 %v5917, 7
  %v5919 = vsub.s32 0, %v5918
  %v5920 = vrot.slane %v5915, %v5919
  %v5922 = vadd.f32 %v5914, %v5920
  %v5923 = vxor.u32 %v5922, 2147483648
  %v5924 = vmul.f32 %v5923, 1.442695
  %v5925 = vpow.pop %v5924
  %v5926 = vadd.f32 %v5925, 1.0
  %v5927 = vrcp.pop %v5926
  %v5928 = vmul.f32 1.0, %v5927
  %vm5929 = vcmask 1024
  %5930 = vst.msk [vmem:[%s10] sm:$0x3] %vm5929, %v5928
  // Predicated region
  $region38: #{dc_discriminator_forward.1} parent=0 // pred_check
    _
  $region39: #{dc_discriminator_forward.1} parent=0 // pred_check_branch
    %5932 = sbr.rel (0) target = $region41
  $region40: #{dc_discriminator_forward.1} parent=0 // pred_region
    _
  $region41: #{dc_discriminator_forward.1} parent=0 // pred_fallthru
    _
  // Predicated region
  $region42: #{dc_discriminator_forward.1} parent=0 // pred_check
    _
  $region43: #{dc_discriminator_forward.1} parent=0 // pred_check_branch
    %5934 = sbr.rel (0) target = $region45
  $region44: #{dc_discriminator_forward.1} parent=0 // pred_region
    _
  $region45: #{dc_discriminator_forward.1} parent=0 // pred_fallthru
    _
  // Predicated region
  $region46: #{dc_discriminator_forward.1} parent=0 // pred_check
    _
  $region47: #{dc_discriminator_forward.1} parent=0 // pred_check_branch
    %5936 = sbr.rel (0) target = $region49
  $region48: #{dc_discriminator_forward.1} parent=0 // pred_region
    _
  $region49: #{dc_discriminator_forward.1} parent=0 // pred_fallthru
    _
  // Predicated region
  $region50: #{dc_discriminator_forward.1} parent=0 // pred_check
    _
  $region51: #{dc_discriminator_forward.1} parent=0 // pred_check_branch
    %5938 = sbr.rel (0) target = $region53
  $region52: #{dc_discriminator_forward.1} parent=0 // pred_region
    _
  $region53: #{dc_discriminator_forward.1} parent=0 // pred_fallthru
    _

</llo_original>
